<compile_context>
chip_gen: v7x
topology: tpu7x:2x2x1
jax: 0.10.0
libtpu: 0.0.40
codegen_flags: <defaults>
</compile_context>

<pallas_src>
import math
import jax
import jax.numpy as jnp
from jax import lax
from jax.experimental import pallas as pl
from jax.experimental.pallas import tpu as pltpu

# ---------------- small config consistent with the module ----------------
VOCAB = 128       # vocab_size (toy; 128 keeps the output store lane-dense)
D = 32            # model_dimension
H = 4             # heads
DK = D // H       # d_k
P = 64            # projection_dimension (ff hidden)
B = 2             # batch
T = 8             # seq len (context_length)
N_PRELUDE = 1
N_CODA = 1
N_BLOCKS = N_PRELUDE + N_CODA
EPS = 1e-5
SCALE = 1.0 / math.sqrt(DK)
SCALE2 = SCALE * SCALE          # double 1/sqrt(dk) of the torch code, folded
SQRT_D = math.sqrt(D)
HIGHEST = lax.Precision.HIGHEST  # reference-only: f32-accurate gold

# packed per-block vector slab rows (x 128 lanes):
#   0: bq|bv|br (96)   1: bo (32)   2: wsum (32)   3: g1   4: b1
#   5: bf1 (64)        6: bf2       7: g2          8: b2   9..10: h0 (B rows)
NV = 9 + B

# ---- single parameter slab layout (rows x 128 lanes); all offsets 8-aligned
OFF_WQVR = 0                       # (D, 3D)  lanes 0:96
OFF_WO = OFF_WQVR + D              # (D, D)   lanes 0:32
OFF_WF1 = OFF_WO + D               # (D, P)   lanes 0:64
OFF_WF2 = OFF_WF1 + D              # (P, D)   lanes 0:32
OFF_VEC = OFF_WF2 + P              # (NV,128)
BLOCK_STRIDE = OFF_VEC + 16        # NV=11 padded to 16 -> next block 8-aligned
OFF_WPB = N_BLOCKS * BLOCK_STRIDE  # (D+1, VOCAB) final projection weight+bias
SLAB_ROWS = OFF_WPB + 40           # 33 rows padded to 40 (multiple of 8)


# ---------------- shared math ---------------------------------------------
def _layernorm(x, g, b):
    mu = jnp.mean(x, axis=-1, keepdims=True)
    var = jnp.mean((x - mu) ** 2, axis=-1, keepdims=True)
    return (x - mu) * lax.rsqrt(var + EPS) * g + b


# ---------------- fused Pallas kernel --------------------------------------
def fused_forward_kernel(ids_ref, emb_ref, slab_ref, o_ref):
    # causal 0/1 mask built in-kernel (torch adds a *bool* triu mask to floats)
    rows = lax.broadcasted_iota(jnp.int32, (T, T), 0)
    cols = lax.broadcasted_iota(jnp.int32, (T, T), 1)
    mask = (cols > rows).astype(jnp.float32)                       # (T, T)

    # --- fused embedding gather + sqrt(D) scale (ids in SMEM) -------------
    # emb_ref is (VOCAB, 1, D): dynamic index on the untiled leading axis.
    xrows = []
    for b in range(B):
        for t in range(T):
            tok = ids_ref[b, t]
            xrows.append(emb_ref[tok])                             # (1, D)
    x = jnp.concatenate(xrows, axis=0) * SQRT_D                    # (B*T, D)

    for blk in range(N_BLOCKS):                                    # 2 blocks, fused
        base = blk * BLOCK_STRIDE
        wqvr = slab_ref[base + OFF_WQVR:base + OFF_WQVR + D, 0:3 * D]   # (D, 3D)
        wo = slab_ref[base + OFF_WO:base + OFF_WO + D, 0:D]             # (D, D)
        wf1 = slab_ref[base + OFF_WF1:base + OFF_WF1 + D, 0:P]          # (D, P)
        wf2 = slab_ref[base + OFF_WF2:base + OFF_WF2 + P, 0:D]          # (P, D)
        vec = slab_ref[base + OFF_VEC:base + OFF_VEC + NV, :]           # (NV, 128)
        bqvr = vec[0, :3 * D]
        bo = vec[1, :D]
        wsum = vec[2, :D]
        g1 = vec[3, :D]
        b1 = vec[4, :D]
        bf1 = vec[5, :P]
        bf2 = vec[6, :D]
        g2 = vec[7, :D]
        b2 = vec[8, :D]
        h0 = vec[9:9 + B, :D]                                      # (B, D)

        # --- fused Q|V|R projection: one MXU matmul (DEFAULT precision) ---
        qvr = jnp.dot(x, wqvr, preferred_element_type=jnp.float32) + bqvr
        qb = qvr[:, 0:D].reshape(B, T, D)
        vb = qvr[:, D:2 * D].reshape(B, T, D)
        rb = qvr[:, 2 * D:3 * D].reshape(B, T, D)

        # --- recurrence over time; states stay in vregs (no VMEM scratch) ---
        wsum_b = jnp.broadcast_to(wsum[None, :], (B, D))           # hoisted
        h = h0
        h_steps = []
        for t in range(T):
            h = jnp.tanh(wsum_b * h + rb[:, t, :])
            h_steps.append(h[:, None, :])
        hs = jnp.concatenate(h_steps, axis=1)                      # (B, T, D)

        # --- per-head attention on the VPU/XLU (no tiny MXU matmuls) ------
        # NOTE: the width-8 static lane slices + one 4-way lane concat per
        # block remain (heads live in the lane dim); at this size they are a
        # handful of XLU shuffles and do not compete with the LN reductions.
        head_outs = []
        for hd in range(H):
            lo = hd * DK
            hi = lo + DK
            qh = qb[:, :, lo:hi]                                   # (B, T, DK)
            hh = hs[:, :, lo:hi]
            vh = vb[:, :, lo:hi]
            # scores: (B,T,T,DK) intermediate = 1 f32 vreg per head
            s = jnp.sum(qh[:, :, None, :] * hh[:, None, :, :], axis=-1) * SCALE2
            s = s + mask[None, :, :]                               # additive 0/1 mask
            s = s - jnp.max(s, axis=-1, keepdims=True)
            e = jnp.exp(s)
            a = e * pl.reciprocal(jnp.sum(e, axis=-1, keepdims=True),
                                  approx=True)                    # EUP vrcp slot
            head_outs.append(jnp.sum(a[:, :, :, None] * vh[:, None, :, :],
                                     axis=2))                      # (B, T, DK)
        attn_out = jnp.concatenate(head_outs, axis=-1).reshape(B * T, D)
        attn_out = jnp.dot(attn_out, wo,
                           preferred_element_type=jnp.float32) + bo

        # --- residual + norm1, FFN, residual + norm2 ---
        x1 = _layernorm(x + attn_out, g1, b1)
        ff = jnp.maximum(jnp.dot(x1, wf1,
                                 preferred_element_type=jnp.float32) + bf1, 0.0)
        ff = jnp.dot(ff, wf2, preferred_element_type=jnp.float32) + bf2
        x = _layernorm(x1 + ff, g2, b2)

    # --- final vocab projection; VOCAB=128 -> lane-dense 2-D output store ---
    # (At real VOCAB sizes: tile this over a grid axis in 128-lane multiples,
    #  double-buffer the weight tiles and set vmem_limit_bytes for v7x 64 MiB.)
    wp = slab_ref[OFF_WPB:OFF_WPB + D, :]                          # (D, VOCAB)
    bp = slab_ref[OFF_WPB + D, :]                                  # (VOCAB,)
    o_ref[...] = jnp.dot(x, wp, preferred_element_type=jnp.float32) + bp


# ---------------- jitted forward: exactly one kernel launch ----------------
@jax.jit
def forward(packed, input_ids):
    # Gridless call -> runs on one TensorCore; for real sizes add a 'parallel'
    # grid axis over batch / query tiles (v7x megacore) — irrelevant at B=2,T=8.
    logits2d = pl.pallas_call(
        fused_forward_kernel,
        out_shape=jax.ShapeDtypeStruct((B * T, VOCAB), jnp.float32),
        in_specs=[
            pl.BlockSpec(memory_space=pltpu.MemorySpace.SMEM),   # input_ids
            pl.BlockSpec(memory_space=pltpu.MemorySpace.VMEM),   # emb table
            pl.BlockSpec(memory_space=pltpu.MemorySpace.VMEM),   # param slab
        ],
        out_specs=pl.BlockSpec(memory_space=pltpu.MemorySpace.VMEM),
    )(input_ids, packed['emb'], packed['slab'])
    return logits2d.reshape(B, T, VOCAB)        # free metadata reshape in XLA


# ---------------- parameter init (deterministic, synthetic) ----------------
def _xavier(key, shape, fan_in, fan_out):
    limit = math.sqrt(6.0 / (fan_in + fan_out))
    return jax.random.uniform(key, shape, jnp.float32, -limit, limit)


def init_block_params(key):
    ks = jax.random.split(key, 10)
    # Linear weights stored pre-transposed as (in, out) so the kernel does x @ W
    wq = _xavier(ks[0], (D, D), D, D)
    wv = _xavier(ks[1], (D, D), D, D)
    wr = _xavier(ks[2], (D, D), D, D)
    W_h = _xavier(ks[3], (H, DK, DK), DK * DK, H * DK)
    wsum = jnp.sum(W_h, axis=-1).reshape(1, D)            # row-sums of W_h
    wo = _xavier(ks[4], (D, D), D, D)
    bo = jax.random.uniform(ks[5], (1, D), jnp.float32, -1, 1) / math.sqrt(D)
    wf1 = _xavier(ks[6], (D, P), D, P)
    bf1 = jax.random.uniform(ks[7], (1, P), jnp.float32, -1, 1) / math.sqrt(D)
    wf2 = _xavier(ks[8], (P, D), P, D)
    bf2 = jax.random.uniform(ks[9], (1, D), jnp.float32, -1, 1) / math.sqrt(P)
    z = lambda n: jnp.zeros((1, n), jnp.float32)
    return dict(
        wq=wq, bq=z(D), wv=wv, bv=z(D), wr=wr, br=z(D),
        wsum=wsum, wo=wo, bo=bo,
        g1=jnp.ones((1, D), jnp.float32), b1=z(D),
        wf1=wf1, bf1=bf1, wf2=wf2, bf2=bf2,
        g2=jnp.ones((1, D), jnp.float32), b2=z(D),
    )


def build_packed(params, h0_list):
    """Pack ALL parameters into one 8-aligned (SLAB_ROWS,128) slab + emb table."""
    slab = jnp.zeros((SLAB_ROWS, 128), jnp.float32)
    for blk, (bp, h0) in enumerate(zip(params['blocks'], h0_list)):
        base = blk * BLOCK_STRIDE
        wqvr = jnp.concatenate([bp['wq'], bp['wv'], bp['wr']], axis=1)  # (D,3D)
        slab = slab.at[base + OFF_WQVR:base + OFF_WQVR + D, 0:3 * D].set(wqvr)
        slab = slab.at[base + OFF_WO:base + OFF_WO + D, 0:D].set(bp['wo'])
        slab = slab.at[base + OFF_WF1:base + OFF_WF1 + D, 0:P].set(bp['wf1'])
        slab = slab.at[base + OFF_WF2:base + OFF_WF2 + P, 0:D].set(bp['wf2'])
        v = base + OFF_VEC
        bqvr = jnp.concatenate([bp['bq'], bp['bv'], bp['br']], axis=-1)[0]
        slab = slab.at[v + 0, :3 * D].set(bqvr)
        slab = slab.at[v + 1, :D].set(bp['bo'][0])
        slab = slab.at[v + 2, :D].set(bp['wsum'][0])
        slab = slab.at[v + 3, :D].set(bp['g1'][0])
        slab = slab.at[v + 4, :D].set(bp['b1'][0])
        slab = slab.at[v + 5, :P].set(bp['bf1'][0])
        slab = slab.at[v + 6, :D].set(bp['bf2'][0])
        slab = slab.at[v + 7, :D].set(bp['g2'][0])
        slab = slab.at[v + 8, :D].set(bp['b2'][0])
        slab = slab.at[v + 9:v + 9 + B, :D].set(h0)
    slab = slab.at[OFF_WPB:OFF_WPB + D, :].set(params['wproj'])
    slab = slab.at[OFF_WPB + D, :].set(params['bproj'][0])
    return dict(
        emb=params['emb'].reshape(VOCAB, 1, D),   # leading-axis dynamic gather
        slab=slab,
    )


# ---------------- pure-JAX reference (independent, unpacked, f32 gold) -----
def _block_math_ref(x, mask, h0, p):
    xf = x.reshape(B * T, D)
    q = jnp.dot(xf, p['wq'], precision=HIGHEST) + p['bq']
    v = jnp.dot(xf, p['wv'], precision=HIGHEST) + p['bv']
    r = jnp.dot(xf, p['wr'], precision=HIGHEST) + p['br']
    qb = q.reshape(B, T, D)
    vb = v.reshape(B, T, D)
    rb = r.reshape(B, T, D)

    h_t = h0
    hs_rows = []
    for t in range(T):
        h_t = jnp.tanh(p['wsum'] * h_t + rb[:, t, :])
        hs_rows.append(h_t)
    hs = jnp.stack(hs_rows, axis=1) * SCALE                 # scale applied twice,

    head_outs = []
    for hd in range(H):
        lo, hi = hd * DK, (hd + 1) * DK
        s = jnp.einsum('bqd,bkd->bqk', qb[:, :, lo:hi], hs[:, :, lo:hi],
                       precision=HIGHEST) * SCALE           # ... as in torch
        s = s + mask[None, :, :]
        s = s - jnp.max(s, axis=-1, keepdims=True)
        e = jnp.exp(s)
        attn = e / jnp.sum(e, axis=-1, keepdims=True)
        head_outs.append(jnp.einsum('bqk,bkd->bqd', attn, vb[:, :, lo:hi],
                                    precision=HIGHEST))
    attn_out = jnp.concatenate(head_outs, axis=-1).reshape(B * T, D)
    attn_out = jnp.dot(attn_out, p['wo'], precision=HIGHEST) + p['bo']

    x1 = _layernorm(xf + attn_out, p['g1'], p['b1'])
    ff = jnp.maximum(jnp.dot(x1, p['wf1'], precision=HIGHEST) + p['bf1'], 0.0)
    ff = jnp.dot(ff, p['wf2'], precision=HIGHEST) + p['bf2']
    return _layernorm(x1 + ff, p['g2'], p['b2']).reshape(B, T, D)


def forward_ref(params, input_ids, h0_list):
    x = params['emb'][input_ids] * SQRT_D
    for bp, h0 in zip(params['blocks'], h0_list):
        x = _block_math_ref(x, params['mask'], h0, bp)
    out = (jnp.dot(x.reshape(B * T, D), params['wproj'], precision=HIGHEST)
           + params['bproj'])
    return out.reshape(B, T, VOCAB)


# ---------------- main ------------------------------------------------------
if __name__ == "__main__":
    key = jax.random.PRNGKey(0)
    k_emb, k_ids, k_blk, k_proj, k_h0 = jax.random.split(key, 5)

    emb = jax.random.normal(k_emb, (VOCAB, D), jnp.float32)   # nn.Embedding ~ N(0,1)
    wproj = _xavier(k_proj, (D, VOCAB), D, VOCAB)
    bproj = jnp.zeros((1, VOCAB), jnp.float32)
    blocks = [init_block_params(k) for k in jax.random.split(k_blk, N_BLOCKS)]
    # bool triu(diagonal=1) mask, added as 0.0/1.0 floats (reproduces torch quirk)
    mask = jnp.triu(jnp.ones((T, T), jnp.float32), k=1)
    # deterministic replacement for torch.randn(B, H, d_k) * 0.01 per block
    h0_list = [jax.random.normal(k, (B, D), jnp.float32) * 0.01
               for k in jax.random.split(k_h0, N_BLOCKS)]

    params = dict(emb=emb, blocks=blocks, mask=mask, wproj=wproj, bproj=bproj)
    packed = build_packed(params, h0_list)

    input_ids = jax.random.randint(k_ids, (B, T), 0, VOCAB, dtype=jnp.int32)

    logits = jax.block_until_ready(forward(packed, input_ids))
    assert logits.shape == (B, T, VOCAB)
    assert bool(jnp.all(jnp.isfinite(logits)))

    ref = forward_ref(params, input_ids, h0_list)
    rel_err = float(jnp.linalg.norm(logits - ref) / (jnp.linalg.norm(ref) + 1e-9))
    # Tolerance re-derived per the review: the reference is f32-accurate
    # (HIGHEST) gold while the kernel intentionally runs its MXU matmuls at
    # DEFAULT precision (single bf16 pass) and uses approx EUP reciprocal, so
    # expected deltas are ~1e-3 (review's estimate). Gate at 2e-2 for robust
    # margin across chip generations; any real layout/indexing bug is O(1),
    # orders of magnitude above this.
    assert rel_err < 2e-2, f"Pallas vs JAX reference relative error too large: {rel_err}"

    print("KERNEL_OK")
</pallas_src>

<mosaic_0001>
module attributes {stable_mosaic.version = 11 : i64} {
  func.func @fused_forward_kernel(%arg0: memref<2x8xi32, #tpu.memory_space<smem>>, %arg1: memref<128x1x32xf32, #tpu.memory_space<vmem>>, %arg2: memref<392x128xf32, #tpu.memory_space<vmem>>, %arg3: memref<16x128xf32, #tpu.memory_space<vmem>>) attributes {dimension_semantics = [], scalar_prefetch = 0 : i64, scratch_operands = 0 : i64, tpu.core_type = #tpu.core_type<tc>} {
    %0 = tpu.iota {dimensions = array<i32: 0>} : vector<8x8xi32>
    %1 = tpu.iota {dimensions = array<i32: 1>} : vector<8x8xi32>
    %2 = arith.cmpi sgt, %1, %0 : vector<8x8xi32>
    %3 = arith.extui %2 : vector<8x8xi1> to vector<8x8xi32>
    %4 = arith.sitofp %3 : vector<8x8xi32> to vector<8x8xf32>
    %c0 = arith.constant 0 : index
    %c0_0 = arith.constant 0 : index
    %5 = memref.load %arg0[%c0, %c0_0] : memref<2x8xi32, #tpu.memory_space<smem>>
    %6 = arith.index_cast %5 : i32 to index
    %c0_1 = arith.constant 0 : index
    %c0_2 = arith.constant 0 : index
    %7 = vector.load %arg1[%6, %c0_1, %c0_2] : memref<128x1x32xf32, #tpu.memory_space<vmem>>, vector<1x1x32xf32>
    %8 = vector.shape_cast %7 : vector<1x1x32xf32> to vector<1x32xf32>
    %c0_3 = arith.constant 0 : index
    %c1 = arith.constant 1 : index
    %9 = memref.load %arg0[%c0_3, %c1] : memref<2x8xi32, #tpu.memory_space<smem>>
    %10 = arith.index_cast %9 : i32 to index
    %c0_4 = arith.constant 0 : index
    %c0_5 = arith.constant 0 : index
    %11 = vector.load %arg1[%10, %c0_4, %c0_5] : memref<128x1x32xf32, #tpu.memory_space<vmem>>, vector<1x1x32xf32>
    %12 = vector.shape_cast %11 : vector<1x1x32xf32> to vector<1x32xf32>
    %c0_6 = arith.constant 0 : index
    %c2 = arith.constant 2 : index
    %13 = memref.load %arg0[%c0_6, %c2] : memref<2x8xi32, #tpu.memory_space<smem>>
    %14 = arith.index_cast %13 : i32 to index
    %c0_7 = arith.constant 0 : index
    %c0_8 = arith.constant 0 : index
    %15 = vector.load %arg1[%14, %c0_7, %c0_8] : memref<128x1x32xf32, #tpu.memory_space<vmem>>, vector<1x1x32xf32>
    %16 = vector.shape_cast %15 : vector<1x1x32xf32> to vector<1x32xf32>
    %c0_9 = arith.constant 0 : index
    %c3 = arith.constant 3 : index
    %17 = memref.load %arg0[%c0_9, %c3] : memref<2x8xi32, #tpu.memory_space<smem>>
    %18 = arith.index_cast %17 : i32 to index
    %c0_10 = arith.constant 0 : index
    %c0_11 = arith.constant 0 : index
    %19 = vector.load %arg1[%18, %c0_10, %c0_11] : memref<128x1x32xf32, #tpu.memory_space<vmem>>, vector<1x1x32xf32>
    %20 = vector.shape_cast %19 : vector<1x1x32xf32> to vector<1x32xf32>
    %c0_12 = arith.constant 0 : index
    %c4 = arith.constant 4 : index
    %21 = memref.load %arg0[%c0_12, %c4] : memref<2x8xi32, #tpu.memory_space<smem>>
    %22 = arith.index_cast %21 : i32 to index
    %c0_13 = arith.constant 0 : index
    %c0_14 = arith.constant 0 : index
    %23 = vector.load %arg1[%22, %c0_13, %c0_14] : memref<128x1x32xf32, #tpu.memory_space<vmem>>, vector<1x1x32xf32>
    %24 = vector.shape_cast %23 : vector<1x1x32xf32> to vector<1x32xf32>
    %c0_15 = arith.constant 0 : index
    %c5 = arith.constant 5 : index
    %25 = memref.load %arg0[%c0_15, %c5] : memref<2x8xi32, #tpu.memory_space<smem>>
    %26 = arith.index_cast %25 : i32 to index
    %c0_16 = arith.constant 0 : index
    %c0_17 = arith.constant 0 : index
    %27 = vector.load %arg1[%26, %c0_16, %c0_17] : memref<128x1x32xf32, #tpu.memory_space<vmem>>, vector<1x1x32xf32>
    %28 = vector.shape_cast %27 : vector<1x1x32xf32> to vector<1x32xf32>
    %c0_18 = arith.constant 0 : index
    %c6 = arith.constant 6 : index
    %29 = memref.load %arg0[%c0_18, %c6] : memref<2x8xi32, #tpu.memory_space<smem>>
    %30 = arith.index_cast %29 : i32 to index
    %c0_19 = arith.constant 0 : index
    %c0_20 = arith.constant 0 : index
    %31 = vector.load %arg1[%30, %c0_19, %c0_20] : memref<128x1x32xf32, #tpu.memory_space<vmem>>, vector<1x1x32xf32>
    %32 = vector.shape_cast %31 : vector<1x1x32xf32> to vector<1x32xf32>
    %c0_21 = arith.constant 0 : index
    %c7 = arith.constant 7 : index
    %33 = memref.load %arg0[%c0_21, %c7] : memref<2x8xi32, #tpu.memory_space<smem>>
    %34 = arith.index_cast %33 : i32 to index
    %c0_22 = arith.constant 0 : index
    %c0_23 = arith.constant 0 : index
    %35 = vector.load %arg1[%34, %c0_22, %c0_23] : memref<128x1x32xf32, #tpu.memory_space<vmem>>, vector<1x1x32xf32>
    %36 = vector.shape_cast %35 : vector<1x1x32xf32> to vector<1x32xf32>
    %c1_24 = arith.constant 1 : index
    %c0_25 = arith.constant 0 : index
    %37 = memref.load %arg0[%c1_24, %c0_25] : memref<2x8xi32, #tpu.memory_space<smem>>
    %38 = arith.index_cast %37 : i32 to index
    %c0_26 = arith.constant 0 : index
    %c0_27 = arith.constant 0 : index
    %39 = vector.load %arg1[%38, %c0_26, %c0_27] : memref<128x1x32xf32, #tpu.memory_space<vmem>>, vector<1x1x32xf32>
    %40 = vector.shape_cast %39 : vector<1x1x32xf32> to vector<1x32xf32>
    %c1_28 = arith.constant 1 : index
    %c1_29 = arith.constant 1 : index
    %41 = memref.load %arg0[%c1_28, %c1_29] : memref<2x8xi32, #tpu.memory_space<smem>>
    %42 = arith.index_cast %41 : i32 to index
    %c0_30 = arith.constant 0 : index
    %c0_31 = arith.constant 0 : index
    %43 = vector.load %arg1[%42, %c0_30, %c0_31] : memref<128x1x32xf32, #tpu.memory_space<vmem>>, vector<1x1x32xf32>
    %44 = vector.shape_cast %43 : vector<1x1x32xf32> to vector<1x32xf32>
    %c1_32 = arith.constant 1 : index
    %c2_33 = arith.constant 2 : index
    %45 = memref.load %arg0[%c1_32, %c2_33] : memref<2x8xi32, #tpu.memory_space<smem>>
    %46 = arith.index_cast %45 : i32 to index
    %c0_34 = arith.constant 0 : index
    %c0_35 = arith.constant 0 : index
    %47 = vector.load %arg1[%46, %c0_34, %c0_35] : memref<128x1x32xf32, #tpu.memory_space<vmem>>, vector<1x1x32xf32>
    %48 = vector.shape_cast %47 : vector<1x1x32xf32> to vector<1x32xf32>
    %c1_36 = arith.constant 1 : index
    %c3_37 = arith.constant 3 : index
    %49 = memref.load %arg0[%c1_36, %c3_37] : memref<2x8xi32, #tpu.memory_space<smem>>
    %50 = arith.index_cast %49 : i32 to index
    %c0_38 = arith.constant 0 : index
    %c0_39 = arith.constant 0 : index
    %51 = vector.load %arg1[%50, %c0_38, %c0_39] : memref<128x1x32xf32, #tpu.memory_space<vmem>>, vector<1x1x32xf32>
    %52 = vector.shape_cast %51 : vector<1x1x32xf32> to vector<1x32xf32>
    %c1_40 = arith.constant 1 : index
    %c4_41 = arith.constant 4 : index
    %53 = memref.load %arg0[%c1_40, %c4_41] : memref<2x8xi32, #tpu.memory_space<smem>>
    %54 = arith.index_cast %53 : i32 to index
    %c0_42 = arith.constant 0 : index
    %c0_43 = arith.constant 0 : index
    %55 = vector.load %arg1[%54, %c0_42, %c0_43] : memref<128x1x32xf32, #tpu.memory_space<vmem>>, vector<1x1x32xf32>
    %56 = vector.shape_cast %55 : vector<1x1x32xf32> to vector<1x32xf32>
    %c1_44 = arith.constant 1 : index
    %c5_45 = arith.constant 5 : index
    %57 = memref.load %arg0[%c1_44, %c5_45] : memref<2x8xi32, #tpu.memory_space<smem>>
    %58 = arith.index_cast %57 : i32 to index
    %c0_46 = arith.constant 0 : index
    %c0_47 = arith.constant 0 : index
    %59 = vector.load %arg1[%58, %c0_46, %c0_47] : memref<128x1x32xf32, #tpu.memory_space<vmem>>, vector<1x1x32xf32>
    %60 = vector.shape_cast %59 : vector<1x1x32xf32> to vector<1x32xf32>
    %c1_48 = arith.constant 1 : index
    %c6_49 = arith.constant 6 : index
    %61 = memref.load %arg0[%c1_48, %c6_49] : memref<2x8xi32, #tpu.memory_space<smem>>
    %62 = arith.index_cast %61 : i32 to index
    %c0_50 = arith.constant 0 : index
    %c0_51 = arith.constant 0 : index
    %63 = vector.load %arg1[%62, %c0_50, %c0_51] : memref<128x1x32xf32, #tpu.memory_space<vmem>>, vector<1x1x32xf32>
    %64 = vector.shape_cast %63 : vector<1x1x32xf32> to vector<1x32xf32>
    %c1_52 = arith.constant 1 : index
    %c7_53 = arith.constant 7 : index
    %65 = memref.load %arg0[%c1_52, %c7_53] : memref<2x8xi32, #tpu.memory_space<smem>>
    %66 = arith.index_cast %65 : i32 to index
    %c0_54 = arith.constant 0 : index
    %c0_55 = arith.constant 0 : index
    %67 = vector.load %arg1[%66, %c0_54, %c0_55] : memref<128x1x32xf32, #tpu.memory_space<vmem>>, vector<1x1x32xf32>
    %68 = vector.shape_cast %67 : vector<1x1x32xf32> to vector<1x32xf32>
    %69 = tpu.concatenate %8, %12, %16, %20, %24, %28, %32, %36, %40, %44, %48, %52, %56, %60, %64, %68 in 0 : vector<1x32xf32>, vector<1x32xf32>, vector<1x32xf32>, vector<1x32xf32>, vector<1x32xf32>, vector<1x32xf32>, vector<1x32xf32>, vector<1x32xf32>, vector<1x32xf32>, vector<1x32xf32>, vector<1x32xf32>, vector<1x32xf32>, vector<1x32xf32>, vector<1x32xf32>, vector<1x32xf32>, vector<1x32xf32> -> vector<16x32xf32>
    %cst = arith.constant 5.65685415 : f32
    %70 = vector.broadcast %cst : f32 to vector<16x32xf32>
    %71 = arith.mulf %69, %70 : vector<16x32xf32>
    %c0_56 = arith.constant 0 : index
    %c0_57 = arith.constant 0 : index
    %72 = vector.load %arg2[%c0_56, %c0_57] : memref<392x128xf32, #tpu.memory_space<vmem>>, vector<32x96xf32>
    %c32 = arith.constant 32 : index
    %c0_58 = arith.constant 0 : index
    %73 = vector.load %arg2[%c32, %c0_58] : memref<392x128xf32, #tpu.memory_space<vmem>>, vector<32x32xf32>
    %c64 = arith.constant 64 : index
    %c0_59 = arith.constant 0 : index
    %74 = vector.load %arg2[%c64, %c0_59] : memref<392x128xf32, #tpu.memory_space<vmem>>, vector<32x64xf32>
    %c96 = arith.constant 96 : index
    %c0_60 = arith.constant 0 : index
    %75 = vector.load %arg2[%c96, %c0_60] : memref<392x128xf32, #tpu.memory_space<vmem>>, vector<64x32xf32>
    %c160 = arith.constant 160 : index
    %c0_61 = arith.constant 0 : index
    %76 = vector.load %arg2[%c160, %c0_61] : memref<392x128xf32, #tpu.memory_space<vmem>>, vector<11x128xf32>
    %77 = vector.extract_strided_slice %76 {offsets = [0, 0], sizes = [1, 96], strides = [1, 1]} : vector<11x128xf32> to vector<1x96xf32>
    %78 = vector.shape_cast %77 : vector<1x96xf32> to vector<96xf32>
    %79 = vector.extract_strided_slice %76 {offsets = [1, 0], sizes = [1, 32], strides = [1, 1]} : vector<11x128xf32> to vector<1x32xf32>
    %80 = vector.shape_cast %79 : vector<1x32xf32> to vector<32xf32>
    %81 = vector.extract_strided_slice %76 {offsets = [2, 0], sizes = [1, 32], strides = [1, 1]} : vector<11x128xf32> to vector<1x32xf32>
    %82 = vector.shape_cast %81 : vector<1x32xf32> to vector<32xf32>
    %83 = vector.extract_strided_slice %76 {offsets = [3, 0], sizes = [1, 32], strides = [1, 1]} : vector<11x128xf32> to vector<1x32xf32>
    %84 = vector.shape_cast %83 : vector<1x32xf32> to vector<32xf32>
    %85 = vector.extract_strided_slice %76 {offsets = [4, 0], sizes = [1, 32], strides = [1, 1]} : vector<11x128xf32> to vector<1x32xf32>
    %86 = vector.shape_cast %85 : vector<1x32xf32> to vector<32xf32>
    %87 = vector.extract_strided_slice %76 {offsets = [5, 0], sizes = [1, 64], strides = [1, 1]} : vector<11x128xf32> to vector<1x64xf32>
    %88 = vector.shape_cast %87 : vector<1x64xf32> to vector<64xf32>
    %89 = vector.extract_strided_slice %76 {offsets = [6, 0], sizes = [1, 32], strides = [1, 1]} : vector<11x128xf32> to vector<1x32xf32>
    %90 = vector.shape_cast %89 : vector<1x32xf32> to vector<32xf32>
    %91 = vector.extract_strided_slice %76 {offsets = [7, 0], sizes = [1, 32], strides = [1, 1]} : vector<11x128xf32> to vector<1x32xf32>
    %92 = vector.shape_cast %91 : vector<1x32xf32> to vector<32xf32>
    %93 = vector.extract_strided_slice %76 {offsets = [8, 0], sizes = [1, 32], strides = [1, 1]} : vector<11x128xf32> to vector<1x32xf32>
    %94 = vector.shape_cast %93 : vector<1x32xf32> to vector<32xf32>
    %95 = vector.extract_strided_slice %76 {offsets = [9, 0], sizes = [2, 32], strides = [1, 1]} : vector<11x128xf32> to vector<2x32xf32>
    %cst_62 = arith.constant dense<0.000000e+00> : vector<16x96xf32>
    %96 = tpu.matmul %71, %72, %cst_62 {dimension_numbers = #tpu.dot_dimension_numbers<[1], [0], [0], [1], [0, 0, 1, 1], [], []>} : vector<16x32xf32>, vector<32x96xf32>, vector<16x96xf32> -> vector<16x96xf32>
    %97 = vector.shape_cast %78 : vector<96xf32> to vector<1x96xf32>
    %98 = vector.broadcast %97 : vector<1x96xf32> to vector<16x96xf32>
    %99 = arith.addf %96, %98 : vector<16x96xf32>
    %100 = vector.extract_strided_slice %99 {offsets = [0, 0], sizes = [16, 32], strides = [1, 1]} : vector<16x96xf32> to vector<16x32xf32>
    %101 = vector.shape_cast %100 : vector<16x32xf32> to vector<2x8x32xf32>
    %102 = vector.extract_strided_slice %99 {offsets = [0, 32], sizes = [16, 32], strides = [1, 1]} : vector<16x96xf32> to vector<16x32xf32>
    %103 = vector.shape_cast %102 : vector<16x32xf32> to vector<2x8x32xf32>
    %104 = vector.extract_strided_slice %99 {offsets = [0, 64], sizes = [16, 32], strides = [1, 1]} : vector<16x96xf32> to vector<16x32xf32>
    %105 = vector.shape_cast %104 : vector<16x32xf32> to vector<2x8x32xf32>
    %106 = vector.shape_cast %82 : vector<32xf32> to vector<1x32xf32>
    %107 = vector.shape_cast %106 : vector<1x32xf32> to vector<1x32xf32>
    %108 = vector.broadcast %107 : vector<1x32xf32> to vector<2x32xf32>
    %109 = arith.mulf %108, %95 : vector<2x32xf32>
    %110 = vector.extract_strided_slice %105 {offsets = [0, 0, 0], sizes = [2, 1, 32], strides = [1, 1, 1]} : vector<2x8x32xf32> to vector<2x1x32xf32>
    %111 = vector.shape_cast %110 : vector<2x1x32xf32> to vector<2x32xf32>
    %112 = arith.addf %109, %111 : vector<2x32xf32>
    %113 = math.tanh %112 : vector<2x32xf32>
    %114 = vector.shape_cast %113 : vector<2x32xf32> to vector<2x1x32xf32>
    %115 = arith.mulf %108, %113 : vector<2x32xf32>
    %116 = vector.extract_strided_slice %105 {offsets = [0, 1, 0], sizes = [2, 1, 32], strides = [1, 1, 1]} : vector<2x8x32xf32> to vector<2x1x32xf32>
    %117 = vector.shape_cast %116 : vector<2x1x32xf32> to vector<2x32xf32>
    %118 = arith.addf %115, %117 : vector<2x32xf32>
    %119 = math.tanh %118 : vector<2x32xf32>
    %120 = vector.shape_cast %119 : vector<2x32xf32> to vector<2x1x32xf32>
    %121 = arith.mulf %108, %119 : vector<2x32xf32>
    %122 = vector.extract_strided_slice %105 {offsets = [0, 2, 0], sizes = [2, 1, 32], strides = [1, 1, 1]} : vector<2x8x32xf32> to vector<2x1x32xf32>
    %123 = vector.shape_cast %122 : vector<2x1x32xf32> to vector<2x32xf32>
    %124 = arith.addf %121, %123 : vector<2x32xf32>
    %125 = math.tanh %124 : vector<2x32xf32>
    %126 = vector.shape_cast %125 : vector<2x32xf32> to vector<2x1x32xf32>
    %127 = arith.mulf %108, %125 : vector<2x32xf32>
    %128 = vector.extract_strided_slice %105 {offsets = [0, 3, 0], sizes = [2, 1, 32], strides = [1, 1, 1]} : vector<2x8x32xf32> to vector<2x1x32xf32>
    %129 = vector.shape_cast %128 : vector<2x1x32xf32> to vector<2x32xf32>
    %130 = arith.addf %127, %129 : vector<2x32xf32>
    %131 = math.tanh %130 : vector<2x32xf32>
    %132 = vector.shape_cast %131 : vector<2x32xf32> to vector<2x1x32xf32>
    %133 = arith.mulf %108, %131 : vector<2x32xf32>
    %134 = vector.extract_strided_slice %105 {offsets = [0, 4, 0], sizes = [2, 1, 32], strides = [1, 1, 1]} : vector<2x8x32xf32> to vector<2x1x32xf32>
    %135 = vector.shape_cast %134 : vector<2x1x32xf32> to vector<2x32xf32>
    %136 = arith.addf %133, %135 : vector<2x32xf32>
    %137 = math.tanh %136 : vector<2x32xf32>
    %138 = vector.shape_cast %137 : vector<2x32xf32> to vector<2x1x32xf32>
    %139 = arith.mulf %108, %137 : vector<2x32xf32>
    %140 = vector.extract_strided_slice %105 {offsets = [0, 5, 0], sizes = [2, 1, 32], strides = [1, 1, 1]} : vector<2x8x32xf32> to vector<2x1x32xf32>
    %141 = vector.shape_cast %140 : vector<2x1x32xf32> to vector<2x32xf32>
    %142 = arith.addf %139, %141 : vector<2x32xf32>
    %143 = math.tanh %142 : vector<2x32xf32>
    %144 = vector.shape_cast %143 : vector<2x32xf32> to vector<2x1x32xf32>
    %145 = arith.mulf %108, %143 : vector<2x32xf32>
    %146 = vector.extract_strided_slice %105 {offsets = [0, 6, 0], sizes = [2, 1, 32], strides = [1, 1, 1]} : vector<2x8x32xf32> to vector<2x1x32xf32>
    %147 = vector.shape_cast %146 : vector<2x1x32xf32> to vector<2x32xf32>
    %148 = arith.addf %145, %147 : vector<2x32xf32>
    %149 = math.tanh %148 : vector<2x32xf32>
    %150 = vector.shape_cast %149 : vector<2x32xf32> to vector<2x1x32xf32>
    %151 = arith.mulf %108, %149 : vector<2x32xf32>
    %152 = vector.extract_strided_slice %105 {offsets = [0, 7, 0], sizes = [2, 1, 32], strides = [1, 1, 1]} : vector<2x8x32xf32> to vector<2x1x32xf32>
    %153 = vector.shape_cast %152 : vector<2x1x32xf32> to vector<2x32xf32>
    %154 = arith.addf %151, %153 : vector<2x32xf32>
    %155 = math.tanh %154 : vector<2x32xf32>
    %156 = vector.shape_cast %155 : vector<2x32xf32> to vector<2x1x32xf32>
    %157 = tpu.concatenate %114, %120, %126, %132, %138, %144, %150, %156 in 1 : vector<2x1x32xf32>, vector<2x1x32xf32>, vector<2x1x32xf32>, vector<2x1x32xf32>, vector<2x1x32xf32>, vector<2x1x32xf32>, vector<2x1x32xf32>, vector<2x1x32xf32> -> vector<2x8x32xf32>
    %158 = vector.extract_strided_slice %101 {offsets = [0, 0, 0], sizes = [2, 8, 8], strides = [1, 1, 1]} : vector<2x8x32xf32> to vector<2x8x8xf32>
    %159 = vector.extract_strided_slice %157 {offsets = [0, 0, 0], sizes = [2, 8, 8], strides = [1, 1, 1]} : vector<2x8x32xf32> to vector<2x8x8xf32>
    %160 = vector.extract_strided_slice %103 {offsets = [0, 0, 0], sizes = [2, 8, 8], strides = [1, 1, 1]} : vector<2x8x32xf32> to vector<2x8x8xf32>
    %161 = vector.shape_cast %158 : vector<2x8x8xf32> to vector<2x8x1x8xf32>
    %162 = vector.shape_cast %159 : vector<2x8x8xf32> to vector<2x1x8x8xf32>
    %163 = vector.broadcast %161 : vector<2x8x1x8xf32> to vector<2x8x8x8xf32>
    %164 = vector.broadcast %162 : vector<2x1x8x8xf32> to vector<2x8x8x8xf32>
    %165 = arith.mulf %163, %164 : vector<2x8x8x8xf32>
    %cst_63 = arith.constant dense<0.000000e+00> : vector<2x8x8xf32>
    %166 = vector.multi_reduction <add>, %165, %cst_63 [3] : vector<2x8x8x8xf32> to vector<2x8x8xf32>
    %cst_64 = arith.constant 1.250000e-01 : f32
    %167 = vector.broadcast %cst_64 : f32 to vector<2x8x8xf32>
    %168 = arith.mulf %166, %167 : vector<2x8x8xf32>
    %169 = vector.shape_cast %4 : vector<8x8xf32> to vector<1x8x8xf32>
    %170 = vector.broadcast %169 : vector<1x8x8xf32> to vector<2x8x8xf32>
    %171 = arith.addf %168, %170 : vector<2x8x8xf32>
    %cst_65 = arith.constant dense<0xFF800000> : vector<2x8xf32>
    %172 = vector.multi_reduction <maximumf>, %171, %cst_65 [2] : vector<2x8x8xf32> to vector<2x8xf32>
    %173 = vector.shape_cast %172 : vector<2x8xf32> to vector<2x8x1xf32>
    %174 = vector.broadcast %173 : vector<2x8x1xf32> to vector<2x8x8xf32>
    %175 = arith.subf %171, %174 : vector<2x8x8xf32>
    %176 = math.exp %175 : vector<2x8x8xf32>
    %cst_66 = arith.constant dense<0.000000e+00> : vector<2x8xf32>
    %177 = vector.multi_reduction <add>, %176, %cst_66 [2] : vector<2x8x8xf32> to vector<2x8xf32>
    %178 = vector.shape_cast %177 : vector<2x8xf32> to vector<2x8x1xf32>
    %179 = tpu.reciprocal %178 {approx = true} : vector<2x8x1xf32> -> vector<2x8x1xf32>
    %180 = vector.broadcast %179 : vector<2x8x1xf32> to vector<2x8x8xf32>
    %181 = arith.mulf %176, %180 : vector<2x8x8xf32>
    %182 = vector.shape_cast %181 : vector<2x8x8xf32> to vector<2x8x8x1xf32>
    %183 = vector.shape_cast %160 : vector<2x8x8xf32> to vector<2x1x8x8xf32>
    %184 = vector.broadcast %182 : vector<2x8x8x1xf32> to vector<2x8x8x8xf32>
    %185 = vector.broadcast %183 : vector<2x1x8x8xf32> to vector<2x8x8x8xf32>
    %186 = arith.mulf %184, %185 : vector<2x8x8x8xf32>
    %cst_67 = arith.constant dense<0.000000e+00> : vector<2x8x8xf32>
    %187 = vector.multi_reduction <add>, %186, %cst_67 [2] : vector<2x8x8x8xf32> to vector<2x8x8xf32>
    %188 = vector.extract_strided_slice %101 {offsets = [0, 0, 8], sizes = [2, 8, 8], strides = [1, 1, 1]} : vector<2x8x32xf32> to vector<2x8x8xf32>
    %189 = vector.extract_strided_slice %157 {offsets = [0, 0, 8], sizes = [2, 8, 8], strides = [1, 1, 1]} : vector<2x8x32xf32> to vector<2x8x8xf32>
    %190 = vector.extract_strided_slice %103 {offsets = [0, 0, 8], sizes = [2, 8, 8], strides = [1, 1, 1]} : vector<2x8x32xf32> to vector<2x8x8xf32>
    %191 = vector.shape_cast %188 : vector<2x8x8xf32> to vector<2x8x1x8xf32>
    %192 = vector.shape_cast %189 : vector<2x8x8xf32> to vector<2x1x8x8xf32>
    %193 = vector.broadcast %191 : vector<2x8x1x8xf32> to vector<2x8x8x8xf32>
    %194 = vector.broadcast %192 : vector<2x1x8x8xf32> to vector<2x8x8x8xf32>
    %195 = arith.mulf %193, %194 : vector<2x8x8x8xf32>
    %cst_68 = arith.constant dense<0.000000e+00> : vector<2x8x8xf32>
    %196 = vector.multi_reduction <add>, %195, %cst_68 [3] : vector<2x8x8x8xf32> to vector<2x8x8xf32>
    %cst_69 = arith.constant 1.250000e-01 : f32
    %197 = vector.broadcast %cst_69 : f32 to vector<2x8x8xf32>
    %198 = arith.mulf %196, %197 : vector<2x8x8xf32>
    %199 = vector.shape_cast %4 : vector<8x8xf32> to vector<1x8x8xf32>
    %200 = vector.broadcast %199 : vector<1x8x8xf32> to vector<2x8x8xf32>
    %201 = arith.addf %198, %200 : vector<2x8x8xf32>
    %cst_70 = arith.constant dense<0xFF800000> : vector<2x8xf32>
    %202 = vector.multi_reduction <maximumf>, %201, %cst_70 [2] : vector<2x8x8xf32> to vector<2x8xf32>
    %203 = vector.shape_cast %202 : vector<2x8xf32> to vector<2x8x1xf32>
    %204 = vector.broadcast %203 : vector<2x8x1xf32> to vector<2x8x8xf32>
    %205 = arith.subf %201, %204 : vector<2x8x8xf32>
    %206 = math.exp %205 : vector<2x8x8xf32>
    %cst_71 = arith.constant dense<0.000000e+00> : vector<2x8xf32>
    %207 = vector.multi_reduction <add>, %206, %cst_71 [2] : vector<2x8x8xf32> to vector<2x8xf32>
    %208 = vector.shape_cast %207 : vector<2x8xf32> to vector<2x8x1xf32>
    %209 = tpu.reciprocal %208 {approx = true} : vector<2x8x1xf32> -> vector<2x8x1xf32>
    %210 = vector.broadcast %209 : vector<2x8x1xf32> to vector<2x8x8xf32>
    %211 = arith.mulf %206, %210 : vector<2x8x8xf32>
    %212 = vector.shape_cast %211 : vector<2x8x8xf32> to vector<2x8x8x1xf32>
    %213 = vector.shape_cast %190 : vector<2x8x8xf32> to vector<2x1x8x8xf32>
    %214 = vector.broadcast %212 : vector<2x8x8x1xf32> to vector<2x8x8x8xf32>
    %215 = vector.broadcast %213 : vector<2x1x8x8xf32> to vector<2x8x8x8xf32>
    %216 = arith.mulf %214, %215 : vector<2x8x8x8xf32>
    %cst_72 = arith.constant dense<0.000000e+00> : vector<2x8x8xf32>
    %217 = vector.multi_reduction <add>, %216, %cst_72 [2] : vector<2x8x8x8xf32> to vector<2x8x8xf32>
    %218 = vector.extract_strided_slice %101 {offsets = [0, 0, 16], sizes = [2, 8, 8], strides = [1, 1, 1]} : vector<2x8x32xf32> to vector<2x8x8xf32>
    %219 = vector.extract_strided_slice %157 {offsets = [0, 0, 16], sizes = [2, 8, 8], strides = [1, 1, 1]} : vector<2x8x32xf32> to vector<2x8x8xf32>
    %220 = vector.extract_strided_slice %103 {offsets = [0, 0, 16], sizes = [2, 8, 8], strides = [1, 1, 1]} : vector<2x8x32xf32> to vector<2x8x8xf32>
    %221 = vector.shape_cast %218 : vector<2x8x8xf32> to vector<2x8x1x8xf32>
    %222 = vector.shape_cast %219 : vector<2x8x8xf32> to vector<2x1x8x8xf32>
    %223 = vector.broadcast %221 : vector<2x8x1x8xf32> to vector<2x8x8x8xf32>
    %224 = vector.broadcast %222 : vector<2x1x8x8xf32> to vector<2x8x8x8xf32>
    %225 = arith.mulf %223, %224 : vector<2x8x8x8xf32>
    %cst_73 = arith.constant dense<0.000000e+00> : vector<2x8x8xf32>
    %226 = vector.multi_reduction <add>, %225, %cst_73 [3] : vector<2x8x8x8xf32> to vector<2x8x8xf32>
    %cst_74 = arith.constant 1.250000e-01 : f32
    %227 = vector.broadcast %cst_74 : f32 to vector<2x8x8xf32>
    %228 = arith.mulf %226, %227 : vector<2x8x8xf32>
    %229 = vector.shape_cast %4 : vector<8x8xf32> to vector<1x8x8xf32>
    %230 = vector.broadcast %229 : vector<1x8x8xf32> to vector<2x8x8xf32>
    %231 = arith.addf %228, %230 : vector<2x8x8xf32>
    %cst_75 = arith.constant dense<0xFF800000> : vector<2x8xf32>
    %232 = vector.multi_reduction <maximumf>, %231, %cst_75 [2] : vector<2x8x8xf32> to vector<2x8xf32>
    %233 = vector.shape_cast %232 : vector<2x8xf32> to vector<2x8x1xf32>
    %234 = vector.broadcast %233 : vector<2x8x1xf32> to vector<2x8x8xf32>
    %235 = arith.subf %231, %234 : vector<2x8x8xf32>
    %236 = math.exp %235 : vector<2x8x8xf32>
    %cst_76 = arith.constant dense<0.000000e+00> : vector<2x8xf32>
    %237 = vector.multi_reduction <add>, %236, %cst_76 [2] : vector<2x8x8xf32> to vector<2x8xf32>
    %238 = vector.shape_cast %237 : vector<2x8xf32> to vector<2x8x1xf32>
    %239 = tpu.reciprocal %238 {approx = true} : vector<2x8x1xf32> -> vector<2x8x1xf32>
    %240 = vector.broadcast %239 : vector<2x8x1xf32> to vector<2x8x8xf32>
    %241 = arith.mulf %236, %240 : vector<2x8x8xf32>
    %242 = vector.shape_cast %241 : vector<2x8x8xf32> to vector<2x8x8x1xf32>
    %243 = vector.shape_cast %220 : vector<2x8x8xf32> to vector<2x1x8x8xf32>
    %244 = vector.broadcast %242 : vector<2x8x8x1xf32> to vector<2x8x8x8xf32>
    %245 = vector.broadcast %243 : vector<2x1x8x8xf32> to vector<2x8x8x8xf32>
    %246 = arith.mulf %244, %245 : vector<2x8x8x8xf32>
    %cst_77 = arith.constant dense<0.000000e+00> : vector<2x8x8xf32>
    %247 = vector.multi_reduction <add>, %246, %cst_77 [2] : vector<2x8x8x8xf32> to vector<2x8x8xf32>
    %248 = vector.extract_strided_slice %101 {offsets = [0, 0, 24], sizes = [2, 8, 8], strides = [1, 1, 1]} : vector<2x8x32xf32> to vector<2x8x8xf32>
    %249 = vector.extract_strided_slice %157 {offsets = [0, 0, 24], sizes = [2, 8, 8], strides = [1, 1, 1]} : vector<2x8x32xf32> to vector<2x8x8xf32>
    %250 = vector.extract_strided_slice %103 {offsets = [0, 0, 24], sizes = [2, 8, 8], strides = [1, 1, 1]} : vector<2x8x32xf32> to vector<2x8x8xf32>
    %251 = vector.shape_cast %248 : vector<2x8x8xf32> to vector<2x8x1x8xf32>
    %252 = vector.shape_cast %249 : vector<2x8x8xf32> to vector<2x1x8x8xf32>
    %253 = vector.broadcast %251 : vector<2x8x1x8xf32> to vector<2x8x8x8xf32>
    %254 = vector.broadcast %252 : vector<2x1x8x8xf32> to vector<2x8x8x8xf32>
    %255 = arith.mulf %253, %254 : vector<2x8x8x8xf32>
    %cst_78 = arith.constant dense<0.000000e+00> : vector<2x8x8xf32>
    %256 = vector.multi_reduction <add>, %255, %cst_78 [3] : vector<2x8x8x8xf32> to vector<2x8x8xf32>
    %cst_79 = arith.constant 1.250000e-01 : f32
    %257 = vector.broadcast %cst_79 : f32 to vector<2x8x8xf32>
    %258 = arith.mulf %256, %257 : vector<2x8x8xf32>
    %259 = vector.shape_cast %4 : vector<8x8xf32> to vector<1x8x8xf32>
    %260 = vector.broadcast %259 : vector<1x8x8xf32> to vector<2x8x8xf32>
    %261 = arith.addf %258, %260 : vector<2x8x8xf32>
    %cst_80 = arith.constant dense<0xFF800000> : vector<2x8xf32>
    %262 = vector.multi_reduction <maximumf>, %261, %cst_80 [2] : vector<2x8x8xf32> to vector<2x8xf32>
    %263 = vector.shape_cast %262 : vector<2x8xf32> to vector<2x8x1xf32>
    %264 = vector.broadcast %263 : vector<2x8x1xf32> to vector<2x8x8xf32>
    %265 = arith.subf %261, %264 : vector<2x8x8xf32>
    %266 = math.exp %265 : vector<2x8x8xf32>
    %cst_81 = arith.constant dense<0.000000e+00> : vector<2x8xf32>
    %267 = vector.multi_reduction <add>, %266, %cst_81 [2] : vector<2x8x8xf32> to vector<2x8xf32>
    %268 = vector.shape_cast %267 : vector<2x8xf32> to vector<2x8x1xf32>
    %269 = tpu.reciprocal %268 {approx = true} : vector<2x8x1xf32> -> vector<2x8x1xf32>
    %270 = vector.broadcast %269 : vector<2x8x1xf32> to vector<2x8x8xf32>
    %271 = arith.mulf %266, %270 : vector<2x8x8xf32>
    %272 = vector.shape_cast %271 : vector<2x8x8xf32> to vector<2x8x8x1xf32>
    %273 = vector.shape_cast %250 : vector<2x8x8xf32> to vector<2x1x8x8xf32>
    %274 = vector.broadcast %272 : vector<2x8x8x1xf32> to vector<2x8x8x8xf32>
    %275 = vector.broadcast %273 : vector<2x1x8x8xf32> to vector<2x8x8x8xf32>
    %276 = arith.mulf %274, %275 : vector<2x8x8x8xf32>
    %cst_82 = arith.constant dense<0.000000e+00> : vector<2x8x8xf32>
    %277 = vector.multi_reduction <add>, %276, %cst_82 [2] : vector<2x8x8x8xf32> to vector<2x8x8xf32>
    %278 = tpu.concatenate %187, %217, %247, %277 in 2 : vector<2x8x8xf32>, vector<2x8x8xf32>, vector<2x8x8xf32>, vector<2x8x8xf32> -> vector<2x8x32xf32>
    %279 = vector.shape_cast %278 : vector<2x8x32xf32> to vector<16x32xf32>
    %cst_83 = arith.constant dense<0.000000e+00> : vector<16x32xf32>
    %280 = tpu.matmul %279, %73, %cst_83 {dimension_numbers = #tpu.dot_dimension_numbers<[1], [0], [0], [1], [0, 0, 1, 1], [], []>} : vector<16x32xf32>, vector<32x32xf32>, vector<16x32xf32> -> vector<16x32xf32>
    %281 = vector.shape_cast %80 : vector<32xf32> to vector<1x32xf32>
    %282 = vector.broadcast %281 : vector<1x32xf32> to vector<16x32xf32>
    %283 = arith.addf %280, %282 : vector<16x32xf32>
    %284 = arith.addf %71, %283 : vector<16x32xf32>
    %cst_84 = arith.constant dense<0.000000e+00> : vector<16xf32>
    %285 = vector.multi_reduction <add>, %284, %cst_84 [1] : vector<16x32xf32> to vector<16xf32>
    %286 = vector.shape_cast %285 : vector<16xf32> to vector<16x1xf32>
    %cst_85 = arith.constant 3.200000e+01 : f32
    %287 = vector.broadcast %cst_85 : f32 to vector<16x1xf32>
    %288 = arith.divf %286, %287 : vector<16x1xf32>
    %289 = vector.broadcast %288 : vector<16x1xf32> to vector<16x32xf32>
    %290 = arith.subf %284, %289 : vector<16x32xf32>
    %291 = arith.mulf %290, %290 : vector<16x32xf32>
    %cst_86 = arith.constant dense<0.000000e+00> : vector<16xf32>
    %292 = vector.multi_reduction <add>, %291, %cst_86 [1] : vector<16x32xf32> to vector<16xf32>
    %293 = vector.shape_cast %292 : vector<16xf32> to vector<16x1xf32>
    %cst_87 = arith.constant 3.200000e+01 : f32
    %294 = vector.broadcast %cst_87 : f32 to vector<16x1xf32>
    %295 = arith.divf %293, %294 : vector<16x1xf32>
    %296 = vector.broadcast %288 : vector<16x1xf32> to vector<16x32xf32>
    %297 = arith.subf %284, %296 : vector<16x32xf32>
    %cst_88 = arith.constant 9.99999974E-6 : f32
    %298 = vector.broadcast %cst_88 : f32 to vector<16x1xf32>
    %299 = arith.addf %295, %298 : vector<16x1xf32>
    %300 = math.rsqrt %299 : vector<16x1xf32>
    %301 = vector.broadcast %300 : vector<16x1xf32> to vector<16x32xf32>
    %302 = arith.mulf %297, %301 : vector<16x32xf32>
    %303 = vector.shape_cast %84 : vector<32xf32> to vector<1x32xf32>
    %304 = vector.broadcast %303 : vector<1x32xf32> to vector<16x32xf32>
    %305 = arith.mulf %302, %304 : vector<16x32xf32>
    %306 = vector.shape_cast %86 : vector<32xf32> to vector<1x32xf32>
    %307 = vector.broadcast %306 : vector<1x32xf32> to vector<16x32xf32>
    %308 = arith.addf %305, %307 : vector<16x32xf32>
    %cst_89 = arith.constant dense<0.000000e+00> : vector<16x64xf32>
    %309 = tpu.matmul %308, %74, %cst_89 {dimension_numbers = #tpu.dot_dimension_numbers<[1], [0], [0], [1], [0, 0, 1, 1], [], []>} : vector<16x32xf32>, vector<32x64xf32>, vector<16x64xf32> -> vector<16x64xf32>
    %310 = vector.shape_cast %88 : vector<64xf32> to vector<1x64xf32>
    %311 = vector.broadcast %310 : vector<1x64xf32> to vector<16x64xf32>
    %312 = arith.addf %309, %311 : vector<16x64xf32>
    %cst_90 = arith.constant 0.000000e+00 : f32
    %313 = vector.broadcast %cst_90 : f32 to vector<16x64xf32>
    %314 = arith.maximumf %312, %313 : vector<16x64xf32>
    %cst_91 = arith.constant dense<0.000000e+00> : vector<16x32xf32>
    %315 = tpu.matmul %314, %75, %cst_91 {dimension_numbers = #tpu.dot_dimension_numbers<[1], [0], [0], [1], [0, 0, 1, 1], [], []>} : vector<16x64xf32>, vector<64x32xf32>, vector<16x32xf32> -> vector<16x32xf32>
    %316 = vector.shape_cast %90 : vector<32xf32> to vector<1x32xf32>
    %317 = vector.broadcast %316 : vector<1x32xf32> to vector<16x32xf32>
    %318 = arith.addf %315, %317 : vector<16x32xf32>
    %319 = arith.addf %308, %318 : vector<16x32xf32>
    %cst_92 = arith.constant dense<0.000000e+00> : vector<16xf32>
    %320 = vector.multi_reduction <add>, %319, %cst_92 [1] : vector<16x32xf32> to vector<16xf32>
    %321 = vector.shape_cast %320 : vector<16xf32> to vector<16x1xf32>
    %cst_93 = arith.constant 3.200000e+01 : f32
    %322 = vector.broadcast %cst_93 : f32 to vector<16x1xf32>
    %323 = arith.divf %321, %322 : vector<16x1xf32>
    %324 = vector.broadcast %323 : vector<16x1xf32> to vector<16x32xf32>
    %325 = arith.subf %319, %324 : vector<16x32xf32>
    %326 = arith.mulf %325, %325 : vector<16x32xf32>
    %cst_94 = arith.constant dense<0.000000e+00> : vector<16xf32>
    %327 = vector.multi_reduction <add>, %326, %cst_94 [1] : vector<16x32xf32> to vector<16xf32>
    %328 = vector.shape_cast %327 : vector<16xf32> to vector<16x1xf32>
    %cst_95 = arith.constant 3.200000e+01 : f32
    %329 = vector.broadcast %cst_95 : f32 to vector<16x1xf32>
    %330 = arith.divf %328, %329 : vector<16x1xf32>
    %331 = vector.broadcast %323 : vector<16x1xf32> to vector<16x32xf32>
    %332 = arith.subf %319, %331 : vector<16x32xf32>
    %cst_96 = arith.constant 9.99999974E-6 : f32
    %333 = vector.broadcast %cst_96 : f32 to vector<16x1xf32>
    %334 = arith.addf %330, %333 : vector<16x1xf32>
    %335 = math.rsqrt %334 : vector<16x1xf32>
    %336 = vector.broadcast %335 : vector<16x1xf32> to vector<16x32xf32>
    %337 = arith.mulf %332, %336 : vector<16x32xf32>
    %338 = vector.shape_cast %92 : vector<32xf32> to vector<1x32xf32>
    %339 = vector.broadcast %338 : vector<1x32xf32> to vector<16x32xf32>
    %340 = arith.mulf %337, %339 : vector<16x32xf32>
    %341 = vector.shape_cast %94 : vector<32xf32> to vector<1x32xf32>
    %342 = vector.broadcast %341 : vector<1x32xf32> to vector<16x32xf32>
    %343 = arith.addf %340, %342 : vector<16x32xf32>
    %c176 = arith.constant 176 : index
    %c0_97 = arith.constant 0 : index
    %344 = vector.load %arg2[%c176, %c0_97] : memref<392x128xf32, #tpu.memory_space<vmem>>, vector<32x96xf32>
    %c208 = arith.constant 208 : index
    %c0_98 = arith.constant 0 : index
    %345 = vector.load %arg2[%c208, %c0_98] : memref<392x128xf32, #tpu.memory_space<vmem>>, vector<32x32xf32>
    %c240 = arith.constant 240 : index
    %c0_99 = arith.constant 0 : index
    %346 = vector.load %arg2[%c240, %c0_99] : memref<392x128xf32, #tpu.memory_space<vmem>>, vector<32x64xf32>
    %c272 = arith.constant 272 : index
    %c0_100 = arith.constant 0 : index
    %347 = vector.load %arg2[%c272, %c0_100] : memref<392x128xf32, #tpu.memory_space<vmem>>, vector<64x32xf32>
    %c336 = arith.constant 336 : index
    %c0_101 = arith.constant 0 : index
    %348 = vector.load %arg2[%c336, %c0_101] : memref<392x128xf32, #tpu.memory_space<vmem>>, vector<11x128xf32>
    %349 = vector.extract_strided_slice %348 {offsets = [0, 0], sizes = [1, 96], strides = [1, 1]} : vector<11x128xf32> to vector<1x96xf32>
    %350 = vector.shape_cast %349 : vector<1x96xf32> to vector<96xf32>
    %351 = vector.extract_strided_slice %348 {offsets = [1, 0], sizes = [1, 32], strides = [1, 1]} : vector<11x128xf32> to vector<1x32xf32>
    %352 = vector.shape_cast %351 : vector<1x32xf32> to vector<32xf32>
    %353 = vector.extract_strided_slice %348 {offsets = [2, 0], sizes = [1, 32], strides = [1, 1]} : vector<11x128xf32> to vector<1x32xf32>
    %354 = vector.shape_cast %353 : vector<1x32xf32> to vector<32xf32>
    %355 = vector.extract_strided_slice %348 {offsets = [3, 0], sizes = [1, 32], strides = [1, 1]} : vector<11x128xf32> to vector<1x32xf32>
    %356 = vector.shape_cast %355 : vector<1x32xf32> to vector<32xf32>
    %357 = vector.extract_strided_slice %348 {offsets = [4, 0], sizes = [1, 32], strides = [1, 1]} : vector<11x128xf32> to vector<1x32xf32>
    %358 = vector.shape_cast %357 : vector<1x32xf32> to vector<32xf32>
    %359 = vector.extract_strided_slice %348 {offsets = [5, 0], sizes = [1, 64], strides = [1, 1]} : vector<11x128xf32> to vector<1x64xf32>
    %360 = vector.shape_cast %359 : vector<1x64xf32> to vector<64xf32>
    %361 = vector.extract_strided_slice %348 {offsets = [6, 0], sizes = [1, 32], strides = [1, 1]} : vector<11x128xf32> to vector<1x32xf32>
    %362 = vector.shape_cast %361 : vector<1x32xf32> to vector<32xf32>
    %363 = vector.extract_strided_slice %348 {offsets = [7, 0], sizes = [1, 32], strides = [1, 1]} : vector<11x128xf32> to vector<1x32xf32>
    %364 = vector.shape_cast %363 : vector<1x32xf32> to vector<32xf32>
    %365 = vector.extract_strided_slice %348 {offsets = [8, 0], sizes = [1, 32], strides = [1, 1]} : vector<11x128xf32> to vector<1x32xf32>
    %366 = vector.shape_cast %365 : vector<1x32xf32> to vector<32xf32>
    %367 = vector.extract_strided_slice %348 {offsets = [9, 0], sizes = [2, 32], strides = [1, 1]} : vector<11x128xf32> to vector<2x32xf32>
    %cst_102 = arith.constant dense<0.000000e+00> : vector<16x96xf32>
    %368 = tpu.matmul %343, %344, %cst_102 {dimension_numbers = #tpu.dot_dimension_numbers<[1], [0], [0], [1], [0, 0, 1, 1], [], []>} : vector<16x32xf32>, vector<32x96xf32>, vector<16x96xf32> -> vector<16x96xf32>
    %369 = vector.shape_cast %350 : vector<96xf32> to vector<1x96xf32>
    %370 = vector.broadcast %369 : vector<1x96xf32> to vector<16x96xf32>
    %371 = arith.addf %368, %370 : vector<16x96xf32>
    %372 = vector.extract_strided_slice %371 {offsets = [0, 0], sizes = [16, 32], strides = [1, 1]} : vector<16x96xf32> to vector<16x32xf32>
    %373 = vector.shape_cast %372 : vector<16x32xf32> to vector<2x8x32xf32>
    %374 = vector.extract_strided_slice %371 {offsets = [0, 32], sizes = [16, 32], strides = [1, 1]} : vector<16x96xf32> to vector<16x32xf32>
    %375 = vector.shape_cast %374 : vector<16x32xf32> to vector<2x8x32xf32>
    %376 = vector.extract_strided_slice %371 {offsets = [0, 64], sizes = [16, 32], strides = [1, 1]} : vector<16x96xf32> to vector<16x32xf32>
    %377 = vector.shape_cast %376 : vector<16x32xf32> to vector<2x8x32xf32>
    %378 = vector.shape_cast %354 : vector<32xf32> to vector<1x32xf32>
    %379 = vector.shape_cast %378 : vector<1x32xf32> to vector<1x32xf32>
    %380 = vector.broadcast %379 : vector<1x32xf32> to vector<2x32xf32>
    %381 = arith.mulf %380, %367 : vector<2x32xf32>
    %382 = vector.extract_strided_slice %377 {offsets = [0, 0, 0], sizes = [2, 1, 32], strides = [1, 1, 1]} : vector<2x8x32xf32> to vector<2x1x32xf32>
    %383 = vector.shape_cast %382 : vector<2x1x32xf32> to vector<2x32xf32>
    %384 = arith.addf %381, %383 : vector<2x32xf32>
    %385 = math.tanh %384 : vector<2x32xf32>
    %386 = vector.shape_cast %385 : vector<2x32xf32> to vector<2x1x32xf32>
    %387 = arith.mulf %380, %385 : vector<2x32xf32>
    %388 = vector.extract_strided_slice %377 {offsets = [0, 1, 0], sizes = [2, 1, 32], strides = [1, 1, 1]} : vector<2x8x32xf32> to vector<2x1x32xf32>
    %389 = vector.shape_cast %388 : vector<2x1x32xf32> to vector<2x32xf32>
    %390 = arith.addf %387, %389 : vector<2x32xf32>
    %391 = math.tanh %390 : vector<2x32xf32>
    %392 = vector.shape_cast %391 : vector<2x32xf32> to vector<2x1x32xf32>
    %393 = arith.mulf %380, %391 : vector<2x32xf32>
    %394 = vector.extract_strided_slice %377 {offsets = [0, 2, 0], sizes = [2, 1, 32], strides = [1, 1, 1]} : vector<2x8x32xf32> to vector<2x1x32xf32>
    %395 = vector.shape_cast %394 : vector<2x1x32xf32> to vector<2x32xf32>
    %396 = arith.addf %393, %395 : vector<2x32xf32>
    %397 = math.tanh %396 : vector<2x32xf32>
    %398 = vector.shape_cast %397 : vector<2x32xf32> to vector<2x1x32xf32>
    %399 = arith.mulf %380, %397 : vector<2x32xf32>
    %400 = vector.extract_strided_slice %377 {offsets = [0, 3, 0], sizes = [2, 1, 32], strides = [1, 1, 1]} : vector<2x8x32xf32> to vector<2x1x32xf32>
    %401 = vector.shape_cast %400 : vector<2x1x32xf32> to vector<2x32xf32>
    %402 = arith.addf %399, %401 : vector<2x32xf32>
    %403 = math.tanh %402 : vector<2x32xf32>
    %404 = vector.shape_cast %403 : vector<2x32xf32> to vector<2x1x32xf32>
    %405 = arith.mulf %380, %403 : vector<2x32xf32>
    %406 = vector.extract_strided_slice %377 {offsets = [0, 4, 0], sizes = [2, 1, 32], strides = [1, 1, 1]} : vector<2x8x32xf32> to vector<2x1x32xf32>
    %407 = vector.shape_cast %406 : vector<2x1x32xf32> to vector<2x32xf32>
    %408 = arith.addf %405, %407 : vector<2x32xf32>
    %409 = math.tanh %408 : vector<2x32xf32>
    %410 = vector.shape_cast %409 : vector<2x32xf32> to vector<2x1x32xf32>
    %411 = arith.mulf %380, %409 : vector<2x32xf32>
    %412 = vector.extract_strided_slice %377 {offsets = [0, 5, 0], sizes = [2, 1, 32], strides = [1, 1, 1]} : vector<2x8x32xf32> to vector<2x1x32xf32>
    %413 = vector.shape_cast %412 : vector<2x1x32xf32> to vector<2x32xf32>
    %414 = arith.addf %411, %413 : vector<2x32xf32>
    %415 = math.tanh %414 : vector<2x32xf32>
    %416 = vector.shape_cast %415 : vector<2x32xf32> to vector<2x1x32xf32>
    %417 = arith.mulf %380, %415 : vector<2x32xf32>
    %418 = vector.extract_strided_slice %377 {offsets = [0, 6, 0], sizes = [2, 1, 32], strides = [1, 1, 1]} : vector<2x8x32xf32> to vector<2x1x32xf32>
    %419 = vector.shape_cast %418 : vector<2x1x32xf32> to vector<2x32xf32>
    %420 = arith.addf %417, %419 : vector<2x32xf32>
    %421 = math.tanh %420 : vector<2x32xf32>
    %422 = vector.shape_cast %421 : vector<2x32xf32> to vector<2x1x32xf32>
    %423 = arith.mulf %380, %421 : vector<2x32xf32>
    %424 = vector.extract_strided_slice %377 {offsets = [0, 7, 0], sizes = [2, 1, 32], strides = [1, 1, 1]} : vector<2x8x32xf32> to vector<2x1x32xf32>
    %425 = vector.shape_cast %424 : vector<2x1x32xf32> to vector<2x32xf32>
    %426 = arith.addf %423, %425 : vector<2x32xf32>
    %427 = math.tanh %426 : vector<2x32xf32>
    %428 = vector.shape_cast %427 : vector<2x32xf32> to vector<2x1x32xf32>
    %429 = tpu.concatenate %386, %392, %398, %404, %410, %416, %422, %428 in 1 : vector<2x1x32xf32>, vector<2x1x32xf32>, vector<2x1x32xf32>, vector<2x1x32xf32>, vector<2x1x32xf32>, vector<2x1x32xf32>, vector<2x1x32xf32>, vector<2x1x32xf32> -> vector<2x8x32xf32>
    %430 = vector.extract_strided_slice %373 {offsets = [0, 0, 0], sizes = [2, 8, 8], strides = [1, 1, 1]} : vector<2x8x32xf32> to vector<2x8x8xf32>
    %431 = vector.extract_strided_slice %429 {offsets = [0, 0, 0], sizes = [2, 8, 8], strides = [1, 1, 1]} : vector<2x8x32xf32> to vector<2x8x8xf32>
    %432 = vector.extract_strided_slice %375 {offsets = [0, 0, 0], sizes = [2, 8, 8], strides = [1, 1, 1]} : vector<2x8x32xf32> to vector<2x8x8xf32>
    %433 = vector.shape_cast %430 : vector<2x8x8xf32> to vector<2x8x1x8xf32>
    %434 = vector.shape_cast %431 : vector<2x8x8xf32> to vector<2x1x8x8xf32>
    %435 = vector.broadcast %433 : vector<2x8x1x8xf32> to vector<2x8x8x8xf32>
    %436 = vector.broadcast %434 : vector<2x1x8x8xf32> to vector<2x8x8x8xf32>
    %437 = arith.mulf %435, %436 : vector<2x8x8x8xf32>
    %cst_103 = arith.constant dense<0.000000e+00> : vector<2x8x8xf32>
    %438 = vector.multi_reduction <add>, %437, %cst_103 [3] : vector<2x8x8x8xf32> to vector<2x8x8xf32>
    %cst_104 = arith.constant 1.250000e-01 : f32
    %439 = vector.broadcast %cst_104 : f32 to vector<2x8x8xf32>
    %440 = arith.mulf %438, %439 : vector<2x8x8xf32>
    %441 = vector.shape_cast %4 : vector<8x8xf32> to vector<1x8x8xf32>
    %442 = vector.broadcast %441 : vector<1x8x8xf32> to vector<2x8x8xf32>
    %443 = arith.addf %440, %442 : vector<2x8x8xf32>
    %cst_105 = arith.constant dense<0xFF800000> : vector<2x8xf32>
    %444 = vector.multi_reduction <maximumf>, %443, %cst_105 [2] : vector<2x8x8xf32> to vector<2x8xf32>
    %445 = vector.shape_cast %444 : vector<2x8xf32> to vector<2x8x1xf32>
    %446 = vector.broadcast %445 : vector<2x8x1xf32> to vector<2x8x8xf32>
    %447 = arith.subf %443, %446 : vector<2x8x8xf32>
    %448 = math.exp %447 : vector<2x8x8xf32>
    %cst_106 = arith.constant dense<0.000000e+00> : vector<2x8xf32>
    %449 = vector.multi_reduction <add>, %448, %cst_106 [2] : vector<2x8x8xf32> to vector<2x8xf32>
    %450 = vector.shape_cast %449 : vector<2x8xf32> to vector<2x8x1xf32>
    %451 = tpu.reciprocal %450 {approx = true} : vector<2x8x1xf32> -> vector<2x8x1xf32>
    %452 = vector.broadcast %451 : vector<2x8x1xf32> to vector<2x8x8xf32>
    %453 = arith.mulf %448, %452 : vector<2x8x8xf32>
    %454 = vector.shape_cast %453 : vector<2x8x8xf32> to vector<2x8x8x1xf32>
    %455 = vector.shape_cast %432 : vector<2x8x8xf32> to vector<2x1x8x8xf32>
    %456 = vector.broadcast %454 : vector<2x8x8x1xf32> to vector<2x8x8x8xf32>
    %457 = vector.broadcast %455 : vector<2x1x8x8xf32> to vector<2x8x8x8xf32>
    %458 = arith.mulf %456, %457 : vector<2x8x8x8xf32>
    %cst_107 = arith.constant dense<0.000000e+00> : vector<2x8x8xf32>
    %459 = vector.multi_reduction <add>, %458, %cst_107 [2] : vector<2x8x8x8xf32> to vector<2x8x8xf32>
    %460 = vector.extract_strided_slice %373 {offsets = [0, 0, 8], sizes = [2, 8, 8], strides = [1, 1, 1]} : vector<2x8x32xf32> to vector<2x8x8xf32>
    %461 = vector.extract_strided_slice %429 {offsets = [0, 0, 8], sizes = [2, 8, 8], strides = [1, 1, 1]} : vector<2x8x32xf32> to vector<2x8x8xf32>
    %462 = vector.extract_strided_slice %375 {offsets = [0, 0, 8], sizes = [2, 8, 8], strides = [1, 1, 1]} : vector<2x8x32xf32> to vector<2x8x8xf32>
    %463 = vector.shape_cast %460 : vector<2x8x8xf32> to vector<2x8x1x8xf32>
    %464 = vector.shape_cast %461 : vector<2x8x8xf32> to vector<2x1x8x8xf32>
    %465 = vector.broadcast %463 : vector<2x8x1x8xf32> to vector<2x8x8x8xf32>
    %466 = vector.broadcast %464 : vector<2x1x8x8xf32> to vector<2x8x8x8xf32>
    %467 = arith.mulf %465, %466 : vector<2x8x8x8xf32>
    %cst_108 = arith.constant dense<0.000000e+00> : vector<2x8x8xf32>
    %468 = vector.multi_reduction <add>, %467, %cst_108 [3] : vector<2x8x8x8xf32> to vector<2x8x8xf32>
    %cst_109 = arith.constant 1.250000e-01 : f32
    %469 = vector.broadcast %cst_109 : f32 to vector<2x8x8xf32>
    %470 = arith.mulf %468, %469 : vector<2x8x8xf32>
    %471 = vector.shape_cast %4 : vector<8x8xf32> to vector<1x8x8xf32>
    %472 = vector.broadcast %471 : vector<1x8x8xf32> to vector<2x8x8xf32>
    %473 = arith.addf %470, %472 : vector<2x8x8xf32>
    %cst_110 = arith.constant dense<0xFF800000> : vector<2x8xf32>
    %474 = vector.multi_reduction <maximumf>, %473, %cst_110 [2] : vector<2x8x8xf32> to vector<2x8xf32>
    %475 = vector.shape_cast %474 : vector<2x8xf32> to vector<2x8x1xf32>
    %476 = vector.broadcast %475 : vector<2x8x1xf32> to vector<2x8x8xf32>
    %477 = arith.subf %473, %476 : vector<2x8x8xf32>
    %478 = math.exp %477 : vector<2x8x8xf32>
    %cst_111 = arith.constant dense<0.000000e+00> : vector<2x8xf32>
    %479 = vector.multi_reduction <add>, %478, %cst_111 [2] : vector<2x8x8xf32> to vector<2x8xf32>
    %480 = vector.shape_cast %479 : vector<2x8xf32> to vector<2x8x1xf32>
    %481 = tpu.reciprocal %480 {approx = true} : vector<2x8x1xf32> -> vector<2x8x1xf32>
    %482 = vector.broadcast %481 : vector<2x8x1xf32> to vector<2x8x8xf32>
    %483 = arith.mulf %478, %482 : vector<2x8x8xf32>
    %484 = vector.shape_cast %483 : vector<2x8x8xf32> to vector<2x8x8x1xf32>
    %485 = vector.shape_cast %462 : vector<2x8x8xf32> to vector<2x1x8x8xf32>
    %486 = vector.broadcast %484 : vector<2x8x8x1xf32> to vector<2x8x8x8xf32>
    %487 = vector.broadcast %485 : vector<2x1x8x8xf32> to vector<2x8x8x8xf32>
    %488 = arith.mulf %486, %487 : vector<2x8x8x8xf32>
    %cst_112 = arith.constant dense<0.000000e+00> : vector<2x8x8xf32>
    %489 = vector.multi_reduction <add>, %488, %cst_112 [2] : vector<2x8x8x8xf32> to vector<2x8x8xf32>
    %490 = vector.extract_strided_slice %373 {offsets = [0, 0, 16], sizes = [2, 8, 8], strides = [1, 1, 1]} : vector<2x8x32xf32> to vector<2x8x8xf32>
    %491 = vector.extract_strided_slice %429 {offsets = [0, 0, 16], sizes = [2, 8, 8], strides = [1, 1, 1]} : vector<2x8x32xf32> to vector<2x8x8xf32>
    %492 = vector.extract_strided_slice %375 {offsets = [0, 0, 16], sizes = [2, 8, 8], strides = [1, 1, 1]} : vector<2x8x32xf32> to vector<2x8x8xf32>
    %493 = vector.shape_cast %490 : vector<2x8x8xf32> to vector<2x8x1x8xf32>
    %494 = vector.shape_cast %491 : vector<2x8x8xf32> to vector<2x1x8x8xf32>
    %495 = vector.broadcast %493 : vector<2x8x1x8xf32> to vector<2x8x8x8xf32>
    %496 = vector.broadcast %494 : vector<2x1x8x8xf32> to vector<2x8x8x8xf32>
    %497 = arith.mulf %495, %496 : vector<2x8x8x8xf32>
    %cst_113 = arith.constant dense<0.000000e+00> : vector<2x8x8xf32>
    %498 = vector.multi_reduction <add>, %497, %cst_113 [3] : vector<2x8x8x8xf32> to vector<2x8x8xf32>
    %cst_114 = arith.constant 1.250000e-01 : f32
    %499 = vector.broadcast %cst_114 : f32 to vector<2x8x8xf32>
    %500 = arith.mulf %498, %499 : vector<2x8x8xf32>
    %501 = vector.shape_cast %4 : vector<8x8xf32> to vector<1x8x8xf32>
    %502 = vector.broadcast %501 : vector<1x8x8xf32> to vector<2x8x8xf32>
    %503 = arith.addf %500, %502 : vector<2x8x8xf32>
    %cst_115 = arith.constant dense<0xFF800000> : vector<2x8xf32>
    %504 = vector.multi_reduction <maximumf>, %503, %cst_115 [2] : vector<2x8x8xf32> to vector<2x8xf32>
    %505 = vector.shape_cast %504 : vector<2x8xf32> to vector<2x8x1xf32>
    %506 = vector.broadcast %505 : vector<2x8x1xf32> to vector<2x8x8xf32>
    %507 = arith.subf %503, %506 : vector<2x8x8xf32>
    %508 = math.exp %507 : vector<2x8x8xf32>
    %cst_116 = arith.constant dense<0.000000e+00> : vector<2x8xf32>
    %509 = vector.multi_reduction <add>, %508, %cst_116 [2] : vector<2x8x8xf32> to vector<2x8xf32>
    %510 = vector.shape_cast %509 : vector<2x8xf32> to vector<2x8x1xf32>
    %511 = tpu.reciprocal %510 {approx = true} : vector<2x8x1xf32> -> vector<2x8x1xf32>
    %512 = vector.broadcast %511 : vector<2x8x1xf32> to vector<2x8x8xf32>
    %513 = arith.mulf %508, %512 : vector<2x8x8xf32>
    %514 = vector.shape_cast %513 : vector<2x8x8xf32> to vector<2x8x8x1xf32>
    %515 = vector.shape_cast %492 : vector<2x8x8xf32> to vector<2x1x8x8xf32>
    %516 = vector.broadcast %514 : vector<2x8x8x1xf32> to vector<2x8x8x8xf32>
    %517 = vector.broadcast %515 : vector<2x1x8x8xf32> to vector<2x8x8x8xf32>
    %518 = arith.mulf %516, %517 : vector<2x8x8x8xf32>
    %cst_117 = arith.constant dense<0.000000e+00> : vector<2x8x8xf32>
    %519 = vector.multi_reduction <add>, %518, %cst_117 [2] : vector<2x8x8x8xf32> to vector<2x8x8xf32>
    %520 = vector.extract_strided_slice %373 {offsets = [0, 0, 24], sizes = [2, 8, 8], strides = [1, 1, 1]} : vector<2x8x32xf32> to vector<2x8x8xf32>
    %521 = vector.extract_strided_slice %429 {offsets = [0, 0, 24], sizes = [2, 8, 8], strides = [1, 1, 1]} : vector<2x8x32xf32> to vector<2x8x8xf32>
    %522 = vector.extract_strided_slice %375 {offsets = [0, 0, 24], sizes = [2, 8, 8], strides = [1, 1, 1]} : vector<2x8x32xf32> to vector<2x8x8xf32>
    %523 = vector.shape_cast %520 : vector<2x8x8xf32> to vector<2x8x1x8xf32>
    %524 = vector.shape_cast %521 : vector<2x8x8xf32> to vector<2x1x8x8xf32>
    %525 = vector.broadcast %523 : vector<2x8x1x8xf32> to vector<2x8x8x8xf32>
    %526 = vector.broadcast %524 : vector<2x1x8x8xf32> to vector<2x8x8x8xf32>
    %527 = arith.mulf %525, %526 : vector<2x8x8x8xf32>
    %cst_118 = arith.constant dense<0.000000e+00> : vector<2x8x8xf32>
    %528 = vector.multi_reduction <add>, %527, %cst_118 [3] : vector<2x8x8x8xf32> to vector<2x8x8xf32>
    %cst_119 = arith.constant 1.250000e-01 : f32
    %529 = vector.broadcast %cst_119 : f32 to vector<2x8x8xf32>
    %530 = arith.mulf %528, %529 : vector<2x8x8xf32>
    %531 = vector.shape_cast %4 : vector<8x8xf32> to vector<1x8x8xf32>
    %532 = vector.broadcast %531 : vector<1x8x8xf32> to vector<2x8x8xf32>
    %533 = arith.addf %530, %532 : vector<2x8x8xf32>
    %cst_120 = arith.constant dense<0xFF800000> : vector<2x8xf32>
    %534 = vector.multi_reduction <maximumf>, %533, %cst_120 [2] : vector<2x8x8xf32> to vector<2x8xf32>
    %535 = vector.shape_cast %534 : vector<2x8xf32> to vector<2x8x1xf32>
    %536 = vector.broadcast %535 : vector<2x8x1xf32> to vector<2x8x8xf32>
    %537 = arith.subf %533, %536 : vector<2x8x8xf32>
    %538 = math.exp %537 : vector<2x8x8xf32>
    %cst_121 = arith.constant dense<0.000000e+00> : vector<2x8xf32>
    %539 = vector.multi_reduction <add>, %538, %cst_121 [2] : vector<2x8x8xf32> to vector<2x8xf32>
    %540 = vector.shape_cast %539 : vector<2x8xf32> to vector<2x8x1xf32>
    %541 = tpu.reciprocal %540 {approx = true} : vector<2x8x1xf32> -> vector<2x8x1xf32>
    %542 = vector.broadcast %541 : vector<2x8x1xf32> to vector<2x8x8xf32>
    %543 = arith.mulf %538, %542 : vector<2x8x8xf32>
    %544 = vector.shape_cast %543 : vector<2x8x8xf32> to vector<2x8x8x1xf32>
    %545 = vector.shape_cast %522 : vector<2x8x8xf32> to vector<2x1x8x8xf32>
    %546 = vector.broadcast %544 : vector<2x8x8x1xf32> to vector<2x8x8x8xf32>
    %547 = vector.broadcast %545 : vector<2x1x8x8xf32> to vector<2x8x8x8xf32>
    %548 = arith.mulf %546, %547 : vector<2x8x8x8xf32>
    %cst_122 = arith.constant dense<0.000000e+00> : vector<2x8x8xf32>
    %549 = vector.multi_reduction <add>, %548, %cst_122 [2] : vector<2x8x8x8xf32> to vector<2x8x8xf32>
    %550 = tpu.concatenate %459, %489, %519, %549 in 2 : vector<2x8x8xf32>, vector<2x8x8xf32>, vector<2x8x8xf32>, vector<2x8x8xf32> -> vector<2x8x32xf32>
    %551 = vector.shape_cast %550 : vector<2x8x32xf32> to vector<16x32xf32>
    %cst_123 = arith.constant dense<0.000000e+00> : vector<16x32xf32>
    %552 = tpu.matmul %551, %345, %cst_123 {dimension_numbers = #tpu.dot_dimension_numbers<[1], [0], [0], [1], [0, 0, 1, 1], [], []>} : vector<16x32xf32>, vector<32x32xf32>, vector<16x32xf32> -> vector<16x32xf32>
    %553 = vector.shape_cast %352 : vector<32xf32> to vector<1x32xf32>
    %554 = vector.broadcast %553 : vector<1x32xf32> to vector<16x32xf32>
    %555 = arith.addf %552, %554 : vector<16x32xf32>
    %556 = arith.addf %343, %555 : vector<16x32xf32>
    %cst_124 = arith.constant dense<0.000000e+00> : vector<16xf32>
    %557 = vector.multi_reduction <add>, %556, %cst_124 [1] : vector<16x32xf32> to vector<16xf32>
    %558 = vector.shape_cast %557 : vector<16xf32> to vector<16x1xf32>
    %cst_125 = arith.constant 3.200000e+01 : f32
    %559 = vector.broadcast %cst_125 : f32 to vector<16x1xf32>
    %560 = arith.divf %558, %559 : vector<16x1xf32>
    %561 = vector.broadcast %560 : vector<16x1xf32> to vector<16x32xf32>
    %562 = arith.subf %556, %561 : vector<16x32xf32>
    %563 = arith.mulf %562, %562 : vector<16x32xf32>
    %cst_126 = arith.constant dense<0.000000e+00> : vector<16xf32>
    %564 = vector.multi_reduction <add>, %563, %cst_126 [1] : vector<16x32xf32> to vector<16xf32>
    %565 = vector.shape_cast %564 : vector<16xf32> to vector<16x1xf32>
    %cst_127 = arith.constant 3.200000e+01 : f32
    %566 = vector.broadcast %cst_127 : f32 to vector<16x1xf32>
    %567 = arith.divf %565, %566 : vector<16x1xf32>
    %568 = vector.broadcast %560 : vector<16x1xf32> to vector<16x32xf32>
    %569 = arith.subf %556, %568 : vector<16x32xf32>
    %cst_128 = arith.constant 9.99999974E-6 : f32
    %570 = vector.broadcast %cst_128 : f32 to vector<16x1xf32>
    %571 = arith.addf %567, %570 : vector<16x1xf32>
    %572 = math.rsqrt %571 : vector<16x1xf32>
    %573 = vector.broadcast %572 : vector<16x1xf32> to vector<16x32xf32>
    %574 = arith.mulf %569, %573 : vector<16x32xf32>
    %575 = vector.shape_cast %356 : vector<32xf32> to vector<1x32xf32>
    %576 = vector.broadcast %575 : vector<1x32xf32> to vector<16x32xf32>
    %577 = arith.mulf %574, %576 : vector<16x32xf32>
    %578 = vector.shape_cast %358 : vector<32xf32> to vector<1x32xf32>
    %579 = vector.broadcast %578 : vector<1x32xf32> to vector<16x32xf32>
    %580 = arith.addf %577, %579 : vector<16x32xf32>
    %cst_129 = arith.constant dense<0.000000e+00> : vector<16x64xf32>
    %581 = tpu.matmul %580, %346, %cst_129 {dimension_numbers = #tpu.dot_dimension_numbers<[1], [0], [0], [1], [0, 0, 1, 1], [], []>} : vector<16x32xf32>, vector<32x64xf32>, vector<16x64xf32> -> vector<16x64xf32>
    %582 = vector.shape_cast %360 : vector<64xf32> to vector<1x64xf32>
    %583 = vector.broadcast %582 : vector<1x64xf32> to vector<16x64xf32>
    %584 = arith.addf %581, %583 : vector<16x64xf32>
    %cst_130 = arith.constant 0.000000e+00 : f32
    %585 = vector.broadcast %cst_130 : f32 to vector<16x64xf32>
    %586 = arith.maximumf %584, %585 : vector<16x64xf32>
    %cst_131 = arith.constant dense<0.000000e+00> : vector<16x32xf32>
    %587 = tpu.matmul %586, %347, %cst_131 {dimension_numbers = #tpu.dot_dimension_numbers<[1], [0], [0], [1], [0, 0, 1, 1], [], []>} : vector<16x64xf32>, vector<64x32xf32>, vector<16x32xf32> -> vector<16x32xf32>
    %588 = vector.shape_cast %362 : vector<32xf32> to vector<1x32xf32>
    %589 = vector.broadcast %588 : vector<1x32xf32> to vector<16x32xf32>
    %590 = arith.addf %587, %589 : vector<16x32xf32>
    %591 = arith.addf %580, %590 : vector<16x32xf32>
    %cst_132 = arith.constant dense<0.000000e+00> : vector<16xf32>
    %592 = vector.multi_reduction <add>, %591, %cst_132 [1] : vector<16x32xf32> to vector<16xf32>
    %593 = vector.shape_cast %592 : vector<16xf32> to vector<16x1xf32>
    %cst_133 = arith.constant 3.200000e+01 : f32
    %594 = vector.broadcast %cst_133 : f32 to vector<16x1xf32>
    %595 = arith.divf %593, %594 : vector<16x1xf32>
    %596 = vector.broadcast %595 : vector<16x1xf32> to vector<16x32xf32>
    %597 = arith.subf %591, %596 : vector<16x32xf32>
    %598 = arith.mulf %597, %597 : vector<16x32xf32>
    %cst_134 = arith.constant dense<0.000000e+00> : vector<16xf32>
    %599 = vector.multi_reduction <add>, %598, %cst_134 [1] : vector<16x32xf32> to vector<16xf32>
    %600 = vector.shape_cast %599 : vector<16xf32> to vector<16x1xf32>
    %cst_135 = arith.constant 3.200000e+01 : f32
    %601 = vector.broadcast %cst_135 : f32 to vector<16x1xf32>
    %602 = arith.divf %600, %601 : vector<16x1xf32>
    %603 = vector.broadcast %595 : vector<16x1xf32> to vector<16x32xf32>
    %604 = arith.subf %591, %603 : vector<16x32xf32>
    %cst_136 = arith.constant 9.99999974E-6 : f32
    %605 = vector.broadcast %cst_136 : f32 to vector<16x1xf32>
    %606 = arith.addf %602, %605 : vector<16x1xf32>
    %607 = math.rsqrt %606 : vector<16x1xf32>
    %608 = vector.broadcast %607 : vector<16x1xf32> to vector<16x32xf32>
    %609 = arith.mulf %604, %608 : vector<16x32xf32>
    %610 = vector.shape_cast %364 : vector<32xf32> to vector<1x32xf32>
    %611 = vector.broadcast %610 : vector<1x32xf32> to vector<16x32xf32>
    %612 = arith.mulf %609, %611 : vector<16x32xf32>
    %613 = vector.shape_cast %366 : vector<32xf32> to vector<1x32xf32>
    %614 = vector.broadcast %613 : vector<1x32xf32> to vector<16x32xf32>
    %615 = arith.addf %612, %614 : vector<16x32xf32>
    %c352 = arith.constant 352 : index
    %c0_137 = arith.constant 0 : index
    %616 = vector.load %arg2[%c352, %c0_137] : memref<392x128xf32, #tpu.memory_space<vmem>>, vector<32x128xf32>
    %c384 = arith.constant 384 : index
    %c0_138 = arith.constant 0 : index
    %617 = vector.load %arg2[%c384, %c0_138] : memref<392x128xf32, #tpu.memory_space<vmem>>, vector<1x128xf32>
    %618 = vector.shape_cast %617 : vector<1x128xf32> to vector<128xf32>
    %cst_139 = arith.constant dense<0.000000e+00> : vector<16x128xf32>
    %619 = tpu.matmul %615, %616, %cst_139 {dimension_numbers = #tpu.dot_dimension_numbers<[1], [0], [0], [1], [0, 0, 1, 1], [], []>} : vector<16x32xf32>, vector<32x128xf32>, vector<16x128xf32> -> vector<16x128xf32>
    %620 = vector.shape_cast %618 : vector<128xf32> to vector<1x128xf32>
    %621 = vector.broadcast %620 : vector<1x128xf32> to vector<16x128xf32>
    %622 = arith.addf %619, %621 : vector<16x128xf32>
    %c0_140 = arith.constant 0 : index
    %c0_141 = arith.constant 0 : index
    %623 = vector.load %arg3[%c0_140, %c0_141] : memref<16x128xf32, #tpu.memory_space<vmem>>, vector<16x128xf32>
    tpu.vector_store %arg3[%c0_140, %c0_141], %622 {strides = array<i32>} : memref<16x128xf32, #tpu.memory_space<vmem>>, vector<16x128xf32>,
    return
  }
}

</mosaic_0001>

<llo_original>
// kernel: forward.1
$region0: #{forward.1}
  #allocation0 [shape = 'u32[]', space=smem, size = 0x4, offset = 0x4, fixed_abs, tag = 'smem constant byte address 0x4 - core index']
  #allocation1 [shape = 'u32[144,128]{1,0:T(1,128)}', space=vmem, size = 0x12000, scoped, tag = 'internal scratch']
  %s0 = inlined_call_operand.vmem [shape: s32[2,8], index: 0, kind: input, shape index: {}]
  %s1 = inlined_call_operand.vmem [shape: f32[128,1,32], index: 1, kind: input, shape index: {}]
  %s2 = inlined_call_operand.hbm [shape: f32[392,128], index: 2, kind: input, shape index: {}]
  %s3 = inlined_call_operand.hbm [shape: f32[16,128], index: 3, kind: output, shape index: {}]
  %s4 = sld [smem:[#allocation0]]
  $region30: #{forward.1} parent=0
    _
  %s6 = ssub.s32 1, %s4
  %s7 = scalar_select 0, %s6, %s4
  $region1: #{forward.1} parent=0
    #allocation2 [shape = 'u8[1024]{0}', space=smem, size = 0x400, scoped, tag = 'input window, operand 0, single buffered']
    #allocation3 [shape = 's32[1]{0}', space=sflag, size = 0x4, scoped, tag = 'scoped memory for forward.1']
    #allocation4 [shape = 's32[1]{0}', space=sflag, size = 0x4, scoped, tag = 'scoped memory for forward.1']
    #allocation5 [shape = 's32[1]{0}', space=sflag, size = 0x4, scoped, tag = 'scoped memory for forward.1']
    #allocation6 [shape = 'u8[200704]{0}', space=vmem, size = 0x31000, scoped, tag = 'input window, operand 2, single buffered']
    #allocation7 [shape = 'u8[8192]{0}', space=vmem, size = 0x2000, scoped, tag = 'output window, operand 0, single buffered']
    %8 = vsyncpa [#allocation5], 0
    %9 = vsyncpa [#allocation3], 0
    %10 = vsyncpa [#allocation4], 0
    // Predicated region
    $region2: #{forward.1} parent=1 // pred_check
      _
    $region3: #{forward.1} parent=1 // pred_check_branch
      %12 = sbr.rel (0) target = $region5
    $region4: #{forward.1} parent=1 // pred_region
      %s14 = ssub.s32 32, 32
      %15 = vsyncadd [#allocation5], %s14
      %s17 = sshll.u32 %s0, 4
      %s18 = int_to_ptr.vmem [resolvable:$true] %s17
      %20 = dma.vmem_to_smem %s18, 32, [#allocation2], [#allocation5]
    $region5: #{forward.1} parent=1 // pred_fallthru
      _
    // Predicated region
    $region6: #{forward.1} parent=1 // pred_check
      _
    $region7: #{forward.1} parent=1 // pred_check_branch
      %22 = sbr.rel (0) target = $region9
    $region8: #{forward.1} parent=1 // pred_region
      _
    $region9: #{forward.1} parent=1 // pred_fallthru
      _
    // Predicated region
    $region10: #{forward.1} parent=1 // pred_check
      _
    $region11: #{forward.1} parent=1 // pred_check_branch
      %24 = sbr.rel (0) target = $region13
    $region12: #{forward.1} parent=1 // pred_region
      %s26 = ssub.s32 6272, 6272
      %27 = vsyncadd [#allocation3], %s26
      %s28 = sshll.u32 [#allocation6], 4
      %s29 = int_to_ptr.vmem [resolvable:$true] %s28
      %34 = dma.hbm_to_vmem [thread:$0]  %s2, 6272, %s29, [#allocation3], 128, 128, 8
    $region13: #{forward.1} parent=1 // pred_fallthru
      _
    // Predicated region
    $region14: #{forward.1} parent=1 // pred_check
      _
    $region15: #{forward.1} parent=1 // pred_check_branch
      %36 = sbr.rel (0) target = $region17
    $region16: #{forward.1} parent=1 // pred_region
      %37 = dma.done [#allocation5], 32
    $region17: #{forward.1} parent=1 // pred_fallthru
      _
    // Predicated region
    $region18: #{forward.1} parent=1 // pred_check
      _
    $region19: #{forward.1} parent=1 // pred_check_branch
      %39 = sbr.rel (0) target = $region21
    $region20: #{forward.1} parent=1 // pred_region
      %40 = dma.done [#allocation3], 6272
    $region21: #{forward.1} parent=1 // pred_fallthru
      _
    %41 = sfence
    %v42 = vlaneseq
    %v43 = vshrl.u32 %v42, 7
    %v44 = vlaneseq
    %v45 = vand.u32 %v44, 127
    %vm46 = vcmp.gt.s32.totalorder %v45, %v43
    %v47 = vsel %vm46, 1, 0
    %v48 = vcvt.s32.f32 %v47
    %s49 = sld [smem:[#allocation2]]
    %s50 = scalar_lea.vmem %s1, %s49
    %v51 = vld [vmem:[%s50] sm:$0x1]
    %s52 = sld [smem:[#allocation2 + $0x1]]
    %s53 = scalar_lea.vmem %s1, %s52
    %v54 = vld [vmem:[%s53] sm:$0x1]
    %s55 = sld [smem:[#allocation2 + $0x2]]
    %s56 = scalar_lea.vmem %s1, %s55
    %v57 = vld [vmem:[%s56] sm:$0x1]
    %s58 = sld [smem:[#allocation2 + $0x3]]
    %s59 = scalar_lea.vmem %s1, %s58
    %v60 = vld [vmem:[%s59] sm:$0x1]
    %s61 = sld [smem:[#allocation2 + $0x4]]
    %s62 = scalar_lea.vmem %s1, %s61
    %v63 = vld [vmem:[%s62] sm:$0x1]
    %s64 = sld [smem:[#allocation2 + $0x5]]
    %s65 = scalar_lea.vmem %s1, %s64
    %v66 = vld [vmem:[%s65] sm:$0x1]
    %s67 = sld [smem:[#allocation2 + $0x6]]
    %s68 = scalar_lea.vmem %s1, %s67
    %v69 = vld [vmem:[%s68] sm:$0x1]
    %s70 = sld [smem:[#allocation2 + $0x7]]
    %s71 = scalar_lea.vmem %s1, %s70
    %v72 = vld [vmem:[%s71] sm:$0x1]
    %s73 = sld [smem:[#allocation2 + $0x80]]
    %s74 = scalar_lea.vmem %s1, %s73
    %v75 = vld [vmem:[%s74] sm:$0x1]
    %s76 = sld [smem:[#allocation2 + $0x81]]
    %s77 = scalar_lea.vmem %s1, %s76
    %v78 = vld [vmem:[%s77] sm:$0x1]
    %s79 = sld [smem:[#allocation2 + $0x82]]
    %s80 = scalar_lea.vmem %s1, %s79
    %v81 = vld [vmem:[%s80] sm:$0x1]
    %s82 = sld [smem:[#allocation2 + $0x83]]
    %s83 = scalar_lea.vmem %s1, %s82
    %v84 = vld [vmem:[%s83] sm:$0x1]
    %s85 = sld [smem:[#allocation2 + $0x84]]
    %s86 = scalar_lea.vmem %s1, %s85
    %v87 = vld [vmem:[%s86] sm:$0x1]
    %s88 = sld [smem:[#allocation2 + $0x85]]
    %s89 = scalar_lea.vmem %s1, %s88
    %v90 = vld [vmem:[%s89] sm:$0x1]
    %s91 = sld [smem:[#allocation2 + $0x86]]
    %s92 = scalar_lea.vmem %s1, %s91
    %v93 = vld [vmem:[%s92] sm:$0x1]
    %s94 = sld [smem:[#allocation2 + $0x87]]
    %s95 = scalar_lea.vmem %s1, %s94
    %v96 = vld [vmem:[%s95] sm:$0x1]
    %v98 = vlaneseq
    %v99 = vshrl.u32 %v98, 7
    %v100 = vsub.s32 0, %v99
    %v101 = vrot.slane %v54, %v100
    %v104 = vlaneseq
    %v105 = vshrl.u32 %v104, 7
    %v106 = vsub.s32 0, %v105
    %v107 = vrot.slane %v57, %v106
    %v110 = vlaneseq
    %v111 = vshrl.u32 %v110, 7
    %v112 = vsub.s32 0, %v111
    %v113 = vrot.slane %v60, %v112
    %v116 = vlaneseq
    %v117 = vshrl.u32 %v116, 7
    %v118 = vsub.s32 0, %v117
    %v119 = vrot.slane %v63, %v118
    %v122 = vlaneseq
    %v123 = vshrl.u32 %v122, 7
    %v124 = vsub.s32 0, %v123
    %v125 = vrot.slane %v66, %v124
    %v128 = vlaneseq
    %v129 = vshrl.u32 %v128, 7
    %v130 = vsub.s32 0, %v129
    %v131 = vrot.slane %v69, %v130
    %v134 = vlaneseq
    %v135 = vshrl.u32 %v134, 7
    %v136 = vsub.s32 0, %v135
    %v137 = vrot.slane %v72, %v136
    %v140 = vlaneseq
    %v141 = vshrl.u32 %v140, 7
    %v142 = vsub.s32 0, %v141
    %v143 = vrot.slane %v78, %v142
    %v146 = vlaneseq
    %v147 = vshrl.u32 %v146, 7
    %v148 = vsub.s32 0, %v147
    %v149 = vrot.slane %v81, %v148
    %v152 = vlaneseq
    %v153 = vshrl.u32 %v152, 7
    %v154 = vsub.s32 0, %v153
    %v155 = vrot.slane %v84, %v154
    %v158 = vlaneseq
    %v159 = vshrl.u32 %v158, 7
    %v160 = vsub.s32 0, %v159
    %v161 = vrot.slane %v87, %v160
    %v164 = vlaneseq
    %v165 = vshrl.u32 %v164, 7
    %v166 = vsub.s32 0, %v165
    %v167 = vrot.slane %v90, %v166
    %v170 = vlaneseq
    %v171 = vshrl.u32 %v170, 7
    %v172 = vsub.s32 0, %v171
    %v173 = vrot.slane %v93, %v172
    %v176 = vlaneseq
    %v177 = vshrl.u32 %v176, 7
    %v178 = vsub.s32 0, %v177
    %v179 = vrot.slane %v96, %v178
    %vm181 = vcmask 1040384
    %v182 = vsel %vm181, %v51, %v101
    %vm183 = vcmask 1041408
    %v184 = vsel %vm183, %v182, %v107
    %vm185 = vcmask 1042432
    %v186 = vsel %vm185, %v184, %v113
    %vm187 = vcmask 1043456
    %v188 = vsel %vm187, %v186, %v119
    %vm189 = vcmask 1044480
    %v190 = vsel %vm189, %v188, %v125
    %vm191 = vcmask 1045504
    %v192 = vsel %vm191, %v190, %v131
    %vm193 = vcmask 1046528
    %v194 = vsel %vm193, %v192, %v137
    %v195 = vsel %vm181, %v75, %v143
    %v196 = vsel %vm183, %v195, %v149
    %v197 = vsel %vm185, %v196, %v155
    %v198 = vsel %vm187, %v197, %v161
    %v199 = vsel %vm189, %v198, %v167
    %v200 = vsel %vm191, %v199, %v173
    %v201 = vsel %vm193, %v200, %v179
    %v202 = vmul.f32 %v194, 5.656854
    %v203 = vmul.f32 %v201, 5.656854
    %v204 = vld [vmem:[#allocation6] sm:$0xff]
    %v205 = vld [vmem:[#allocation6 + $0x8] sm:$0xff]
    %v206 = vld [vmem:[#allocation6 + $0x10] sm:$0xff]
    %v207 = vld [vmem:[#allocation6 + $0x18] sm:$0xff]
    %v208 = vld [vmem:[#allocation6 + $0x20] sm:$0xff]
    %v209 = vld [vmem:[#allocation6 + $0x28] sm:$0xff]
    %v210 = vld [vmem:[#allocation6 + $0x30] sm:$0xff]
    %v211 = vld [vmem:[#allocation6 + $0x38] sm:$0xff]
    %v212 = vld [vmem:[#allocation6 + $0x40] sm:$0xff]
    %v213 = vld [vmem:[#allocation6 + $0x48] sm:$0xff]
    %v214 = vld [vmem:[#allocation6 + $0x50] sm:$0xff]
    %v215 = vld [vmem:[#allocation6 + $0x58] sm:$0xff]
    %v216 = vld [vmem:[#allocation6 + $0x60] sm:$0xff]
    %v217 = vld [vmem:[#allocation6 + $0x68] sm:$0xff]
    %v218 = vld [vmem:[#allocation6 + $0x70] sm:$0xff]
    %v219 = vld [vmem:[#allocation6 + $0x78] sm:$0xff]
    %v220 = vld [vmem:[#allocation6 + $0x80] sm:$0xff]
    %v221 = vld [vmem:[#allocation6 + $0x88] sm:$0xff]
    %v222 = vld [vmem:[#allocation6 + $0x90] sm:$0xff]
    %v223 = vld [vmem:[#allocation6 + $0x98] sm:$0xff]
    %v224 = vld [vmem:[#allocation6 + $0xa0] sm:$0xff]
    %v225 = vld [vmem:[#allocation6 + $0xa8] sm:$0x7]
    %v226 = vlaneseq
    %v227 = vshrl.u32 %v226, 7
    %v228 = vsub.s32 0, %v227
    %v229 = vrot.slane %v224, %v228
    %vm230 = vcmask 261120
    %v232 = vsel %vm230, %v202, 0
    %v235 = vsel %vm230, %v203, 0
    %237 = vmatprep.subr.mxu0 0.0
    %238 = vmatpush1.msra.mxu0 %v204
    %239 = vmatprep.subr.mxu0 0.0
    %240 = vmatpush1.msra.mxu0 %v205
    %241 = vmatprep.subr.mxu0 0.0
    %242 = vmatpush1.msra.mxu0 %v206
    %243 = vmatprep.subr.mxu0 0.0
    %244 = vmatpush1.msra.mxu0 %v207
    %245 = vmatprep.subr.mxu0 0.0
    %246 = vmatpush1.msra.mxu0 0.0
    %247 = vmatprep.subr.mxu0 0.0
    %248 = vmatpush1.msra.mxu0 0.0
    %249 = vmatprep.subr.mxu0 0.0
    %250 = vmatpush1.msra.mxu0 0.0
    %251 = vmatprep.subr.mxu0 0.0
    %252 = vmatpush1.msra.mxu0 0.0
    %253 = vmatprep.subr.mxu0 0.0
    %254 = vmatpush1.msra.mxu0 0.0
    %255 = vmatprep.subr.mxu0 0.0
    %256 = vmatpush1.msra.mxu0 0.0
    %257 = vmatprep.subr.mxu0 0.0
    %258 = vmatpush1.msra.mxu0 0.0
    %259 = vmatprep.subr.mxu0 0.0
    %260 = vmatpush1.msra.mxu0 0.0
    %261 = vmatprep.subr.mxu0 0.0
    %262 = vmatpush1.msra.mxu0 0.0
    %263 = vmatprep.subr.mxu0 0.0
    %264 = vmatpush1.msra.mxu0 0.0
    %265 = vmatprep.subr.mxu0 0.0
    %266 = vmatpush1.msra.mxu0 0.0
    %267 = vmatprep.subr.mxu0 0.0
    %268 = vmatpush1.msra.mxu0 0.0
    %269 = vmatprep.subr.mxu0 0.0
    %270 = vmatpush1.msra.mxu0 0.0
    %271 = vmatprep.subr.mxu0 0.0
    %272 = vmatpush1.msra.mxu0 0.0
    %273 = vmatprep.subr.mxu0 0.0
    %274 = vmatpush1.msra.mxu0 0.0
    %275 = vmatprep.subr.mxu0 0.0
    %276 = vmatpush1.msra.mxu0 0.0
    %277 = vmatprep.subr.mxu0 0.0
    %278 = vmatpush1.msra.mxu0 0.0
    %279 = vmatprep.subr.mxu0 0.0
    %280 = vmatpush1.msra.mxu0 0.0
    %281 = vmatprep.subr.mxu0 0.0
    %282 = vmatpush1.msra.mxu0 0.0
    %283 = vmatprep.subr.mxu0 0.0
    %284 = vmatpush1.msra.mxu0 0.0
    %285 = vmatprep.subr.mxu0 0.0
    %286 = vmatpush1.msra.mxu0 0.0
    %287 = vmatprep.subr.mxu0 0.0
    %288 = vmatpush1.msra.mxu0 0.0
    %289 = vmatprep.subr.mxu0 0.0
    %290 = vmatpush1.msra.mxu0 0.0
    %291 = vmatprep.subr.mxu0 0.0
    %292 = vmatpush1.msra.mxu0 0.0
    %293 = vmatprep.subr.mxu0 0.0
    %294 = vmatpush1.msra.mxu0 0.0
    %295 = vmatprep.subr.mxu0 0.0
    %296 = vmatpush1.msra.mxu0 0.0
    %297 = vmatprep.subr.mxu0 0.0
    %298 = vmatpush1.msra.mxu0 0.0
    %299 = vmatprep.subr.mxu0 0.0
    %300 = vmatpush1.msra.mxu0 0.0
    %301 = vmatprep.mubr.f32.mxu0 0.0
    %302 = vmatmul.mubr.f32.gmra.mrb[0].mxu0 %v232
    %v303 = vpop.f32.mrb[0].mxu0
    %v304 = vadd.f32 %v229, %v303
    %v305 = vpop.f32.mrb[0].mxu0
    %306 = vmatprep.mubr.f32.mxu0 0.0
    %307 = vmatmul.mubr.f32.gmra.mrb[0].mxu0 %v235
    %v308 = vpop.f32.mrb[0].mxu0
    %v309 = vadd.f32 %v229, %v308
    %v310 = vpop.f32.mrb[0].mxu0
    %311 = vdwg.mxu0
    %v312 = vlaneseq
    %v313 = vshrl.u32 %v312, 7
    %v314 = vsub.s32 2, %v313
    %v315 = vrot.slane %v224, %v314
    %v316 = vmul.f32 %v315, %v225
    %v319 = vrot.slane %v304, 7
    %v320 = vrot.slane %v309, 6
    %vm321 = vcmask 1042434
    %v322 = vsel %vm321, %v320, %v319
    %323 = vrot.lane.b32.xlu0 %v322, 64
    %v324 = vpop.permute.xlu0 %323
    %v326 = vadd.f32 %v316, %v324
    %v327 = vtanh.pop %v326
    %v330 = vunpack.c.l.s4 1966171168
    %v331 = vunpack.c.0.s8 %v330
    %v332 = vlaneseq
    %v333 = vshrl.u32 %v332, 7
    %v334 = vsub.s32 %v331, %v333
    %v335 = vrot.slane %v327, %v334
    %v336 = vcombine.high %v335, %v335
    %v338 = vunpack.c.l.s4 1966171168
    %v339 = vunpack.c.0.s8 %v338
    %v340 = vlaneseq
    %v341 = vshrl.u32 %v340, 7
    %v342 = vsub.s32 %v339, %v341
    %v343 = vrot.slane %v335, %v342
    %v345 = vunpack.c.l.s4 1966171168
    %v346 = vunpack.c.0.s8 %v345
    %v347 = vlaneseq
    %v348 = vshrl.u32 %v347, 7
    %v349 = vsub.s32 %v346, %v348
    %v350 = vrot.slane %v336, %v349
    %v351 = vcombine.high %v343, %v343
    %v354 = vmul.f32 %v315, %v327
    %v355 = vrot.slane %v309, 7
    %v356 = vsel %vm321, %v355, %v304
    %357 = vrot.lane.b32.xlu0 %v356, 64
    %v358 = vpop.permute.xlu0 %357
    %v360 = vadd.f32 %v354, %v358
    %v361 = vtanh.pop %v360
    %v364 = vunpack.c.l.s4 1966171168
    %v365 = vunpack.c.0.s8 %v364
    %v366 = vlaneseq
    %v367 = vshrl.u32 %v366, 7
    %v368 = vsub.s32 %v365, %v367
    %v369 = vrot.slane %v361, %v368
    %v370 = vcombine.high %v369, %v369
    %v372 = vunpack.c.l.s4 1966171168
    %v373 = vunpack.c.0.s8 %v372
    %v374 = vlaneseq
    %v375 = vshrl.u32 %v374, 7
    %v376 = vsub.s32 %v373, %v375
    %v377 = vrot.slane %v369, %v376
    %v379 = vunpack.c.l.s4 1966171168
    %v380 = vunpack.c.0.s8 %v379
    %v381 = vlaneseq
    %v382 = vshrl.u32 %v381, 7
    %v383 = vsub.s32 %v380, %v382
    %v384 = vrot.slane %v370, %v383
    %v385 = vcombine.high %v377, %v377
    %v386 = vmul.f32 %v315, %v361
    %v387 = vrot.slane %v304, 1
    %v388 = vsel %vm321, %v309, %v387
    %389 = vrot.lane.b32.xlu0 %v388, 64
    %v390 = vpop.permute.xlu0 %389
    %v392 = vadd.f32 %v386, %v390
    %v393 = vtanh.pop %v392
    %v396 = vunpack.c.l.s4 1966171168
    %v397 = vunpack.c.0.s8 %v396
    %v398 = vlaneseq
    %v399 = vshrl.u32 %v398, 7
    %v400 = vsub.s32 %v397, %v399
    %v401 = vrot.slane %v393, %v400
    %v402 = vcombine.high %v401, %v401
    %v404 = vunpack.c.l.s4 1966171168
    %v405 = vunpack.c.0.s8 %v404
    %v406 = vlaneseq
    %v407 = vshrl.u32 %v406, 7
    %v408 = vsub.s32 %v405, %v407
    %v409 = vrot.slane %v401, %v408
    %v411 = vunpack.c.l.s4 1966171168
    %v412 = vunpack.c.0.s8 %v411
    %v413 = vlaneseq
    %v414 = vshrl.u32 %v413, 7
    %v415 = vsub.s32 %v412, %v414
    %v416 = vrot.slane %v402, %v415
    %v417 = vcombine.high %v409, %v409
    %v418 = vmul.f32 %v315, %v393
    %v419 = vrot.slane %v304, 2
    %v420 = vrot.slane %v309, 1
    %v421 = vsel %vm321, %v420, %v419
    %422 = vrot.lane.b32.xlu0 %v421, 64
    %v423 = vpop.permute.xlu0 %422
    %v425 = vadd.f32 %v418, %v423
    %v426 = vtanh.pop %v425
    %v429 = vunpack.c.l.s4 1966171168
    %v430 = vunpack.c.0.s8 %v429
    %v431 = vlaneseq
    %v432 = vshrl.u32 %v431, 7
    %v433 = vsub.s32 %v430, %v432
    %v434 = vrot.slane %v426, %v433
    %v435 = vcombine.high %v434, %v434
    %v437 = vunpack.c.l.s4 1966171168
    %v438 = vunpack.c.0.s8 %v437
    %v439 = vlaneseq
    %v440 = vshrl.u32 %v439, 7
    %v441 = vsub.s32 %v438, %v440
    %v442 = vrot.slane %v434, %v441
    %v444 = vunpack.c.l.s4 1966171168
    %v445 = vunpack.c.0.s8 %v444
    %v446 = vlaneseq
    %v447 = vshrl.u32 %v446, 7
    %v448 = vsub.s32 %v445, %v447
    %v449 = vrot.slane %v435, %v448
    %v450 = vcombine.high %v442, %v442
    %v451 = vmul.f32 %v315, %v426
    %v452 = vrot.slane %v304, 3
    %v453 = vrot.slane %v309, 2
    %v454 = vsel %vm321, %v453, %v452
    %455 = vrot.lane.b32.xlu0 %v454, 64
    %v456 = vpop.permute.xlu0 %455
    %v458 = vadd.f32 %v451, %v456
    %v459 = vtanh.pop %v458
    %v462 = vunpack.c.l.s4 1966171168
    %v463 = vunpack.c.0.s8 %v462
    %v464 = vlaneseq
    %v465 = vshrl.u32 %v464, 7
    %v466 = vsub.s32 %v463, %v465
    %v467 = vrot.slane %v459, %v466
    %v468 = vcombine.high %v467, %v467
    %v470 = vunpack.c.l.s4 1966171168
    %v471 = vunpack.c.0.s8 %v470
    %v472 = vlaneseq
    %v473 = vshrl.u32 %v472, 7
    %v474 = vsub.s32 %v471, %v473
    %v475 = vrot.slane %v467, %v474
    %v477 = vunpack.c.l.s4 1966171168
    %v478 = vunpack.c.0.s8 %v477
    %v479 = vlaneseq
    %v480 = vshrl.u32 %v479, 7
    %v481 = vsub.s32 %v478, %v480
    %v482 = vrot.slane %v468, %v481
    %v483 = vcombine.high %v475, %v475
    %v484 = vmul.f32 %v315, %v459
    %v485 = vrot.slane %v304, 4
    %v486 = vrot.slane %v309, 3
    %v487 = vsel %vm321, %v486, %v485
    %488 = vrot.lane.b32.xlu0 %v487, 64
    %v489 = vpop.permute.xlu0 %488
    %v491 = vadd.f32 %v484, %v489
    %v492 = vtanh.pop %v491
    %v495 = vunpack.c.l.s4 1966171168
    %v496 = vunpack.c.0.s8 %v495
    %v497 = vlaneseq
    %v498 = vshrl.u32 %v497, 7
    %v499 = vsub.s32 %v496, %v498
    %v500 = vrot.slane %v492, %v499
    %v501 = vcombine.high %v500, %v500
    %v503 = vunpack.c.l.s4 1966171168
    %v504 = vunpack.c.0.s8 %v503
    %v505 = vlaneseq
    %v506 = vshrl.u32 %v505, 7
    %v507 = vsub.s32 %v504, %v506
    %v508 = vrot.slane %v500, %v507
    %v510 = vunpack.c.l.s4 1966171168
    %v511 = vunpack.c.0.s8 %v510
    %v512 = vlaneseq
    %v513 = vshrl.u32 %v512, 7
    %v514 = vsub.s32 %v511, %v513
    %v515 = vrot.slane %v501, %v514
    %v516 = vcombine.high %v508, %v508
    %v517 = vmul.f32 %v315, %v492
    %v518 = vrot.slane %v304, 5
    %v519 = vrot.slane %v309, 4
    %v520 = vsel %vm321, %v519, %v518
    %521 = vrot.lane.b32.xlu0 %v520, 64
    %v522 = vpop.permute.xlu0 %521
    %v524 = vadd.f32 %v517, %v522
    %v525 = vtanh.pop %v524
    %v528 = vunpack.c.l.s4 1966171168
    %v529 = vunpack.c.0.s8 %v528
    %v530 = vlaneseq
    %v531 = vshrl.u32 %v530, 7
    %v532 = vsub.s32 %v529, %v531
    %v533 = vrot.slane %v525, %v532
    %v534 = vcombine.high %v533, %v533
    %v536 = vunpack.c.l.s4 1966171168
    %v537 = vunpack.c.0.s8 %v536
    %v538 = vlaneseq
    %v539 = vshrl.u32 %v538, 7
    %v540 = vsub.s32 %v537, %v539
    %v541 = vrot.slane %v533, %v540
    %v543 = vunpack.c.l.s4 1966171168
    %v544 = vunpack.c.0.s8 %v543
    %v545 = vlaneseq
    %v546 = vshrl.u32 %v545, 7
    %v547 = vsub.s32 %v544, %v546
    %v548 = vrot.slane %v534, %v547
    %v549 = vcombine.high %v541, %v541
    %v550 = vmul.f32 %v315, %v525
    %v551 = vrot.slane %v304, 6
    %v552 = vrot.slane %v309, 5
    %v553 = vsel %vm321, %v552, %v551
    %554 = vrot.lane.b32.xlu0 %v553, 64
    %v555 = vpop.permute.xlu0 %554
    %v557 = vadd.f32 %v550, %v555
    %v558 = vtanh.pop %v557
    %v561 = vunpack.c.l.s4 1966171168
    %v562 = vunpack.c.0.s8 %v561
    %v563 = vlaneseq
    %v564 = vshrl.u32 %v563, 7
    %v565 = vsub.s32 %v562, %v564
    %v566 = vrot.slane %v558, %v565
    %v567 = vcombine.high %v566, %v566
    %v569 = vunpack.c.l.s4 1966171168
    %v570 = vunpack.c.0.s8 %v569
    %v571 = vlaneseq
    %v572 = vshrl.u32 %v571, 7
    %v573 = vsub.s32 %v570, %v572
    %v574 = vrot.slane %v566, %v573
    %v576 = vunpack.c.l.s4 1966171168
    %v577 = vunpack.c.0.s8 %v576
    %v578 = vlaneseq
    %v579 = vshrl.u32 %v578, 7
    %v580 = vsub.s32 %v577, %v579
    %v581 = vrot.slane %v567, %v580
    %v582 = vcombine.high %v574, %v574
    %v583 = vlaneseq
    %v584 = vshrl.u32 %v583, 7
    %v585 = vsub.s32 0, %v584
    %v586 = vrot.slane %v384, %v585
    %v587 = vlaneseq
    %v588 = vshrl.u32 %v587, 7
    %v589 = vsub.s32 0, %v588
    %v590 = vrot.slane %v385, %v589
    %v593 = vlaneseq
    %v594 = vshrl.u32 %v593, 7
    %v595 = vsub.s32 0, %v594
    %v596 = vrot.slane %v416, %v595
    %v597 = vlaneseq
    %v598 = vshrl.u32 %v597, 7
    %v599 = vsub.s32 0, %v598
    %v600 = vrot.slane %v417, %v599
    %v603 = vlaneseq
    %v604 = vshrl.u32 %v603, 7
    %v605 = vsub.s32 0, %v604
    %v606 = vrot.slane %v449, %v605
    %v607 = vlaneseq
    %v608 = vshrl.u32 %v607, 7
    %v609 = vsub.s32 0, %v608
    %v610 = vrot.slane %v450, %v609
    %v613 = vlaneseq
    %v614 = vshrl.u32 %v613, 7
    %v615 = vsub.s32 0, %v614
    %v616 = vrot.slane %v482, %v615
    %v617 = vlaneseq
    %v618 = vshrl.u32 %v617, 7
    %v619 = vsub.s32 0, %v618
    %v620 = vrot.slane %v483, %v619
    %v623 = vlaneseq
    %v624 = vshrl.u32 %v623, 7
    %v625 = vsub.s32 0, %v624
    %v626 = vrot.slane %v515, %v625
    %v627 = vlaneseq
    %v628 = vshrl.u32 %v627, 7
    %v629 = vsub.s32 0, %v628
    %v630 = vrot.slane %v516, %v629
    %v633 = vlaneseq
    %v634 = vshrl.u32 %v633, 7
    %v635 = vsub.s32 0, %v634
    %v636 = vrot.slane %v548, %v635
    %v637 = vlaneseq
    %v638 = vshrl.u32 %v637, 7
    %v639 = vsub.s32 0, %v638
    %v640 = vrot.slane %v549, %v639
    %v643 = vlaneseq
    %v644 = vshrl.u32 %v643, 7
    %v645 = vsub.s32 0, %v644
    %v646 = vrot.slane %v581, %v645
    %v647 = vlaneseq
    %v648 = vshrl.u32 %v647, 7
    %v649 = vsub.s32 0, %v648
    %v650 = vrot.slane %v582, %v649
    %v653 = vsel %vm181, %v350, %v586
    %v654 = vsel %vm181, %v351, %v590
    %v655 = vsel %vm183, %v653, %v596
    %v656 = vsel %vm183, %v654, %v600
    %v657 = vsel %vm185, %v655, %v606
    %v658 = vsel %vm185, %v656, %v610
    %v659 = vsel %vm187, %v657, %v616
    %v660 = vsel %vm187, %v658, %v620
    %v661 = vsel %vm189, %v659, %v626
    %v662 = vsel %vm189, %v660, %v630
    %v663 = vsel %vm191, %v661, %v636
    %v664 = vsel %vm191, %v662, %v640
    %v665 = vsel %vm193, %v663, %v646
    %v666 = vsel %vm193, %v664, %v650
    %v667 = vcombine.high %v304, %v304
    %v669 = vunpack.c.l.s4 1966171168
    %v670 = vunpack.c.0.s8 %v669
    %v671 = vlaneseq
    %v672 = vshrl.u32 %v671, 7
    %v673 = vsub.s32 %v670, %v672
    %v674 = vrot.slane %v304, %v673
    %v676 = vunpack.c.l.s4 1966171168
    %v677 = vunpack.c.0.s8 %v676
    %v678 = vlaneseq
    %v679 = vshrl.u32 %v678, 7
    %v680 = vsub.s32 %v677, %v679
    %v681 = vrot.slane %v667, %v680
    %v682 = vcombine.high %v674, %v674
    %v683 = vcombine.high %v681, %v681
    %v685 = vunpack.c.l.s4 1966171168
    %v686 = vunpack.c.0.s8 %v685
    %v687 = vlaneseq
    %v688 = vshrl.u32 %v687, 7
    %v689 = vsub.s32 %v686, %v688
    %v690 = vrot.slane %v674, %v689
    %v692 = vunpack.c.l.s4 1966171168
    %v693 = vunpack.c.0.s8 %v692
    %v694 = vlaneseq
    %v695 = vshrl.u32 %v694, 7
    %v696 = vsub.s32 %v693, %v695
    %v697 = vrot.slane %v681, %v696
    %v699 = vunpack.c.l.s4 1966171168
    %v700 = vunpack.c.0.s8 %v699
    %v701 = vlaneseq
    %v702 = vshrl.u32 %v701, 7
    %v703 = vsub.s32 %v700, %v702
    %v704 = vrot.slane %v682, %v703
    %v706 = vunpack.c.l.s4 1966171168
    %v707 = vunpack.c.0.s8 %v706
    %v708 = vlaneseq
    %v709 = vshrl.u32 %v708, 7
    %v710 = vsub.s32 %v707, %v709
    %v711 = vrot.slane %v683, %v710
    %v712 = vcombine.high %v690, %v690
    %v713 = vcombine.high %v697, %v697
    %v714 = vcombine.high %v704, %v704
    %v715 = vcombine.high %v711, %v711
    %v716 = vcombine.high %v309, %v309
    %v718 = vunpack.c.l.s4 1966171168
    %v719 = vunpack.c.0.s8 %v718
    %v720 = vlaneseq
    %v721 = vshrl.u32 %v720, 7
    %v722 = vsub.s32 %v719, %v721
    %v723 = vrot.slane %v309, %v722
    %v725 = vunpack.c.l.s4 1966171168
    %v726 = vunpack.c.0.s8 %v725
    %v727 = vlaneseq
    %v728 = vshrl.u32 %v727, 7
    %v729 = vsub.s32 %v726, %v728
    %v730 = vrot.slane %v716, %v729
    %v731 = vcombine.high %v723, %v723
    %v732 = vcombine.high %v730, %v730
    %v734 = vunpack.c.l.s4 1966171168
    %v735 = vunpack.c.0.s8 %v734
    %v736 = vlaneseq
    %v737 = vshrl.u32 %v736, 7
    %v738 = vsub.s32 %v735, %v737
    %v739 = vrot.slane %v723, %v738
    %v741 = vunpack.c.l.s4 1966171168
    %v742 = vunpack.c.0.s8 %v741
    %v743 = vlaneseq
    %v744 = vshrl.u32 %v743, 7
    %v745 = vsub.s32 %v742, %v744
    %v746 = vrot.slane %v730, %v745
    %v748 = vunpack.c.l.s4 1966171168
    %v749 = vunpack.c.0.s8 %v748
    %v750 = vlaneseq
    %v751 = vshrl.u32 %v750, 7
    %v752 = vsub.s32 %v749, %v751
    %v753 = vrot.slane %v731, %v752
    %v755 = vunpack.c.l.s4 1966171168
    %v756 = vunpack.c.0.s8 %v755
    %v757 = vlaneseq
    %v758 = vshrl.u32 %v757, 7
    %v759 = vsub.s32 %v756, %v758
    %v760 = vrot.slane %v732, %v759
    %v761 = vcombine.high %v739, %v739
    %v762 = vcombine.high %v746, %v746
    %v763 = vcombine.high %v753, %v753
    %v764 = vcombine.high %v760, %v760
    %v765 = vlaneseq
    %v766 = vshrl.u32 %v765, 7
    %v767 = vsub.s32 0, %v766
    %v768 = vrot.slane %v690, %v767
    %v769 = vlaneseq
    %v770 = vshrl.u32 %v769, 7
    %v771 = vsub.s32 0, %v770
    %v772 = vrot.slane %v704, %v771
    %v773 = vlaneseq
    %v774 = vshrl.u32 %v773, 7
    %v775 = vsub.s32 0, %v774
    %v776 = vrot.slane %v712, %v775
    %v777 = vlaneseq
    %v778 = vshrl.u32 %v777, 7
    %v779 = vsub.s32 0, %v778
    %v780 = vrot.slane %v714, %v779
    %v781 = vlaneseq
    %v782 = vshrl.u32 %v781, 7
    %v783 = vsub.s32 0, %v782
    %v784 = vrot.slane %v697, %v783
    %v785 = vlaneseq
    %v786 = vshrl.u32 %v785, 7
    %v787 = vsub.s32 0, %v786
    %v788 = vrot.slane %v711, %v787
    %v789 = vlaneseq
    %v790 = vshrl.u32 %v789, 7
    %v791 = vsub.s32 0, %v790
    %v792 = vrot.slane %v713, %v791
    %v793 = vlaneseq
    %v794 = vshrl.u32 %v793, 7
    %v795 = vsub.s32 0, %v794
    %v796 = vrot.slane %v715, %v795
    %v797 = vlaneseq
    %v798 = vshrl.u32 %v797, 7
    %v799 = vsub.s32 0, %v798
    %v800 = vrot.slane %v739, %v799
    %v801 = vlaneseq
    %v802 = vshrl.u32 %v801, 7
    %v803 = vsub.s32 0, %v802
    %v804 = vrot.slane %v753, %v803
    %v805 = vlaneseq
    %v806 = vshrl.u32 %v805, 7
    %v807 = vsub.s32 0, %v806
    %v808 = vrot.slane %v761, %v807
    %v809 = vlaneseq
    %v810 = vshrl.u32 %v809, 7
    %v811 = vsub.s32 0, %v810
    %v812 = vrot.slane %v763, %v811
    %v813 = vlaneseq
    %v814 = vshrl.u32 %v813, 7
    %v815 = vsub.s32 0, %v814
    %v816 = vrot.slane %v746, %v815
    %v817 = vlaneseq
    %v818 = vshrl.u32 %v817, 7
    %v819 = vsub.s32 0, %v818
    %v820 = vrot.slane %v760, %v819
    %v821 = vlaneseq
    %v822 = vshrl.u32 %v821, 7
    %v823 = vsub.s32 0, %v822
    %v824 = vrot.slane %v762, %v823
    %v825 = vlaneseq
    %v826 = vshrl.u32 %v825, 7
    %v827 = vsub.s32 0, %v826
    %v828 = vrot.slane %v764, %v827
    %v845 = vmul.f32 %v768, %v665
    %v846 = vmul.f32 %v772, %v665
    %v847 = vmul.f32 %v776, %v665
    %v848 = vmul.f32 %v780, %v665
    %v849 = vmul.f32 %v784, %v665
    %v850 = vmul.f32 %v788, %v665
    %v851 = vmul.f32 %v792, %v665
    %v852 = vmul.f32 %v796, %v665
    %v853 = vmul.f32 %v800, %v666
    %v854 = vmul.f32 %v804, %v666
    %v855 = vmul.f32 %v808, %v666
    %v856 = vmul.f32 %v812, %v666
    %v857 = vmul.f32 %v816, %v666
    %v858 = vmul.f32 %v820, %v666
    %v859 = vmul.f32 %v824, %v666
    %v860 = vmul.f32 %v828, %v666
    %vm861 = vcmask 64512
    %v862 = vsel %vm861, %v845, 0.0
    %863 = vadd.xlane.f32.xlu0 %v862
    %v864 = vpop.xlane.xlu0 %863
    %v865 = vsel %vm861, %v846, 0.0
    %866 = vadd.xlane.f32.xlu0 %v865
    %v867 = vpop.xlane.xlu0 %866
    %v868 = vsel %vm861, %v847, 0.0
    %869 = vadd.xlane.f32.xlu0 %v868
    %v870 = vpop.xlane.xlu0 %869
    %v871 = vsel %vm861, %v848, 0.0
    %872 = vadd.xlane.f32.xlu0 %v871
    %v873 = vpop.xlane.xlu0 %872
    %v874 = vsel %vm861, %v849, 0.0
    %875 = vadd.xlane.f32.xlu0 %v874
    %v876 = vpop.xlane.xlu0 %875
    %v877 = vsel %vm861, %v850, 0.0
    %878 = vadd.xlane.f32.xlu0 %v877
    %v879 = vpop.xlane.xlu0 %878
    %v880 = vsel %vm861, %v851, 0.0
    %881 = vadd.xlane.f32.xlu0 %v880
    %v882 = vpop.xlane.xlu0 %881
    %v883 = vsel %vm861, %v852, 0.0
    %884 = vadd.xlane.f32.xlu0 %v883
    %v885 = vpop.xlane.xlu0 %884
    %v886 = vsel %vm861, %v853, 0.0
    %887 = vadd.xlane.f32.xlu0 %v886
    %v888 = vpop.xlane.xlu0 %887
    %v889 = vsel %vm861, %v854, 0.0
    %890 = vadd.xlane.f32.xlu0 %v889
    %v891 = vpop.xlane.xlu0 %890
    %v892 = vsel %vm861, %v855, 0.0
    %893 = vadd.xlane.f32.xlu0 %v892
    %v894 = vpop.xlane.xlu0 %893
    %v895 = vsel %vm861, %v856, 0.0
    %896 = vadd.xlane.f32.xlu0 %v895
    %v897 = vpop.xlane.xlu0 %896
    %v898 = vsel %vm861, %v857, 0.0
    %899 = vadd.xlane.f32.xlu0 %v898
    %v900 = vpop.xlane.xlu0 %899
    %v901 = vsel %vm861, %v858, 0.0
    %902 = vadd.xlane.f32.xlu0 %v901
    %v903 = vpop.xlane.xlu0 %902
    %v904 = vsel %vm861, %v859, 0.0
    %905 = vadd.xlane.f32.xlu0 %v904
    %v906 = vpop.xlane.xlu0 %905
    %v907 = vsel %vm861, %v860, 0.0
    %908 = vadd.xlane.f32.xlu0 %v907
    %v909 = vpop.xlane.xlu0 %908
    %v910 = vmul.f32 %v864, 0.125
    %v911 = vmul.f32 %v867, 0.125
    %v912 = vmul.f32 %v870, 0.125
    %v913 = vmul.f32 %v873, 0.125
    %v914 = vmul.f32 %v876, 0.125
    %v915 = vmul.f32 %v879, 0.125
    %v916 = vmul.f32 %v882, 0.125
    %v917 = vmul.f32 %v885, 0.125
    %v918 = vmul.f32 %v888, 0.125
    %v919 = vmul.f32 %v891, 0.125
    %v920 = vmul.f32 %v894, 0.125
    %v921 = vmul.f32 %v897, 0.125
    %v922 = vmul.f32 %v900, 0.125
    %v923 = vmul.f32 %v903, 0.125
    %v924 = vmul.f32 %v906, 0.125
    %v925 = vmul.f32 %v909, 0.125
    %v927 = vlaneseq
    %v928 = vshrl.u32 %v927, 7
    %v929 = vsub.s32 0, %v928
    %v930 = vrot.slane %v48, %v929
    %932 = vbcast.lane.b32.xlu0 %v930, 256
    %v933 = vpop.permute.xlu0 %932
    %v934 = vlaneseq
    %v935 = vshrl.u32 %v934, 7
    %v936 = vsub.s32 1, %v935
    %v937 = vrot.slane %v48, %v936
    %939 = vbcast.lane.b32.xlu0 %v937, 256
    %v940 = vpop.permute.xlu0 %939
    %v941 = vlaneseq
    %v942 = vshrl.u32 %v941, 7
    %v943 = vsub.s32 2, %v942
    %v944 = vrot.slane %v48, %v943
    %946 = vbcast.lane.b32.xlu0 %v944, 256
    %v947 = vpop.permute.xlu0 %946
    %v948 = vlaneseq
    %v949 = vshrl.u32 %v948, 7
    %v950 = vsub.s32 3, %v949
    %v951 = vrot.slane %v48, %v950
    %953 = vbcast.lane.b32.xlu0 %v951, 256
    %v954 = vpop.permute.xlu0 %953
    %v955 = vlaneseq
    %v956 = vshrl.u32 %v955, 7
    %v957 = vsub.s32 4, %v956
    %v958 = vrot.slane %v48, %v957
    %960 = vbcast.lane.b32.xlu0 %v958, 256
    %v961 = vpop.permute.xlu0 %960
    %v962 = vlaneseq
    %v963 = vshrl.u32 %v962, 7
    %v964 = vsub.s32 5, %v963
    %v965 = vrot.slane %v48, %v964
    %967 = vbcast.lane.b32.xlu0 %v965, 256
    %v968 = vpop.permute.xlu0 %967
    %v969 = vlaneseq
    %v970 = vshrl.u32 %v969, 7
    %v971 = vsub.s32 6, %v970
    %v972 = vrot.slane %v48, %v971
    %974 = vbcast.lane.b32.xlu0 %v972, 256
    %v975 = vpop.permute.xlu0 %974
    %v976 = vlaneseq
    %v977 = vshrl.u32 %v976, 7
    %v978 = vsub.s32 7, %v977
    %v979 = vrot.slane %v48, %v978
    %981 = vbcast.lane.b32.xlu0 %v979, 256
    %v982 = vpop.permute.xlu0 %981
    %v991 = vadd.f32 %v910, %v933
    %v992 = vadd.f32 %v911, %v940
    %v993 = vadd.f32 %v912, %v947
    %v994 = vadd.f32 %v913, %v954
    %v995 = vadd.f32 %v914, %v961
    %v996 = vadd.f32 %v915, %v968
    %v997 = vadd.f32 %v916, %v975
    %v998 = vadd.f32 %v917, %v982
    %v999 = vadd.f32 %v918, %v933
    %v1000 = vadd.f32 %v919, %v940
    %v1001 = vadd.f32 %v920, %v947
    %v1002 = vadd.f32 %v921, %v954
    %v1003 = vadd.f32 %v922, %v961
    %v1004 = vadd.f32 %v923, %v968
    %v1005 = vadd.f32 %v924, %v975
    %v1006 = vadd.f32 %v925, %v982
    %1023 = vset.pattern.permute.xlu0 0
    %1024 = vperm.xlu0 %1023, %v991
    %v1025 = vpop.permute.xlu0 %1024
    %1026 = vset.pattern.permute.xlu0 0
    %1027 = vperm.xlu0 %1026, %v992
    %v1028 = vpop.permute.xlu0 %1027
    %1029 = vset.pattern.permute.xlu0 0
    %1030 = vperm.xlu0 %1029, %v993
    %v1031 = vpop.permute.xlu0 %1030
    %1032 = vset.pattern.permute.xlu0 0
    %1033 = vperm.xlu0 %1032, %v994
    %v1034 = vpop.permute.xlu0 %1033
    %1035 = vset.pattern.permute.xlu0 0
    %1036 = vperm.xlu0 %1035, %v995
    %v1037 = vpop.permute.xlu0 %1036
    %1038 = vset.pattern.permute.xlu0 0
    %1039 = vperm.xlu0 %1038, %v996
    %v1040 = vpop.permute.xlu0 %1039
    %1041 = vset.pattern.permute.xlu0 0
    %1042 = vperm.xlu0 %1041, %v997
    %v1043 = vpop.permute.xlu0 %1042
    %1044 = vset.pattern.permute.xlu0 0
    %1045 = vperm.xlu0 %1044, %v998
    %v1046 = vpop.permute.xlu0 %1045
    %1047 = vset.pattern.permute.xlu0 0
    %1048 = vperm.xlu0 %1047, %v999
    %v1049 = vpop.permute.xlu0 %1048
    %1050 = vset.pattern.permute.xlu0 0
    %1051 = vperm.xlu0 %1050, %v1000
    %v1052 = vpop.permute.xlu0 %1051
    %1053 = vset.pattern.permute.xlu0 0
    %1054 = vperm.xlu0 %1053, %v1001
    %v1055 = vpop.permute.xlu0 %1054
    %1056 = vset.pattern.permute.xlu0 0
    %1057 = vperm.xlu0 %1056, %v1002
    %v1058 = vpop.permute.xlu0 %1057
    %1059 = vset.pattern.permute.xlu0 0
    %1060 = vperm.xlu0 %1059, %v1003
    %v1061 = vpop.permute.xlu0 %1060
    %1062 = vset.pattern.permute.xlu0 0
    %1063 = vperm.xlu0 %1062, %v1004
    %v1064 = vpop.permute.xlu0 %1063
    %1065 = vset.pattern.permute.xlu0 0
    %1066 = vperm.xlu0 %1065, %v1005
    %v1067 = vpop.permute.xlu0 %1066
    %1068 = vset.pattern.permute.xlu0 0
    %1069 = vperm.xlu0 %1068, %v1006
    %v1070 = vpop.permute.xlu0 %1069
    %v1071 = vlaneseq
    %v1072 = vshrl.u32 %v1071, 7
    %v1073 = vsub.s32 %v45, %v1072
    %v1074 = vrot.slane %v1025, %v1073
    %v1075 = vlaneseq
    %v1076 = vshrl.u32 %v1075, 7
    %v1077 = vsub.s32 %v45, %v1076
    %v1078 = vrot.slane %v1028, %v1077
    %v1079 = vlaneseq
    %v1080 = vshrl.u32 %v1079, 7
    %v1081 = vsub.s32 %v45, %v1080
    %v1082 = vrot.slane %v1031, %v1081
    %v1083 = vlaneseq
    %v1084 = vshrl.u32 %v1083, 7
    %v1085 = vsub.s32 %v45, %v1084
    %v1086 = vrot.slane %v1034, %v1085
    %v1087 = vlaneseq
    %v1088 = vshrl.u32 %v1087, 7
    %v1089 = vsub.s32 %v45, %v1088
    %v1090 = vrot.slane %v1037, %v1089
    %v1091 = vlaneseq
    %v1092 = vshrl.u32 %v1091, 7
    %v1093 = vsub.s32 %v45, %v1092
    %v1094 = vrot.slane %v1040, %v1093
    %v1095 = vlaneseq
    %v1096 = vshrl.u32 %v1095, 7
    %v1097 = vsub.s32 %v45, %v1096
    %v1098 = vrot.slane %v1043, %v1097
    %v1099 = vlaneseq
    %v1100 = vshrl.u32 %v1099, 7
    %v1101 = vsub.s32 %v45, %v1100
    %v1102 = vrot.slane %v1046, %v1101
    %v1103 = vlaneseq
    %v1104 = vshrl.u32 %v1103, 7
    %v1105 = vsub.s32 %v45, %v1104
    %v1106 = vrot.slane %v1049, %v1105
    %v1107 = vlaneseq
    %v1108 = vshrl.u32 %v1107, 7
    %v1109 = vsub.s32 %v45, %v1108
    %v1110 = vrot.slane %v1052, %v1109
    %v1111 = vlaneseq
    %v1112 = vshrl.u32 %v1111, 7
    %v1113 = vsub.s32 %v45, %v1112
    %v1114 = vrot.slane %v1055, %v1113
    %v1115 = vlaneseq
    %v1116 = vshrl.u32 %v1115, 7
    %v1117 = vsub.s32 %v45, %v1116
    %v1118 = vrot.slane %v1058, %v1117
    %v1119 = vlaneseq
    %v1120 = vshrl.u32 %v1119, 7
    %v1121 = vsub.s32 %v45, %v1120
    %v1122 = vrot.slane %v1061, %v1121
    %v1123 = vlaneseq
    %v1124 = vshrl.u32 %v1123, 7
    %v1125 = vsub.s32 %v45, %v1124
    %v1126 = vrot.slane %v1064, %v1125
    %v1127 = vlaneseq
    %v1128 = vshrl.u32 %v1127, 7
    %v1129 = vsub.s32 %v45, %v1128
    %v1130 = vrot.slane %v1067, %v1129
    %v1131 = vlaneseq
    %v1132 = vshrl.u32 %v1131, 7
    %v1133 = vsub.s32 %v45, %v1132
    %v1134 = vrot.slane %v1070, %v1133
    %vm1135 = vcmask 1041409
    %v1136 = vsel %vm1135, %v1078, %v1074
    %v1137 = vsel %vm321, %v1082, %v1136
    %vm1138 = vcmask 1043459
    %v1139 = vsel %vm1138, %v1086, %v1137
    %vm1140 = vcmask 1044484
    %v1141 = vsel %vm1140, %v1090, %v1139
    %vm1142 = vcmask 1045509
    %v1143 = vsel %vm1142, %v1094, %v1141
    %vm1144 = vcmask 1046534
    %v1145 = vsel %vm1144, %v1098, %v1143
    %vm1146 = vcmask 1047559
    %v1147 = vsel %vm1146, %v1102, %v1145
    %v1148 = vsel %vm1135, %v1110, %v1106
    %v1149 = vsel %vm321, %v1114, %v1148
    %v1150 = vsel %vm1138, %v1118, %v1149
    %v1151 = vsel %vm1140, %v1122, %v1150
    %v1152 = vsel %vm1142, %v1126, %v1151
    %v1153 = vsel %vm1144, %v1130, %v1152
    %v1154 = vsel %vm1146, %v1134, %v1153
    %v1157 = vsel %vm861, %v1147, -inf
    %1158 = vmax.xlane.f32.xlu0 %v1157
    %v1159 = vpop.xlane.xlu0 %1158
    %v1160 = vsel %vm861, %v1154, -inf
    %1161 = vmax.xlane.f32.xlu0 %v1160
    %v1162 = vpop.xlane.xlu0 %1161
    %v1165 = vlaneseq
    %v1166 = vshrl.u32 %v1165, 7
    %v1167 = vsub.s32 0, %v1166
    %v1168 = vrot.slane %v1159, %v1167
    %v1169 = vlaneseq
    %v1170 = vshrl.u32 %v1169, 7
    %v1171 = vsub.s32 1, %v1170
    %v1172 = vrot.slane %v1159, %v1171
    %v1173 = vlaneseq
    %v1174 = vshrl.u32 %v1173, 7
    %v1175 = vsub.s32 2, %v1174
    %v1176 = vrot.slane %v1159, %v1175
    %v1177 = vlaneseq
    %v1178 = vshrl.u32 %v1177, 7
    %v1179 = vsub.s32 3, %v1178
    %v1180 = vrot.slane %v1159, %v1179
    %v1181 = vlaneseq
    %v1182 = vshrl.u32 %v1181, 7
    %v1183 = vsub.s32 4, %v1182
    %v1184 = vrot.slane %v1159, %v1183
    %v1185 = vlaneseq
    %v1186 = vshrl.u32 %v1185, 7
    %v1187 = vsub.s32 5, %v1186
    %v1188 = vrot.slane %v1159, %v1187
    %v1189 = vlaneseq
    %v1190 = vshrl.u32 %v1189, 7
    %v1191 = vsub.s32 6, %v1190
    %v1192 = vrot.slane %v1159, %v1191
    %v1193 = vlaneseq
    %v1194 = vshrl.u32 %v1193, 7
    %v1195 = vsub.s32 7, %v1194
    %v1196 = vrot.slane %v1159, %v1195
    %v1197 = vlaneseq
    %v1198 = vshrl.u32 %v1197, 7
    %v1199 = vsub.s32 0, %v1198
    %v1200 = vrot.slane %v1162, %v1199
    %v1201 = vlaneseq
    %v1202 = vshrl.u32 %v1201, 7
    %v1203 = vsub.s32 1, %v1202
    %v1204 = vrot.slane %v1162, %v1203
    %v1205 = vlaneseq
    %v1206 = vshrl.u32 %v1205, 7
    %v1207 = vsub.s32 2, %v1206
    %v1208 = vrot.slane %v1162, %v1207
    %v1209 = vlaneseq
    %v1210 = vshrl.u32 %v1209, 7
    %v1211 = vsub.s32 3, %v1210
    %v1212 = vrot.slane %v1162, %v1211
    %v1213 = vlaneseq
    %v1214 = vshrl.u32 %v1213, 7
    %v1215 = vsub.s32 4, %v1214
    %v1216 = vrot.slane %v1162, %v1215
    %v1217 = vlaneseq
    %v1218 = vshrl.u32 %v1217, 7
    %v1219 = vsub.s32 5, %v1218
    %v1220 = vrot.slane %v1162, %v1219
    %v1221 = vlaneseq
    %v1222 = vshrl.u32 %v1221, 7
    %v1223 = vsub.s32 6, %v1222
    %v1224 = vrot.slane %v1162, %v1223
    %v1225 = vlaneseq
    %v1226 = vshrl.u32 %v1225, 7
    %v1227 = vsub.s32 7, %v1226
    %v1228 = vrot.slane %v1162, %v1227
    %v1245 = vsub.f32 %v991, %v1168
    %v1246 = vsub.f32 %v992, %v1172
    %v1247 = vsub.f32 %v993, %v1176
    %v1248 = vsub.f32 %v994, %v1180
    %v1249 = vsub.f32 %v995, %v1184
    %v1250 = vsub.f32 %v996, %v1188
    %v1251 = vsub.f32 %v997, %v1192
    %v1252 = vsub.f32 %v998, %v1196
    %v1253 = vsub.f32 %v999, %v1200
    %v1254 = vsub.f32 %v1000, %v1204
    %v1255 = vsub.f32 %v1001, %v1208
    %v1256 = vsub.f32 %v1002, %v1212
    %v1257 = vsub.f32 %v1003, %v1216
    %v1258 = vsub.f32 %v1004, %v1220
    %v1259 = vsub.f32 %v1005, %v1224
    %v1260 = vsub.f32 %v1006, %v1228
    %v1261 = vmul.f32 %v1245, 1.442695
    %v1262 = vpow.pop %v1261
    %v1263 = vmul.f32 %v1246, 1.442695
    %v1264 = vpow.pop %v1263
    %v1265 = vmul.f32 %v1247, 1.442695
    %v1266 = vpow.pop %v1265
    %v1267 = vmul.f32 %v1248, 1.442695
    %v1268 = vpow.pop %v1267
    %v1269 = vmul.f32 %v1249, 1.442695
    %v1270 = vpow.pop %v1269
    %v1271 = vmul.f32 %v1250, 1.442695
    %v1272 = vpow.pop %v1271
    %v1273 = vmul.f32 %v1251, 1.442695
    %v1274 = vpow.pop %v1273
    %v1275 = vmul.f32 %v1252, 1.442695
    %v1276 = vpow.pop %v1275
    %v1277 = vmul.f32 %v1253, 1.442695
    %v1278 = vpow.pop %v1277
    %v1279 = vmul.f32 %v1254, 1.442695
    %v1280 = vpow.pop %v1279
    %v1281 = vmul.f32 %v1255, 1.442695
    %v1282 = vpow.pop %v1281
    %v1283 = vmul.f32 %v1256, 1.442695
    %v1284 = vpow.pop %v1283
    %v1285 = vmul.f32 %v1257, 1.442695
    %v1286 = vpow.pop %v1285
    %v1287 = vmul.f32 %v1258, 1.442695
    %v1288 = vpow.pop %v1287
    %v1289 = vmul.f32 %v1259, 1.442695
    %v1290 = vpow.pop %v1289
    %v1291 = vmul.f32 %v1260, 1.442695
    %v1292 = vpow.pop %v1291
    %1309 = vset.pattern.permute.xlu0 0
    %1310 = vperm.xlu0 %1309, %v1262
    %v1311 = vpop.permute.xlu0 %1310
    %1312 = vset.pattern.permute.xlu0 0
    %1313 = vperm.xlu0 %1312, %v1264
    %v1314 = vpop.permute.xlu0 %1313
    %1315 = vset.pattern.permute.xlu0 0
    %1316 = vperm.xlu0 %1315, %v1266
    %v1317 = vpop.permute.xlu0 %1316
    %1318 = vset.pattern.permute.xlu0 0
    %1319 = vperm.xlu0 %1318, %v1268
    %v1320 = vpop.permute.xlu0 %1319
    %1321 = vset.pattern.permute.xlu0 0
    %1322 = vperm.xlu0 %1321, %v1270
    %v1323 = vpop.permute.xlu0 %1322
    %1324 = vset.pattern.permute.xlu0 0
    %1325 = vperm.xlu0 %1324, %v1272
    %v1326 = vpop.permute.xlu0 %1325
    %1327 = vset.pattern.permute.xlu0 0
    %1328 = vperm.xlu0 %1327, %v1274
    %v1329 = vpop.permute.xlu0 %1328
    %1330 = vset.pattern.permute.xlu0 0
    %1331 = vperm.xlu0 %1330, %v1276
    %v1332 = vpop.permute.xlu0 %1331
    %1333 = vset.pattern.permute.xlu0 0
    %1334 = vperm.xlu0 %1333, %v1278
    %v1335 = vpop.permute.xlu0 %1334
    %1336 = vset.pattern.permute.xlu0 0
    %1337 = vperm.xlu0 %1336, %v1280
    %v1338 = vpop.permute.xlu0 %1337
    %1339 = vset.pattern.permute.xlu0 0
    %1340 = vperm.xlu0 %1339, %v1282
    %v1341 = vpop.permute.xlu0 %1340
    %1342 = vset.pattern.permute.xlu0 0
    %1343 = vperm.xlu0 %1342, %v1284
    %v1344 = vpop.permute.xlu0 %1343
    %1345 = vset.pattern.permute.xlu0 0
    %1346 = vperm.xlu0 %1345, %v1286
    %v1347 = vpop.permute.xlu0 %1346
    %1348 = vset.pattern.permute.xlu0 0
    %1349 = vperm.xlu0 %1348, %v1288
    %v1350 = vpop.permute.xlu0 %1349
    %1351 = vset.pattern.permute.xlu0 0
    %1352 = vperm.xlu0 %1351, %v1290
    %v1353 = vpop.permute.xlu0 %1352
    %1354 = vset.pattern.permute.xlu0 0
    %1355 = vperm.xlu0 %1354, %v1292
    %v1356 = vpop.permute.xlu0 %1355
    %v1357 = vlaneseq
    %v1358 = vshrl.u32 %v1357, 7
    %v1359 = vsub.s32 %v45, %v1358
    %v1360 = vrot.slane %v1311, %v1359
    %v1361 = vlaneseq
    %v1362 = vshrl.u32 %v1361, 7
    %v1363 = vsub.s32 %v45, %v1362
    %v1364 = vrot.slane %v1314, %v1363
    %v1365 = vlaneseq
    %v1366 = vshrl.u32 %v1365, 7
    %v1367 = vsub.s32 %v45, %v1366
    %v1368 = vrot.slane %v1317, %v1367
    %v1369 = vlaneseq
    %v1370 = vshrl.u32 %v1369, 7
    %v1371 = vsub.s32 %v45, %v1370
    %v1372 = vrot.slane %v1320, %v1371
    %v1373 = vlaneseq
    %v1374 = vshrl.u32 %v1373, 7
    %v1375 = vsub.s32 %v45, %v1374
    %v1376 = vrot.slane %v1323, %v1375
    %v1377 = vlaneseq
    %v1378 = vshrl.u32 %v1377, 7
    %v1379 = vsub.s32 %v45, %v1378
    %v1380 = vrot.slane %v1326, %v1379
    %v1381 = vlaneseq
    %v1382 = vshrl.u32 %v1381, 7
    %v1383 = vsub.s32 %v45, %v1382
    %v1384 = vrot.slane %v1329, %v1383
    %v1385 = vlaneseq
    %v1386 = vshrl.u32 %v1385, 7
    %v1387 = vsub.s32 %v45, %v1386
    %v1388 = vrot.slane %v1332, %v1387
    %v1389 = vlaneseq
    %v1390 = vshrl.u32 %v1389, 7
    %v1391 = vsub.s32 %v45, %v1390
    %v1392 = vrot.slane %v1335, %v1391
    %v1393 = vlaneseq
    %v1394 = vshrl.u32 %v1393, 7
    %v1395 = vsub.s32 %v45, %v1394
    %v1396 = vrot.slane %v1338, %v1395
    %v1397 = vlaneseq
    %v1398 = vshrl.u32 %v1397, 7
    %v1399 = vsub.s32 %v45, %v1398
    %v1400 = vrot.slane %v1341, %v1399
    %v1401 = vlaneseq
    %v1402 = vshrl.u32 %v1401, 7
    %v1403 = vsub.s32 %v45, %v1402
    %v1404 = vrot.slane %v1344, %v1403
    %v1405 = vlaneseq
    %v1406 = vshrl.u32 %v1405, 7
    %v1407 = vsub.s32 %v45, %v1406
    %v1408 = vrot.slane %v1347, %v1407
    %v1409 = vlaneseq
    %v1410 = vshrl.u32 %v1409, 7
    %v1411 = vsub.s32 %v45, %v1410
    %v1412 = vrot.slane %v1350, %v1411
    %v1413 = vlaneseq
    %v1414 = vshrl.u32 %v1413, 7
    %v1415 = vsub.s32 %v45, %v1414
    %v1416 = vrot.slane %v1353, %v1415
    %v1417 = vlaneseq
    %v1418 = vshrl.u32 %v1417, 7
    %v1419 = vsub.s32 %v45, %v1418
    %v1420 = vrot.slane %v1356, %v1419
    %v1421 = vsel %vm1135, %v1364, %v1360
    %v1422 = vsel %vm321, %v1368, %v1421
    %v1423 = vsel %vm1138, %v1372, %v1422
    %v1424 = vsel %vm1140, %v1376, %v1423
    %v1425 = vsel %vm1142, %v1380, %v1424
    %v1426 = vsel %vm1144, %v1384, %v1425
    %v1427 = vsel %vm1146, %v1388, %v1426
    %v1428 = vsel %vm1135, %v1396, %v1392
    %v1429 = vsel %vm321, %v1400, %v1428
    %v1430 = vsel %vm1138, %v1404, %v1429
    %v1431 = vsel %vm1140, %v1408, %v1430
    %v1432 = vsel %vm1142, %v1412, %v1431
    %v1433 = vsel %vm1144, %v1416, %v1432
    %v1434 = vsel %vm1146, %v1420, %v1433
    %v1437 = vsel %vm861, %v1427, 0.0
    %1438 = vadd.xlane.f32.xlu0 %v1437
    %v1439 = vpop.xlane.xlu0 %1438
    %v1440 = vsel %vm861, %v1434, 0.0
    %1441 = vadd.xlane.f32.xlu0 %v1440
    %v1442 = vpop.xlane.xlu0 %1441
    %v1443 = vrcp.pop %v1439
    %v1444 = vrcp.pop %v1442
    %v1447 = vlaneseq
    %v1448 = vshrl.u32 %v1447, 7
    %v1449 = vsub.s32 0, %v1448
    %v1450 = vrot.slane %v1443, %v1449
    %v1451 = vlaneseq
    %v1452 = vshrl.u32 %v1451, 7
    %v1453 = vsub.s32 1, %v1452
    %v1454 = vrot.slane %v1443, %v1453
    %v1455 = vlaneseq
    %v1456 = vshrl.u32 %v1455, 7
    %v1457 = vsub.s32 2, %v1456
    %v1458 = vrot.slane %v1443, %v1457
    %v1459 = vlaneseq
    %v1460 = vshrl.u32 %v1459, 7
    %v1461 = vsub.s32 3, %v1460
    %v1462 = vrot.slane %v1443, %v1461
    %v1463 = vlaneseq
    %v1464 = vshrl.u32 %v1463, 7
    %v1465 = vsub.s32 4, %v1464
    %v1466 = vrot.slane %v1443, %v1465
    %v1467 = vlaneseq
    %v1468 = vshrl.u32 %v1467, 7
    %v1469 = vsub.s32 5, %v1468
    %v1470 = vrot.slane %v1443, %v1469
    %v1471 = vlaneseq
    %v1472 = vshrl.u32 %v1471, 7
    %v1473 = vsub.s32 6, %v1472
    %v1474 = vrot.slane %v1443, %v1473
    %v1475 = vlaneseq
    %v1476 = vshrl.u32 %v1475, 7
    %v1477 = vsub.s32 7, %v1476
    %v1478 = vrot.slane %v1443, %v1477
    %v1479 = vlaneseq
    %v1480 = vshrl.u32 %v1479, 7
    %v1481 = vsub.s32 0, %v1480
    %v1482 = vrot.slane %v1444, %v1481
    %v1483 = vlaneseq
    %v1484 = vshrl.u32 %v1483, 7
    %v1485 = vsub.s32 1, %v1484
    %v1486 = vrot.slane %v1444, %v1485
    %v1487 = vlaneseq
    %v1488 = vshrl.u32 %v1487, 7
    %v1489 = vsub.s32 2, %v1488
    %v1490 = vrot.slane %v1444, %v1489
    %v1491 = vlaneseq
    %v1492 = vshrl.u32 %v1491, 7
    %v1493 = vsub.s32 3, %v1492
    %v1494 = vrot.slane %v1444, %v1493
    %v1495 = vlaneseq
    %v1496 = vshrl.u32 %v1495, 7
    %v1497 = vsub.s32 4, %v1496
    %v1498 = vrot.slane %v1444, %v1497
    %v1499 = vlaneseq
    %v1500 = vshrl.u32 %v1499, 7
    %v1501 = vsub.s32 5, %v1500
    %v1502 = vrot.slane %v1444, %v1501
    %v1503 = vlaneseq
    %v1504 = vshrl.u32 %v1503, 7
    %v1505 = vsub.s32 6, %v1504
    %v1506 = vrot.slane %v1444, %v1505
    %v1507 = vlaneseq
    %v1508 = vshrl.u32 %v1507, 7
    %v1509 = vsub.s32 7, %v1508
    %v1510 = vrot.slane %v1444, %v1509
    %v1527 = vmul.f32 %v1262, %v1450
    %v1528 = vmul.f32 %v1264, %v1454
    %v1529 = vmul.f32 %v1266, %v1458
    %v1530 = vmul.f32 %v1268, %v1462
    %v1531 = vmul.f32 %v1270, %v1466
    %v1532 = vmul.f32 %v1272, %v1470
    %v1533 = vmul.f32 %v1274, %v1474
    %v1534 = vmul.f32 %v1276, %v1478
    %v1535 = vmul.f32 %v1278, %v1482
    %v1536 = vmul.f32 %v1280, %v1486
    %v1537 = vmul.f32 %v1282, %v1490
    %v1538 = vmul.f32 %v1284, %v1494
    %v1539 = vmul.f32 %v1286, %v1498
    %v1540 = vmul.f32 %v1288, %v1502
    %v1541 = vmul.f32 %v1290, %v1506
    %v1542 = vmul.f32 %v1292, %v1510
    %1544 = vset.pattern.permute.xlu0 0
    %1545 = vperm.xlu0 %1544, %v1527
    %v1546 = vpop.permute.xlu0 %1545
    %1549 = vset.pattern.permute.xlu0 0
    %1550 = vperm.xlu0 %1549, %v1528
    %v1551 = vpop.permute.xlu0 %1550
    %1554 = vset.pattern.permute.xlu0 0
    %1555 = vperm.xlu0 %1554, %v1529
    %v1556 = vpop.permute.xlu0 %1555
    %1559 = vset.pattern.permute.xlu0 0
    %1560 = vperm.xlu0 %1559, %v1530
    %v1561 = vpop.permute.xlu0 %1560
    %1564 = vset.pattern.permute.xlu0 0
    %1565 = vperm.xlu0 %1564, %v1531
    %v1566 = vpop.permute.xlu0 %1565
    %1569 = vset.pattern.permute.xlu0 0
    %1570 = vperm.xlu0 %1569, %v1532
    %v1571 = vpop.permute.xlu0 %1570
    %1574 = vset.pattern.permute.xlu0 0
    %1575 = vperm.xlu0 %1574, %v1533
    %v1576 = vpop.permute.xlu0 %1575
    %1579 = vset.pattern.permute.xlu0 0
    %1580 = vperm.xlu0 %1579, %v1534
    %v1581 = vpop.permute.xlu0 %1580
    %1584 = vset.pattern.permute.xlu0 0
    %1585 = vperm.xlu0 %1584, %v1535
    %v1586 = vpop.permute.xlu0 %1585
    %1589 = vset.pattern.permute.xlu0 0
    %1590 = vperm.xlu0 %1589, %v1536
    %v1591 = vpop.permute.xlu0 %1590
    %1594 = vset.pattern.permute.xlu0 0
    %1595 = vperm.xlu0 %1594, %v1537
    %v1596 = vpop.permute.xlu0 %1595
    %1599 = vset.pattern.permute.xlu0 0
    %1600 = vperm.xlu0 %1599, %v1538
    %v1601 = vpop.permute.xlu0 %1600
    %1604 = vset.pattern.permute.xlu0 0
    %1605 = vperm.xlu0 %1604, %v1539
    %v1606 = vpop.permute.xlu0 %1605
    %1609 = vset.pattern.permute.xlu0 0
    %1610 = vperm.xlu0 %1609, %v1540
    %v1611 = vpop.permute.xlu0 %1610
    %1614 = vset.pattern.permute.xlu0 0
    %1615 = vperm.xlu0 %1614, %v1541
    %v1616 = vpop.permute.xlu0 %1615
    %1619 = vset.pattern.permute.xlu0 0
    %1620 = vperm.xlu0 %1619, %v1542
    %v1621 = vpop.permute.xlu0 %1620
    %v1623 = vmul.f32 %v1546, %v304
    %v1624 = vmul.f32 %v1551, %v304
    %v1625 = vmul.f32 %v1556, %v304
    %v1626 = vmul.f32 %v1561, %v304
    %v1627 = vmul.f32 %v1566, %v304
    %v1628 = vmul.f32 %v1571, %v304
    %v1629 = vmul.f32 %v1576, %v304
    %v1630 = vmul.f32 %v1581, %v304
    %v1631 = vmul.f32 %v1586, %v309
    %v1632 = vmul.f32 %v1591, %v309
    %v1633 = vmul.f32 %v1596, %v309
    %v1634 = vmul.f32 %v1601, %v309
    %v1635 = vmul.f32 %v1606, %v309
    %v1636 = vmul.f32 %v1611, %v309
    %v1637 = vmul.f32 %v1616, %v309
    %v1638 = vmul.f32 %v1621, %v309
    %vm1639 = vcmask 326912
    %v1640 = vsel %vm1639, %v1623, 0.0
    %v1641 = vrot.slane %v1640, 4
    %v1642 = vadd.f32 %v1640, %v1641
    %v1643 = vrot.slane %v1642, 2
    %v1644 = vadd.f32 %v1642, %v1643
    %v1645 = vrot.slane %v1644, 1
    %v1646 = vadd.f32 %v1644, %v1645
    %v1647 = vsel %vm1639, %v1624, 0.0
    %v1648 = vrot.slane %v1647, 4
    %v1649 = vadd.f32 %v1647, %v1648
    %v1650 = vrot.slane %v1649, 2
    %v1651 = vadd.f32 %v1649, %v1650
    %v1652 = vrot.slane %v1651, 1
    %v1653 = vadd.f32 %v1651, %v1652
    %v1654 = vsel %vm1639, %v1625, 0.0
    %v1655 = vrot.slane %v1654, 4
    %v1656 = vadd.f32 %v1654, %v1655
    %v1657 = vrot.slane %v1656, 2
    %v1658 = vadd.f32 %v1656, %v1657
    %v1659 = vrot.slane %v1658, 1
    %v1660 = vadd.f32 %v1658, %v1659
    %v1661 = vsel %vm1639, %v1626, 0.0
    %v1662 = vrot.slane %v1661, 4
    %v1663 = vadd.f32 %v1661, %v1662
    %v1664 = vrot.slane %v1663, 2
    %v1665 = vadd.f32 %v1663, %v1664
    %v1666 = vrot.slane %v1665, 1
    %v1667 = vadd.f32 %v1665, %v1666
    %v1668 = vsel %vm1639, %v1627, 0.0
    %v1669 = vrot.slane %v1668, 4
    %v1670 = vadd.f32 %v1668, %v1669
    %v1671 = vrot.slane %v1670, 2
    %v1672 = vadd.f32 %v1670, %v1671
    %v1673 = vrot.slane %v1672, 1
    %v1674 = vadd.f32 %v1672, %v1673
    %v1675 = vsel %vm1639, %v1628, 0.0
    %v1676 = vrot.slane %v1675, 4
    %v1677 = vadd.f32 %v1675, %v1676
    %v1678 = vrot.slane %v1677, 2
    %v1679 = vadd.f32 %v1677, %v1678
    %v1680 = vrot.slane %v1679, 1
    %v1681 = vadd.f32 %v1679, %v1680
    %v1682 = vsel %vm1639, %v1629, 0.0
    %v1683 = vrot.slane %v1682, 4
    %v1684 = vadd.f32 %v1682, %v1683
    %v1685 = vrot.slane %v1684, 2
    %v1686 = vadd.f32 %v1684, %v1685
    %v1687 = vrot.slane %v1686, 1
    %v1688 = vadd.f32 %v1686, %v1687
    %v1689 = vsel %vm1639, %v1630, 0.0
    %v1690 = vrot.slane %v1689, 4
    %v1691 = vadd.f32 %v1689, %v1690
    %v1692 = vrot.slane %v1691, 2
    %v1693 = vadd.f32 %v1691, %v1692
    %v1694 = vrot.slane %v1693, 1
    %v1695 = vadd.f32 %v1693, %v1694
    %v1696 = vsel %vm1639, %v1631, 0.0
    %v1697 = vrot.slane %v1696, 4
    %v1698 = vadd.f32 %v1696, %v1697
    %v1699 = vrot.slane %v1698, 2
    %v1700 = vadd.f32 %v1698, %v1699
    %v1701 = vrot.slane %v1700, 1
    %v1702 = vadd.f32 %v1700, %v1701
    %v1703 = vsel %vm1639, %v1632, 0.0
    %v1704 = vrot.slane %v1703, 4
    %v1705 = vadd.f32 %v1703, %v1704
    %v1706 = vrot.slane %v1705, 2
    %v1707 = vadd.f32 %v1705, %v1706
    %v1708 = vrot.slane %v1707, 1
    %v1709 = vadd.f32 %v1707, %v1708
    %v1710 = vsel %vm1639, %v1633, 0.0
    %v1711 = vrot.slane %v1710, 4
    %v1712 = vadd.f32 %v1710, %v1711
    %v1713 = vrot.slane %v1712, 2
    %v1714 = vadd.f32 %v1712, %v1713
    %v1715 = vrot.slane %v1714, 1
    %v1716 = vadd.f32 %v1714, %v1715
    %v1717 = vsel %vm1639, %v1634, 0.0
    %v1718 = vrot.slane %v1717, 4
    %v1719 = vadd.f32 %v1717, %v1718
    %v1720 = vrot.slane %v1719, 2
    %v1721 = vadd.f32 %v1719, %v1720
    %v1722 = vrot.slane %v1721, 1
    %v1723 = vadd.f32 %v1721, %v1722
    %v1724 = vsel %vm1639, %v1635, 0.0
    %v1725 = vrot.slane %v1724, 4
    %v1726 = vadd.f32 %v1724, %v1725
    %v1727 = vrot.slane %v1726, 2
    %v1728 = vadd.f32 %v1726, %v1727
    %v1729 = vrot.slane %v1728, 1
    %v1730 = vadd.f32 %v1728, %v1729
    %v1731 = vsel %vm1639, %v1636, 0.0
    %v1732 = vrot.slane %v1731, 4
    %v1733 = vadd.f32 %v1731, %v1732
    %v1734 = vrot.slane %v1733, 2
    %v1735 = vadd.f32 %v1733, %v1734
    %v1736 = vrot.slane %v1735, 1
    %v1737 = vadd.f32 %v1735, %v1736
    %v1738 = vsel %vm1639, %v1637, 0.0
    %v1739 = vrot.slane %v1738, 4
    %v1740 = vadd.f32 %v1738, %v1739
    %v1741 = vrot.slane %v1740, 2
    %v1742 = vadd.f32 %v1740, %v1741
    %v1743 = vrot.slane %v1742, 1
    %v1744 = vadd.f32 %v1742, %v1743
    %v1745 = vsel %vm1639, %v1638, 0.0
    %v1746 = vrot.slane %v1745, 4
    %v1747 = vadd.f32 %v1745, %v1746
    %v1748 = vrot.slane %v1747, 2
    %v1749 = vadd.f32 %v1747, %v1748
    %v1750 = vrot.slane %v1749, 1
    %v1751 = vadd.f32 %v1749, %v1750
    %1768 = vrot.lane.b32.xlu0 %v845, 120
    %v1769 = vpop.permute.xlu0 %1768
    %1770 = vrot.lane.b32.xlu0 %v846, 120
    %v1771 = vpop.permute.xlu0 %1770
    %1772 = vrot.lane.b32.xlu0 %v847, 120
    %v1773 = vpop.permute.xlu0 %1772
    %1774 = vrot.lane.b32.xlu0 %v848, 120
    %v1775 = vpop.permute.xlu0 %1774
    %1776 = vrot.lane.b32.xlu0 %v849, 120
    %v1777 = vpop.permute.xlu0 %1776
    %1778 = vrot.lane.b32.xlu0 %v850, 120
    %v1779 = vpop.permute.xlu0 %1778
    %1780 = vrot.lane.b32.xlu0 %v851, 120
    %v1781 = vpop.permute.xlu0 %1780
    %1782 = vrot.lane.b32.xlu0 %v852, 120
    %v1783 = vpop.permute.xlu0 %1782
    %1784 = vrot.lane.b32.xlu0 %v853, 120
    %v1785 = vpop.permute.xlu0 %1784
    %1786 = vrot.lane.b32.xlu0 %v854, 120
    %v1787 = vpop.permute.xlu0 %1786
    %1788 = vrot.lane.b32.xlu0 %v855, 120
    %v1789 = vpop.permute.xlu0 %1788
    %1790 = vrot.lane.b32.xlu0 %v856, 120
    %v1791 = vpop.permute.xlu0 %1790
    %1792 = vrot.lane.b32.xlu0 %v857, 120
    %v1793 = vpop.permute.xlu0 %1792
    %1794 = vrot.lane.b32.xlu0 %v858, 120
    %v1795 = vpop.permute.xlu0 %1794
    %1796 = vrot.lane.b32.xlu0 %v859, 120
    %v1797 = vpop.permute.xlu0 %1796
    %1798 = vrot.lane.b32.xlu0 %v860, 120
    %v1799 = vpop.permute.xlu0 %1798
    %v1816 = vsel %vm861, %v1769, 0.0
    %1817 = vadd.xlane.f32.xlu0 %v1816
    %v1818 = vpop.xlane.xlu0 %1817
    %v1819 = vsel %vm861, %v1771, 0.0
    %1820 = vadd.xlane.f32.xlu0 %v1819
    %v1821 = vpop.xlane.xlu0 %1820
    %v1822 = vsel %vm861, %v1773, 0.0
    %1823 = vadd.xlane.f32.xlu0 %v1822
    %v1824 = vpop.xlane.xlu0 %1823
    %v1825 = vsel %vm861, %v1775, 0.0
    %1826 = vadd.xlane.f32.xlu0 %v1825
    %v1827 = vpop.xlane.xlu0 %1826
    %v1828 = vsel %vm861, %v1777, 0.0
    %1829 = vadd.xlane.f32.xlu0 %v1828
    %v1830 = vpop.xlane.xlu0 %1829
    %v1831 = vsel %vm861, %v1779, 0.0
    %1832 = vadd.xlane.f32.xlu0 %v1831
    %v1833 = vpop.xlane.xlu0 %1832
    %v1834 = vsel %vm861, %v1781, 0.0
    %1835 = vadd.xlane.f32.xlu0 %v1834
    %v1836 = vpop.xlane.xlu0 %1835
    %v1837 = vsel %vm861, %v1783, 0.0
    %1838 = vadd.xlane.f32.xlu0 %v1837
    %v1839 = vpop.xlane.xlu0 %1838
    %v1840 = vsel %vm861, %v1785, 0.0
    %1841 = vadd.xlane.f32.xlu0 %v1840
    %v1842 = vpop.xlane.xlu0 %1841
    %v1843 = vsel %vm861, %v1787, 0.0
    %1844 = vadd.xlane.f32.xlu0 %v1843
    %v1845 = vpop.xlane.xlu0 %1844
    %v1846 = vsel %vm861, %v1789, 0.0
    %1847 = vadd.xlane.f32.xlu0 %v1846
    %v1848 = vpop.xlane.xlu0 %1847
    %v1849 = vsel %vm861, %v1791, 0.0
    %1850 = vadd.xlane.f32.xlu0 %v1849
    %v1851 = vpop.xlane.xlu0 %1850
    %v1852 = vsel %vm861, %v1793, 0.0
    %1853 = vadd.xlane.f32.xlu0 %v1852
    %v1854 = vpop.xlane.xlu0 %1853
    %v1855 = vsel %vm861, %v1795, 0.0
    %1856 = vadd.xlane.f32.xlu0 %v1855
    %v1857 = vpop.xlane.xlu0 %1856
    %v1858 = vsel %vm861, %v1797, 0.0
    %1859 = vadd.xlane.f32.xlu0 %v1858
    %v1860 = vpop.xlane.xlu0 %1859
    %v1861 = vsel %vm861, %v1799, 0.0
    %1862 = vadd.xlane.f32.xlu0 %v1861
    %v1863 = vpop.xlane.xlu0 %1862
    %v1864 = vmul.f32 %v1818, 0.125
    %v1865 = vmul.f32 %v1821, 0.125
    %v1866 = vmul.f32 %v1824, 0.125
    %v1867 = vmul.f32 %v1827, 0.125
    %v1868 = vmul.f32 %v1830, 0.125
    %v1869 = vmul.f32 %v1833, 0.125
    %v1870 = vmul.f32 %v1836, 0.125
    %v1871 = vmul.f32 %v1839, 0.125
    %v1872 = vmul.f32 %v1842, 0.125
    %v1873 = vmul.f32 %v1845, 0.125
    %v1874 = vmul.f32 %v1848, 0.125
    %v1875 = vmul.f32 %v1851, 0.125
    %v1876 = vmul.f32 %v1854, 0.125
    %v1877 = vmul.f32 %v1857, 0.125
    %v1878 = vmul.f32 %v1860, 0.125
    %v1879 = vmul.f32 %v1863, 0.125
    %v1880 = vadd.f32 %v1864, %v933
    %v1881 = vadd.f32 %v1865, %v940
    %v1882 = vadd.f32 %v1866, %v947
    %v1883 = vadd.f32 %v1867, %v954
    %v1884 = vadd.f32 %v1868, %v961
    %v1885 = vadd.f32 %v1869, %v968
    %v1886 = vadd.f32 %v1870, %v975
    %v1887 = vadd.f32 %v1871, %v982
    %v1888 = vadd.f32 %v1872, %v933
    %v1889 = vadd.f32 %v1873, %v940
    %v1890 = vadd.f32 %v1874, %v947
    %v1891 = vadd.f32 %v1875, %v954
    %v1892 = vadd.f32 %v1876, %v961
    %v1893 = vadd.f32 %v1877, %v968
    %v1894 = vadd.f32 %v1878, %v975
    %v1895 = vadd.f32 %v1879, %v982
    %1912 = vset.pattern.permute.xlu0 0
    %1913 = vperm.xlu0 %1912, %v1880
    %v1914 = vpop.permute.xlu0 %1913
    %1915 = vset.pattern.permute.xlu0 0
    %1916 = vperm.xlu0 %1915, %v1881
    %v1917 = vpop.permute.xlu0 %1916
    %1918 = vset.pattern.permute.xlu0 0
    %1919 = vperm.xlu0 %1918, %v1882
    %v1920 = vpop.permute.xlu0 %1919
    %1921 = vset.pattern.permute.xlu0 0
    %1922 = vperm.xlu0 %1921, %v1883
    %v1923 = vpop.permute.xlu0 %1922
    %1924 = vset.pattern.permute.xlu0 0
    %1925 = vperm.xlu0 %1924, %v1884
    %v1926 = vpop.permute.xlu0 %1925
    %1927 = vset.pattern.permute.xlu0 0
    %1928 = vperm.xlu0 %1927, %v1885
    %v1929 = vpop.permute.xlu0 %1928
    %1930 = vset.pattern.permute.xlu0 0
    %1931 = vperm.xlu0 %1930, %v1886
    %v1932 = vpop.permute.xlu0 %1931
    %1933 = vset.pattern.permute.xlu0 0
    %1934 = vperm.xlu0 %1933, %v1887
    %v1935 = vpop.permute.xlu0 %1934
    %1936 = vset.pattern.permute.xlu0 0
    %1937 = vperm.xlu0 %1936, %v1888
    %v1938 = vpop.permute.xlu0 %1937
    %1939 = vset.pattern.permute.xlu0 0
    %1940 = vperm.xlu0 %1939, %v1889
    %v1941 = vpop.permute.xlu0 %1940
    %1942 = vset.pattern.permute.xlu0 0
    %1943 = vperm.xlu0 %1942, %v1890
    %v1944 = vpop.permute.xlu0 %1943
    %1945 = vset.pattern.permute.xlu0 0
    %1946 = vperm.xlu0 %1945, %v1891
    %v1947 = vpop.permute.xlu0 %1946
    %1948 = vset.pattern.permute.xlu0 0
    %1949 = vperm.xlu0 %1948, %v1892
    %v1950 = vpop.permute.xlu0 %1949
    %1951 = vset.pattern.permute.xlu0 0
    %1952 = vperm.xlu0 %1951, %v1893
    %v1953 = vpop.permute.xlu0 %1952
    %1954 = vset.pattern.permute.xlu0 0
    %1955 = vperm.xlu0 %1954, %v1894
    %v1956 = vpop.permute.xlu0 %1955
    %1957 = vset.pattern.permute.xlu0 0
    %1958 = vperm.xlu0 %1957, %v1895
    %v1959 = vpop.permute.xlu0 %1958
    %v1960 = vlaneseq
    %v1961 = vshrl.u32 %v1960, 7
    %v1962 = vsub.s32 %v45, %v1961
    %v1963 = vrot.slane %v1914, %v1962
    %v1964 = vlaneseq
    %v1965 = vshrl.u32 %v1964, 7
    %v1966 = vsub.s32 %v45, %v1965
    %v1967 = vrot.slane %v1917, %v1966
    %v1968 = vlaneseq
    %v1969 = vshrl.u32 %v1968, 7
    %v1970 = vsub.s32 %v45, %v1969
    %v1971 = vrot.slane %v1920, %v1970
    %v1972 = vlaneseq
    %v1973 = vshrl.u32 %v1972, 7
    %v1974 = vsub.s32 %v45, %v1973
    %v1975 = vrot.slane %v1923, %v1974
    %v1976 = vlaneseq
    %v1977 = vshrl.u32 %v1976, 7
    %v1978 = vsub.s32 %v45, %v1977
    %v1979 = vrot.slane %v1926, %v1978
    %v1980 = vlaneseq
    %v1981 = vshrl.u32 %v1980, 7
    %v1982 = vsub.s32 %v45, %v1981
    %v1983 = vrot.slane %v1929, %v1982
    %v1984 = vlaneseq
    %v1985 = vshrl.u32 %v1984, 7
    %v1986 = vsub.s32 %v45, %v1985
    %v1987 = vrot.slane %v1932, %v1986
    %v1988 = vlaneseq
    %v1989 = vshrl.u32 %v1988, 7
    %v1990 = vsub.s32 %v45, %v1989
    %v1991 = vrot.slane %v1935, %v1990
    %v1992 = vlaneseq
    %v1993 = vshrl.u32 %v1992, 7
    %v1994 = vsub.s32 %v45, %v1993
    %v1995 = vrot.slane %v1938, %v1994
    %v1996 = vlaneseq
    %v1997 = vshrl.u32 %v1996, 7
    %v1998 = vsub.s32 %v45, %v1997
    %v1999 = vrot.slane %v1941, %v1998
    %v2000 = vlaneseq
    %v2001 = vshrl.u32 %v2000, 7
    %v2002 = vsub.s32 %v45, %v2001
    %v2003 = vrot.slane %v1944, %v2002
    %v2004 = vlaneseq
    %v2005 = vshrl.u32 %v2004, 7
    %v2006 = vsub.s32 %v45, %v2005
    %v2007 = vrot.slane %v1947, %v2006
    %v2008 = vlaneseq
    %v2009 = vshrl.u32 %v2008, 7
    %v2010 = vsub.s32 %v45, %v2009
    %v2011 = vrot.slane %v1950, %v2010
    %v2012 = vlaneseq
    %v2013 = vshrl.u32 %v2012, 7
    %v2014 = vsub.s32 %v45, %v2013
    %v2015 = vrot.slane %v1953, %v2014
    %v2016 = vlaneseq
    %v2017 = vshrl.u32 %v2016, 7
    %v2018 = vsub.s32 %v45, %v2017
    %v2019 = vrot.slane %v1956, %v2018
    %v2020 = vlaneseq
    %v2021 = vshrl.u32 %v2020, 7
    %v2022 = vsub.s32 %v45, %v2021
    %v2023 = vrot.slane %v1959, %v2022
    %v2024 = vsel %vm1135, %v1967, %v1963
    %v2025 = vsel %vm321, %v1971, %v2024
    %v2026 = vsel %vm1138, %v1975, %v2025
    %v2027 = vsel %vm1140, %v1979, %v2026
    %v2028 = vsel %vm1142, %v1983, %v2027
    %v2029 = vsel %vm1144, %v1987, %v2028
    %v2030 = vsel %vm1146, %v1991, %v2029
    %v2031 = vsel %vm1135, %v1999, %v1995
    %v2032 = vsel %vm321, %v2003, %v2031
    %v2033 = vsel %vm1138, %v2007, %v2032
    %v2034 = vsel %vm1140, %v2011, %v2033
    %v2035 = vsel %vm1142, %v2015, %v2034
    %v2036 = vsel %vm1144, %v2019, %v2035
    %v2037 = vsel %vm1146, %v2023, %v2036
    %v2040 = vsel %vm861, %v2030, -inf
    %2041 = vmax.xlane.f32.xlu0 %v2040
    %v2042 = vpop.xlane.xlu0 %2041
    %v2043 = vsel %vm861, %v2037, -inf
    %2044 = vmax.xlane.f32.xlu0 %v2043
    %v2045 = vpop.xlane.xlu0 %2044
    %v2048 = vlaneseq
    %v2049 = vshrl.u32 %v2048, 7
    %v2050 = vsub.s32 0, %v2049
    %v2051 = vrot.slane %v2042, %v2050
    %v2052 = vlaneseq
    %v2053 = vshrl.u32 %v2052, 7
    %v2054 = vsub.s32 1, %v2053
    %v2055 = vrot.slane %v2042, %v2054
    %v2056 = vlaneseq
    %v2057 = vshrl.u32 %v2056, 7
    %v2058 = vsub.s32 2, %v2057
    %v2059 = vrot.slane %v2042, %v2058
    %v2060 = vlaneseq
    %v2061 = vshrl.u32 %v2060, 7
    %v2062 = vsub.s32 3, %v2061
    %v2063 = vrot.slane %v2042, %v2062
    %v2064 = vlaneseq
    %v2065 = vshrl.u32 %v2064, 7
    %v2066 = vsub.s32 4, %v2065
    %v2067 = vrot.slane %v2042, %v2066
    %v2068 = vlaneseq
    %v2069 = vshrl.u32 %v2068, 7
    %v2070 = vsub.s32 5, %v2069
    %v2071 = vrot.slane %v2042, %v2070
    %v2072 = vlaneseq
    %v2073 = vshrl.u32 %v2072, 7
    %v2074 = vsub.s32 6, %v2073
    %v2075 = vrot.slane %v2042, %v2074
    %v2076 = vlaneseq
    %v2077 = vshrl.u32 %v2076, 7
    %v2078 = vsub.s32 7, %v2077
    %v2079 = vrot.slane %v2042, %v2078
    %v2080 = vlaneseq
    %v2081 = vshrl.u32 %v2080, 7
    %v2082 = vsub.s32 0, %v2081
    %v2083 = vrot.slane %v2045, %v2082
    %v2084 = vlaneseq
    %v2085 = vshrl.u32 %v2084, 7
    %v2086 = vsub.s32 1, %v2085
    %v2087 = vrot.slane %v2045, %v2086
    %v2088 = vlaneseq
    %v2089 = vshrl.u32 %v2088, 7
    %v2090 = vsub.s32 2, %v2089
    %v2091 = vrot.slane %v2045, %v2090
    %v2092 = vlaneseq
    %v2093 = vshrl.u32 %v2092, 7
    %v2094 = vsub.s32 3, %v2093
    %v2095 = vrot.slane %v2045, %v2094
    %v2096 = vlaneseq
    %v2097 = vshrl.u32 %v2096, 7
    %v2098 = vsub.s32 4, %v2097
    %v2099 = vrot.slane %v2045, %v2098
    %v2100 = vlaneseq
    %v2101 = vshrl.u32 %v2100, 7
    %v2102 = vsub.s32 5, %v2101
    %v2103 = vrot.slane %v2045, %v2102
    %v2104 = vlaneseq
    %v2105 = vshrl.u32 %v2104, 7
    %v2106 = vsub.s32 6, %v2105
    %v2107 = vrot.slane %v2045, %v2106
    %v2108 = vlaneseq
    %v2109 = vshrl.u32 %v2108, 7
    %v2110 = vsub.s32 7, %v2109
    %v2111 = vrot.slane %v2045, %v2110
    %v2128 = vsub.f32 %v1880, %v2051
    %v2129 = vsub.f32 %v1881, %v2055
    %v2130 = vsub.f32 %v1882, %v2059
    %v2131 = vsub.f32 %v1883, %v2063
    %v2132 = vsub.f32 %v1884, %v2067
    %v2133 = vsub.f32 %v1885, %v2071
    %v2134 = vsub.f32 %v1886, %v2075
    %v2135 = vsub.f32 %v1887, %v2079
    %v2136 = vsub.f32 %v1888, %v2083
    %v2137 = vsub.f32 %v1889, %v2087
    %v2138 = vsub.f32 %v1890, %v2091
    %v2139 = vsub.f32 %v1891, %v2095
    %v2140 = vsub.f32 %v1892, %v2099
    %v2141 = vsub.f32 %v1893, %v2103
    %v2142 = vsub.f32 %v1894, %v2107
    %v2143 = vsub.f32 %v1895, %v2111
    %v2144 = vmul.f32 %v2128, 1.442695
    %v2145 = vpow.pop %v2144
    %v2146 = vmul.f32 %v2129, 1.442695
    %v2147 = vpow.pop %v2146
    %v2148 = vmul.f32 %v2130, 1.442695
    %v2149 = vpow.pop %v2148
    %v2150 = vmul.f32 %v2131, 1.442695
    %v2151 = vpow.pop %v2150
    %v2152 = vmul.f32 %v2132, 1.442695
    %v2153 = vpow.pop %v2152
    %v2154 = vmul.f32 %v2133, 1.442695
    %v2155 = vpow.pop %v2154
    %v2156 = vmul.f32 %v2134, 1.442695
    %v2157 = vpow.pop %v2156
    %v2158 = vmul.f32 %v2135, 1.442695
    %v2159 = vpow.pop %v2158
    %v2160 = vmul.f32 %v2136, 1.442695
    %v2161 = vpow.pop %v2160
    %v2162 = vmul.f32 %v2137, 1.442695
    %v2163 = vpow.pop %v2162
    %v2164 = vmul.f32 %v2138, 1.442695
    %v2165 = vpow.pop %v2164
    %v2166 = vmul.f32 %v2139, 1.442695
    %v2167 = vpow.pop %v2166
    %v2168 = vmul.f32 %v2140, 1.442695
    %v2169 = vpow.pop %v2168
    %v2170 = vmul.f32 %v2141, 1.442695
    %v2171 = vpow.pop %v2170
    %v2172 = vmul.f32 %v2142, 1.442695
    %v2173 = vpow.pop %v2172
    %v2174 = vmul.f32 %v2143, 1.442695
    %v2175 = vpow.pop %v2174
    %2192 = vset.pattern.permute.xlu0 0
    %2193 = vperm.xlu0 %2192, %v2145
    %v2194 = vpop.permute.xlu0 %2193
    %2195 = vset.pattern.permute.xlu0 0
    %2196 = vperm.xlu0 %2195, %v2147
    %v2197 = vpop.permute.xlu0 %2196
    %2198 = vset.pattern.permute.xlu0 0
    %2199 = vperm.xlu0 %2198, %v2149
    %v2200 = vpop.permute.xlu0 %2199
    %2201 = vset.pattern.permute.xlu0 0
    %2202 = vperm.xlu0 %2201, %v2151
    %v2203 = vpop.permute.xlu0 %2202
    %2204 = vset.pattern.permute.xlu0 0
    %2205 = vperm.xlu0 %2204, %v2153
    %v2206 = vpop.permute.xlu0 %2205
    %2207 = vset.pattern.permute.xlu0 0
    %2208 = vperm.xlu0 %2207, %v2155
    %v2209 = vpop.permute.xlu0 %2208
    %2210 = vset.pattern.permute.xlu0 0
    %2211 = vperm.xlu0 %2210, %v2157
    %v2212 = vpop.permute.xlu0 %2211
    %2213 = vset.pattern.permute.xlu0 0
    %2214 = vperm.xlu0 %2213, %v2159
    %v2215 = vpop.permute.xlu0 %2214
    %2216 = vset.pattern.permute.xlu0 0
    %2217 = vperm.xlu0 %2216, %v2161
    %v2218 = vpop.permute.xlu0 %2217
    %2219 = vset.pattern.permute.xlu0 0
    %2220 = vperm.xlu0 %2219, %v2163
    %v2221 = vpop.permute.xlu0 %2220
    %2222 = vset.pattern.permute.xlu0 0
    %2223 = vperm.xlu0 %2222, %v2165
    %v2224 = vpop.permute.xlu0 %2223
    %2225 = vset.pattern.permute.xlu0 0
    %2226 = vperm.xlu0 %2225, %v2167
    %v2227 = vpop.permute.xlu0 %2226
    %2228 = vset.pattern.permute.xlu0 0
    %2229 = vperm.xlu0 %2228, %v2169
    %v2230 = vpop.permute.xlu0 %2229
    %2231 = vset.pattern.permute.xlu0 0
    %2232 = vperm.xlu0 %2231, %v2171
    %v2233 = vpop.permute.xlu0 %2232
    %2234 = vset.pattern.permute.xlu0 0
    %2235 = vperm.xlu0 %2234, %v2173
    %v2236 = vpop.permute.xlu0 %2235
    %2237 = vset.pattern.permute.xlu0 0
    %2238 = vperm.xlu0 %2237, %v2175
    %v2239 = vpop.permute.xlu0 %2238
    %v2240 = vlaneseq
    %v2241 = vshrl.u32 %v2240, 7
    %v2242 = vsub.s32 %v45, %v2241
    %v2243 = vrot.slane %v2194, %v2242
    %v2244 = vlaneseq
    %v2245 = vshrl.u32 %v2244, 7
    %v2246 = vsub.s32 %v45, %v2245
    %v2247 = vrot.slane %v2197, %v2246
    %v2248 = vlaneseq
    %v2249 = vshrl.u32 %v2248, 7
    %v2250 = vsub.s32 %v45, %v2249
    %v2251 = vrot.slane %v2200, %v2250
    %v2252 = vlaneseq
    %v2253 = vshrl.u32 %v2252, 7
    %v2254 = vsub.s32 %v45, %v2253
    %v2255 = vrot.slane %v2203, %v2254
    %v2256 = vlaneseq
    %v2257 = vshrl.u32 %v2256, 7
    %v2258 = vsub.s32 %v45, %v2257
    %v2259 = vrot.slane %v2206, %v2258
    %v2260 = vlaneseq
    %v2261 = vshrl.u32 %v2260, 7
    %v2262 = vsub.s32 %v45, %v2261
    %v2263 = vrot.slane %v2209, %v2262
    %v2264 = vlaneseq
    %v2265 = vshrl.u32 %v2264, 7
    %v2266 = vsub.s32 %v45, %v2265
    %v2267 = vrot.slane %v2212, %v2266
    %v2268 = vlaneseq
    %v2269 = vshrl.u32 %v2268, 7
    %v2270 = vsub.s32 %v45, %v2269
    %v2271 = vrot.slane %v2215, %v2270
    %v2272 = vlaneseq
    %v2273 = vshrl.u32 %v2272, 7
    %v2274 = vsub.s32 %v45, %v2273
    %v2275 = vrot.slane %v2218, %v2274
    %v2276 = vlaneseq
    %v2277 = vshrl.u32 %v2276, 7
    %v2278 = vsub.s32 %v45, %v2277
    %v2279 = vrot.slane %v2221, %v2278
    %v2280 = vlaneseq
    %v2281 = vshrl.u32 %v2280, 7
    %v2282 = vsub.s32 %v45, %v2281
    %v2283 = vrot.slane %v2224, %v2282
    %v2284 = vlaneseq
    %v2285 = vshrl.u32 %v2284, 7
    %v2286 = vsub.s32 %v45, %v2285
    %v2287 = vrot.slane %v2227, %v2286
    %v2288 = vlaneseq
    %v2289 = vshrl.u32 %v2288, 7
    %v2290 = vsub.s32 %v45, %v2289
    %v2291 = vrot.slane %v2230, %v2290
    %v2292 = vlaneseq
    %v2293 = vshrl.u32 %v2292, 7
    %v2294 = vsub.s32 %v45, %v2293
    %v2295 = vrot.slane %v2233, %v2294
    %v2296 = vlaneseq
    %v2297 = vshrl.u32 %v2296, 7
    %v2298 = vsub.s32 %v45, %v2297
    %v2299 = vrot.slane %v2236, %v2298
    %v2300 = vlaneseq
    %v2301 = vshrl.u32 %v2300, 7
    %v2302 = vsub.s32 %v45, %v2301
    %v2303 = vrot.slane %v2239, %v2302
    %v2304 = vsel %vm1135, %v2247, %v2243
    %v2305 = vsel %vm321, %v2251, %v2304
    %v2306 = vsel %vm1138, %v2255, %v2305
    %v2307 = vsel %vm1140, %v2259, %v2306
    %v2308 = vsel %vm1142, %v2263, %v2307
    %v2309 = vsel %vm1144, %v2267, %v2308
    %v2310 = vsel %vm1146, %v2271, %v2309
    %v2311 = vsel %vm1135, %v2279, %v2275
    %v2312 = vsel %vm321, %v2283, %v2311
    %v2313 = vsel %vm1138, %v2287, %v2312
    %v2314 = vsel %vm1140, %v2291, %v2313
    %v2315 = vsel %vm1142, %v2295, %v2314
    %v2316 = vsel %vm1144, %v2299, %v2315
    %v2317 = vsel %vm1146, %v2303, %v2316
    %v2320 = vsel %vm861, %v2310, 0.0
    %2321 = vadd.xlane.f32.xlu0 %v2320
    %v2322 = vpop.xlane.xlu0 %2321
    %v2323 = vsel %vm861, %v2317, 0.0
    %2324 = vadd.xlane.f32.xlu0 %v2323
    %v2325 = vpop.xlane.xlu0 %2324
    %v2326 = vrcp.pop %v2322
    %v2327 = vrcp.pop %v2325
    %v2330 = vlaneseq
    %v2331 = vshrl.u32 %v2330, 7
    %v2332 = vsub.s32 0, %v2331
    %v2333 = vrot.slane %v2326, %v2332
    %v2334 = vlaneseq
    %v2335 = vshrl.u32 %v2334, 7
    %v2336 = vsub.s32 1, %v2335
    %v2337 = vrot.slane %v2326, %v2336
    %v2338 = vlaneseq
    %v2339 = vshrl.u32 %v2338, 7
    %v2340 = vsub.s32 2, %v2339
    %v2341 = vrot.slane %v2326, %v2340
    %v2342 = vlaneseq
    %v2343 = vshrl.u32 %v2342, 7
    %v2344 = vsub.s32 3, %v2343
    %v2345 = vrot.slane %v2326, %v2344
    %v2346 = vlaneseq
    %v2347 = vshrl.u32 %v2346, 7
    %v2348 = vsub.s32 4, %v2347
    %v2349 = vrot.slane %v2326, %v2348
    %v2350 = vlaneseq
    %v2351 = vshrl.u32 %v2350, 7
    %v2352 = vsub.s32 5, %v2351
    %v2353 = vrot.slane %v2326, %v2352
    %v2354 = vlaneseq
    %v2355 = vshrl.u32 %v2354, 7
    %v2356 = vsub.s32 6, %v2355
    %v2357 = vrot.slane %v2326, %v2356
    %v2358 = vlaneseq
    %v2359 = vshrl.u32 %v2358, 7
    %v2360 = vsub.s32 7, %v2359
    %v2361 = vrot.slane %v2326, %v2360
    %v2362 = vlaneseq
    %v2363 = vshrl.u32 %v2362, 7
    %v2364 = vsub.s32 0, %v2363
    %v2365 = vrot.slane %v2327, %v2364
    %v2366 = vlaneseq
    %v2367 = vshrl.u32 %v2366, 7
    %v2368 = vsub.s32 1, %v2367
    %v2369 = vrot.slane %v2327, %v2368
    %v2370 = vlaneseq
    %v2371 = vshrl.u32 %v2370, 7
    %v2372 = vsub.s32 2, %v2371
    %v2373 = vrot.slane %v2327, %v2372
    %v2374 = vlaneseq
    %v2375 = vshrl.u32 %v2374, 7
    %v2376 = vsub.s32 3, %v2375
    %v2377 = vrot.slane %v2327, %v2376
    %v2378 = vlaneseq
    %v2379 = vshrl.u32 %v2378, 7
    %v2380 = vsub.s32 4, %v2379
    %v2381 = vrot.slane %v2327, %v2380
    %v2382 = vlaneseq
    %v2383 = vshrl.u32 %v2382, 7
    %v2384 = vsub.s32 5, %v2383
    %v2385 = vrot.slane %v2327, %v2384
    %v2386 = vlaneseq
    %v2387 = vshrl.u32 %v2386, 7
    %v2388 = vsub.s32 6, %v2387
    %v2389 = vrot.slane %v2327, %v2388
    %v2390 = vlaneseq
    %v2391 = vshrl.u32 %v2390, 7
    %v2392 = vsub.s32 7, %v2391
    %v2393 = vrot.slane %v2327, %v2392
    %v2410 = vmul.f32 %v2145, %v2333
    %v2411 = vmul.f32 %v2147, %v2337
    %v2412 = vmul.f32 %v2149, %v2341
    %v2413 = vmul.f32 %v2151, %v2345
    %v2414 = vmul.f32 %v2153, %v2349
    %v2415 = vmul.f32 %v2155, %v2353
    %v2416 = vmul.f32 %v2157, %v2357
    %v2417 = vmul.f32 %v2159, %v2361
    %v2418 = vmul.f32 %v2161, %v2365
    %v2419 = vmul.f32 %v2163, %v2369
    %v2420 = vmul.f32 %v2165, %v2373
    %v2421 = vmul.f32 %v2167, %v2377
    %v2422 = vmul.f32 %v2169, %v2381
    %v2423 = vmul.f32 %v2171, %v2385
    %v2424 = vmul.f32 %v2173, %v2389
    %v2425 = vmul.f32 %v2175, %v2393
    %2427 = vset.pattern.permute.xlu0 0
    %2428 = vperm.xlu0 %2427, %v2410
    %v2429 = vpop.permute.xlu0 %2428
    %2432 = vset.pattern.permute.xlu0 0
    %2433 = vperm.xlu0 %2432, %v2411
    %v2434 = vpop.permute.xlu0 %2433
    %2437 = vset.pattern.permute.xlu0 0
    %2438 = vperm.xlu0 %2437, %v2412
    %v2439 = vpop.permute.xlu0 %2438
    %2442 = vset.pattern.permute.xlu0 0
    %2443 = vperm.xlu0 %2442, %v2413
    %v2444 = vpop.permute.xlu0 %2443
    %2447 = vset.pattern.permute.xlu0 0
    %2448 = vperm.xlu0 %2447, %v2414
    %v2449 = vpop.permute.xlu0 %2448
    %2452 = vset.pattern.permute.xlu0 0
    %2453 = vperm.xlu0 %2452, %v2415
    %v2454 = vpop.permute.xlu0 %2453
    %2457 = vset.pattern.permute.xlu0 0
    %2458 = vperm.xlu0 %2457, %v2416
    %v2459 = vpop.permute.xlu0 %2458
    %2462 = vset.pattern.permute.xlu0 0
    %2463 = vperm.xlu0 %2462, %v2417
    %v2464 = vpop.permute.xlu0 %2463
    %2467 = vset.pattern.permute.xlu0 0
    %2468 = vperm.xlu0 %2467, %v2418
    %v2469 = vpop.permute.xlu0 %2468
    %2472 = vset.pattern.permute.xlu0 0
    %2473 = vperm.xlu0 %2472, %v2419
    %v2474 = vpop.permute.xlu0 %2473
    %2477 = vset.pattern.permute.xlu0 0
    %2478 = vperm.xlu0 %2477, %v2420
    %v2479 = vpop.permute.xlu0 %2478
    %2482 = vset.pattern.permute.xlu0 0
    %2483 = vperm.xlu0 %2482, %v2421
    %v2484 = vpop.permute.xlu0 %2483
    %2487 = vset.pattern.permute.xlu0 0
    %2488 = vperm.xlu0 %2487, %v2422
    %v2489 = vpop.permute.xlu0 %2488
    %2492 = vset.pattern.permute.xlu0 0
    %2493 = vperm.xlu0 %2492, %v2423
    %v2494 = vpop.permute.xlu0 %2493
    %2497 = vset.pattern.permute.xlu0 0
    %2498 = vperm.xlu0 %2497, %v2424
    %v2499 = vpop.permute.xlu0 %2498
    %2502 = vset.pattern.permute.xlu0 0
    %2503 = vperm.xlu0 %2502, %v2425
    %v2504 = vpop.permute.xlu0 %2503
    %v2506 = vmul.f32 %v2429, %v304
    %v2507 = vmul.f32 %v2434, %v304
    %v2508 = vmul.f32 %v2439, %v304
    %v2509 = vmul.f32 %v2444, %v304
    %v2510 = vmul.f32 %v2449, %v304
    %v2511 = vmul.f32 %v2454, %v304
    %v2512 = vmul.f32 %v2459, %v304
    %v2513 = vmul.f32 %v2464, %v304
    %v2514 = vmul.f32 %v2469, %v309
    %v2515 = vmul.f32 %v2474, %v309
    %v2516 = vmul.f32 %v2479, %v309
    %v2517 = vmul.f32 %v2484, %v309
    %v2518 = vmul.f32 %v2489, %v309
    %v2519 = vmul.f32 %v2494, %v309
    %v2520 = vmul.f32 %v2499, %v309
    %v2521 = vmul.f32 %v2504, %v309
    %vm2522 = vcmask 392512
    %v2523 = vsel %vm2522, %v2506, 0.0
    %v2524 = vrot.slane %v2523, 4
    %v2525 = vadd.f32 %v2523, %v2524
    %v2526 = vrot.slane %v2525, 2
    %v2527 = vadd.f32 %v2525, %v2526
    %v2528 = vrot.slane %v2527, 1
    %v2529 = vadd.f32 %v2527, %v2528
    %v2530 = vsel %vm2522, %v2507, 0.0
    %v2531 = vrot.slane %v2530, 4
    %v2532 = vadd.f32 %v2530, %v2531
    %v2533 = vrot.slane %v2532, 2
    %v2534 = vadd.f32 %v2532, %v2533
    %v2535 = vrot.slane %v2534, 1
    %v2536 = vadd.f32 %v2534, %v2535
    %v2537 = vsel %vm2522, %v2508, 0.0
    %v2538 = vrot.slane %v2537, 4
    %v2539 = vadd.f32 %v2537, %v2538
    %v2540 = vrot.slane %v2539, 2
    %v2541 = vadd.f32 %v2539, %v2540
    %v2542 = vrot.slane %v2541, 1
    %v2543 = vadd.f32 %v2541, %v2542
    %v2544 = vsel %vm2522, %v2509, 0.0
    %v2545 = vrot.slane %v2544, 4
    %v2546 = vadd.f32 %v2544, %v2545
    %v2547 = vrot.slane %v2546, 2
    %v2548 = vadd.f32 %v2546, %v2547
    %v2549 = vrot.slane %v2548, 1
    %v2550 = vadd.f32 %v2548, %v2549
    %v2551 = vsel %vm2522, %v2510, 0.0
    %v2552 = vrot.slane %v2551, 4
    %v2553 = vadd.f32 %v2551, %v2552
    %v2554 = vrot.slane %v2553, 2
    %v2555 = vadd.f32 %v2553, %v2554
    %v2556 = vrot.slane %v2555, 1
    %v2557 = vadd.f32 %v2555, %v2556
    %v2558 = vsel %vm2522, %v2511, 0.0
    %v2559 = vrot.slane %v2558, 4
    %v2560 = vadd.f32 %v2558, %v2559
    %v2561 = vrot.slane %v2560, 2
    %v2562 = vadd.f32 %v2560, %v2561
    %v2563 = vrot.slane %v2562, 1
    %v2564 = vadd.f32 %v2562, %v2563
    %v2565 = vsel %vm2522, %v2512, 0.0
    %v2566 = vrot.slane %v2565, 4
    %v2567 = vadd.f32 %v2565, %v2566
    %v2568 = vrot.slane %v2567, 2
    %v2569 = vadd.f32 %v2567, %v2568
    %v2570 = vrot.slane %v2569, 1
    %v2571 = vadd.f32 %v2569, %v2570
    %v2572 = vsel %vm2522, %v2513, 0.0
    %v2573 = vrot.slane %v2572, 4
    %v2574 = vadd.f32 %v2572, %v2573
    %v2575 = vrot.slane %v2574, 2
    %v2576 = vadd.f32 %v2574, %v2575
    %v2577 = vrot.slane %v2576, 1
    %v2578 = vadd.f32 %v2576, %v2577
    %v2579 = vsel %vm2522, %v2514, 0.0
    %v2580 = vrot.slane %v2579, 4
    %v2581 = vadd.f32 %v2579, %v2580
    %v2582 = vrot.slane %v2581, 2
    %v2583 = vadd.f32 %v2581, %v2582
    %v2584 = vrot.slane %v2583, 1
    %v2585 = vadd.f32 %v2583, %v2584
    %v2586 = vsel %vm2522, %v2515, 0.0
    %v2587 = vrot.slane %v2586, 4
    %v2588 = vadd.f32 %v2586, %v2587
    %v2589 = vrot.slane %v2588, 2
    %v2590 = vadd.f32 %v2588, %v2589
    %v2591 = vrot.slane %v2590, 1
    %v2592 = vadd.f32 %v2590, %v2591
    %v2593 = vsel %vm2522, %v2516, 0.0
    %v2594 = vrot.slane %v2593, 4
    %v2595 = vadd.f32 %v2593, %v2594
    %v2596 = vrot.slane %v2595, 2
    %v2597 = vadd.f32 %v2595, %v2596
    %v2598 = vrot.slane %v2597, 1
    %v2599 = vadd.f32 %v2597, %v2598
    %v2600 = vsel %vm2522, %v2517, 0.0
    %v2601 = vrot.slane %v2600, 4
    %v2602 = vadd.f32 %v2600, %v2601
    %v2603 = vrot.slane %v2602, 2
    %v2604 = vadd.f32 %v2602, %v2603
    %v2605 = vrot.slane %v2604, 1
    %v2606 = vadd.f32 %v2604, %v2605
    %v2607 = vsel %vm2522, %v2518, 0.0
    %v2608 = vrot.slane %v2607, 4
    %v2609 = vadd.f32 %v2607, %v2608
    %v2610 = vrot.slane %v2609, 2
    %v2611 = vadd.f32 %v2609, %v2610
    %v2612 = vrot.slane %v2611, 1
    %v2613 = vadd.f32 %v2611, %v2612
    %v2614 = vsel %vm2522, %v2519, 0.0
    %v2615 = vrot.slane %v2614, 4
    %v2616 = vadd.f32 %v2614, %v2615
    %v2617 = vrot.slane %v2616, 2
    %v2618 = vadd.f32 %v2616, %v2617
    %v2619 = vrot.slane %v2618, 1
    %v2620 = vadd.f32 %v2618, %v2619
    %v2621 = vsel %vm2522, %v2520, 0.0
    %v2622 = vrot.slane %v2621, 4
    %v2623 = vadd.f32 %v2621, %v2622
    %v2624 = vrot.slane %v2623, 2
    %v2625 = vadd.f32 %v2623, %v2624
    %v2626 = vrot.slane %v2625, 1
    %v2627 = vadd.f32 %v2625, %v2626
    %v2628 = vsel %vm2522, %v2521, 0.0
    %v2629 = vrot.slane %v2628, 4
    %v2630 = vadd.f32 %v2628, %v2629
    %v2631 = vrot.slane %v2630, 2
    %v2632 = vadd.f32 %v2630, %v2631
    %v2633 = vrot.slane %v2632, 1
    %v2634 = vadd.f32 %v2632, %v2633
    %2635 = vrot.lane.b32.xlu0 %v845, 112
    %v2636 = vpop.permute.xlu0 %2635
    %2637 = vrot.lane.b32.xlu0 %v846, 112
    %v2638 = vpop.permute.xlu0 %2637
    %2639 = vrot.lane.b32.xlu0 %v847, 112
    %v2640 = vpop.permute.xlu0 %2639
    %2641 = vrot.lane.b32.xlu0 %v848, 112
    %v2642 = vpop.permute.xlu0 %2641
    %2643 = vrot.lane.b32.xlu0 %v849, 112
    %v2644 = vpop.permute.xlu0 %2643
    %2645 = vrot.lane.b32.xlu0 %v850, 112
    %v2646 = vpop.permute.xlu0 %2645
    %2647 = vrot.lane.b32.xlu0 %v851, 112
    %v2648 = vpop.permute.xlu0 %2647
    %2649 = vrot.lane.b32.xlu0 %v852, 112
    %v2650 = vpop.permute.xlu0 %2649
    %2651 = vrot.lane.b32.xlu0 %v853, 112
    %v2652 = vpop.permute.xlu0 %2651
    %2653 = vrot.lane.b32.xlu0 %v854, 112
    %v2654 = vpop.permute.xlu0 %2653
    %2655 = vrot.lane.b32.xlu0 %v855, 112
    %v2656 = vpop.permute.xlu0 %2655
    %2657 = vrot.lane.b32.xlu0 %v856, 112
    %v2658 = vpop.permute.xlu0 %2657
    %2659 = vrot.lane.b32.xlu0 %v857, 112
    %v2660 = vpop.permute.xlu0 %2659
    %2661 = vrot.lane.b32.xlu0 %v858, 112
    %v2662 = vpop.permute.xlu0 %2661
    %2663 = vrot.lane.b32.xlu0 %v859, 112
    %v2664 = vpop.permute.xlu0 %2663
    %2665 = vrot.lane.b32.xlu0 %v860, 112
    %v2666 = vpop.permute.xlu0 %2665
    %v2683 = vsel %vm861, %v2636, 0.0
    %2684 = vadd.xlane.f32.xlu0 %v2683
    %v2685 = vpop.xlane.xlu0 %2684
    %v2686 = vsel %vm861, %v2638, 0.0
    %2687 = vadd.xlane.f32.xlu0 %v2686
    %v2688 = vpop.xlane.xlu0 %2687
    %v2689 = vsel %vm861, %v2640, 0.0
    %2690 = vadd.xlane.f32.xlu0 %v2689
    %v2691 = vpop.xlane.xlu0 %2690
    %v2692 = vsel %vm861, %v2642, 0.0
    %2693 = vadd.xlane.f32.xlu0 %v2692
    %v2694 = vpop.xlane.xlu0 %2693
    %v2695 = vsel %vm861, %v2644, 0.0
    %2696 = vadd.xlane.f32.xlu0 %v2695
    %v2697 = vpop.xlane.xlu0 %2696
    %v2698 = vsel %vm861, %v2646, 0.0
    %2699 = vadd.xlane.f32.xlu0 %v2698
    %v2700 = vpop.xlane.xlu0 %2699
    %v2701 = vsel %vm861, %v2648, 0.0
    %2702 = vadd.xlane.f32.xlu0 %v2701
    %v2703 = vpop.xlane.xlu0 %2702
    %v2704 = vsel %vm861, %v2650, 0.0
    %2705 = vadd.xlane.f32.xlu0 %v2704
    %v2706 = vpop.xlane.xlu0 %2705
    %v2707 = vsel %vm861, %v2652, 0.0
    %2708 = vadd.xlane.f32.xlu0 %v2707
    %v2709 = vpop.xlane.xlu0 %2708
    %v2710 = vsel %vm861, %v2654, 0.0
    %2711 = vadd.xlane.f32.xlu0 %v2710
    %v2712 = vpop.xlane.xlu0 %2711
    %v2713 = vsel %vm861, %v2656, 0.0
    %2714 = vadd.xlane.f32.xlu0 %v2713
    %v2715 = vpop.xlane.xlu0 %2714
    %v2716 = vsel %vm861, %v2658, 0.0
    %2717 = vadd.xlane.f32.xlu0 %v2716
    %v2718 = vpop.xlane.xlu0 %2717
    %v2719 = vsel %vm861, %v2660, 0.0
    %2720 = vadd.xlane.f32.xlu0 %v2719
    %v2721 = vpop.xlane.xlu0 %2720
    %v2722 = vsel %vm861, %v2662, 0.0
    %2723 = vadd.xlane.f32.xlu0 %v2722
    %v2724 = vpop.xlane.xlu0 %2723
    %v2725 = vsel %vm861, %v2664, 0.0
    %2726 = vadd.xlane.f32.xlu0 %v2725
    %v2727 = vpop.xlane.xlu0 %2726
    %v2728 = vsel %vm861, %v2666, 0.0
    %2729 = vadd.xlane.f32.xlu0 %v2728
    %v2730 = vpop.xlane.xlu0 %2729
    %v2731 = vmul.f32 %v2685, 0.125
    %v2732 = vmul.f32 %v2688, 0.125
    %v2733 = vmul.f32 %v2691, 0.125
    %v2734 = vmul.f32 %v2694, 0.125
    %v2735 = vmul.f32 %v2697, 0.125
    %v2736 = vmul.f32 %v2700, 0.125
    %v2737 = vmul.f32 %v2703, 0.125
    %v2738 = vmul.f32 %v2706, 0.125
    %v2739 = vmul.f32 %v2709, 0.125
    %v2740 = vmul.f32 %v2712, 0.125
    %v2741 = vmul.f32 %v2715, 0.125
    %v2742 = vmul.f32 %v2718, 0.125
    %v2743 = vmul.f32 %v2721, 0.125
    %v2744 = vmul.f32 %v2724, 0.125
    %v2745 = vmul.f32 %v2727, 0.125
    %v2746 = vmul.f32 %v2730, 0.125
    %v2747 = vadd.f32 %v2731, %v933
    %v2748 = vadd.f32 %v2732, %v940
    %v2749 = vadd.f32 %v2733, %v947
    %v2750 = vadd.f32 %v2734, %v954
    %v2751 = vadd.f32 %v2735, %v961
    %v2752 = vadd.f32 %v2736, %v968
    %v2753 = vadd.f32 %v2737, %v975
    %v2754 = vadd.f32 %v2738, %v982
    %v2755 = vadd.f32 %v2739, %v933
    %v2756 = vadd.f32 %v2740, %v940
    %v2757 = vadd.f32 %v2741, %v947
    %v2758 = vadd.f32 %v2742, %v954
    %v2759 = vadd.f32 %v2743, %v961
    %v2760 = vadd.f32 %v2744, %v968
    %v2761 = vadd.f32 %v2745, %v975
    %v2762 = vadd.f32 %v2746, %v982
    %2779 = vset.pattern.permute.xlu0 0
    %2780 = vperm.xlu0 %2779, %v2747
    %v2781 = vpop.permute.xlu0 %2780
    %2782 = vset.pattern.permute.xlu0 0
    %2783 = vperm.xlu0 %2782, %v2748
    %v2784 = vpop.permute.xlu0 %2783
    %2785 = vset.pattern.permute.xlu0 0
    %2786 = vperm.xlu0 %2785, %v2749
    %v2787 = vpop.permute.xlu0 %2786
    %2788 = vset.pattern.permute.xlu0 0
    %2789 = vperm.xlu0 %2788, %v2750
    %v2790 = vpop.permute.xlu0 %2789
    %2791 = vset.pattern.permute.xlu0 0
    %2792 = vperm.xlu0 %2791, %v2751
    %v2793 = vpop.permute.xlu0 %2792
    %2794 = vset.pattern.permute.xlu0 0
    %2795 = vperm.xlu0 %2794, %v2752
    %v2796 = vpop.permute.xlu0 %2795
    %2797 = vset.pattern.permute.xlu0 0
    %2798 = vperm.xlu0 %2797, %v2753
    %v2799 = vpop.permute.xlu0 %2798
    %2800 = vset.pattern.permute.xlu0 0
    %2801 = vperm.xlu0 %2800, %v2754
    %v2802 = vpop.permute.xlu0 %2801
    %2803 = vset.pattern.permute.xlu0 0
    %2804 = vperm.xlu0 %2803, %v2755
    %v2805 = vpop.permute.xlu0 %2804
    %2806 = vset.pattern.permute.xlu0 0
    %2807 = vperm.xlu0 %2806, %v2756
    %v2808 = vpop.permute.xlu0 %2807
    %2809 = vset.pattern.permute.xlu0 0
    %2810 = vperm.xlu0 %2809, %v2757
    %v2811 = vpop.permute.xlu0 %2810
    %2812 = vset.pattern.permute.xlu0 0
    %2813 = vperm.xlu0 %2812, %v2758
    %v2814 = vpop.permute.xlu0 %2813
    %2815 = vset.pattern.permute.xlu0 0
    %2816 = vperm.xlu0 %2815, %v2759
    %v2817 = vpop.permute.xlu0 %2816
    %2818 = vset.pattern.permute.xlu0 0
    %2819 = vperm.xlu0 %2818, %v2760
    %v2820 = vpop.permute.xlu0 %2819
    %2821 = vset.pattern.permute.xlu0 0
    %2822 = vperm.xlu0 %2821, %v2761
    %v2823 = vpop.permute.xlu0 %2822
    %2824 = vset.pattern.permute.xlu0 0
    %2825 = vperm.xlu0 %2824, %v2762
    %v2826 = vpop.permute.xlu0 %2825
    %v2827 = vlaneseq
    %v2828 = vshrl.u32 %v2827, 7
    %v2829 = vsub.s32 %v45, %v2828
    %v2830 = vrot.slane %v2781, %v2829
    %v2831 = vlaneseq
    %v2832 = vshrl.u32 %v2831, 7
    %v2833 = vsub.s32 %v45, %v2832
    %v2834 = vrot.slane %v2784, %v2833
    %v2835 = vlaneseq
    %v2836 = vshrl.u32 %v2835, 7
    %v2837 = vsub.s32 %v45, %v2836
    %v2838 = vrot.slane %v2787, %v2837
    %v2839 = vlaneseq
    %v2840 = vshrl.u32 %v2839, 7
    %v2841 = vsub.s32 %v45, %v2840
    %v2842 = vrot.slane %v2790, %v2841
    %v2843 = vlaneseq
    %v2844 = vshrl.u32 %v2843, 7
    %v2845 = vsub.s32 %v45, %v2844
    %v2846 = vrot.slane %v2793, %v2845
    %v2847 = vlaneseq
    %v2848 = vshrl.u32 %v2847, 7
    %v2849 = vsub.s32 %v45, %v2848
    %v2850 = vrot.slane %v2796, %v2849
    %v2851 = vlaneseq
    %v2852 = vshrl.u32 %v2851, 7
    %v2853 = vsub.s32 %v45, %v2852
    %v2854 = vrot.slane %v2799, %v2853
    %v2855 = vlaneseq
    %v2856 = vshrl.u32 %v2855, 7
    %v2857 = vsub.s32 %v45, %v2856
    %v2858 = vrot.slane %v2802, %v2857
    %v2859 = vlaneseq
    %v2860 = vshrl.u32 %v2859, 7
    %v2861 = vsub.s32 %v45, %v2860
    %v2862 = vrot.slane %v2805, %v2861
    %v2863 = vlaneseq
    %v2864 = vshrl.u32 %v2863, 7
    %v2865 = vsub.s32 %v45, %v2864
    %v2866 = vrot.slane %v2808, %v2865
    %v2867 = vlaneseq
    %v2868 = vshrl.u32 %v2867, 7
    %v2869 = vsub.s32 %v45, %v2868
    %v2870 = vrot.slane %v2811, %v2869
    %v2871 = vlaneseq
    %v2872 = vshrl.u32 %v2871, 7
    %v2873 = vsub.s32 %v45, %v2872
    %v2874 = vrot.slane %v2814, %v2873
    %v2875 = vlaneseq
    %v2876 = vshrl.u32 %v2875, 7
    %v2877 = vsub.s32 %v45, %v2876
    %v2878 = vrot.slane %v2817, %v2877
    %v2879 = vlaneseq
    %v2880 = vshrl.u32 %v2879, 7
    %v2881 = vsub.s32 %v45, %v2880
    %v2882 = vrot.slane %v2820, %v2881
    %v2883 = vlaneseq
    %v2884 = vshrl.u32 %v2883, 7
    %v2885 = vsub.s32 %v45, %v2884
    %v2886 = vrot.slane %v2823, %v2885
    %v2887 = vlaneseq
    %v2888 = vshrl.u32 %v2887, 7
    %v2889 = vsub.s32 %v45, %v2888
    %v2890 = vrot.slane %v2826, %v2889
    %v2891 = vsel %vm1135, %v2834, %v2830
    %v2892 = vsel %vm321, %v2838, %v2891
    %v2893 = vsel %vm1138, %v2842, %v2892
    %v2894 = vsel %vm1140, %v2846, %v2893
    %v2895 = vsel %vm1142, %v2850, %v2894
    %v2896 = vsel %vm1144, %v2854, %v2895
    %v2897 = vsel %vm1146, %v2858, %v2896
    %v2898 = vsel %vm1135, %v2866, %v2862
    %v2899 = vsel %vm321, %v2870, %v2898
    %v2900 = vsel %vm1138, %v2874, %v2899
    %v2901 = vsel %vm1140, %v2878, %v2900
    %v2902 = vsel %vm1142, %v2882, %v2901
    %v2903 = vsel %vm1144, %v2886, %v2902
    %v2904 = vsel %vm1146, %v2890, %v2903
    %v2907 = vsel %vm861, %v2897, -inf
    %2908 = vmax.xlane.f32.xlu0 %v2907
    %v2909 = vpop.xlane.xlu0 %2908
    %v2910 = vsel %vm861, %v2904, -inf
    %2911 = vmax.xlane.f32.xlu0 %v2910
    %v2912 = vpop.xlane.xlu0 %2911
    %v2915 = vlaneseq
    %v2916 = vshrl.u32 %v2915, 7
    %v2917 = vsub.s32 0, %v2916
    %v2918 = vrot.slane %v2909, %v2917
    %v2919 = vlaneseq
    %v2920 = vshrl.u32 %v2919, 7
    %v2921 = vsub.s32 1, %v2920
    %v2922 = vrot.slane %v2909, %v2921
    %v2923 = vlaneseq
    %v2924 = vshrl.u32 %v2923, 7
    %v2925 = vsub.s32 2, %v2924
    %v2926 = vrot.slane %v2909, %v2925
    %v2927 = vlaneseq
    %v2928 = vshrl.u32 %v2927, 7
    %v2929 = vsub.s32 3, %v2928
    %v2930 = vrot.slane %v2909, %v2929
    %v2931 = vlaneseq
    %v2932 = vshrl.u32 %v2931, 7
    %v2933 = vsub.s32 4, %v2932
    %v2934 = vrot.slane %v2909, %v2933
    %v2935 = vlaneseq
    %v2936 = vshrl.u32 %v2935, 7
    %v2937 = vsub.s32 5, %v2936
    %v2938 = vrot.slane %v2909, %v2937
    %v2939 = vlaneseq
    %v2940 = vshrl.u32 %v2939, 7
    %v2941 = vsub.s32 6, %v2940
    %v2942 = vrot.slane %v2909, %v2941
    %v2943 = vlaneseq
    %v2944 = vshrl.u32 %v2943, 7
    %v2945 = vsub.s32 7, %v2944
    %v2946 = vrot.slane %v2909, %v2945
    %v2947 = vlaneseq
    %v2948 = vshrl.u32 %v2947, 7
    %v2949 = vsub.s32 0, %v2948
    %v2950 = vrot.slane %v2912, %v2949
    %v2951 = vlaneseq
    %v2952 = vshrl.u32 %v2951, 7
    %v2953 = vsub.s32 1, %v2952
    %v2954 = vrot.slane %v2912, %v2953
    %v2955 = vlaneseq
    %v2956 = vshrl.u32 %v2955, 7
    %v2957 = vsub.s32 2, %v2956
    %v2958 = vrot.slane %v2912, %v2957
    %v2959 = vlaneseq
    %v2960 = vshrl.u32 %v2959, 7
    %v2961 = vsub.s32 3, %v2960
    %v2962 = vrot.slane %v2912, %v2961
    %v2963 = vlaneseq
    %v2964 = vshrl.u32 %v2963, 7
    %v2965 = vsub.s32 4, %v2964
    %v2966 = vrot.slane %v2912, %v2965
    %v2967 = vlaneseq
    %v2968 = vshrl.u32 %v2967, 7
    %v2969 = vsub.s32 5, %v2968
    %v2970 = vrot.slane %v2912, %v2969
    %v2971 = vlaneseq
    %v2972 = vshrl.u32 %v2971, 7
    %v2973 = vsub.s32 6, %v2972
    %v2974 = vrot.slane %v2912, %v2973
    %v2975 = vlaneseq
    %v2976 = vshrl.u32 %v2975, 7
    %v2977 = vsub.s32 7, %v2976
    %v2978 = vrot.slane %v2912, %v2977
    %v2995 = vsub.f32 %v2747, %v2918
    %v2996 = vsub.f32 %v2748, %v2922
    %v2997 = vsub.f32 %v2749, %v2926
    %v2998 = vsub.f32 %v2750, %v2930
    %v2999 = vsub.f32 %v2751, %v2934
    %v3000 = vsub.f32 %v2752, %v2938
    %v3001 = vsub.f32 %v2753, %v2942
    %v3002 = vsub.f32 %v2754, %v2946
    %v3003 = vsub.f32 %v2755, %v2950
    %v3004 = vsub.f32 %v2756, %v2954
    %v3005 = vsub.f32 %v2757, %v2958
    %v3006 = vsub.f32 %v2758, %v2962
    %v3007 = vsub.f32 %v2759, %v2966
    %v3008 = vsub.f32 %v2760, %v2970
    %v3009 = vsub.f32 %v2761, %v2974
    %v3010 = vsub.f32 %v2762, %v2978
    %v3011 = vmul.f32 %v2995, 1.442695
    %v3012 = vpow.pop %v3011
    %v3013 = vmul.f32 %v2996, 1.442695
    %v3014 = vpow.pop %v3013
    %v3015 = vmul.f32 %v2997, 1.442695
    %v3016 = vpow.pop %v3015
    %v3017 = vmul.f32 %v2998, 1.442695
    %v3018 = vpow.pop %v3017
    %v3019 = vmul.f32 %v2999, 1.442695
    %v3020 = vpow.pop %v3019
    %v3021 = vmul.f32 %v3000, 1.442695
    %v3022 = vpow.pop %v3021
    %v3023 = vmul.f32 %v3001, 1.442695
    %v3024 = vpow.pop %v3023
    %v3025 = vmul.f32 %v3002, 1.442695
    %v3026 = vpow.pop %v3025
    %v3027 = vmul.f32 %v3003, 1.442695
    %v3028 = vpow.pop %v3027
    %v3029 = vmul.f32 %v3004, 1.442695
    %v3030 = vpow.pop %v3029
    %v3031 = vmul.f32 %v3005, 1.442695
    %v3032 = vpow.pop %v3031
    %v3033 = vmul.f32 %v3006, 1.442695
    %v3034 = vpow.pop %v3033
    %v3035 = vmul.f32 %v3007, 1.442695
    %v3036 = vpow.pop %v3035
    %v3037 = vmul.f32 %v3008, 1.442695
    %v3038 = vpow.pop %v3037
    %v3039 = vmul.f32 %v3009, 1.442695
    %v3040 = vpow.pop %v3039
    %v3041 = vmul.f32 %v3010, 1.442695
    %v3042 = vpow.pop %v3041
    %3059 = vset.pattern.permute.xlu0 0
    %3060 = vperm.xlu0 %3059, %v3012
    %v3061 = vpop.permute.xlu0 %3060
    %3062 = vset.pattern.permute.xlu0 0
    %3063 = vperm.xlu0 %3062, %v3014
    %v3064 = vpop.permute.xlu0 %3063
    %3065 = vset.pattern.permute.xlu0 0
    %3066 = vperm.xlu0 %3065, %v3016
    %v3067 = vpop.permute.xlu0 %3066
    %3068 = vset.pattern.permute.xlu0 0
    %3069 = vperm.xlu0 %3068, %v3018
    %v3070 = vpop.permute.xlu0 %3069
    %3071 = vset.pattern.permute.xlu0 0
    %3072 = vperm.xlu0 %3071, %v3020
    %v3073 = vpop.permute.xlu0 %3072
    %3074 = vset.pattern.permute.xlu0 0
    %3075 = vperm.xlu0 %3074, %v3022
    %v3076 = vpop.permute.xlu0 %3075
    %3077 = vset.pattern.permute.xlu0 0
    %3078 = vperm.xlu0 %3077, %v3024
    %v3079 = vpop.permute.xlu0 %3078
    %3080 = vset.pattern.permute.xlu0 0
    %3081 = vperm.xlu0 %3080, %v3026
    %v3082 = vpop.permute.xlu0 %3081
    %3083 = vset.pattern.permute.xlu0 0
    %3084 = vperm.xlu0 %3083, %v3028
    %v3085 = vpop.permute.xlu0 %3084
    %3086 = vset.pattern.permute.xlu0 0
    %3087 = vperm.xlu0 %3086, %v3030
    %v3088 = vpop.permute.xlu0 %3087
    %3089 = vset.pattern.permute.xlu0 0
    %3090 = vperm.xlu0 %3089, %v3032
    %v3091 = vpop.permute.xlu0 %3090
    %3092 = vset.pattern.permute.xlu0 0
    %3093 = vperm.xlu0 %3092, %v3034
    %v3094 = vpop.permute.xlu0 %3093
    %3095 = vset.pattern.permute.xlu0 0
    %3096 = vperm.xlu0 %3095, %v3036
    %v3097 = vpop.permute.xlu0 %3096
    %3098 = vset.pattern.permute.xlu0 0
    %3099 = vperm.xlu0 %3098, %v3038
    %v3100 = vpop.permute.xlu0 %3099
    %3101 = vset.pattern.permute.xlu0 0
    %3102 = vperm.xlu0 %3101, %v3040
    %v3103 = vpop.permute.xlu0 %3102
    %3104 = vset.pattern.permute.xlu0 0
    %3105 = vperm.xlu0 %3104, %v3042
    %v3106 = vpop.permute.xlu0 %3105
    %v3107 = vlaneseq
    %v3108 = vshrl.u32 %v3107, 7
    %v3109 = vsub.s32 %v45, %v3108
    %v3110 = vrot.slane %v3061, %v3109
    %v3111 = vlaneseq
    %v3112 = vshrl.u32 %v3111, 7
    %v3113 = vsub.s32 %v45, %v3112
    %v3114 = vrot.slane %v3064, %v3113
    %v3115 = vlaneseq
    %v3116 = vshrl.u32 %v3115, 7
    %v3117 = vsub.s32 %v45, %v3116
    %v3118 = vrot.slane %v3067, %v3117
    %v3119 = vlaneseq
    %v3120 = vshrl.u32 %v3119, 7
    %v3121 = vsub.s32 %v45, %v3120
    %v3122 = vrot.slane %v3070, %v3121
    %v3123 = vlaneseq
    %v3124 = vshrl.u32 %v3123, 7
    %v3125 = vsub.s32 %v45, %v3124
    %v3126 = vrot.slane %v3073, %v3125
    %v3127 = vlaneseq
    %v3128 = vshrl.u32 %v3127, 7
    %v3129 = vsub.s32 %v45, %v3128
    %v3130 = vrot.slane %v3076, %v3129
    %v3131 = vlaneseq
    %v3132 = vshrl.u32 %v3131, 7
    %v3133 = vsub.s32 %v45, %v3132
    %v3134 = vrot.slane %v3079, %v3133
    %v3135 = vlaneseq
    %v3136 = vshrl.u32 %v3135, 7
    %v3137 = vsub.s32 %v45, %v3136
    %v3138 = vrot.slane %v3082, %v3137
    %v3139 = vlaneseq
    %v3140 = vshrl.u32 %v3139, 7
    %v3141 = vsub.s32 %v45, %v3140
    %v3142 = vrot.slane %v3085, %v3141
    %v3143 = vlaneseq
    %v3144 = vshrl.u32 %v3143, 7
    %v3145 = vsub.s32 %v45, %v3144
    %v3146 = vrot.slane %v3088, %v3145
    %v3147 = vlaneseq
    %v3148 = vshrl.u32 %v3147, 7
    %v3149 = vsub.s32 %v45, %v3148
    %v3150 = vrot.slane %v3091, %v3149
    %v3151 = vlaneseq
    %v3152 = vshrl.u32 %v3151, 7
    %v3153 = vsub.s32 %v45, %v3152
    %v3154 = vrot.slane %v3094, %v3153
    %v3155 = vlaneseq
    %v3156 = vshrl.u32 %v3155, 7
    %v3157 = vsub.s32 %v45, %v3156
    %v3158 = vrot.slane %v3097, %v3157
    %v3159 = vlaneseq
    %v3160 = vshrl.u32 %v3159, 7
    %v3161 = vsub.s32 %v45, %v3160
    %v3162 = vrot.slane %v3100, %v3161
    %v3163 = vlaneseq
    %v3164 = vshrl.u32 %v3163, 7
    %v3165 = vsub.s32 %v45, %v3164
    %v3166 = vrot.slane %v3103, %v3165
    %v3167 = vlaneseq
    %v3168 = vshrl.u32 %v3167, 7
    %v3169 = vsub.s32 %v45, %v3168
    %v3170 = vrot.slane %v3106, %v3169
    %v3171 = vsel %vm1135, %v3114, %v3110
    %v3172 = vsel %vm321, %v3118, %v3171
    %v3173 = vsel %vm1138, %v3122, %v3172
    %v3174 = vsel %vm1140, %v3126, %v3173
    %v3175 = vsel %vm1142, %v3130, %v3174
    %v3176 = vsel %vm1144, %v3134, %v3175
    %v3177 = vsel %vm1146, %v3138, %v3176
    %v3178 = vsel %vm1135, %v3146, %v3142
    %v3179 = vsel %vm321, %v3150, %v3178
    %v3180 = vsel %vm1138, %v3154, %v3179
    %v3181 = vsel %vm1140, %v3158, %v3180
    %v3182 = vsel %vm1142, %v3162, %v3181
    %v3183 = vsel %vm1144, %v3166, %v3182
    %v3184 = vsel %vm1146, %v3170, %v3183
    %v3187 = vsel %vm861, %v3177, 0.0
    %3188 = vadd.xlane.f32.xlu0 %v3187
    %v3189 = vpop.xlane.xlu0 %3188
    %v3190 = vsel %vm861, %v3184, 0.0
    %3191 = vadd.xlane.f32.xlu0 %v3190
    %v3192 = vpop.xlane.xlu0 %3191
    %v3193 = vrcp.pop %v3189
    %v3194 = vrcp.pop %v3192
    %v3197 = vlaneseq
    %v3198 = vshrl.u32 %v3197, 7
    %v3199 = vsub.s32 0, %v3198
    %v3200 = vrot.slane %v3193, %v3199
    %v3201 = vlaneseq
    %v3202 = vshrl.u32 %v3201, 7
    %v3203 = vsub.s32 1, %v3202
    %v3204 = vrot.slane %v3193, %v3203
    %v3205 = vlaneseq
    %v3206 = vshrl.u32 %v3205, 7
    %v3207 = vsub.s32 2, %v3206
    %v3208 = vrot.slane %v3193, %v3207
    %v3209 = vlaneseq
    %v3210 = vshrl.u32 %v3209, 7
    %v3211 = vsub.s32 3, %v3210
    %v3212 = vrot.slane %v3193, %v3211
    %v3213 = vlaneseq
    %v3214 = vshrl.u32 %v3213, 7
    %v3215 = vsub.s32 4, %v3214
    %v3216 = vrot.slane %v3193, %v3215
    %v3217 = vlaneseq
    %v3218 = vshrl.u32 %v3217, 7
    %v3219 = vsub.s32 5, %v3218
    %v3220 = vrot.slane %v3193, %v3219
    %v3221 = vlaneseq
    %v3222 = vshrl.u32 %v3221, 7
    %v3223 = vsub.s32 6, %v3222
    %v3224 = vrot.slane %v3193, %v3223
    %v3225 = vlaneseq
    %v3226 = vshrl.u32 %v3225, 7
    %v3227 = vsub.s32 7, %v3226
    %v3228 = vrot.slane %v3193, %v3227
    %v3229 = vlaneseq
    %v3230 = vshrl.u32 %v3229, 7
    %v3231 = vsub.s32 0, %v3230
    %v3232 = vrot.slane %v3194, %v3231
    %v3233 = vlaneseq
    %v3234 = vshrl.u32 %v3233, 7
    %v3235 = vsub.s32 1, %v3234
    %v3236 = vrot.slane %v3194, %v3235
    %v3237 = vlaneseq
    %v3238 = vshrl.u32 %v3237, 7
    %v3239 = vsub.s32 2, %v3238
    %v3240 = vrot.slane %v3194, %v3239
    %v3241 = vlaneseq
    %v3242 = vshrl.u32 %v3241, 7
    %v3243 = vsub.s32 3, %v3242
    %v3244 = vrot.slane %v3194, %v3243
    %v3245 = vlaneseq
    %v3246 = vshrl.u32 %v3245, 7
    %v3247 = vsub.s32 4, %v3246
    %v3248 = vrot.slane %v3194, %v3247
    %v3249 = vlaneseq
    %v3250 = vshrl.u32 %v3249, 7
    %v3251 = vsub.s32 5, %v3250
    %v3252 = vrot.slane %v3194, %v3251
    %v3253 = vlaneseq
    %v3254 = vshrl.u32 %v3253, 7
    %v3255 = vsub.s32 6, %v3254
    %v3256 = vrot.slane %v3194, %v3255
    %v3257 = vlaneseq
    %v3258 = vshrl.u32 %v3257, 7
    %v3259 = vsub.s32 7, %v3258
    %v3260 = vrot.slane %v3194, %v3259
    %v3277 = vmul.f32 %v3012, %v3200
    %v3278 = vmul.f32 %v3014, %v3204
    %v3279 = vmul.f32 %v3016, %v3208
    %v3280 = vmul.f32 %v3018, %v3212
    %v3281 = vmul.f32 %v3020, %v3216
    %v3282 = vmul.f32 %v3022, %v3220
    %v3283 = vmul.f32 %v3024, %v3224
    %v3284 = vmul.f32 %v3026, %v3228
    %v3285 = vmul.f32 %v3028, %v3232
    %v3286 = vmul.f32 %v3030, %v3236
    %v3287 = vmul.f32 %v3032, %v3240
    %v3288 = vmul.f32 %v3034, %v3244
    %v3289 = vmul.f32 %v3036, %v3248
    %v3290 = vmul.f32 %v3038, %v3252
    %v3291 = vmul.f32 %v3040, %v3256
    %v3292 = vmul.f32 %v3042, %v3260
    %3294 = vset.pattern.permute.xlu0 0
    %3295 = vperm.xlu0 %3294, %v3277
    %v3296 = vpop.permute.xlu0 %3295
    %3299 = vset.pattern.permute.xlu0 0
    %3300 = vperm.xlu0 %3299, %v3278
    %v3301 = vpop.permute.xlu0 %3300
    %3304 = vset.pattern.permute.xlu0 0
    %3305 = vperm.xlu0 %3304, %v3279
    %v3306 = vpop.permute.xlu0 %3305
    %3309 = vset.pattern.permute.xlu0 0
    %3310 = vperm.xlu0 %3309, %v3280
    %v3311 = vpop.permute.xlu0 %3310
    %3314 = vset.pattern.permute.xlu0 0
    %3315 = vperm.xlu0 %3314, %v3281
    %v3316 = vpop.permute.xlu0 %3315
    %3319 = vset.pattern.permute.xlu0 0
    %3320 = vperm.xlu0 %3319, %v3282
    %v3321 = vpop.permute.xlu0 %3320
    %3324 = vset.pattern.permute.xlu0 0
    %3325 = vperm.xlu0 %3324, %v3283
    %v3326 = vpop.permute.xlu0 %3325
    %3329 = vset.pattern.permute.xlu0 0
    %3330 = vperm.xlu0 %3329, %v3284
    %v3331 = vpop.permute.xlu0 %3330
    %3334 = vset.pattern.permute.xlu0 0
    %3335 = vperm.xlu0 %3334, %v3285
    %v3336 = vpop.permute.xlu0 %3335
    %3339 = vset.pattern.permute.xlu0 0
    %3340 = vperm.xlu0 %3339, %v3286
    %v3341 = vpop.permute.xlu0 %3340
    %3344 = vset.pattern.permute.xlu0 0
    %3345 = vperm.xlu0 %3344, %v3287
    %v3346 = vpop.permute.xlu0 %3345
    %3349 = vset.pattern.permute.xlu0 0
    %3350 = vperm.xlu0 %3349, %v3288
    %v3351 = vpop.permute.xlu0 %3350
    %3354 = vset.pattern.permute.xlu0 0
    %3355 = vperm.xlu0 %3354, %v3289
    %v3356 = vpop.permute.xlu0 %3355
    %3359 = vset.pattern.permute.xlu0 0
    %3360 = vperm.xlu0 %3359, %v3290
    %v3361 = vpop.permute.xlu0 %3360
    %3364 = vset.pattern.permute.xlu0 0
    %3365 = vperm.xlu0 %3364, %v3291
    %v3366 = vpop.permute.xlu0 %3365
    %3369 = vset.pattern.permute.xlu0 0
    %3370 = vperm.xlu0 %3369, %v3292
    %v3371 = vpop.permute.xlu0 %3370
    %v3373 = vmul.f32 %v3296, %v304
    %v3374 = vmul.f32 %v3301, %v304
    %v3375 = vmul.f32 %v3306, %v304
    %v3376 = vmul.f32 %v3311, %v304
    %v3377 = vmul.f32 %v3316, %v304
    %v3378 = vmul.f32 %v3321, %v304
    %v3379 = vmul.f32 %v3326, %v304
    %v3380 = vmul.f32 %v3331, %v304
    %v3381 = vmul.f32 %v3336, %v309
    %v3382 = vmul.f32 %v3341, %v309
    %v3383 = vmul.f32 %v3346, %v309
    %v3384 = vmul.f32 %v3351, %v309
    %v3385 = vmul.f32 %v3356, %v309
    %v3386 = vmul.f32 %v3361, %v309
    %v3387 = vmul.f32 %v3366, %v309
    %v3388 = vmul.f32 %v3371, %v309
    %vm3389 = vcmask 458112
    %v3390 = vsel %vm3389, %v3373, 0.0
    %v3391 = vrot.slane %v3390, 4
    %v3392 = vadd.f32 %v3390, %v3391
    %v3393 = vrot.slane %v3392, 2
    %v3394 = vadd.f32 %v3392, %v3393
    %v3395 = vrot.slane %v3394, 1
    %v3396 = vadd.f32 %v3394, %v3395
    %v3397 = vsel %vm3389, %v3374, 0.0
    %v3398 = vrot.slane %v3397, 4
    %v3399 = vadd.f32 %v3397, %v3398
    %v3400 = vrot.slane %v3399, 2
    %v3401 = vadd.f32 %v3399, %v3400
    %v3402 = vrot.slane %v3401, 1
    %v3403 = vadd.f32 %v3401, %v3402
    %v3404 = vsel %vm3389, %v3375, 0.0
    %v3405 = vrot.slane %v3404, 4
    %v3406 = vadd.f32 %v3404, %v3405
    %v3407 = vrot.slane %v3406, 2
    %v3408 = vadd.f32 %v3406, %v3407
    %v3409 = vrot.slane %v3408, 1
    %v3410 = vadd.f32 %v3408, %v3409
    %v3411 = vsel %vm3389, %v3376, 0.0
    %v3412 = vrot.slane %v3411, 4
    %v3413 = vadd.f32 %v3411, %v3412
    %v3414 = vrot.slane %v3413, 2
    %v3415 = vadd.f32 %v3413, %v3414
    %v3416 = vrot.slane %v3415, 1
    %v3417 = vadd.f32 %v3415, %v3416
    %v3418 = vsel %vm3389, %v3377, 0.0
    %v3419 = vrot.slane %v3418, 4
    %v3420 = vadd.f32 %v3418, %v3419
    %v3421 = vrot.slane %v3420, 2
    %v3422 = vadd.f32 %v3420, %v3421
    %v3423 = vrot.slane %v3422, 1
    %v3424 = vadd.f32 %v3422, %v3423
    %v3425 = vsel %vm3389, %v3378, 0.0
    %v3426 = vrot.slane %v3425, 4
    %v3427 = vadd.f32 %v3425, %v3426
    %v3428 = vrot.slane %v3427, 2
    %v3429 = vadd.f32 %v3427, %v3428
    %v3430 = vrot.slane %v3429, 1
    %v3431 = vadd.f32 %v3429, %v3430
    %v3432 = vsel %vm3389, %v3379, 0.0
    %v3433 = vrot.slane %v3432, 4
    %v3434 = vadd.f32 %v3432, %v3433
    %v3435 = vrot.slane %v3434, 2
    %v3436 = vadd.f32 %v3434, %v3435
    %v3437 = vrot.slane %v3436, 1
    %v3438 = vadd.f32 %v3436, %v3437
    %v3439 = vsel %vm3389, %v3380, 0.0
    %v3440 = vrot.slane %v3439, 4
    %v3441 = vadd.f32 %v3439, %v3440
    %v3442 = vrot.slane %v3441, 2
    %v3443 = vadd.f32 %v3441, %v3442
    %v3444 = vrot.slane %v3443, 1
    %v3445 = vadd.f32 %v3443, %v3444
    %v3446 = vsel %vm3389, %v3381, 0.0
    %v3447 = vrot.slane %v3446, 4
    %v3448 = vadd.f32 %v3446, %v3447
    %v3449 = vrot.slane %v3448, 2
    %v3450 = vadd.f32 %v3448, %v3449
    %v3451 = vrot.slane %v3450, 1
    %v3452 = vadd.f32 %v3450, %v3451
    %v3453 = vsel %vm3389, %v3382, 0.0
    %v3454 = vrot.slane %v3453, 4
    %v3455 = vadd.f32 %v3453, %v3454
    %v3456 = vrot.slane %v3455, 2
    %v3457 = vadd.f32 %v3455, %v3456
    %v3458 = vrot.slane %v3457, 1
    %v3459 = vadd.f32 %v3457, %v3458
    %v3460 = vsel %vm3389, %v3383, 0.0
    %v3461 = vrot.slane %v3460, 4
    %v3462 = vadd.f32 %v3460, %v3461
    %v3463 = vrot.slane %v3462, 2
    %v3464 = vadd.f32 %v3462, %v3463
    %v3465 = vrot.slane %v3464, 1
    %v3466 = vadd.f32 %v3464, %v3465
    %v3467 = vsel %vm3389, %v3384, 0.0
    %v3468 = vrot.slane %v3467, 4
    %v3469 = vadd.f32 %v3467, %v3468
    %v3470 = vrot.slane %v3469, 2
    %v3471 = vadd.f32 %v3469, %v3470
    %v3472 = vrot.slane %v3471, 1
    %v3473 = vadd.f32 %v3471, %v3472
    %v3474 = vsel %vm3389, %v3385, 0.0
    %v3475 = vrot.slane %v3474, 4
    %v3476 = vadd.f32 %v3474, %v3475
    %v3477 = vrot.slane %v3476, 2
    %v3478 = vadd.f32 %v3476, %v3477
    %v3479 = vrot.slane %v3478, 1
    %v3480 = vadd.f32 %v3478, %v3479
    %v3481 = vsel %vm3389, %v3386, 0.0
    %v3482 = vrot.slane %v3481, 4
    %v3483 = vadd.f32 %v3481, %v3482
    %v3484 = vrot.slane %v3483, 2
    %v3485 = vadd.f32 %v3483, %v3484
    %v3486 = vrot.slane %v3485, 1
    %v3487 = vadd.f32 %v3485, %v3486
    %v3488 = vsel %vm3389, %v3387, 0.0
    %v3489 = vrot.slane %v3488, 4
    %v3490 = vadd.f32 %v3488, %v3489
    %v3491 = vrot.slane %v3490, 2
    %v3492 = vadd.f32 %v3490, %v3491
    %v3493 = vrot.slane %v3492, 1
    %v3494 = vadd.f32 %v3492, %v3493
    %v3495 = vsel %vm3389, %v3388, 0.0
    %v3496 = vrot.slane %v3495, 4
    %v3497 = vadd.f32 %v3495, %v3496
    %v3498 = vrot.slane %v3497, 2
    %v3499 = vadd.f32 %v3497, %v3498
    %v3500 = vrot.slane %v3499, 1
    %v3501 = vadd.f32 %v3499, %v3500
    %3502 = vrot.lane.b32.xlu0 %v845, 104
    %v3503 = vpop.permute.xlu0 %3502
    %3504 = vrot.lane.b32.xlu0 %v846, 104
    %v3505 = vpop.permute.xlu0 %3504
    %3506 = vrot.lane.b32.xlu0 %v847, 104
    %v3507 = vpop.permute.xlu0 %3506
    %3508 = vrot.lane.b32.xlu0 %v848, 104
    %v3509 = vpop.permute.xlu0 %3508
    %3510 = vrot.lane.b32.xlu0 %v849, 104
    %v3511 = vpop.permute.xlu0 %3510
    %3512 = vrot.lane.b32.xlu0 %v850, 104
    %v3513 = vpop.permute.xlu0 %3512
    %3514 = vrot.lane.b32.xlu0 %v851, 104
    %v3515 = vpop.permute.xlu0 %3514
    %3516 = vrot.lane.b32.xlu0 %v852, 104
    %v3517 = vpop.permute.xlu0 %3516
    %3518 = vrot.lane.b32.xlu0 %v853, 104
    %v3519 = vpop.permute.xlu0 %3518
    %3520 = vrot.lane.b32.xlu0 %v854, 104
    %v3521 = vpop.permute.xlu0 %3520
    %3522 = vrot.lane.b32.xlu0 %v855, 104
    %v3523 = vpop.permute.xlu0 %3522
    %3524 = vrot.lane.b32.xlu0 %v856, 104
    %v3525 = vpop.permute.xlu0 %3524
    %3526 = vrot.lane.b32.xlu0 %v857, 104
    %v3527 = vpop.permute.xlu0 %3526
    %3528 = vrot.lane.b32.xlu0 %v858, 104
    %v3529 = vpop.permute.xlu0 %3528
    %3530 = vrot.lane.b32.xlu0 %v859, 104
    %v3531 = vpop.permute.xlu0 %3530
    %3532 = vrot.lane.b32.xlu0 %v860, 104
    %v3533 = vpop.permute.xlu0 %3532
    %v3550 = vsel %vm861, %v3503, 0.0
    %3551 = vadd.xlane.f32.xlu0 %v3550
    %v3552 = vpop.xlane.xlu0 %3551
    %v3553 = vsel %vm861, %v3505, 0.0
    %3554 = vadd.xlane.f32.xlu0 %v3553
    %v3555 = vpop.xlane.xlu0 %3554
    %v3556 = vsel %vm861, %v3507, 0.0
    %3557 = vadd.xlane.f32.xlu0 %v3556
    %v3558 = vpop.xlane.xlu0 %3557
    %v3559 = vsel %vm861, %v3509, 0.0
    %3560 = vadd.xlane.f32.xlu0 %v3559
    %v3561 = vpop.xlane.xlu0 %3560
    %v3562 = vsel %vm861, %v3511, 0.0
    %3563 = vadd.xlane.f32.xlu0 %v3562
    %v3564 = vpop.xlane.xlu0 %3563
    %v3565 = vsel %vm861, %v3513, 0.0
    %3566 = vadd.xlane.f32.xlu0 %v3565
    %v3567 = vpop.xlane.xlu0 %3566
    %v3568 = vsel %vm861, %v3515, 0.0
    %3569 = vadd.xlane.f32.xlu0 %v3568
    %v3570 = vpop.xlane.xlu0 %3569
    %v3571 = vsel %vm861, %v3517, 0.0
    %3572 = vadd.xlane.f32.xlu0 %v3571
    %v3573 = vpop.xlane.xlu0 %3572
    %v3574 = vsel %vm861, %v3519, 0.0
    %3575 = vadd.xlane.f32.xlu0 %v3574
    %v3576 = vpop.xlane.xlu0 %3575
    %v3577 = vsel %vm861, %v3521, 0.0
    %3578 = vadd.xlane.f32.xlu0 %v3577
    %v3579 = vpop.xlane.xlu0 %3578
    %v3580 = vsel %vm861, %v3523, 0.0
    %3581 = vadd.xlane.f32.xlu0 %v3580
    %v3582 = vpop.xlane.xlu0 %3581
    %v3583 = vsel %vm861, %v3525, 0.0
    %3584 = vadd.xlane.f32.xlu0 %v3583
    %v3585 = vpop.xlane.xlu0 %3584
    %v3586 = vsel %vm861, %v3527, 0.0
    %3587 = vadd.xlane.f32.xlu0 %v3586
    %v3588 = vpop.xlane.xlu0 %3587
    %v3589 = vsel %vm861, %v3529, 0.0
    %3590 = vadd.xlane.f32.xlu0 %v3589
    %v3591 = vpop.xlane.xlu0 %3590
    %v3592 = vsel %vm861, %v3531, 0.0
    %3593 = vadd.xlane.f32.xlu0 %v3592
    %v3594 = vpop.xlane.xlu0 %3593
    %v3595 = vsel %vm861, %v3533, 0.0
    %3596 = vadd.xlane.f32.xlu0 %v3595
    %v3597 = vpop.xlane.xlu0 %3596
    %v3598 = vmul.f32 %v3552, 0.125
    %v3599 = vmul.f32 %v3555, 0.125
    %v3600 = vmul.f32 %v3558, 0.125
    %v3601 = vmul.f32 %v3561, 0.125
    %v3602 = vmul.f32 %v3564, 0.125
    %v3603 = vmul.f32 %v3567, 0.125
    %v3604 = vmul.f32 %v3570, 0.125
    %v3605 = vmul.f32 %v3573, 0.125
    %v3606 = vmul.f32 %v3576, 0.125
    %v3607 = vmul.f32 %v3579, 0.125
    %v3608 = vmul.f32 %v3582, 0.125
    %v3609 = vmul.f32 %v3585, 0.125
    %v3610 = vmul.f32 %v3588, 0.125
    %v3611 = vmul.f32 %v3591, 0.125
    %v3612 = vmul.f32 %v3594, 0.125
    %v3613 = vmul.f32 %v3597, 0.125
    %v3614 = vadd.f32 %v3598, %v933
    %v3615 = vadd.f32 %v3599, %v940
    %v3616 = vadd.f32 %v3600, %v947
    %v3617 = vadd.f32 %v3601, %v954
    %v3618 = vadd.f32 %v3602, %v961
    %v3619 = vadd.f32 %v3603, %v968
    %v3620 = vadd.f32 %v3604, %v975
    %v3621 = vadd.f32 %v3605, %v982
    %v3622 = vadd.f32 %v3606, %v933
    %v3623 = vadd.f32 %v3607, %v940
    %v3624 = vadd.f32 %v3608, %v947
    %v3625 = vadd.f32 %v3609, %v954
    %v3626 = vadd.f32 %v3610, %v961
    %v3627 = vadd.f32 %v3611, %v968
    %v3628 = vadd.f32 %v3612, %v975
    %v3629 = vadd.f32 %v3613, %v982
    %3646 = vset.pattern.permute.xlu0 0
    %3647 = vperm.xlu0 %3646, %v3614
    %v3648 = vpop.permute.xlu0 %3647
    %3649 = vset.pattern.permute.xlu0 0
    %3650 = vperm.xlu0 %3649, %v3615
    %v3651 = vpop.permute.xlu0 %3650
    %3652 = vset.pattern.permute.xlu0 0
    %3653 = vperm.xlu0 %3652, %v3616
    %v3654 = vpop.permute.xlu0 %3653
    %3655 = vset.pattern.permute.xlu0 0
    %3656 = vperm.xlu0 %3655, %v3617
    %v3657 = vpop.permute.xlu0 %3656
    %3658 = vset.pattern.permute.xlu0 0
    %3659 = vperm.xlu0 %3658, %v3618
    %v3660 = vpop.permute.xlu0 %3659
    %3661 = vset.pattern.permute.xlu0 0
    %3662 = vperm.xlu0 %3661, %v3619
    %v3663 = vpop.permute.xlu0 %3662
    %3664 = vset.pattern.permute.xlu0 0
    %3665 = vperm.xlu0 %3664, %v3620
    %v3666 = vpop.permute.xlu0 %3665
    %3667 = vset.pattern.permute.xlu0 0
    %3668 = vperm.xlu0 %3667, %v3621
    %v3669 = vpop.permute.xlu0 %3668
    %3670 = vset.pattern.permute.xlu0 0
    %3671 = vperm.xlu0 %3670, %v3622
    %v3672 = vpop.permute.xlu0 %3671
    %3673 = vset.pattern.permute.xlu0 0
    %3674 = vperm.xlu0 %3673, %v3623
    %v3675 = vpop.permute.xlu0 %3674
    %3676 = vset.pattern.permute.xlu0 0
    %3677 = vperm.xlu0 %3676, %v3624
    %v3678 = vpop.permute.xlu0 %3677
    %3679 = vset.pattern.permute.xlu0 0
    %3680 = vperm.xlu0 %3679, %v3625
    %v3681 = vpop.permute.xlu0 %3680
    %3682 = vset.pattern.permute.xlu0 0
    %3683 = vperm.xlu0 %3682, %v3626
    %v3684 = vpop.permute.xlu0 %3683
    %3685 = vset.pattern.permute.xlu0 0
    %3686 = vperm.xlu0 %3685, %v3627
    %v3687 = vpop.permute.xlu0 %3686
    %3688 = vset.pattern.permute.xlu0 0
    %3689 = vperm.xlu0 %3688, %v3628
    %v3690 = vpop.permute.xlu0 %3689
    %3691 = vset.pattern.permute.xlu0 0
    %3692 = vperm.xlu0 %3691, %v3629
    %v3693 = vpop.permute.xlu0 %3692
    %v3694 = vlaneseq
    %v3695 = vshrl.u32 %v3694, 7
    %v3696 = vsub.s32 %v45, %v3695
    %v3697 = vrot.slane %v3648, %v3696
    %v3698 = vlaneseq
    %v3699 = vshrl.u32 %v3698, 7
    %v3700 = vsub.s32 %v45, %v3699
    %v3701 = vrot.slane %v3651, %v3700
    %v3702 = vlaneseq
    %v3703 = vshrl.u32 %v3702, 7
    %v3704 = vsub.s32 %v45, %v3703
    %v3705 = vrot.slane %v3654, %v3704
    %v3706 = vlaneseq
    %v3707 = vshrl.u32 %v3706, 7
    %v3708 = vsub.s32 %v45, %v3707
    %v3709 = vrot.slane %v3657, %v3708
    %v3710 = vlaneseq
    %v3711 = vshrl.u32 %v3710, 7
    %v3712 = vsub.s32 %v45, %v3711
    %v3713 = vrot.slane %v3660, %v3712
    %v3714 = vlaneseq
    %v3715 = vshrl.u32 %v3714, 7
    %v3716 = vsub.s32 %v45, %v3715
    %v3717 = vrot.slane %v3663, %v3716
    %v3718 = vlaneseq
    %v3719 = vshrl.u32 %v3718, 7
    %v3720 = vsub.s32 %v45, %v3719
    %v3721 = vrot.slane %v3666, %v3720
    %v3722 = vlaneseq
    %v3723 = vshrl.u32 %v3722, 7
    %v3724 = vsub.s32 %v45, %v3723
    %v3725 = vrot.slane %v3669, %v3724
    %v3726 = vlaneseq
    %v3727 = vshrl.u32 %v3726, 7
    %v3728 = vsub.s32 %v45, %v3727
    %v3729 = vrot.slane %v3672, %v3728
    %v3730 = vlaneseq
    %v3731 = vshrl.u32 %v3730, 7
    %v3732 = vsub.s32 %v45, %v3731
    %v3733 = vrot.slane %v3675, %v3732
    %v3734 = vlaneseq
    %v3735 = vshrl.u32 %v3734, 7
    %v3736 = vsub.s32 %v45, %v3735
    %v3737 = vrot.slane %v3678, %v3736
    %v3738 = vlaneseq
    %v3739 = vshrl.u32 %v3738, 7
    %v3740 = vsub.s32 %v45, %v3739
    %v3741 = vrot.slane %v3681, %v3740
    %v3742 = vlaneseq
    %v3743 = vshrl.u32 %v3742, 7
    %v3744 = vsub.s32 %v45, %v3743
    %v3745 = vrot.slane %v3684, %v3744
    %v3746 = vlaneseq
    %v3747 = vshrl.u32 %v3746, 7
    %v3748 = vsub.s32 %v45, %v3747
    %v3749 = vrot.slane %v3687, %v3748
    %v3750 = vlaneseq
    %v3751 = vshrl.u32 %v3750, 7
    %v3752 = vsub.s32 %v45, %v3751
    %v3753 = vrot.slane %v3690, %v3752
    %v3754 = vlaneseq
    %v3755 = vshrl.u32 %v3754, 7
    %v3756 = vsub.s32 %v45, %v3755
    %v3757 = vrot.slane %v3693, %v3756
    %v3758 = vsel %vm1135, %v3701, %v3697
    %v3759 = vsel %vm321, %v3705, %v3758
    %v3760 = vsel %vm1138, %v3709, %v3759
    %v3761 = vsel %vm1140, %v3713, %v3760
    %v3762 = vsel %vm1142, %v3717, %v3761
    %v3763 = vsel %vm1144, %v3721, %v3762
    %v3764 = vsel %vm1146, %v3725, %v3763
    %v3765 = vsel %vm1135, %v3733, %v3729
    %v3766 = vsel %vm321, %v3737, %v3765
    %v3767 = vsel %vm1138, %v3741, %v3766
    %v3768 = vsel %vm1140, %v3745, %v3767
    %v3769 = vsel %vm1142, %v3749, %v3768
    %v3770 = vsel %vm1144, %v3753, %v3769
    %v3771 = vsel %vm1146, %v3757, %v3770
    %v3774 = vsel %vm861, %v3764, -inf
    %3775 = vmax.xlane.f32.xlu0 %v3774
    %v3776 = vpop.xlane.xlu0 %3775
    %v3777 = vsel %vm861, %v3771, -inf
    %3778 = vmax.xlane.f32.xlu0 %v3777
    %v3779 = vpop.xlane.xlu0 %3778
    %v3782 = vlaneseq
    %v3783 = vshrl.u32 %v3782, 7
    %v3784 = vsub.s32 0, %v3783
    %v3785 = vrot.slane %v3776, %v3784
    %v3786 = vlaneseq
    %v3787 = vshrl.u32 %v3786, 7
    %v3788 = vsub.s32 1, %v3787
    %v3789 = vrot.slane %v3776, %v3788
    %v3790 = vlaneseq
    %v3791 = vshrl.u32 %v3790, 7
    %v3792 = vsub.s32 2, %v3791
    %v3793 = vrot.slane %v3776, %v3792
    %v3794 = vlaneseq
    %v3795 = vshrl.u32 %v3794, 7
    %v3796 = vsub.s32 3, %v3795
    %v3797 = vrot.slane %v3776, %v3796
    %v3798 = vlaneseq
    %v3799 = vshrl.u32 %v3798, 7
    %v3800 = vsub.s32 4, %v3799
    %v3801 = vrot.slane %v3776, %v3800
    %v3802 = vlaneseq
    %v3803 = vshrl.u32 %v3802, 7
    %v3804 = vsub.s32 5, %v3803
    %v3805 = vrot.slane %v3776, %v3804
    %v3806 = vlaneseq
    %v3807 = vshrl.u32 %v3806, 7
    %v3808 = vsub.s32 6, %v3807
    %v3809 = vrot.slane %v3776, %v3808
    %v3810 = vlaneseq
    %v3811 = vshrl.u32 %v3810, 7
    %v3812 = vsub.s32 7, %v3811
    %v3813 = vrot.slane %v3776, %v3812
    %v3814 = vlaneseq
    %v3815 = vshrl.u32 %v3814, 7
    %v3816 = vsub.s32 0, %v3815
    %v3817 = vrot.slane %v3779, %v3816
    %v3818 = vlaneseq
    %v3819 = vshrl.u32 %v3818, 7
    %v3820 = vsub.s32 1, %v3819
    %v3821 = vrot.slane %v3779, %v3820
    %v3822 = vlaneseq
    %v3823 = vshrl.u32 %v3822, 7
    %v3824 = vsub.s32 2, %v3823
    %v3825 = vrot.slane %v3779, %v3824
    %v3826 = vlaneseq
    %v3827 = vshrl.u32 %v3826, 7
    %v3828 = vsub.s32 3, %v3827
    %v3829 = vrot.slane %v3779, %v3828
    %v3830 = vlaneseq
    %v3831 = vshrl.u32 %v3830, 7
    %v3832 = vsub.s32 4, %v3831
    %v3833 = vrot.slane %v3779, %v3832
    %v3834 = vlaneseq
    %v3835 = vshrl.u32 %v3834, 7
    %v3836 = vsub.s32 5, %v3835
    %v3837 = vrot.slane %v3779, %v3836
    %v3838 = vlaneseq
    %v3839 = vshrl.u32 %v3838, 7
    %v3840 = vsub.s32 6, %v3839
    %v3841 = vrot.slane %v3779, %v3840
    %v3842 = vlaneseq
    %v3843 = vshrl.u32 %v3842, 7
    %v3844 = vsub.s32 7, %v3843
    %v3845 = vrot.slane %v3779, %v3844
    %v3862 = vsub.f32 %v3614, %v3785
    %v3863 = vsub.f32 %v3615, %v3789
    %v3864 = vsub.f32 %v3616, %v3793
    %v3865 = vsub.f32 %v3617, %v3797
    %v3866 = vsub.f32 %v3618, %v3801
    %v3867 = vsub.f32 %v3619, %v3805
    %v3868 = vsub.f32 %v3620, %v3809
    %v3869 = vsub.f32 %v3621, %v3813
    %v3870 = vsub.f32 %v3622, %v3817
    %v3871 = vsub.f32 %v3623, %v3821
    %v3872 = vsub.f32 %v3624, %v3825
    %v3873 = vsub.f32 %v3625, %v3829
    %v3874 = vsub.f32 %v3626, %v3833
    %v3875 = vsub.f32 %v3627, %v3837
    %v3876 = vsub.f32 %v3628, %v3841
    %v3877 = vsub.f32 %v3629, %v3845
    %v3878 = vmul.f32 %v3862, 1.442695
    %v3879 = vpow.pop %v3878
    %v3880 = vmul.f32 %v3863, 1.442695
    %v3881 = vpow.pop %v3880
    %v3882 = vmul.f32 %v3864, 1.442695
    %v3883 = vpow.pop %v3882
    %v3884 = vmul.f32 %v3865, 1.442695
    %v3885 = vpow.pop %v3884
    %v3886 = vmul.f32 %v3866, 1.442695
    %v3887 = vpow.pop %v3886
    %v3888 = vmul.f32 %v3867, 1.442695
    %v3889 = vpow.pop %v3888
    %v3890 = vmul.f32 %v3868, 1.442695
    %v3891 = vpow.pop %v3890
    %v3892 = vmul.f32 %v3869, 1.442695
    %v3893 = vpow.pop %v3892
    %v3894 = vmul.f32 %v3870, 1.442695
    %v3895 = vpow.pop %v3894
    %v3896 = vmul.f32 %v3871, 1.442695
    %v3897 = vpow.pop %v3896
    %v3898 = vmul.f32 %v3872, 1.442695
    %v3899 = vpow.pop %v3898
    %v3900 = vmul.f32 %v3873, 1.442695
    %v3901 = vpow.pop %v3900
    %v3902 = vmul.f32 %v3874, 1.442695
    %v3903 = vpow.pop %v3902
    %v3904 = vmul.f32 %v3875, 1.442695
    %v3905 = vpow.pop %v3904
    %v3906 = vmul.f32 %v3876, 1.442695
    %v3907 = vpow.pop %v3906
    %v3908 = vmul.f32 %v3877, 1.442695
    %v3909 = vpow.pop %v3908
    %3926 = vset.pattern.permute.xlu0 0
    %3927 = vperm.xlu0 %3926, %v3879
    %v3928 = vpop.permute.xlu0 %3927
    %3929 = vset.pattern.permute.xlu0 0
    %3930 = vperm.xlu0 %3929, %v3881
    %v3931 = vpop.permute.xlu0 %3930
    %3932 = vset.pattern.permute.xlu0 0
    %3933 = vperm.xlu0 %3932, %v3883
    %v3934 = vpop.permute.xlu0 %3933
    %3935 = vset.pattern.permute.xlu0 0
    %3936 = vperm.xlu0 %3935, %v3885
    %v3937 = vpop.permute.xlu0 %3936
    %3938 = vset.pattern.permute.xlu0 0
    %3939 = vperm.xlu0 %3938, %v3887
    %v3940 = vpop.permute.xlu0 %3939
    %3941 = vset.pattern.permute.xlu0 0
    %3942 = vperm.xlu0 %3941, %v3889
    %v3943 = vpop.permute.xlu0 %3942
    %3944 = vset.pattern.permute.xlu0 0
    %3945 = vperm.xlu0 %3944, %v3891
    %v3946 = vpop.permute.xlu0 %3945
    %3947 = vset.pattern.permute.xlu0 0
    %3948 = vperm.xlu0 %3947, %v3893
    %v3949 = vpop.permute.xlu0 %3948
    %3950 = vset.pattern.permute.xlu0 0
    %3951 = vperm.xlu0 %3950, %v3895
    %v3952 = vpop.permute.xlu0 %3951
    %3953 = vset.pattern.permute.xlu0 0
    %3954 = vperm.xlu0 %3953, %v3897
    %v3955 = vpop.permute.xlu0 %3954
    %3956 = vset.pattern.permute.xlu0 0
    %3957 = vperm.xlu0 %3956, %v3899
    %v3958 = vpop.permute.xlu0 %3957
    %3959 = vset.pattern.permute.xlu0 0
    %3960 = vperm.xlu0 %3959, %v3901
    %v3961 = vpop.permute.xlu0 %3960
    %3962 = vset.pattern.permute.xlu0 0
    %3963 = vperm.xlu0 %3962, %v3903
    %v3964 = vpop.permute.xlu0 %3963
    %3965 = vset.pattern.permute.xlu0 0
    %3966 = vperm.xlu0 %3965, %v3905
    %v3967 = vpop.permute.xlu0 %3966
    %3968 = vset.pattern.permute.xlu0 0
    %3969 = vperm.xlu0 %3968, %v3907
    %v3970 = vpop.permute.xlu0 %3969
    %3971 = vset.pattern.permute.xlu0 0
    %3972 = vperm.xlu0 %3971, %v3909
    %v3973 = vpop.permute.xlu0 %3972
    %v3974 = vlaneseq
    %v3975 = vshrl.u32 %v3974, 7
    %v3976 = vsub.s32 %v45, %v3975
    %v3977 = vrot.slane %v3928, %v3976
    %v3978 = vlaneseq
    %v3979 = vshrl.u32 %v3978, 7
    %v3980 = vsub.s32 %v45, %v3979
    %v3981 = vrot.slane %v3931, %v3980
    %v3982 = vlaneseq
    %v3983 = vshrl.u32 %v3982, 7
    %v3984 = vsub.s32 %v45, %v3983
    %v3985 = vrot.slane %v3934, %v3984
    %v3986 = vlaneseq
    %v3987 = vshrl.u32 %v3986, 7
    %v3988 = vsub.s32 %v45, %v3987
    %v3989 = vrot.slane %v3937, %v3988
    %v3990 = vlaneseq
    %v3991 = vshrl.u32 %v3990, 7
    %v3992 = vsub.s32 %v45, %v3991
    %v3993 = vrot.slane %v3940, %v3992
    %v3994 = vlaneseq
    %v3995 = vshrl.u32 %v3994, 7
    %v3996 = vsub.s32 %v45, %v3995
    %v3997 = vrot.slane %v3943, %v3996
    %v3998 = vlaneseq
    %v3999 = vshrl.u32 %v3998, 7
    %v4000 = vsub.s32 %v45, %v3999
    %v4001 = vrot.slane %v3946, %v4000
    %v4002 = vlaneseq
    %v4003 = vshrl.u32 %v4002, 7
    %v4004 = vsub.s32 %v45, %v4003
    %v4005 = vrot.slane %v3949, %v4004
    %v4006 = vlaneseq
    %v4007 = vshrl.u32 %v4006, 7
    %v4008 = vsub.s32 %v45, %v4007
    %v4009 = vrot.slane %v3952, %v4008
    %v4010 = vlaneseq
    %v4011 = vshrl.u32 %v4010, 7
    %v4012 = vsub.s32 %v45, %v4011
    %v4013 = vrot.slane %v3955, %v4012
    %v4014 = vlaneseq
    %v4015 = vshrl.u32 %v4014, 7
    %v4016 = vsub.s32 %v45, %v4015
    %v4017 = vrot.slane %v3958, %v4016
    %v4018 = vlaneseq
    %v4019 = vshrl.u32 %v4018, 7
    %v4020 = vsub.s32 %v45, %v4019
    %v4021 = vrot.slane %v3961, %v4020
    %v4022 = vlaneseq
    %v4023 = vshrl.u32 %v4022, 7
    %v4024 = vsub.s32 %v45, %v4023
    %v4025 = vrot.slane %v3964, %v4024
    %v4026 = vlaneseq
    %v4027 = vshrl.u32 %v4026, 7
    %v4028 = vsub.s32 %v45, %v4027
    %v4029 = vrot.slane %v3967, %v4028
    %v4030 = vlaneseq
    %v4031 = vshrl.u32 %v4030, 7
    %v4032 = vsub.s32 %v45, %v4031
    %v4033 = vrot.slane %v3970, %v4032
    %v4034 = vlaneseq
    %v4035 = vshrl.u32 %v4034, 7
    %v4036 = vsub.s32 %v45, %v4035
    %v4037 = vrot.slane %v3973, %v4036
    %v4038 = vsel %vm1135, %v3981, %v3977
    %v4039 = vsel %vm321, %v3985, %v4038
    %v4040 = vsel %vm1138, %v3989, %v4039
    %v4041 = vsel %vm1140, %v3993, %v4040
    %v4042 = vsel %vm1142, %v3997, %v4041
    %v4043 = vsel %vm1144, %v4001, %v4042
    %v4044 = vsel %vm1146, %v4005, %v4043
    %v4045 = vsel %vm1135, %v4013, %v4009
    %v4046 = vsel %vm321, %v4017, %v4045
    %v4047 = vsel %vm1138, %v4021, %v4046
    %v4048 = vsel %vm1140, %v4025, %v4047
    %v4049 = vsel %vm1142, %v4029, %v4048
    %v4050 = vsel %vm1144, %v4033, %v4049
    %v4051 = vsel %vm1146, %v4037, %v4050
    %v4054 = vsel %vm861, %v4044, 0.0
    %4055 = vadd.xlane.f32.xlu0 %v4054
    %v4056 = vpop.xlane.xlu0 %4055
    %v4057 = vsel %vm861, %v4051, 0.0
    %4058 = vadd.xlane.f32.xlu0 %v4057
    %v4059 = vpop.xlane.xlu0 %4058
    %v4060 = vrcp.pop %v4056
    %v4061 = vrcp.pop %v4059
    %v4064 = vlaneseq
    %v4065 = vshrl.u32 %v4064, 7
    %v4066 = vsub.s32 0, %v4065
    %v4067 = vrot.slane %v4060, %v4066
    %v4068 = vlaneseq
    %v4069 = vshrl.u32 %v4068, 7
    %v4070 = vsub.s32 1, %v4069
    %v4071 = vrot.slane %v4060, %v4070
    %v4072 = vlaneseq
    %v4073 = vshrl.u32 %v4072, 7
    %v4074 = vsub.s32 2, %v4073
    %v4075 = vrot.slane %v4060, %v4074
    %v4076 = vlaneseq
    %v4077 = vshrl.u32 %v4076, 7
    %v4078 = vsub.s32 3, %v4077
    %v4079 = vrot.slane %v4060, %v4078
    %v4080 = vlaneseq
    %v4081 = vshrl.u32 %v4080, 7
    %v4082 = vsub.s32 4, %v4081
    %v4083 = vrot.slane %v4060, %v4082
    %v4084 = vlaneseq
    %v4085 = vshrl.u32 %v4084, 7
    %v4086 = vsub.s32 5, %v4085
    %v4087 = vrot.slane %v4060, %v4086
    %v4088 = vlaneseq
    %v4089 = vshrl.u32 %v4088, 7
    %v4090 = vsub.s32 6, %v4089
    %v4091 = vrot.slane %v4060, %v4090
    %v4092 = vlaneseq
    %v4093 = vshrl.u32 %v4092, 7
    %v4094 = vsub.s32 7, %v4093
    %v4095 = vrot.slane %v4060, %v4094
    %v4096 = vlaneseq
    %v4097 = vshrl.u32 %v4096, 7
    %v4098 = vsub.s32 0, %v4097
    %v4099 = vrot.slane %v4061, %v4098
    %v4100 = vlaneseq
    %v4101 = vshrl.u32 %v4100, 7
    %v4102 = vsub.s32 1, %v4101
    %v4103 = vrot.slane %v4061, %v4102
    %v4104 = vlaneseq
    %v4105 = vshrl.u32 %v4104, 7
    %v4106 = vsub.s32 2, %v4105
    %v4107 = vrot.slane %v4061, %v4106
    %v4108 = vlaneseq
    %v4109 = vshrl.u32 %v4108, 7
    %v4110 = vsub.s32 3, %v4109
    %v4111 = vrot.slane %v4061, %v4110
    %v4112 = vlaneseq
    %v4113 = vshrl.u32 %v4112, 7
    %v4114 = vsub.s32 4, %v4113
    %v4115 = vrot.slane %v4061, %v4114
    %v4116 = vlaneseq
    %v4117 = vshrl.u32 %v4116, 7
    %v4118 = vsub.s32 5, %v4117
    %v4119 = vrot.slane %v4061, %v4118
    %v4120 = vlaneseq
    %v4121 = vshrl.u32 %v4120, 7
    %v4122 = vsub.s32 6, %v4121
    %v4123 = vrot.slane %v4061, %v4122
    %v4124 = vlaneseq
    %v4125 = vshrl.u32 %v4124, 7
    %v4126 = vsub.s32 7, %v4125
    %v4127 = vrot.slane %v4061, %v4126
    %v4144 = vmul.f32 %v3879, %v4067
    %v4145 = vmul.f32 %v3881, %v4071
    %v4146 = vmul.f32 %v3883, %v4075
    %v4147 = vmul.f32 %v3885, %v4079
    %v4148 = vmul.f32 %v3887, %v4083
    %v4149 = vmul.f32 %v3889, %v4087
    %v4150 = vmul.f32 %v3891, %v4091
    %v4151 = vmul.f32 %v3893, %v4095
    %v4152 = vmul.f32 %v3895, %v4099
    %v4153 = vmul.f32 %v3897, %v4103
    %v4154 = vmul.f32 %v3899, %v4107
    %v4155 = vmul.f32 %v3901, %v4111
    %v4156 = vmul.f32 %v3903, %v4115
    %v4157 = vmul.f32 %v3905, %v4119
    %v4158 = vmul.f32 %v3907, %v4123
    %v4159 = vmul.f32 %v3909, %v4127
    %4161 = vset.pattern.permute.xlu0 0
    %4162 = vperm.xlu0 %4161, %v4144
    %v4163 = vpop.permute.xlu0 %4162
    %4166 = vset.pattern.permute.xlu0 0
    %4167 = vperm.xlu0 %4166, %v4145
    %v4168 = vpop.permute.xlu0 %4167
    %4171 = vset.pattern.permute.xlu0 0
    %4172 = vperm.xlu0 %4171, %v4146
    %v4173 = vpop.permute.xlu0 %4172
    %4176 = vset.pattern.permute.xlu0 0
    %4177 = vperm.xlu0 %4176, %v4147
    %v4178 = vpop.permute.xlu0 %4177
    %4181 = vset.pattern.permute.xlu0 0
    %4182 = vperm.xlu0 %4181, %v4148
    %v4183 = vpop.permute.xlu0 %4182
    %4186 = vset.pattern.permute.xlu0 0
    %4187 = vperm.xlu0 %4186, %v4149
    %v4188 = vpop.permute.xlu0 %4187
    %4191 = vset.pattern.permute.xlu0 0
    %4192 = vperm.xlu0 %4191, %v4150
    %v4193 = vpop.permute.xlu0 %4192
    %4196 = vset.pattern.permute.xlu0 0
    %4197 = vperm.xlu0 %4196, %v4151
    %v4198 = vpop.permute.xlu0 %4197
    %4201 = vset.pattern.permute.xlu0 0
    %4202 = vperm.xlu0 %4201, %v4152
    %v4203 = vpop.permute.xlu0 %4202
    %4206 = vset.pattern.permute.xlu0 0
    %4207 = vperm.xlu0 %4206, %v4153
    %v4208 = vpop.permute.xlu0 %4207
    %4211 = vset.pattern.permute.xlu0 0
    %4212 = vperm.xlu0 %4211, %v4154
    %v4213 = vpop.permute.xlu0 %4212
    %4216 = vset.pattern.permute.xlu0 0
    %4217 = vperm.xlu0 %4216, %v4155
    %v4218 = vpop.permute.xlu0 %4217
    %4221 = vset.pattern.permute.xlu0 0
    %4222 = vperm.xlu0 %4221, %v4156
    %v4223 = vpop.permute.xlu0 %4222
    %4226 = vset.pattern.permute.xlu0 0
    %4227 = vperm.xlu0 %4226, %v4157
    %v4228 = vpop.permute.xlu0 %4227
    %4231 = vset.pattern.permute.xlu0 0
    %4232 = vperm.xlu0 %4231, %v4158
    %v4233 = vpop.permute.xlu0 %4232
    %4236 = vset.pattern.permute.xlu0 0
    %4237 = vperm.xlu0 %4236, %v4159
    %v4238 = vpop.permute.xlu0 %4237
    %v4240 = vmul.f32 %v4163, %v304
    %v4241 = vmul.f32 %v4168, %v304
    %v4242 = vmul.f32 %v4173, %v304
    %v4243 = vmul.f32 %v4178, %v304
    %v4244 = vmul.f32 %v4183, %v304
    %v4245 = vmul.f32 %v4188, %v304
    %v4246 = vmul.f32 %v4193, %v304
    %v4247 = vmul.f32 %v4198, %v304
    %v4248 = vmul.f32 %v4203, %v309
    %v4249 = vmul.f32 %v4208, %v309
    %v4250 = vmul.f32 %v4213, %v309
    %v4251 = vmul.f32 %v4218, %v309
    %v4252 = vmul.f32 %v4223, %v309
    %v4253 = vmul.f32 %v4228, %v309
    %v4254 = vmul.f32 %v4233, %v309
    %v4255 = vmul.f32 %v4238, %v309
    %vm4256 = vcmask 523712
    %v4257 = vsel %vm4256, %v4240, 0.0
    %v4258 = vrot.slane %v4257, 4
    %v4259 = vadd.f32 %v4257, %v4258
    %v4260 = vrot.slane %v4259, 2
    %v4261 = vadd.f32 %v4259, %v4260
    %v4262 = vrot.slane %v4261, 1
    %v4263 = vadd.f32 %v4261, %v4262
    %v4264 = vsel %vm4256, %v4241, 0.0
    %v4265 = vrot.slane %v4264, 4
    %v4266 = vadd.f32 %v4264, %v4265
    %v4267 = vrot.slane %v4266, 2
    %v4268 = vadd.f32 %v4266, %v4267
    %v4269 = vrot.slane %v4268, 1
    %v4270 = vadd.f32 %v4268, %v4269
    %v4271 = vsel %vm4256, %v4242, 0.0
    %v4272 = vrot.slane %v4271, 4
    %v4273 = vadd.f32 %v4271, %v4272
    %v4274 = vrot.slane %v4273, 2
    %v4275 = vadd.f32 %v4273, %v4274
    %v4276 = vrot.slane %v4275, 1
    %v4277 = vadd.f32 %v4275, %v4276
    %v4278 = vsel %vm4256, %v4243, 0.0
    %v4279 = vrot.slane %v4278, 4
    %v4280 = vadd.f32 %v4278, %v4279
    %v4281 = vrot.slane %v4280, 2
    %v4282 = vadd.f32 %v4280, %v4281
    %v4283 = vrot.slane %v4282, 1
    %v4284 = vadd.f32 %v4282, %v4283
    %v4285 = vsel %vm4256, %v4244, 0.0
    %v4286 = vrot.slane %v4285, 4
    %v4287 = vadd.f32 %v4285, %v4286
    %v4288 = vrot.slane %v4287, 2
    %v4289 = vadd.f32 %v4287, %v4288
    %v4290 = vrot.slane %v4289, 1
    %v4291 = vadd.f32 %v4289, %v4290
    %v4292 = vsel %vm4256, %v4245, 0.0
    %v4293 = vrot.slane %v4292, 4
    %v4294 = vadd.f32 %v4292, %v4293
    %v4295 = vrot.slane %v4294, 2
    %v4296 = vadd.f32 %v4294, %v4295
    %v4297 = vrot.slane %v4296, 1
    %v4298 = vadd.f32 %v4296, %v4297
    %v4299 = vsel %vm4256, %v4246, 0.0
    %v4300 = vrot.slane %v4299, 4
    %v4301 = vadd.f32 %v4299, %v4300
    %v4302 = vrot.slane %v4301, 2
    %v4303 = vadd.f32 %v4301, %v4302
    %v4304 = vrot.slane %v4303, 1
    %v4305 = vadd.f32 %v4303, %v4304
    %v4306 = vsel %vm4256, %v4247, 0.0
    %v4307 = vrot.slane %v4306, 4
    %v4308 = vadd.f32 %v4306, %v4307
    %v4309 = vrot.slane %v4308, 2
    %v4310 = vadd.f32 %v4308, %v4309
    %v4311 = vrot.slane %v4310, 1
    %v4312 = vadd.f32 %v4310, %v4311
    %v4313 = vsel %vm4256, %v4248, 0.0
    %v4314 = vrot.slane %v4313, 4
    %v4315 = vadd.f32 %v4313, %v4314
    %v4316 = vrot.slane %v4315, 2
    %v4317 = vadd.f32 %v4315, %v4316
    %v4318 = vrot.slane %v4317, 1
    %v4319 = vadd.f32 %v4317, %v4318
    %v4320 = vsel %vm4256, %v4249, 0.0
    %v4321 = vrot.slane %v4320, 4
    %v4322 = vadd.f32 %v4320, %v4321
    %v4323 = vrot.slane %v4322, 2
    %v4324 = vadd.f32 %v4322, %v4323
    %v4325 = vrot.slane %v4324, 1
    %v4326 = vadd.f32 %v4324, %v4325
    %v4327 = vsel %vm4256, %v4250, 0.0
    %v4328 = vrot.slane %v4327, 4
    %v4329 = vadd.f32 %v4327, %v4328
    %v4330 = vrot.slane %v4329, 2
    %v4331 = vadd.f32 %v4329, %v4330
    %v4332 = vrot.slane %v4331, 1
    %v4333 = vadd.f32 %v4331, %v4332
    %v4334 = vsel %vm4256, %v4251, 0.0
    %v4335 = vrot.slane %v4334, 4
    %v4336 = vadd.f32 %v4334, %v4335
    %v4337 = vrot.slane %v4336, 2
    %v4338 = vadd.f32 %v4336, %v4337
    %v4339 = vrot.slane %v4338, 1
    %v4340 = vadd.f32 %v4338, %v4339
    %v4341 = vsel %vm4256, %v4252, 0.0
    %v4342 = vrot.slane %v4341, 4
    %v4343 = vadd.f32 %v4341, %v4342
    %v4344 = vrot.slane %v4343, 2
    %v4345 = vadd.f32 %v4343, %v4344
    %v4346 = vrot.slane %v4345, 1
    %v4347 = vadd.f32 %v4345, %v4346
    %v4348 = vsel %vm4256, %v4253, 0.0
    %v4349 = vrot.slane %v4348, 4
    %v4350 = vadd.f32 %v4348, %v4349
    %v4351 = vrot.slane %v4350, 2
    %v4352 = vadd.f32 %v4350, %v4351
    %v4353 = vrot.slane %v4352, 1
    %v4354 = vadd.f32 %v4352, %v4353
    %v4355 = vsel %vm4256, %v4254, 0.0
    %v4356 = vrot.slane %v4355, 4
    %v4357 = vadd.f32 %v4355, %v4356
    %v4358 = vrot.slane %v4357, 2
    %v4359 = vadd.f32 %v4357, %v4358
    %v4360 = vrot.slane %v4359, 1
    %v4361 = vadd.f32 %v4359, %v4360
    %v4362 = vsel %vm4256, %v4255, 0.0
    %v4363 = vrot.slane %v4362, 4
    %v4364 = vadd.f32 %v4362, %v4363
    %v4365 = vrot.slane %v4364, 2
    %v4366 = vadd.f32 %v4364, %v4365
    %v4367 = vrot.slane %v4366, 1
    %v4368 = vadd.f32 %v4366, %v4367
    %v4385 = vsel %vm1135, %v1653, %v1646
    %v4386 = vsel %vm321, %v1660, %v4385
    %v4387 = vsel %vm1138, %v1667, %v4386
    %v4388 = vsel %vm1140, %v1674, %v4387
    %v4389 = vsel %vm1142, %v1681, %v4388
    %v4390 = vsel %vm1144, %v1688, %v4389
    %v4391 = vsel %vm1146, %v1695, %v4390
    %v4392 = vsel %vm1135, %v1709, %v1702
    %v4393 = vsel %vm321, %v1716, %v4392
    %v4394 = vsel %vm1138, %v1723, %v4393
    %v4395 = vsel %vm1140, %v1730, %v4394
    %v4396 = vsel %vm1142, %v1737, %v4395
    %v4397 = vsel %vm1144, %v1744, %v4396
    %v4398 = vsel %vm1146, %v1751, %v4397
    %4399 = vrot.lane.b32.xlu0 %v4391, 96
    %v4400 = vpop.permute.xlu0 %4399
    %4401 = vrot.lane.b32.xlu0 %v4398, 96
    %v4402 = vpop.permute.xlu0 %4401
    %v4421 = vsel %vm1135, %v2536, %v2529
    %v4422 = vsel %vm321, %v2543, %v4421
    %v4423 = vsel %vm1138, %v2550, %v4422
    %v4424 = vsel %vm1140, %v2557, %v4423
    %v4425 = vsel %vm1142, %v2564, %v4424
    %v4426 = vsel %vm1144, %v2571, %v4425
    %v4427 = vsel %vm1146, %v2578, %v4426
    %v4428 = vsel %vm1135, %v2592, %v2585
    %v4429 = vsel %vm321, %v2599, %v4428
    %v4430 = vsel %vm1138, %v2606, %v4429
    %v4431 = vsel %vm1140, %v2613, %v4430
    %v4432 = vsel %vm1142, %v2620, %v4431
    %v4433 = vsel %vm1144, %v2627, %v4432
    %v4434 = vsel %vm1146, %v2634, %v4433
    %4435 = vrot.lane.b32.xlu0 %v4427, 96
    %v4436 = vpop.permute.xlu0 %4435
    %4437 = vrot.lane.b32.xlu0 %v4434, 96
    %v4438 = vpop.permute.xlu0 %4437
    %v4457 = vsel %vm1135, %v3403, %v3396
    %v4458 = vsel %vm321, %v3410, %v4457
    %v4459 = vsel %vm1138, %v3417, %v4458
    %v4460 = vsel %vm1140, %v3424, %v4459
    %v4461 = vsel %vm1142, %v3431, %v4460
    %v4462 = vsel %vm1144, %v3438, %v4461
    %v4463 = vsel %vm1146, %v3445, %v4462
    %v4464 = vsel %vm1135, %v3459, %v3452
    %v4465 = vsel %vm321, %v3466, %v4464
    %v4466 = vsel %vm1138, %v3473, %v4465
    %v4467 = vsel %vm1140, %v3480, %v4466
    %v4468 = vsel %vm1142, %v3487, %v4467
    %v4469 = vsel %vm1144, %v3494, %v4468
    %v4470 = vsel %vm1146, %v3501, %v4469
    %4471 = vrot.lane.b32.xlu0 %v4463, 96
    %v4472 = vpop.permute.xlu0 %4471
    %4473 = vrot.lane.b32.xlu0 %v4470, 96
    %v4474 = vpop.permute.xlu0 %4473
    %v4493 = vsel %vm1135, %v4270, %v4263
    %v4494 = vsel %vm321, %v4277, %v4493
    %v4495 = vsel %vm1138, %v4284, %v4494
    %v4496 = vsel %vm1140, %v4291, %v4495
    %v4497 = vsel %vm1142, %v4298, %v4496
    %v4498 = vsel %vm1144, %v4305, %v4497
    %v4499 = vsel %vm1146, %v4312, %v4498
    %v4500 = vsel %vm1135, %v4326, %v4319
    %v4501 = vsel %vm321, %v4333, %v4500
    %v4502 = vsel %vm1138, %v4340, %v4501
    %v4503 = vsel %vm1140, %v4347, %v4502
    %v4504 = vsel %vm1142, %v4354, %v4503
    %v4505 = vsel %vm1144, %v4361, %v4504
    %v4506 = vsel %vm1146, %v4368, %v4505
    %4507 = vrot.lane.b32.xlu0 %v4499, 96
    %v4508 = vpop.permute.xlu0 %4507
    %4509 = vrot.lane.b32.xlu0 %v4506, 96
    %v4510 = vpop.permute.xlu0 %4509
    %v4513 = vsel %vm861, %v4400, %v4436
    %v4514 = vsel %vm861, %v4402, %v4438
    %vm4515 = vcmask 130048
    %v4516 = vsel %vm4515, %v4513, %v4472
    %v4517 = vsel %vm4515, %v4514, %v4474
    %vm4518 = vcmask 195584
    %v4519 = vsel %vm4518, %v4516, %v4508
    %v4520 = vsel %vm4518, %v4517, %v4510
    %v4521 = vlaneseq
    %v4522 = vshrl.u32 %v4521, 7
    %v4523 = vsub.s32 1, %v4522
    %v4524 = vrot.slane %v224, %v4523
    %v4526 = vsel %vm230, %v4519, 0
    %v4529 = vsel %vm230, %v4520, 0
    %4531 = vmatprep.subr.mxu0 0.0
    %4532 = vmatpush1.msra.mxu0 %v208
    %4533 = vmatprep.subr.mxu0 0.0
    %4534 = vmatpush1.msra.mxu0 %v209
    %4535 = vmatprep.subr.mxu0 0.0
    %4536 = vmatpush1.msra.mxu0 %v210
    %4537 = vmatprep.subr.mxu0 0.0
    %4538 = vmatpush1.msra.mxu0 %v211
    %4539 = vmatprep.subr.mxu0 0.0
    %4540 = vmatpush1.msra.mxu0 0.0
    %4541 = vmatprep.subr.mxu0 0.0
    %4542 = vmatpush1.msra.mxu0 0.0
    %4543 = vmatprep.subr.mxu0 0.0
    %4544 = vmatpush1.msra.mxu0 0.0
    %4545 = vmatprep.subr.mxu0 0.0
    %4546 = vmatpush1.msra.mxu0 0.0
    %4547 = vmatprep.subr.mxu0 0.0
    %4548 = vmatpush1.msra.mxu0 0.0
    %4549 = vmatprep.subr.mxu0 0.0
    %4550 = vmatpush1.msra.mxu0 0.0
    %4551 = vmatprep.subr.mxu0 0.0
    %4552 = vmatpush1.msra.mxu0 0.0
    %4553 = vmatprep.subr.mxu0 0.0
    %4554 = vmatpush1.msra.mxu0 0.0
    %4555 = vmatprep.subr.mxu0 0.0
    %4556 = vmatpush1.msra.mxu0 0.0
    %4557 = vmatprep.subr.mxu0 0.0
    %4558 = vmatpush1.msra.mxu0 0.0
    %4559 = vmatprep.subr.mxu0 0.0
    %4560 = vmatpush1.msra.mxu0 0.0
    %4561 = vmatprep.subr.mxu0 0.0
    %4562 = vmatpush1.msra.mxu0 0.0
    %4563 = vmatprep.subr.mxu0 0.0
    %4564 = vmatpush1.msra.mxu0 0.0
    %4565 = vmatprep.subr.mxu0 0.0
    %4566 = vmatpush1.msra.mxu0 0.0
    %4567 = vmatprep.subr.mxu0 0.0
    %4568 = vmatpush1.msra.mxu0 0.0
    %4569 = vmatprep.subr.mxu0 0.0
    %4570 = vmatpush1.msra.mxu0 0.0
    %4571 = vmatprep.subr.mxu0 0.0
    %4572 = vmatpush1.msra.mxu0 0.0
    %4573 = vmatprep.subr.mxu0 0.0
    %4574 = vmatpush1.msra.mxu0 0.0
    %4575 = vmatprep.subr.mxu0 0.0
    %4576 = vmatpush1.msra.mxu0 0.0
    %4577 = vmatprep.subr.mxu0 0.0
    %4578 = vmatpush1.msra.mxu0 0.0
    %4579 = vmatprep.subr.mxu0 0.0
    %4580 = vmatpush1.msra.mxu0 0.0
    %4581 = vmatprep.subr.mxu0 0.0
    %4582 = vmatpush1.msra.mxu0 0.0
    %4583 = vmatprep.subr.mxu0 0.0
    %4584 = vmatpush1.msra.mxu0 0.0
    %4585 = vmatprep.subr.mxu0 0.0
    %4586 = vmatpush1.msra.mxu0 0.0
    %4587 = vmatprep.subr.mxu0 0.0
    %4588 = vmatpush1.msra.mxu0 0.0
    %4589 = vmatprep.subr.mxu0 0.0
    %4590 = vmatpush1.msra.mxu0 0.0
    %4591 = vmatprep.subr.mxu0 0.0
    %4592 = vmatpush1.msra.mxu0 0.0
    %4593 = vmatprep.subr.mxu0 0.0
    %4594 = vmatpush1.msra.mxu0 0.0
    %4595 = vmatprep.mubr.f32.mxu0 0.0
    %4596 = vmatmul.mubr.f32.gmra.mrb[0].mxu0 %v4526
    %v4597 = vpop.f32.mrb[0].mxu0
    %v4598 = vadd.f32 %v4524, %v4597
    %v4599 = vpop.f32.mrb[0].mxu0
    %4600 = vmatprep.mubr.f32.mxu0 0.0
    %4601 = vmatmul.mubr.f32.gmra.mrb[0].mxu0 %v4529
    %v4602 = vpop.f32.mrb[0].mxu0
    %v4603 = vadd.f32 %v4524, %v4602
    %v4604 = vpop.f32.mrb[0].mxu0
    %4605 = vdwg.mxu0
    %v4606 = vadd.f32 %v202, %v4598
    %v4607 = vadd.f32 %v203, %v4603
    %v4608 = vsel %vm230, %v4606, 0.0
    %4609 = vadd.xlane.f32.xlu0 %v4608
    %v4610 = vpop.xlane.xlu0 %4609
    %v4611 = vsel %vm230, %v4607, 0.0
    %4612 = vadd.xlane.f32.xlu0 %v4611
    %v4613 = vpop.xlane.xlu0 %4612
    %v4614 = vrcp.pop 32.0
    %v4615 = vmul.f32 %v4610, %v4614
    %v4616 = vmul.f32 %v4613, %v4614
    %v4617 = vsub.f32 %v4606, %v4615
    %v4618 = vsub.f32 %v4607, %v4616
    %v4619 = vmul.f32 %v4617, %v4617
    %v4620 = vmul.f32 %v4618, %v4618
    %v4621 = vsel %vm230, %v4619, 0.0
    %4622 = vadd.xlane.f32.xlu0 %v4621
    %v4623 = vpop.xlane.xlu0 %4622
    %v4624 = vsel %vm230, %v4620, 0.0
    %4625 = vadd.xlane.f32.xlu0 %v4624
    %v4626 = vpop.xlane.xlu0 %4625
    %v4627 = vmul.f32 %v4623, %v4614
    %v4628 = vmul.f32 %v4626, %v4614
    %v4629 = vadd.f32 %v4627, 1e-05
    %v4630 = vadd.f32 %v4628, 1e-05
    %v4631 = vrsqrt.pop %v4629
    %v4632 = vrsqrt.pop %v4630
    %v4633 = vmul.f32 %v4617, %v4631
    %v4634 = vmul.f32 %v4618, %v4632
    %v4635 = vlaneseq
    %v4636 = vshrl.u32 %v4635, 7
    %v4637 = vsub.s32 3, %v4636
    %v4638 = vrot.slane %v224, %v4637
    %v4639 = vmul.f32 %v4633, %v4638
    %v4640 = vmul.f32 %v4634, %v4638
    %v4641 = vlaneseq
    %v4642 = vshrl.u32 %v4641, 7
    %v4643 = vsub.s32 4, %v4642
    %v4644 = vrot.slane %v224, %v4643
    %v4645 = vadd.f32 %v4639, %v4644
    %v4646 = vadd.f32 %v4640, %v4644
    %v4647 = vlaneseq
    %v4648 = vshrl.u32 %v4647, 7
    %v4649 = vsub.s32 5, %v4648
    %v4650 = vrot.slane %v224, %v4649
    %v4652 = vsel %vm230, %v4645, 0
    %v4655 = vsel %vm230, %v4646, 0
    %4657 = vmatprep.subr.mxu0 0.0
    %4658 = vmatpush1.msra.mxu0 %v212
    %4659 = vmatprep.subr.mxu0 0.0
    %4660 = vmatpush1.msra.mxu0 %v213
    %4661 = vmatprep.subr.mxu0 0.0
    %4662 = vmatpush1.msra.mxu0 %v214
    %4663 = vmatprep.subr.mxu0 0.0
    %4664 = vmatpush1.msra.mxu0 %v215
    %4665 = vmatprep.subr.mxu0 0.0
    %4666 = vmatpush1.msra.mxu0 0.0
    %4667 = vmatprep.subr.mxu0 0.0
    %4668 = vmatpush1.msra.mxu0 0.0
    %4669 = vmatprep.subr.mxu0 0.0
    %4670 = vmatpush1.msra.mxu0 0.0
    %4671 = vmatprep.subr.mxu0 0.0
    %4672 = vmatpush1.msra.mxu0 0.0
    %4673 = vmatprep.subr.mxu0 0.0
    %4674 = vmatpush1.msra.mxu0 0.0
    %4675 = vmatprep.subr.mxu0 0.0
    %4676 = vmatpush1.msra.mxu0 0.0
    %4677 = vmatprep.subr.mxu0 0.0
    %4678 = vmatpush1.msra.mxu0 0.0
    %4679 = vmatprep.subr.mxu0 0.0
    %4680 = vmatpush1.msra.mxu0 0.0
    %4681 = vmatprep.subr.mxu0 0.0
    %4682 = vmatpush1.msra.mxu0 0.0
    %4683 = vmatprep.subr.mxu0 0.0
    %4684 = vmatpush1.msra.mxu0 0.0
    %4685 = vmatprep.subr.mxu0 0.0
    %4686 = vmatpush1.msra.mxu0 0.0
    %4687 = vmatprep.subr.mxu0 0.0
    %4688 = vmatpush1.msra.mxu0 0.0
    %4689 = vmatprep.subr.mxu0 0.0
    %4690 = vmatpush1.msra.mxu0 0.0
    %4691 = vmatprep.subr.mxu0 0.0
    %4692 = vmatpush1.msra.mxu0 0.0
    %4693 = vmatprep.subr.mxu0 0.0
    %4694 = vmatpush1.msra.mxu0 0.0
    %4695 = vmatprep.subr.mxu0 0.0
    %4696 = vmatpush1.msra.mxu0 0.0
    %4697 = vmatprep.subr.mxu0 0.0
    %4698 = vmatpush1.msra.mxu0 0.0
    %4699 = vmatprep.subr.mxu0 0.0
    %4700 = vmatpush1.msra.mxu0 0.0
    %4701 = vmatprep.subr.mxu0 0.0
    %4702 = vmatpush1.msra.mxu0 0.0
    %4703 = vmatprep.subr.mxu0 0.0
    %4704 = vmatpush1.msra.mxu0 0.0
    %4705 = vmatprep.subr.mxu0 0.0
    %4706 = vmatpush1.msra.mxu0 0.0
    %4707 = vmatprep.subr.mxu0 0.0
    %4708 = vmatpush1.msra.mxu0 0.0
    %4709 = vmatprep.subr.mxu0 0.0
    %4710 = vmatpush1.msra.mxu0 0.0
    %4711 = vmatprep.subr.mxu0 0.0
    %4712 = vmatpush1.msra.mxu0 0.0
    %4713 = vmatprep.subr.mxu0 0.0
    %4714 = vmatpush1.msra.mxu0 0.0
    %4715 = vmatprep.subr.mxu0 0.0
    %4716 = vmatpush1.msra.mxu0 0.0
    %4717 = vmatprep.subr.mxu0 0.0
    %4718 = vmatpush1.msra.mxu0 0.0
    %4719 = vmatprep.subr.mxu0 0.0
    %4720 = vmatpush1.msra.mxu0 0.0
    %4721 = vmatprep.mubr.f32.mxu0 0.0
    %4722 = vmatmul.mubr.f32.gmra.mrb[0].mxu0 %v4652
    %v4723 = vpop.f32.mrb[0].mxu0
    %v4724 = vadd.f32 %v4650, %v4723
    %v4725 = vpop.f32.mrb[0].mxu0
    %4726 = vmatprep.mubr.f32.mxu0 0.0
    %4727 = vmatmul.mubr.f32.gmra.mrb[0].mxu0 %v4655
    %v4728 = vpop.f32.mrb[0].mxu0
    %v4729 = vadd.f32 %v4650, %v4728
    %v4730 = vpop.f32.mrb[0].mxu0
    %4731 = vdwg.mxu0
    %v4732 = vmax.f32 %v4724, 0.0
    %v4733 = vmax.f32 %v4729, 0.0
    %v4734 = vlaneseq
    %v4735 = vshrl.u32 %v4734, 7
    %v4736 = vsub.s32 6, %v4735
    %v4737 = vrot.slane %v224, %v4736
    %vm4738 = vcmask 523264
    %v4740 = vsel %vm4738, %v4732, 0
    %v4743 = vsel %vm4738, %v4733, 0
    %4745 = vmatprep.subr.mxu0 0.0
    %4746 = vmatpush1.msra.mxu0 %v216
    %4747 = vmatprep.subr.mxu0 0.0
    %4748 = vmatpush1.msra.mxu0 %v217
    %4749 = vmatprep.subr.mxu0 0.0
    %4750 = vmatpush1.msra.mxu0 %v218
    %4751 = vmatprep.subr.mxu0 0.0
    %4752 = vmatpush1.msra.mxu0 %v219
    %4753 = vmatprep.subr.mxu0 0.0
    %4754 = vmatpush1.msra.mxu0 %v220
    %4755 = vmatprep.subr.mxu0 0.0
    %4756 = vmatpush1.msra.mxu0 %v221
    %4757 = vmatprep.subr.mxu0 0.0
    %4758 = vmatpush1.msra.mxu0 %v222
    %4759 = vmatprep.subr.mxu0 0.0
    %4760 = vmatpush1.msra.mxu0 %v223
    %4761 = vmatprep.subr.mxu0 0.0
    %4762 = vmatpush1.msra.mxu0 0.0
    %4763 = vmatprep.subr.mxu0 0.0
    %4764 = vmatpush1.msra.mxu0 0.0
    %4765 = vmatprep.subr.mxu0 0.0
    %4766 = vmatpush1.msra.mxu0 0.0
    %4767 = vmatprep.subr.mxu0 0.0
    %4768 = vmatpush1.msra.mxu0 0.0
    %4769 = vmatprep.subr.mxu0 0.0
    %4770 = vmatpush1.msra.mxu0 0.0
    %4771 = vmatprep.subr.mxu0 0.0
    %4772 = vmatpush1.msra.mxu0 0.0
    %4773 = vmatprep.subr.mxu0 0.0
    %4774 = vmatpush1.msra.mxu0 0.0
    %4775 = vmatprep.subr.mxu0 0.0
    %4776 = vmatpush1.msra.mxu0 0.0
    %4777 = vmatprep.subr.mxu0 0.0
    %4778 = vmatpush1.msra.mxu0 0.0
    %4779 = vmatprep.subr.mxu0 0.0
    %4780 = vmatpush1.msra.mxu0 0.0
    %4781 = vmatprep.subr.mxu0 0.0
    %4782 = vmatpush1.msra.mxu0 0.0
    %4783 = vmatprep.subr.mxu0 0.0
    %4784 = vmatpush1.msra.mxu0 0.0
    %4785 = vmatprep.subr.mxu0 0.0
    %4786 = vmatpush1.msra.mxu0 0.0
    %4787 = vmatprep.subr.mxu0 0.0
    %4788 = vmatpush1.msra.mxu0 0.0
    %4789 = vmatprep.subr.mxu0 0.0
    %4790 = vmatpush1.msra.mxu0 0.0
    %4791 = vmatprep.subr.mxu0 0.0
    %4792 = vmatpush1.msra.mxu0 0.0
    %4793 = vmatprep.subr.mxu0 0.0
    %4794 = vmatpush1.msra.mxu0 0.0
    %4795 = vmatprep.subr.mxu0 0.0
    %4796 = vmatpush1.msra.mxu0 0.0
    %4797 = vmatprep.subr.mxu0 0.0
    %4798 = vmatpush1.msra.mxu0 0.0
    %4799 = vmatprep.subr.mxu0 0.0
    %4800 = vmatpush1.msra.mxu0 0.0
    %4801 = vmatprep.subr.mxu0 0.0
    %4802 = vmatpush1.msra.mxu0 0.0
    %4803 = vmatprep.subr.mxu0 0.0
    %4804 = vmatpush1.msra.mxu0 0.0
    %4805 = vmatprep.subr.mxu0 0.0
    %4806 = vmatpush1.msra.mxu0 0.0
    %4807 = vmatprep.subr.mxu0 0.0
    %4808 = vmatpush1.msra.mxu0 0.0
    %4809 = vmatprep.mubr.f32.mxu0 0.0
    %4810 = vmatmul.mubr.f32.gmra.mrb[0].mxu0 %v4740
    %v4811 = vpop.f32.mrb[0].mxu0
    %v4812 = vadd.f32 %v4737, %v4811
    %v4813 = vpop.f32.mrb[0].mxu0
    %4814 = vmatprep.mubr.f32.mxu0 0.0
    %4815 = vmatmul.mubr.f32.gmra.mrb[0].mxu0 %v4743
    %v4816 = vpop.f32.mrb[0].mxu0
    %v4817 = vadd.f32 %v4737, %v4816
    %v4818 = vpop.f32.mrb[0].mxu0
    %4819 = vdwg.mxu0
    %v4820 = vadd.f32 %v4645, %v4812
    %v4821 = vadd.f32 %v4646, %v4817
    %v4822 = vsel %vm230, %v4820, 0.0
    %4823 = vadd.xlane.f32.xlu0 %v4822
    %v4824 = vpop.xlane.xlu0 %4823
    %v4825 = vsel %vm230, %v4821, 0.0
    %4826 = vadd.xlane.f32.xlu0 %v4825
    %v4827 = vpop.xlane.xlu0 %4826
    %v4828 = vmul.f32 %v4824, %v4614
    %v4829 = vmul.f32 %v4827, %v4614
    %v4830 = vsub.f32 %v4820, %v4828
    %v4831 = vsub.f32 %v4821, %v4829
    %v4832 = vmul.f32 %v4830, %v4830
    %v4833 = vmul.f32 %v4831, %v4831
    %v4834 = vsel %vm230, %v4832, 0.0
    %4835 = vadd.xlane.f32.xlu0 %v4834
    %v4836 = vpop.xlane.xlu0 %4835
    %v4837 = vsel %vm230, %v4833, 0.0
    %4838 = vadd.xlane.f32.xlu0 %v4837
    %v4839 = vpop.xlane.xlu0 %4838
    %v4840 = vmul.f32 %v4836, %v4614
    %v4841 = vmul.f32 %v4839, %v4614
    %v4842 = vadd.f32 %v4840, 1e-05
    %v4843 = vadd.f32 %v4841, 1e-05
    %v4844 = vrsqrt.pop %v4842
    %v4845 = vrsqrt.pop %v4843
    %v4846 = vmul.f32 %v4830, %v4844
    %v4847 = vmul.f32 %v4831, %v4845
    %v4848 = vlaneseq
    %v4849 = vshrl.u32 %v4848, 7
    %v4850 = vsub.s32 7, %v4849
    %v4851 = vrot.slane %v224, %v4850
    %v4852 = vmul.f32 %v4846, %v4851
    %v4853 = vmul.f32 %v4847, %v4851
    %v4854 = vlaneseq
    %v4855 = vshrl.u32 %v4854, 7
    %v4856 = vsub.s32 0, %v4855
    %v4857 = vrot.slane %v225, %v4856
    %v4858 = vadd.f32 %v4852, %v4857
    %v4859 = vadd.f32 %v4853, %v4857
    %v4860 = vld [vmem:[#allocation6 + $0xb0] sm:$0xff]
    %v4861 = vld [vmem:[#allocation6 + $0xb8] sm:$0xff]
    %v4862 = vld [vmem:[#allocation6 + $0xc0] sm:$0xff]
    %v4863 = vld [vmem:[#allocation6 + $0xc8] sm:$0xff]
    %v4864 = vld [vmem:[#allocation6 + $0xd0] sm:$0xff]
    %v4865 = vld [vmem:[#allocation6 + $0xd8] sm:$0xff]
    %v4866 = vld [vmem:[#allocation6 + $0xe0] sm:$0xff]
    %v4867 = vld [vmem:[#allocation6 + $0xe8] sm:$0xff]
    %v4868 = vld [vmem:[#allocation6 + $0xf0] sm:$0xff]
    %v4869 = vld [vmem:[#allocation6 + $0xf8] sm:$0xff]
    %v4870 = vld [vmem:[#allocation6 + $0x100] sm:$0xff]
    %v4871 = vld [vmem:[#allocation6 + $0x108] sm:$0xff]
    %v4872 = vld [vmem:[#allocation6 + $0x110] sm:$0xff]
    %v4873 = vld [vmem:[#allocation6 + $0x118] sm:$0xff]
    %v4874 = vld [vmem:[#allocation6 + $0x120] sm:$0xff]
    %v4875 = vld [vmem:[#allocation6 + $0x128] sm:$0xff]
    %v4876 = vld [vmem:[#allocation6 + $0x130] sm:$0xff]
    %v4877 = vld [vmem:[#allocation6 + $0x138] sm:$0xff]
    %v4878 = vld [vmem:[#allocation6 + $0x140] sm:$0xff]
    %v4879 = vld [vmem:[#allocation6 + $0x148] sm:$0xff]
    %v4880 = vld [vmem:[#allocation6 + $0x150] sm:$0xff]
    %v4881 = vld [vmem:[#allocation6 + $0x158] sm:$0x7]
    %v4882 = vlaneseq
    %v4883 = vshrl.u32 %v4882, 7
    %v4884 = vsub.s32 0, %v4883
    %v4885 = vrot.slane %v4880, %v4884
    %v4887 = vsel %vm230, %v4858, 0
    %v4890 = vsel %vm230, %v4859, 0
    %4892 = vmatprep.subr.mxu0 0.0
    %4893 = vmatpush1.msra.mxu0 %v4860
    %4894 = vmatprep.subr.mxu0 0.0
    %4895 = vmatpush1.msra.mxu0 %v4861
    %4896 = vmatprep.subr.mxu0 0.0
    %4897 = vmatpush1.msra.mxu0 %v4862
    %4898 = vmatprep.subr.mxu0 0.0
    %4899 = vmatpush1.msra.mxu0 %v4863
    %4900 = vmatprep.subr.mxu0 0.0
    %4901 = vmatpush1.msra.mxu0 0.0
    %4902 = vmatprep.subr.mxu0 0.0
    %4903 = vmatpush1.msra.mxu0 0.0
    %4904 = vmatprep.subr.mxu0 0.0
    %4905 = vmatpush1.msra.mxu0 0.0
    %4906 = vmatprep.subr.mxu0 0.0
    %4907 = vmatpush1.msra.mxu0 0.0
    %4908 = vmatprep.subr.mxu0 0.0
    %4909 = vmatpush1.msra.mxu0 0.0
    %4910 = vmatprep.subr.mxu0 0.0
    %4911 = vmatpush1.msra.mxu0 0.0
    %4912 = vmatprep.subr.mxu0 0.0
    %4913 = vmatpush1.msra.mxu0 0.0
    %4914 = vmatprep.subr.mxu0 0.0
    %4915 = vmatpush1.msra.mxu0 0.0
    %4916 = vmatprep.subr.mxu0 0.0
    %4917 = vmatpush1.msra.mxu0 0.0
    %4918 = vmatprep.subr.mxu0 0.0
    %4919 = vmatpush1.msra.mxu0 0.0
    %4920 = vmatprep.subr.mxu0 0.0
    %4921 = vmatpush1.msra.mxu0 0.0
    %4922 = vmatprep.subr.mxu0 0.0
    %4923 = vmatpush1.msra.mxu0 0.0
    %4924 = vmatprep.subr.mxu0 0.0
    %4925 = vmatpush1.msra.mxu0 0.0
    %4926 = vmatprep.subr.mxu0 0.0
    %4927 = vmatpush1.msra.mxu0 0.0
    %4928 = vmatprep.subr.mxu0 0.0
    %4929 = vmatpush1.msra.mxu0 0.0
    %4930 = vmatprep.subr.mxu0 0.0
    %4931 = vmatpush1.msra.mxu0 0.0
    %4932 = vmatprep.subr.mxu0 0.0
    %4933 = vmatpush1.msra.mxu0 0.0
    %4934 = vmatprep.subr.mxu0 0.0
    %4935 = vmatpush1.msra.mxu0 0.0
    %4936 = vmatprep.subr.mxu0 0.0
    %4937 = vmatpush1.msra.mxu0 0.0
    %4938 = vmatprep.subr.mxu0 0.0
    %4939 = vmatpush1.msra.mxu0 0.0
    %4940 = vmatprep.subr.mxu0 0.0
    %4941 = vmatpush1.msra.mxu0 0.0
    %4942 = vmatprep.subr.mxu0 0.0
    %4943 = vmatpush1.msra.mxu0 0.0
    %4944 = vmatprep.subr.mxu0 0.0
    %4945 = vmatpush1.msra.mxu0 0.0
    %4946 = vmatprep.subr.mxu0 0.0
    %4947 = vmatpush1.msra.mxu0 0.0
    %4948 = vmatprep.subr.mxu0 0.0
    %4949 = vmatpush1.msra.mxu0 0.0
    %4950 = vmatprep.subr.mxu0 0.0
    %4951 = vmatpush1.msra.mxu0 0.0
    %4952 = vmatprep.subr.mxu0 0.0
    %4953 = vmatpush1.msra.mxu0 0.0
    %4954 = vmatprep.subr.mxu0 0.0
    %4955 = vmatpush1.msra.mxu0 0.0
    %4956 = vmatprep.mubr.f32.mxu0 0.0
    %4957 = vmatmul.mubr.f32.gmra.mrb[0].mxu0 %v4887
    %v4958 = vpop.f32.mrb[0].mxu0
    %v4959 = vadd.f32 %v4885, %v4958
    %v4960 = vpop.f32.mrb[0].mxu0
    %4961 = vmatprep.mubr.f32.mxu0 0.0
    %4962 = vmatmul.mubr.f32.gmra.mrb[0].mxu0 %v4890
    %v4963 = vpop.f32.mrb[0].mxu0
    %v4964 = vadd.f32 %v4885, %v4963
    %v4965 = vpop.f32.mrb[0].mxu0
    %4966 = vdwg.mxu0
    %v4967 = vlaneseq
    %v4968 = vshrl.u32 %v4967, 7
    %v4969 = vsub.s32 2, %v4968
    %v4970 = vrot.slane %v4880, %v4969
    %v4971 = vmul.f32 %v4970, %v4881
    %v4974 = vrot.slane %v4959, 7
    %v4975 = vrot.slane %v4964, 6
    %v4976 = vsel %vm321, %v4975, %v4974
    %4977 = vrot.lane.b32.xlu0 %v4976, 64
    %v4978 = vpop.permute.xlu0 %4977
    %v4980 = vadd.f32 %v4971, %v4978
    %v4981 = vtanh.pop %v4980
    %v4984 = vunpack.c.l.s4 1966171168
    %v4985 = vunpack.c.0.s8 %v4984
    %v4986 = vlaneseq
    %v4987 = vshrl.u32 %v4986, 7
    %v4988 = vsub.s32 %v4985, %v4987
    %v4989 = vrot.slane %v4981, %v4988
    %v4990 = vcombine.high %v4989, %v4989
    %v4992 = vunpack.c.l.s4 1966171168
    %v4993 = vunpack.c.0.s8 %v4992
    %v4994 = vlaneseq
    %v4995 = vshrl.u32 %v4994, 7
    %v4996 = vsub.s32 %v4993, %v4995
    %v4997 = vrot.slane %v4989, %v4996
    %v4999 = vunpack.c.l.s4 1966171168
    %v5000 = vunpack.c.0.s8 %v4999
    %v5001 = vlaneseq
    %v5002 = vshrl.u32 %v5001, 7
    %v5003 = vsub.s32 %v5000, %v5002
    %v5004 = vrot.slane %v4990, %v5003
    %v5005 = vcombine.high %v4997, %v4997
    %v5008 = vmul.f32 %v4970, %v4981
    %v5009 = vrot.slane %v4964, 7
    %v5010 = vsel %vm321, %v5009, %v4959
    %5011 = vrot.lane.b32.xlu0 %v5010, 64
    %v5012 = vpop.permute.xlu0 %5011
    %v5014 = vadd.f32 %v5008, %v5012
    %v5015 = vtanh.pop %v5014
    %v5018 = vunpack.c.l.s4 1966171168
    %v5019 = vunpack.c.0.s8 %v5018
    %v5020 = vlaneseq
    %v5021 = vshrl.u32 %v5020, 7
    %v5022 = vsub.s32 %v5019, %v5021
    %v5023 = vrot.slane %v5015, %v5022
    %v5024 = vcombine.high %v5023, %v5023
    %v5026 = vunpack.c.l.s4 1966171168
    %v5027 = vunpack.c.0.s8 %v5026
    %v5028 = vlaneseq
    %v5029 = vshrl.u32 %v5028, 7
    %v5030 = vsub.s32 %v5027, %v5029
    %v5031 = vrot.slane %v5023, %v5030
    %v5033 = vunpack.c.l.s4 1966171168
    %v5034 = vunpack.c.0.s8 %v5033
    %v5035 = vlaneseq
    %v5036 = vshrl.u32 %v5035, 7
    %v5037 = vsub.s32 %v5034, %v5036
    %v5038 = vrot.slane %v5024, %v5037
    %v5039 = vcombine.high %v5031, %v5031
    %v5040 = vmul.f32 %v4970, %v5015
    %v5041 = vrot.slane %v4959, 1
    %v5042 = vsel %vm321, %v4964, %v5041
    %5043 = vrot.lane.b32.xlu0 %v5042, 64
    %v5044 = vpop.permute.xlu0 %5043
    %v5046 = vadd.f32 %v5040, %v5044
    %v5047 = vtanh.pop %v5046
    %v5050 = vunpack.c.l.s4 1966171168
    %v5051 = vunpack.c.0.s8 %v5050
    %v5052 = vlaneseq
    %v5053 = vshrl.u32 %v5052, 7
    %v5054 = vsub.s32 %v5051, %v5053
    %v5055 = vrot.slane %v5047, %v5054
    %v5056 = vcombine.high %v5055, %v5055
    %v5058 = vunpack.c.l.s4 1966171168
    %v5059 = vunpack.c.0.s8 %v5058
    %v5060 = vlaneseq
    %v5061 = vshrl.u32 %v5060, 7
    %v5062 = vsub.s32 %v5059, %v5061
    %v5063 = vrot.slane %v5055, %v5062
    %v5065 = vunpack.c.l.s4 1966171168
    %v5066 = vunpack.c.0.s8 %v5065
    %v5067 = vlaneseq
    %v5068 = vshrl.u32 %v5067, 7
    %v5069 = vsub.s32 %v5066, %v5068
    %v5070 = vrot.slane %v5056, %v5069
    %v5071 = vcombine.high %v5063, %v5063
    %v5072 = vmul.f32 %v4970, %v5047
    %v5073 = vrot.slane %v4959, 2
    %v5074 = vrot.slane %v4964, 1
    %v5075 = vsel %vm321, %v5074, %v5073
    %5076 = vrot.lane.b32.xlu0 %v5075, 64
    %v5077 = vpop.permute.xlu0 %5076
    %v5079 = vadd.f32 %v5072, %v5077
    %v5080 = vtanh.pop %v5079
    %v5083 = vunpack.c.l.s4 1966171168
    %v5084 = vunpack.c.0.s8 %v5083
    %v5085 = vlaneseq
    %v5086 = vshrl.u32 %v5085, 7
    %v5087 = vsub.s32 %v5084, %v5086
    %v5088 = vrot.slane %v5080, %v5087
    %v5089 = vcombine.high %v5088, %v5088
    %v5091 = vunpack.c.l.s4 1966171168
    %v5092 = vunpack.c.0.s8 %v5091
    %v5093 = vlaneseq
    %v5094 = vshrl.u32 %v5093, 7
    %v5095 = vsub.s32 %v5092, %v5094
    %v5096 = vrot.slane %v5088, %v5095
    %v5098 = vunpack.c.l.s4 1966171168
    %v5099 = vunpack.c.0.s8 %v5098
    %v5100 = vlaneseq
    %v5101 = vshrl.u32 %v5100, 7
    %v5102 = vsub.s32 %v5099, %v5101
    %v5103 = vrot.slane %v5089, %v5102
    %v5104 = vcombine.high %v5096, %v5096
    %v5105 = vmul.f32 %v4970, %v5080
    %v5106 = vrot.slane %v4959, 3
    %v5107 = vrot.slane %v4964, 2
    %v5108 = vsel %vm321, %v5107, %v5106
    %5109 = vrot.lane.b32.xlu0 %v5108, 64
    %v5110 = vpop.permute.xlu0 %5109
    %v5112 = vadd.f32 %v5105, %v5110
    %v5113 = vtanh.pop %v5112
    %v5116 = vunpack.c.l.s4 1966171168
    %v5117 = vunpack.c.0.s8 %v5116
    %v5118 = vlaneseq
    %v5119 = vshrl.u32 %v5118, 7
    %v5120 = vsub.s32 %v5117, %v5119
    %v5121 = vrot.slane %v5113, %v5120
    %v5122 = vcombine.high %v5121, %v5121
    %v5124 = vunpack.c.l.s4 1966171168
    %v5125 = vunpack.c.0.s8 %v5124
    %v5126 = vlaneseq
    %v5127 = vshrl.u32 %v5126, 7
    %v5128 = vsub.s32 %v5125, %v5127
    %v5129 = vrot.slane %v5121, %v5128
    %v5131 = vunpack.c.l.s4 1966171168
    %v5132 = vunpack.c.0.s8 %v5131
    %v5133 = vlaneseq
    %v5134 = vshrl.u32 %v5133, 7
    %v5135 = vsub.s32 %v5132, %v5134
    %v5136 = vrot.slane %v5122, %v5135
    %v5137 = vcombine.high %v5129, %v5129
    %v5138 = vmul.f32 %v4970, %v5113
    %v5139 = vrot.slane %v4959, 4
    %v5140 = vrot.slane %v4964, 3
    %v5141 = vsel %vm321, %v5140, %v5139
    %5142 = vrot.lane.b32.xlu0 %v5141, 64
    %v5143 = vpop.permute.xlu0 %5142
    %v5145 = vadd.f32 %v5138, %v5143
    %v5146 = vtanh.pop %v5145
    %v5149 = vunpack.c.l.s4 1966171168
    %v5150 = vunpack.c.0.s8 %v5149
    %v5151 = vlaneseq
    %v5152 = vshrl.u32 %v5151, 7
    %v5153 = vsub.s32 %v5150, %v5152
    %v5154 = vrot.slane %v5146, %v5153
    %v5155 = vcombine.high %v5154, %v5154
    %v5157 = vunpack.c.l.s4 1966171168
    %v5158 = vunpack.c.0.s8 %v5157
    %v5159 = vlaneseq
    %v5160 = vshrl.u32 %v5159, 7
    %v5161 = vsub.s32 %v5158, %v5160
    %v5162 = vrot.slane %v5154, %v5161
    %v5164 = vunpack.c.l.s4 1966171168
    %v5165 = vunpack.c.0.s8 %v5164
    %v5166 = vlaneseq
    %v5167 = vshrl.u32 %v5166, 7
    %v5168 = vsub.s32 %v5165, %v5167
    %v5169 = vrot.slane %v5155, %v5168
    %v5170 = vcombine.high %v5162, %v5162
    %v5171 = vmul.f32 %v4970, %v5146
    %v5172 = vrot.slane %v4959, 5
    %v5173 = vrot.slane %v4964, 4
    %v5174 = vsel %vm321, %v5173, %v5172
    %5175 = vrot.lane.b32.xlu0 %v5174, 64
    %v5176 = vpop.permute.xlu0 %5175
    %v5178 = vadd.f32 %v5171, %v5176
    %v5179 = vtanh.pop %v5178
    %v5182 = vunpack.c.l.s4 1966171168
    %v5183 = vunpack.c.0.s8 %v5182
    %v5184 = vlaneseq
    %v5185 = vshrl.u32 %v5184, 7
    %v5186 = vsub.s32 %v5183, %v5185
    %v5187 = vrot.slane %v5179, %v5186
    %v5188 = vcombine.high %v5187, %v5187
    %v5190 = vunpack.c.l.s4 1966171168
    %v5191 = vunpack.c.0.s8 %v5190
    %v5192 = vlaneseq
    %v5193 = vshrl.u32 %v5192, 7
    %v5194 = vsub.s32 %v5191, %v5193
    %v5195 = vrot.slane %v5187, %v5194
    %v5197 = vunpack.c.l.s4 1966171168
    %v5198 = vunpack.c.0.s8 %v5197
    %v5199 = vlaneseq
    %v5200 = vshrl.u32 %v5199, 7
    %v5201 = vsub.s32 %v5198, %v5200
    %v5202 = vrot.slane %v5188, %v5201
    %v5203 = vcombine.high %v5195, %v5195
    %v5204 = vmul.f32 %v4970, %v5179
    %v5205 = vrot.slane %v4959, 6
    %v5206 = vrot.slane %v4964, 5
    %v5207 = vsel %vm321, %v5206, %v5205
    %5208 = vrot.lane.b32.xlu0 %v5207, 64
    %v5209 = vpop.permute.xlu0 %5208
    %v5211 = vadd.f32 %v5204, %v5209
    %v5212 = vtanh.pop %v5211
    %v5215 = vunpack.c.l.s4 1966171168
    %v5216 = vunpack.c.0.s8 %v5215
    %v5217 = vlaneseq
    %v5218 = vshrl.u32 %v5217, 7
    %v5219 = vsub.s32 %v5216, %v5218
    %v5220 = vrot.slane %v5212, %v5219
    %v5221 = vcombine.high %v5220, %v5220
    %v5223 = vunpack.c.l.s4 1966171168
    %v5224 = vunpack.c.0.s8 %v5223
    %v5225 = vlaneseq
    %v5226 = vshrl.u32 %v5225, 7
    %v5227 = vsub.s32 %v5224, %v5226
    %v5228 = vrot.slane %v5220, %v5227
    %v5230 = vunpack.c.l.s4 1966171168
    %v5231 = vunpack.c.0.s8 %v5230
    %v5232 = vlaneseq
    %v5233 = vshrl.u32 %v5232, 7
    %v5234 = vsub.s32 %v5231, %v5233
    %v5235 = vrot.slane %v5221, %v5234
    %v5236 = vcombine.high %v5228, %v5228
    %v5237 = vlaneseq
    %v5238 = vshrl.u32 %v5237, 7
    %v5239 = vsub.s32 0, %v5238
    %v5240 = vrot.slane %v5038, %v5239
    %v5241 = vlaneseq
    %v5242 = vshrl.u32 %v5241, 7
    %v5243 = vsub.s32 0, %v5242
    %v5244 = vrot.slane %v5039, %v5243
    %v5247 = vlaneseq
    %v5248 = vshrl.u32 %v5247, 7
    %v5249 = vsub.s32 0, %v5248
    %v5250 = vrot.slane %v5070, %v5249
    %v5251 = vlaneseq
    %v5252 = vshrl.u32 %v5251, 7
    %v5253 = vsub.s32 0, %v5252
    %v5254 = vrot.slane %v5071, %v5253
    %v5257 = vlaneseq
    %v5258 = vshrl.u32 %v5257, 7
    %v5259 = vsub.s32 0, %v5258
    %v5260 = vrot.slane %v5103, %v5259
    %v5261 = vlaneseq
    %v5262 = vshrl.u32 %v5261, 7
    %v5263 = vsub.s32 0, %v5262
    %v5264 = vrot.slane %v5104, %v5263
    %v5267 = vlaneseq
    %v5268 = vshrl.u32 %v5267, 7
    %v5269 = vsub.s32 0, %v5268
    %v5270 = vrot.slane %v5136, %v5269
    %v5271 = vlaneseq
    %v5272 = vshrl.u32 %v5271, 7
    %v5273 = vsub.s32 0, %v5272
    %v5274 = vrot.slane %v5137, %v5273
    %v5277 = vlaneseq
    %v5278 = vshrl.u32 %v5277, 7
    %v5279 = vsub.s32 0, %v5278
    %v5280 = vrot.slane %v5169, %v5279
    %v5281 = vlaneseq
    %v5282 = vshrl.u32 %v5281, 7
    %v5283 = vsub.s32 0, %v5282
    %v5284 = vrot.slane %v5170, %v5283
    %v5287 = vlaneseq
    %v5288 = vshrl.u32 %v5287, 7
    %v5289 = vsub.s32 0, %v5288
    %v5290 = vrot.slane %v5202, %v5289
    %v5291 = vlaneseq
    %v5292 = vshrl.u32 %v5291, 7
    %v5293 = vsub.s32 0, %v5292
    %v5294 = vrot.slane %v5203, %v5293
    %v5297 = vlaneseq
    %v5298 = vshrl.u32 %v5297, 7
    %v5299 = vsub.s32 0, %v5298
    %v5300 = vrot.slane %v5235, %v5299
    %v5301 = vlaneseq
    %v5302 = vshrl.u32 %v5301, 7
    %v5303 = vsub.s32 0, %v5302
    %v5304 = vrot.slane %v5236, %v5303
    %v5307 = vsel %vm181, %v5004, %v5240
    %v5308 = vsel %vm181, %v5005, %v5244
    %v5309 = vsel %vm183, %v5307, %v5250
    %v5310 = vsel %vm183, %v5308, %v5254
    %v5311 = vsel %vm185, %v5309, %v5260
    %v5312 = vsel %vm185, %v5310, %v5264
    %v5313 = vsel %vm187, %v5311, %v5270
    %v5314 = vsel %vm187, %v5312, %v5274
    %v5315 = vsel %vm189, %v5313, %v5280
    %v5316 = vsel %vm189, %v5314, %v5284
    %v5317 = vsel %vm191, %v5315, %v5290
    %v5318 = vsel %vm191, %v5316, %v5294
    %v5319 = vsel %vm193, %v5317, %v5300
    %v5320 = vsel %vm193, %v5318, %v5304
    %v5321 = vcombine.high %v4959, %v4959
    %v5323 = vunpack.c.l.s4 1966171168
    %v5324 = vunpack.c.0.s8 %v5323
    %v5325 = vlaneseq
    %v5326 = vshrl.u32 %v5325, 7
    %v5327 = vsub.s32 %v5324, %v5326
    %v5328 = vrot.slane %v4959, %v5327
    %v5330 = vunpack.c.l.s4 1966171168
    %v5331 = vunpack.c.0.s8 %v5330
    %v5332 = vlaneseq
    %v5333 = vshrl.u32 %v5332, 7
    %v5334 = vsub.s32 %v5331, %v5333
    %v5335 = vrot.slane %v5321, %v5334
    %v5336 = vcombine.high %v5328, %v5328
    %v5337 = vcombine.high %v5335, %v5335
    %v5339 = vunpack.c.l.s4 1966171168
    %v5340 = vunpack.c.0.s8 %v5339
    %v5341 = vlaneseq
    %v5342 = vshrl.u32 %v5341, 7
    %v5343 = vsub.s32 %v5340, %v5342
    %v5344 = vrot.slane %v5328, %v5343
    %v5346 = vunpack.c.l.s4 1966171168
    %v5347 = vunpack.c.0.s8 %v5346
    %v5348 = vlaneseq
    %v5349 = vshrl.u32 %v5348, 7
    %v5350 = vsub.s32 %v5347, %v5349
    %v5351 = vrot.slane %v5335, %v5350
    %v5353 = vunpack.c.l.s4 1966171168
    %v5354 = vunpack.c.0.s8 %v5353
    %v5355 = vlaneseq
    %v5356 = vshrl.u32 %v5355, 7
    %v5357 = vsub.s32 %v5354, %v5356
    %v5358 = vrot.slane %v5336, %v5357
    %v5360 = vunpack.c.l.s4 1966171168
    %v5361 = vunpack.c.0.s8 %v5360
    %v5362 = vlaneseq
    %v5363 = vshrl.u32 %v5362, 7
    %v5364 = vsub.s32 %v5361, %v5363
    %v5365 = vrot.slane %v5337, %v5364
    %v5366 = vcombine.high %v5344, %v5344
    %v5367 = vcombine.high %v5351, %v5351
    %v5368 = vcombine.high %v5358, %v5358
    %v5369 = vcombine.high %v5365, %v5365
    %v5370 = vcombine.high %v4964, %v4964
    %v5372 = vunpack.c.l.s4 1966171168
    %v5373 = vunpack.c.0.s8 %v5372
    %v5374 = vlaneseq
    %v5375 = vshrl.u32 %v5374, 7
    %v5376 = vsub.s32 %v5373, %v5375
    %v5377 = vrot.slane %v4964, %v5376
    %v5379 = vunpack.c.l.s4 1966171168
    %v5380 = vunpack.c.0.s8 %v5379
    %v5381 = vlaneseq
    %v5382 = vshrl.u32 %v5381, 7
    %v5383 = vsub.s32 %v5380, %v5382
    %v5384 = vrot.slane %v5370, %v5383
    %v5385 = vcombine.high %v5377, %v5377
    %v5386 = vcombine.high %v5384, %v5384
    %v5388 = vunpack.c.l.s4 1966171168
    %v5389 = vunpack.c.0.s8 %v5388
    %v5390 = vlaneseq
    %v5391 = vshrl.u32 %v5390, 7
    %v5392 = vsub.s32 %v5389, %v5391
    %v5393 = vrot.slane %v5377, %v5392
    %v5395 = vunpack.c.l.s4 1966171168
    %v5396 = vunpack.c.0.s8 %v5395
    %v5397 = vlaneseq
    %v5398 = vshrl.u32 %v5397, 7
    %v5399 = vsub.s32 %v5396, %v5398
    %v5400 = vrot.slane %v5384, %v5399
    %v5402 = vunpack.c.l.s4 1966171168
    %v5403 = vunpack.c.0.s8 %v5402
    %v5404 = vlaneseq
    %v5405 = vshrl.u32 %v5404, 7
    %v5406 = vsub.s32 %v5403, %v5405
    %v5407 = vrot.slane %v5385, %v5406
    %v5409 = vunpack.c.l.s4 1966171168
    %v5410 = vunpack.c.0.s8 %v5409
    %v5411 = vlaneseq
    %v5412 = vshrl.u32 %v5411, 7
    %v5413 = vsub.s32 %v5410, %v5412
    %v5414 = vrot.slane %v5386, %v5413
    %v5415 = vcombine.high %v5393, %v5393
    %v5416 = vcombine.high %v5400, %v5400
    %v5417 = vcombine.high %v5407, %v5407
    %v5418 = vcombine.high %v5414, %v5414
    %v5419 = vlaneseq
    %v5420 = vshrl.u32 %v5419, 7
    %v5421 = vsub.s32 0, %v5420
    %v5422 = vrot.slane %v5344, %v5421
    %v5423 = vlaneseq
    %v5424 = vshrl.u32 %v5423, 7
    %v5425 = vsub.s32 0, %v5424
    %v5426 = vrot.slane %v5358, %v5425
    %v5427 = vlaneseq
    %v5428 = vshrl.u32 %v5427, 7
    %v5429 = vsub.s32 0, %v5428
    %v5430 = vrot.slane %v5366, %v5429
    %v5431 = vlaneseq
    %v5432 = vshrl.u32 %v5431, 7
    %v5433 = vsub.s32 0, %v5432
    %v5434 = vrot.slane %v5368, %v5433
    %v5435 = vlaneseq
    %v5436 = vshrl.u32 %v5435, 7
    %v5437 = vsub.s32 0, %v5436
    %v5438 = vrot.slane %v5351, %v5437
    %v5439 = vlaneseq
    %v5440 = vshrl.u32 %v5439, 7
    %v5441 = vsub.s32 0, %v5440
    %v5442 = vrot.slane %v5365, %v5441
    %v5443 = vlaneseq
    %v5444 = vshrl.u32 %v5443, 7
    %v5445 = vsub.s32 0, %v5444
    %v5446 = vrot.slane %v5367, %v5445
    %v5447 = vlaneseq
    %v5448 = vshrl.u32 %v5447, 7
    %v5449 = vsub.s32 0, %v5448
    %v5450 = vrot.slane %v5369, %v5449
    %v5451 = vlaneseq
    %v5452 = vshrl.u32 %v5451, 7
    %v5453 = vsub.s32 0, %v5452
    %v5454 = vrot.slane %v5393, %v5453
    %v5455 = vlaneseq
    %v5456 = vshrl.u32 %v5455, 7
    %v5457 = vsub.s32 0, %v5456
    %v5458 = vrot.slane %v5407, %v5457
    %v5459 = vlaneseq
    %v5460 = vshrl.u32 %v5459, 7
    %v5461 = vsub.s32 0, %v5460
    %v5462 = vrot.slane %v5415, %v5461
    %v5463 = vlaneseq
    %v5464 = vshrl.u32 %v5463, 7
    %v5465 = vsub.s32 0, %v5464
    %v5466 = vrot.slane %v5417, %v5465
    %v5467 = vlaneseq
    %v5468 = vshrl.u32 %v5467, 7
    %v5469 = vsub.s32 0, %v5468
    %v5470 = vrot.slane %v5400, %v5469
    %v5471 = vlaneseq
    %v5472 = vshrl.u32 %v5471, 7
    %v5473 = vsub.s32 0, %v5472
    %v5474 = vrot.slane %v5414, %v5473
    %v5475 = vlaneseq
    %v5476 = vshrl.u32 %v5475, 7
    %v5477 = vsub.s32 0, %v5476
    %v5478 = vrot.slane %v5416, %v5477
    %v5479 = vlaneseq
    %v5480 = vshrl.u32 %v5479, 7
    %v5481 = vsub.s32 0, %v5480
    %v5482 = vrot.slane %v5418, %v5481
    %v5499 = vmul.f32 %v5422, %v5319
    %v5500 = vmul.f32 %v5426, %v5319
    %v5501 = vmul.f32 %v5430, %v5319
    %v5502 = vmul.f32 %v5434, %v5319
    %v5503 = vmul.f32 %v5438, %v5319
    %v5504 = vmul.f32 %v5442, %v5319
    %v5505 = vmul.f32 %v5446, %v5319
    %v5506 = vmul.f32 %v5450, %v5319
    %v5507 = vmul.f32 %v5454, %v5320
    %v5508 = vmul.f32 %v5458, %v5320
    %v5509 = vmul.f32 %v5462, %v5320
    %v5510 = vmul.f32 %v5466, %v5320
    %v5511 = vmul.f32 %v5470, %v5320
    %v5512 = vmul.f32 %v5474, %v5320
    %v5513 = vmul.f32 %v5478, %v5320
    %v5514 = vmul.f32 %v5482, %v5320
    %v5515 = vsel %vm861, %v5499, 0.0
    %5516 = vadd.xlane.f32.xlu0 %v5515
    %v5517 = vpop.xlane.xlu0 %5516
    %v5518 = vsel %vm861, %v5500, 0.0
    %5519 = vadd.xlane.f32.xlu0 %v5518
    %v5520 = vpop.xlane.xlu0 %5519
    %v5521 = vsel %vm861, %v5501, 0.0
    %5522 = vadd.xlane.f32.xlu0 %v5521
    %v5523 = vpop.xlane.xlu0 %5522
    %v5524 = vsel %vm861, %v5502, 0.0
    %5525 = vadd.xlane.f32.xlu0 %v5524
    %v5526 = vpop.xlane.xlu0 %5525
    %v5527 = vsel %vm861, %v5503, 0.0
    %5528 = vadd.xlane.f32.xlu0 %v5527
    %v5529 = vpop.xlane.xlu0 %5528
    %v5530 = vsel %vm861, %v5504, 0.0
    %5531 = vadd.xlane.f32.xlu0 %v5530
    %v5532 = vpop.xlane.xlu0 %5531
    %v5533 = vsel %vm861, %v5505, 0.0
    %5534 = vadd.xlane.f32.xlu0 %v5533
    %v5535 = vpop.xlane.xlu0 %5534
    %v5536 = vsel %vm861, %v5506, 0.0
    %5537 = vadd.xlane.f32.xlu0 %v5536
    %v5538 = vpop.xlane.xlu0 %5537
    %v5539 = vsel %vm861, %v5507, 0.0
    %5540 = vadd.xlane.f32.xlu0 %v5539
    %v5541 = vpop.xlane.xlu0 %5540
    %v5542 = vsel %vm861, %v5508, 0.0
    %5543 = vadd.xlane.f32.xlu0 %v5542
    %v5544 = vpop.xlane.xlu0 %5543
    %v5545 = vsel %vm861, %v5509, 0.0
    %5546 = vadd.xlane.f32.xlu0 %v5545
    %v5547 = vpop.xlane.xlu0 %5546
    %v5548 = vsel %vm861, %v5510, 0.0
    %5549 = vadd.xlane.f32.xlu0 %v5548
    %v5550 = vpop.xlane.xlu0 %5549
    %v5551 = vsel %vm861, %v5511, 0.0
    %5552 = vadd.xlane.f32.xlu0 %v5551
    %v5553 = vpop.xlane.xlu0 %5552
    %v5554 = vsel %vm861, %v5512, 0.0
    %5555 = vadd.xlane.f32.xlu0 %v5554
    %v5556 = vpop.xlane.xlu0 %5555
    %v5557 = vsel %vm861, %v5513, 0.0
    %5558 = vadd.xlane.f32.xlu0 %v5557
    %v5559 = vpop.xlane.xlu0 %5558
    %v5560 = vsel %vm861, %v5514, 0.0
    %5561 = vadd.xlane.f32.xlu0 %v5560
    %v5562 = vpop.xlane.xlu0 %5561
    %v5563 = vmul.f32 %v5517, 0.125
    %v5564 = vmul.f32 %v5520, 0.125
    %v5565 = vmul.f32 %v5523, 0.125
    %v5566 = vmul.f32 %v5526, 0.125
    %v5567 = vmul.f32 %v5529, 0.125
    %v5568 = vmul.f32 %v5532, 0.125
    %v5569 = vmul.f32 %v5535, 0.125
    %v5570 = vmul.f32 %v5538, 0.125
    %v5571 = vmul.f32 %v5541, 0.125
    %v5572 = vmul.f32 %v5544, 0.125
    %v5573 = vmul.f32 %v5547, 0.125
    %v5574 = vmul.f32 %v5550, 0.125
    %v5575 = vmul.f32 %v5553, 0.125
    %v5576 = vmul.f32 %v5556, 0.125
    %v5577 = vmul.f32 %v5559, 0.125
    %v5578 = vmul.f32 %v5562, 0.125
    %v5579 = vadd.f32 %v5563, %v933
    %v5580 = vadd.f32 %v5564, %v940
    %v5581 = vadd.f32 %v5565, %v947
    %v5582 = vadd.f32 %v5566, %v954
    %v5583 = vadd.f32 %v5567, %v961
    %v5584 = vadd.f32 %v5568, %v968
    %v5585 = vadd.f32 %v5569, %v975
    %v5586 = vadd.f32 %v5570, %v982
    %v5587 = vadd.f32 %v5571, %v933
    %v5588 = vadd.f32 %v5572, %v940
    %v5589 = vadd.f32 %v5573, %v947
    %v5590 = vadd.f32 %v5574, %v954
    %v5591 = vadd.f32 %v5575, %v961
    %v5592 = vadd.f32 %v5576, %v968
    %v5593 = vadd.f32 %v5577, %v975
    %v5594 = vadd.f32 %v5578, %v982
    %5611 = vset.pattern.permute.xlu0 0
    %5612 = vperm.xlu0 %5611, %v5579
    %v5613 = vpop.permute.xlu0 %5612
    %5614 = vset.pattern.permute.xlu0 0
    %5615 = vperm.xlu0 %5614, %v5580
    %v5616 = vpop.permute.xlu0 %5615
    %5617 = vset.pattern.permute.xlu0 0
    %5618 = vperm.xlu0 %5617, %v5581
    %v5619 = vpop.permute.xlu0 %5618
    %5620 = vset.pattern.permute.xlu0 0
    %5621 = vperm.xlu0 %5620, %v5582
    %v5622 = vpop.permute.xlu0 %5621
    %5623 = vset.pattern.permute.xlu0 0
    %5624 = vperm.xlu0 %5623, %v5583
    %v5625 = vpop.permute.xlu0 %5624
    %5626 = vset.pattern.permute.xlu0 0
    %5627 = vperm.xlu0 %5626, %v5584
    %v5628 = vpop.permute.xlu0 %5627
    %5629 = vset.pattern.permute.xlu0 0
    %5630 = vperm.xlu0 %5629, %v5585
    %v5631 = vpop.permute.xlu0 %5630
    %5632 = vset.pattern.permute.xlu0 0
    %5633 = vperm.xlu0 %5632, %v5586
    %v5634 = vpop.permute.xlu0 %5633
    %5635 = vset.pattern.permute.xlu0 0
    %5636 = vperm.xlu0 %5635, %v5587
    %v5637 = vpop.permute.xlu0 %5636
    %5638 = vset.pattern.permute.xlu0 0
    %5639 = vperm.xlu0 %5638, %v5588
    %v5640 = vpop.permute.xlu0 %5639
    %5641 = vset.pattern.permute.xlu0 0
    %5642 = vperm.xlu0 %5641, %v5589
    %v5643 = vpop.permute.xlu0 %5642
    %5644 = vset.pattern.permute.xlu0 0
    %5645 = vperm.xlu0 %5644, %v5590
    %v5646 = vpop.permute.xlu0 %5645
    %5647 = vset.pattern.permute.xlu0 0
    %5648 = vperm.xlu0 %5647, %v5591
    %v5649 = vpop.permute.xlu0 %5648
    %5650 = vset.pattern.permute.xlu0 0
    %5651 = vperm.xlu0 %5650, %v5592
    %v5652 = vpop.permute.xlu0 %5651
    %5653 = vset.pattern.permute.xlu0 0
    %5654 = vperm.xlu0 %5653, %v5593
    %v5655 = vpop.permute.xlu0 %5654
    %5656 = vset.pattern.permute.xlu0 0
    %5657 = vperm.xlu0 %5656, %v5594
    %v5658 = vpop.permute.xlu0 %5657
    %v5659 = vlaneseq
    %v5660 = vshrl.u32 %v5659, 7
    %v5661 = vsub.s32 %v45, %v5660
    %v5662 = vrot.slane %v5613, %v5661
    %v5663 = vlaneseq
    %v5664 = vshrl.u32 %v5663, 7
    %v5665 = vsub.s32 %v45, %v5664
    %v5666 = vrot.slane %v5616, %v5665
    %v5667 = vlaneseq
    %v5668 = vshrl.u32 %v5667, 7
    %v5669 = vsub.s32 %v45, %v5668
    %v5670 = vrot.slane %v5619, %v5669
    %v5671 = vlaneseq
    %v5672 = vshrl.u32 %v5671, 7
    %v5673 = vsub.s32 %v45, %v5672
    %v5674 = vrot.slane %v5622, %v5673
    %v5675 = vlaneseq
    %v5676 = vshrl.u32 %v5675, 7
    %v5677 = vsub.s32 %v45, %v5676
    %v5678 = vrot.slane %v5625, %v5677
    %v5679 = vlaneseq
    %v5680 = vshrl.u32 %v5679, 7
    %v5681 = vsub.s32 %v45, %v5680
    %v5682 = vrot.slane %v5628, %v5681
    %v5683 = vlaneseq
    %v5684 = vshrl.u32 %v5683, 7
    %v5685 = vsub.s32 %v45, %v5684
    %v5686 = vrot.slane %v5631, %v5685
    %v5687 = vlaneseq
    %v5688 = vshrl.u32 %v5687, 7
    %v5689 = vsub.s32 %v45, %v5688
    %v5690 = vrot.slane %v5634, %v5689
    %v5691 = vlaneseq
    %v5692 = vshrl.u32 %v5691, 7
    %v5693 = vsub.s32 %v45, %v5692
    %v5694 = vrot.slane %v5637, %v5693
    %v5695 = vlaneseq
    %v5696 = vshrl.u32 %v5695, 7
    %v5697 = vsub.s32 %v45, %v5696
    %v5698 = vrot.slane %v5640, %v5697
    %v5699 = vlaneseq
    %v5700 = vshrl.u32 %v5699, 7
    %v5701 = vsub.s32 %v45, %v5700
    %v5702 = vrot.slane %v5643, %v5701
    %v5703 = vlaneseq
    %v5704 = vshrl.u32 %v5703, 7
    %v5705 = vsub.s32 %v45, %v5704
    %v5706 = vrot.slane %v5646, %v5705
    %v5707 = vlaneseq
    %v5708 = vshrl.u32 %v5707, 7
    %v5709 = vsub.s32 %v45, %v5708
    %v5710 = vrot.slane %v5649, %v5709
    %v5711 = vlaneseq
    %v5712 = vshrl.u32 %v5711, 7
    %v5713 = vsub.s32 %v45, %v5712
    %v5714 = vrot.slane %v5652, %v5713
    %v5715 = vlaneseq
    %v5716 = vshrl.u32 %v5715, 7
    %v5717 = vsub.s32 %v45, %v5716
    %v5718 = vrot.slane %v5655, %v5717
    %v5719 = vlaneseq
    %v5720 = vshrl.u32 %v5719, 7
    %v5721 = vsub.s32 %v45, %v5720
    %v5722 = vrot.slane %v5658, %v5721
    %v5723 = vsel %vm1135, %v5666, %v5662
    %v5724 = vsel %vm321, %v5670, %v5723
    %v5725 = vsel %vm1138, %v5674, %v5724
    %v5726 = vsel %vm1140, %v5678, %v5725
    %v5727 = vsel %vm1142, %v5682, %v5726
    %v5728 = vsel %vm1144, %v5686, %v5727
    %v5729 = vsel %vm1146, %v5690, %v5728
    %v5730 = vsel %vm1135, %v5698, %v5694
    %v5731 = vsel %vm321, %v5702, %v5730
    %v5732 = vsel %vm1138, %v5706, %v5731
    %v5733 = vsel %vm1140, %v5710, %v5732
    %v5734 = vsel %vm1142, %v5714, %v5733
    %v5735 = vsel %vm1144, %v5718, %v5734
    %v5736 = vsel %vm1146, %v5722, %v5735
    %v5739 = vsel %vm861, %v5729, -inf
    %5740 = vmax.xlane.f32.xlu0 %v5739
    %v5741 = vpop.xlane.xlu0 %5740
    %v5742 = vsel %vm861, %v5736, -inf
    %5743 = vmax.xlane.f32.xlu0 %v5742
    %v5744 = vpop.xlane.xlu0 %5743
    %v5747 = vlaneseq
    %v5748 = vshrl.u32 %v5747, 7
    %v5749 = vsub.s32 0, %v5748
    %v5750 = vrot.slane %v5741, %v5749
    %v5751 = vlaneseq
    %v5752 = vshrl.u32 %v5751, 7
    %v5753 = vsub.s32 1, %v5752
    %v5754 = vrot.slane %v5741, %v5753
    %v5755 = vlaneseq
    %v5756 = vshrl.u32 %v5755, 7
    %v5757 = vsub.s32 2, %v5756
    %v5758 = vrot.slane %v5741, %v5757
    %v5759 = vlaneseq
    %v5760 = vshrl.u32 %v5759, 7
    %v5761 = vsub.s32 3, %v5760
    %v5762 = vrot.slane %v5741, %v5761
    %v5763 = vlaneseq
    %v5764 = vshrl.u32 %v5763, 7
    %v5765 = vsub.s32 4, %v5764
    %v5766 = vrot.slane %v5741, %v5765
    %v5767 = vlaneseq
    %v5768 = vshrl.u32 %v5767, 7
    %v5769 = vsub.s32 5, %v5768
    %v5770 = vrot.slane %v5741, %v5769
    %v5771 = vlaneseq
    %v5772 = vshrl.u32 %v5771, 7
    %v5773 = vsub.s32 6, %v5772
    %v5774 = vrot.slane %v5741, %v5773
    %v5775 = vlaneseq
    %v5776 = vshrl.u32 %v5775, 7
    %v5777 = vsub.s32 7, %v5776
    %v5778 = vrot.slane %v5741, %v5777
    %v5779 = vlaneseq
    %v5780 = vshrl.u32 %v5779, 7
    %v5781 = vsub.s32 0, %v5780
    %v5782 = vrot.slane %v5744, %v5781
    %v5783 = vlaneseq
    %v5784 = vshrl.u32 %v5783, 7
    %v5785 = vsub.s32 1, %v5784
    %v5786 = vrot.slane %v5744, %v5785
    %v5787 = vlaneseq
    %v5788 = vshrl.u32 %v5787, 7
    %v5789 = vsub.s32 2, %v5788
    %v5790 = vrot.slane %v5744, %v5789
    %v5791 = vlaneseq
    %v5792 = vshrl.u32 %v5791, 7
    %v5793 = vsub.s32 3, %v5792
    %v5794 = vrot.slane %v5744, %v5793
    %v5795 = vlaneseq
    %v5796 = vshrl.u32 %v5795, 7
    %v5797 = vsub.s32 4, %v5796
    %v5798 = vrot.slane %v5744, %v5797
    %v5799 = vlaneseq
    %v5800 = vshrl.u32 %v5799, 7
    %v5801 = vsub.s32 5, %v5800
    %v5802 = vrot.slane %v5744, %v5801
    %v5803 = vlaneseq
    %v5804 = vshrl.u32 %v5803, 7
    %v5805 = vsub.s32 6, %v5804
    %v5806 = vrot.slane %v5744, %v5805
    %v5807 = vlaneseq
    %v5808 = vshrl.u32 %v5807, 7
    %v5809 = vsub.s32 7, %v5808
    %v5810 = vrot.slane %v5744, %v5809
    %v5827 = vsub.f32 %v5579, %v5750
    %v5828 = vsub.f32 %v5580, %v5754
    %v5829 = vsub.f32 %v5581, %v5758
    %v5830 = vsub.f32 %v5582, %v5762
    %v5831 = vsub.f32 %v5583, %v5766
    %v5832 = vsub.f32 %v5584, %v5770
    %v5833 = vsub.f32 %v5585, %v5774
    %v5834 = vsub.f32 %v5586, %v5778
    %v5835 = vsub.f32 %v5587, %v5782
    %v5836 = vsub.f32 %v5588, %v5786
    %v5837 = vsub.f32 %v5589, %v5790
    %v5838 = vsub.f32 %v5590, %v5794
    %v5839 = vsub.f32 %v5591, %v5798
    %v5840 = vsub.f32 %v5592, %v5802
    %v5841 = vsub.f32 %v5593, %v5806
    %v5842 = vsub.f32 %v5594, %v5810
    %v5843 = vmul.f32 %v5827, 1.442695
    %v5844 = vpow.pop %v5843
    %v5845 = vmul.f32 %v5828, 1.442695
    %v5846 = vpow.pop %v5845
    %v5847 = vmul.f32 %v5829, 1.442695
    %v5848 = vpow.pop %v5847
    %v5849 = vmul.f32 %v5830, 1.442695
    %v5850 = vpow.pop %v5849
    %v5851 = vmul.f32 %v5831, 1.442695
    %v5852 = vpow.pop %v5851
    %v5853 = vmul.f32 %v5832, 1.442695
    %v5854 = vpow.pop %v5853
    %v5855 = vmul.f32 %v5833, 1.442695
    %v5856 = vpow.pop %v5855
    %v5857 = vmul.f32 %v5834, 1.442695
    %v5858 = vpow.pop %v5857
    %v5859 = vmul.f32 %v5835, 1.442695
    %v5860 = vpow.pop %v5859
    %v5861 = vmul.f32 %v5836, 1.442695
    %v5862 = vpow.pop %v5861
    %v5863 = vmul.f32 %v5837, 1.442695
    %v5864 = vpow.pop %v5863
    %v5865 = vmul.f32 %v5838, 1.442695
    %v5866 = vpow.pop %v5865
    %v5867 = vmul.f32 %v5839, 1.442695
    %v5868 = vpow.pop %v5867
    %v5869 = vmul.f32 %v5840, 1.442695
    %v5870 = vpow.pop %v5869
    %v5871 = vmul.f32 %v5841, 1.442695
    %v5872 = vpow.pop %v5871
    %v5873 = vmul.f32 %v5842, 1.442695
    %v5874 = vpow.pop %v5873
    %5891 = vset.pattern.permute.xlu0 0
    %5892 = vperm.xlu0 %5891, %v5844
    %v5893 = vpop.permute.xlu0 %5892
    %5894 = vset.pattern.permute.xlu0 0
    %5895 = vperm.xlu0 %5894, %v5846
    %v5896 = vpop.permute.xlu0 %5895
    %5897 = vset.pattern.permute.xlu0 0
    %5898 = vperm.xlu0 %5897, %v5848
    %v5899 = vpop.permute.xlu0 %5898
    %5900 = vset.pattern.permute.xlu0 0
    %5901 = vperm.xlu0 %5900, %v5850
    %v5902 = vpop.permute.xlu0 %5901
    %5903 = vset.pattern.permute.xlu0 0
    %5904 = vperm.xlu0 %5903, %v5852
    %v5905 = vpop.permute.xlu0 %5904
    %5906 = vset.pattern.permute.xlu0 0
    %5907 = vperm.xlu0 %5906, %v5854
    %v5908 = vpop.permute.xlu0 %5907
    %5909 = vset.pattern.permute.xlu0 0
    %5910 = vperm.xlu0 %5909, %v5856
    %v5911 = vpop.permute.xlu0 %5910
    %5912 = vset.pattern.permute.xlu0 0
    %5913 = vperm.xlu0 %5912, %v5858
    %v5914 = vpop.permute.xlu0 %5913
    %5915 = vset.pattern.permute.xlu0 0
    %5916 = vperm.xlu0 %5915, %v5860
    %v5917 = vpop.permute.xlu0 %5916
    %5918 = vset.pattern.permute.xlu0 0
    %5919 = vperm.xlu0 %5918, %v5862
    %v5920 = vpop.permute.xlu0 %5919
    %5921 = vset.pattern.permute.xlu0 0
    %5922 = vperm.xlu0 %5921, %v5864
    %v5923 = vpop.permute.xlu0 %5922
    %5924 = vset.pattern.permute.xlu0 0
    %5925 = vperm.xlu0 %5924, %v5866
    %v5926 = vpop.permute.xlu0 %5925
    %5927 = vset.pattern.permute.xlu0 0
    %5928 = vperm.xlu0 %5927, %v5868
    %v5929 = vpop.permute.xlu0 %5928
    %5930 = vset.pattern.permute.xlu0 0
    %5931 = vperm.xlu0 %5930, %v5870
    %v5932 = vpop.permute.xlu0 %5931
    %5933 = vset.pattern.permute.xlu0 0
    %5934 = vperm.xlu0 %5933, %v5872
    %v5935 = vpop.permute.xlu0 %5934
    %5936 = vset.pattern.permute.xlu0 0
    %5937 = vperm.xlu0 %5936, %v5874
    %v5938 = vpop.permute.xlu0 %5937
    %v5939 = vlaneseq
    %v5940 = vshrl.u32 %v5939, 7
    %v5941 = vsub.s32 %v45, %v5940
    %v5942 = vrot.slane %v5893, %v5941
    %v5943 = vlaneseq
    %v5944 = vshrl.u32 %v5943, 7
    %v5945 = vsub.s32 %v45, %v5944
    %v5946 = vrot.slane %v5896, %v5945
    %v5947 = vlaneseq
    %v5948 = vshrl.u32 %v5947, 7
    %v5949 = vsub.s32 %v45, %v5948
    %v5950 = vrot.slane %v5899, %v5949
    %v5951 = vlaneseq
    %v5952 = vshrl.u32 %v5951, 7
    %v5953 = vsub.s32 %v45, %v5952
    %v5954 = vrot.slane %v5902, %v5953
    %v5955 = vlaneseq
    %v5956 = vshrl.u32 %v5955, 7
    %v5957 = vsub.s32 %v45, %v5956
    %v5958 = vrot.slane %v5905, %v5957
    %v5959 = vlaneseq
    %v5960 = vshrl.u32 %v5959, 7
    %v5961 = vsub.s32 %v45, %v5960
    %v5962 = vrot.slane %v5908, %v5961
    %v5963 = vlaneseq
    %v5964 = vshrl.u32 %v5963, 7
    %v5965 = vsub.s32 %v45, %v5964
    %v5966 = vrot.slane %v5911, %v5965
    %v5967 = vlaneseq
    %v5968 = vshrl.u32 %v5967, 7
    %v5969 = vsub.s32 %v45, %v5968
    %v5970 = vrot.slane %v5914, %v5969
    %v5971 = vlaneseq
    %v5972 = vshrl.u32 %v5971, 7
    %v5973 = vsub.s32 %v45, %v5972
    %v5974 = vrot.slane %v5917, %v5973
    %v5975 = vlaneseq
    %v5976 = vshrl.u32 %v5975, 7
    %v5977 = vsub.s32 %v45, %v5976
    %v5978 = vrot.slane %v5920, %v5977
    %v5979 = vlaneseq
    %v5980 = vshrl.u32 %v5979, 7
    %v5981 = vsub.s32 %v45, %v5980
    %v5982 = vrot.slane %v5923, %v5981
    %v5983 = vlaneseq
    %v5984 = vshrl.u32 %v5983, 7
    %v5985 = vsub.s32 %v45, %v5984
    %v5986 = vrot.slane %v5926, %v5985
    %v5987 = vlaneseq
    %v5988 = vshrl.u32 %v5987, 7
    %v5989 = vsub.s32 %v45, %v5988
    %v5990 = vrot.slane %v5929, %v5989
    %v5991 = vlaneseq
    %v5992 = vshrl.u32 %v5991, 7
    %v5993 = vsub.s32 %v45, %v5992
    %v5994 = vrot.slane %v5932, %v5993
    %v5995 = vlaneseq
    %v5996 = vshrl.u32 %v5995, 7
    %v5997 = vsub.s32 %v45, %v5996
    %v5998 = vrot.slane %v5935, %v5997
    %v5999 = vlaneseq
    %v6000 = vshrl.u32 %v5999, 7
    %v6001 = vsub.s32 %v45, %v6000
    %v6002 = vrot.slane %v5938, %v6001
    %v6003 = vsel %vm1135, %v5946, %v5942
    %v6004 = vsel %vm321, %v5950, %v6003
    %v6005 = vsel %vm1138, %v5954, %v6004
    %v6006 = vsel %vm1140, %v5958, %v6005
    %v6007 = vsel %vm1142, %v5962, %v6006
    %v6008 = vsel %vm1144, %v5966, %v6007
    %v6009 = vsel %vm1146, %v5970, %v6008
    %v6010 = vsel %vm1135, %v5978, %v5974
    %v6011 = vsel %vm321, %v5982, %v6010
    %v6012 = vsel %vm1138, %v5986, %v6011
    %v6013 = vsel %vm1140, %v5990, %v6012
    %v6014 = vsel %vm1142, %v5994, %v6013
    %v6015 = vsel %vm1144, %v5998, %v6014
    %v6016 = vsel %vm1146, %v6002, %v6015
    %v6019 = vsel %vm861, %v6009, 0.0
    %6020 = vadd.xlane.f32.xlu0 %v6019
    %v6021 = vpop.xlane.xlu0 %6020
    %v6022 = vsel %vm861, %v6016, 0.0
    %6023 = vadd.xlane.f32.xlu0 %v6022
    %v6024 = vpop.xlane.xlu0 %6023
    %v6025 = vrcp.pop %v6021
    %v6026 = vrcp.pop %v6024
    %v6029 = vlaneseq
    %v6030 = vshrl.u32 %v6029, 7
    %v6031 = vsub.s32 0, %v6030
    %v6032 = vrot.slane %v6025, %v6031
    %v6033 = vlaneseq
    %v6034 = vshrl.u32 %v6033, 7
    %v6035 = vsub.s32 1, %v6034
    %v6036 = vrot.slane %v6025, %v6035
    %v6037 = vlaneseq
    %v6038 = vshrl.u32 %v6037, 7
    %v6039 = vsub.s32 2, %v6038
    %v6040 = vrot.slane %v6025, %v6039
    %v6041 = vlaneseq
    %v6042 = vshrl.u32 %v6041, 7
    %v6043 = vsub.s32 3, %v6042
    %v6044 = vrot.slane %v6025, %v6043
    %v6045 = vlaneseq
    %v6046 = vshrl.u32 %v6045, 7
    %v6047 = vsub.s32 4, %v6046
    %v6048 = vrot.slane %v6025, %v6047
    %v6049 = vlaneseq
    %v6050 = vshrl.u32 %v6049, 7
    %v6051 = vsub.s32 5, %v6050
    %v6052 = vrot.slane %v6025, %v6051
    %v6053 = vlaneseq
    %v6054 = vshrl.u32 %v6053, 7
    %v6055 = vsub.s32 6, %v6054
    %v6056 = vrot.slane %v6025, %v6055
    %v6057 = vlaneseq
    %v6058 = vshrl.u32 %v6057, 7
    %v6059 = vsub.s32 7, %v6058
    %v6060 = vrot.slane %v6025, %v6059
    %v6061 = vlaneseq
    %v6062 = vshrl.u32 %v6061, 7
    %v6063 = vsub.s32 0, %v6062
    %v6064 = vrot.slane %v6026, %v6063
    %v6065 = vlaneseq
    %v6066 = vshrl.u32 %v6065, 7
    %v6067 = vsub.s32 1, %v6066
    %v6068 = vrot.slane %v6026, %v6067
    %v6069 = vlaneseq
    %v6070 = vshrl.u32 %v6069, 7
    %v6071 = vsub.s32 2, %v6070
    %v6072 = vrot.slane %v6026, %v6071
    %v6073 = vlaneseq
    %v6074 = vshrl.u32 %v6073, 7
    %v6075 = vsub.s32 3, %v6074
    %v6076 = vrot.slane %v6026, %v6075
    %v6077 = vlaneseq
    %v6078 = vshrl.u32 %v6077, 7
    %v6079 = vsub.s32 4, %v6078
    %v6080 = vrot.slane %v6026, %v6079
    %v6081 = vlaneseq
    %v6082 = vshrl.u32 %v6081, 7
    %v6083 = vsub.s32 5, %v6082
    %v6084 = vrot.slane %v6026, %v6083
    %v6085 = vlaneseq
    %v6086 = vshrl.u32 %v6085, 7
    %v6087 = vsub.s32 6, %v6086
    %v6088 = vrot.slane %v6026, %v6087
    %v6089 = vlaneseq
    %v6090 = vshrl.u32 %v6089, 7
    %v6091 = vsub.s32 7, %v6090
    %v6092 = vrot.slane %v6026, %v6091
    %v6109 = vmul.f32 %v5844, %v6032
    %v6110 = vmul.f32 %v5846, %v6036
    %v6111 = vmul.f32 %v5848, %v6040
    %v6112 = vmul.f32 %v5850, %v6044
    %v6113 = vmul.f32 %v5852, %v6048
    %v6114 = vmul.f32 %v5854, %v6052
    %v6115 = vmul.f32 %v5856, %v6056
    %v6116 = vmul.f32 %v5858, %v6060
    %v6117 = vmul.f32 %v5860, %v6064
    %v6118 = vmul.f32 %v5862, %v6068
    %v6119 = vmul.f32 %v5864, %v6072
    %v6120 = vmul.f32 %v5866, %v6076
    %v6121 = vmul.f32 %v5868, %v6080
    %v6122 = vmul.f32 %v5870, %v6084
    %v6123 = vmul.f32 %v5872, %v6088
    %v6124 = vmul.f32 %v5874, %v6092
    %6126 = vset.pattern.permute.xlu0 0
    %6127 = vperm.xlu0 %6126, %v6109
    %v6128 = vpop.permute.xlu0 %6127
    %6131 = vset.pattern.permute.xlu0 0
    %6132 = vperm.xlu0 %6131, %v6110
    %v6133 = vpop.permute.xlu0 %6132
    %6136 = vset.pattern.permute.xlu0 0
    %6137 = vperm.xlu0 %6136, %v6111
    %v6138 = vpop.permute.xlu0 %6137
    %6141 = vset.pattern.permute.xlu0 0
    %6142 = vperm.xlu0 %6141, %v6112
    %v6143 = vpop.permute.xlu0 %6142
    %6146 = vset.pattern.permute.xlu0 0
    %6147 = vperm.xlu0 %6146, %v6113
    %v6148 = vpop.permute.xlu0 %6147
    %6151 = vset.pattern.permute.xlu0 0
    %6152 = vperm.xlu0 %6151, %v6114
    %v6153 = vpop.permute.xlu0 %6152
    %6156 = vset.pattern.permute.xlu0 0
    %6157 = vperm.xlu0 %6156, %v6115
    %v6158 = vpop.permute.xlu0 %6157
    %6161 = vset.pattern.permute.xlu0 0
    %6162 = vperm.xlu0 %6161, %v6116
    %v6163 = vpop.permute.xlu0 %6162
    %6166 = vset.pattern.permute.xlu0 0
    %6167 = vperm.xlu0 %6166, %v6117
    %v6168 = vpop.permute.xlu0 %6167
    %6171 = vset.pattern.permute.xlu0 0
    %6172 = vperm.xlu0 %6171, %v6118
    %v6173 = vpop.permute.xlu0 %6172
    %6176 = vset.pattern.permute.xlu0 0
    %6177 = vperm.xlu0 %6176, %v6119
    %v6178 = vpop.permute.xlu0 %6177
    %6181 = vset.pattern.permute.xlu0 0
    %6182 = vperm.xlu0 %6181, %v6120
    %v6183 = vpop.permute.xlu0 %6182
    %6186 = vset.pattern.permute.xlu0 0
    %6187 = vperm.xlu0 %6186, %v6121
    %v6188 = vpop.permute.xlu0 %6187
    %6191 = vset.pattern.permute.xlu0 0
    %6192 = vperm.xlu0 %6191, %v6122
    %v6193 = vpop.permute.xlu0 %6192
    %6196 = vset.pattern.permute.xlu0 0
    %6197 = vperm.xlu0 %6196, %v6123
    %v6198 = vpop.permute.xlu0 %6197
    %6201 = vset.pattern.permute.xlu0 0
    %6202 = vperm.xlu0 %6201, %v6124
    %v6203 = vpop.permute.xlu0 %6202
    %v6205 = vmul.f32 %v6128, %v4959
    %v6206 = vmul.f32 %v6133, %v4959
    %v6207 = vmul.f32 %v6138, %v4959
    %v6208 = vmul.f32 %v6143, %v4959
    %v6209 = vmul.f32 %v6148, %v4959
    %v6210 = vmul.f32 %v6153, %v4959
    %v6211 = vmul.f32 %v6158, %v4959
    %v6212 = vmul.f32 %v6163, %v4959
    %v6213 = vmul.f32 %v6168, %v4964
    %v6214 = vmul.f32 %v6173, %v4964
    %v6215 = vmul.f32 %v6178, %v4964
    %v6216 = vmul.f32 %v6183, %v4964
    %v6217 = vmul.f32 %v6188, %v4964
    %v6218 = vmul.f32 %v6193, %v4964
    %v6219 = vmul.f32 %v6198, %v4964
    %v6220 = vmul.f32 %v6203, %v4964
    %v6221 = vsel %vm1639, %v6205, 0.0
    %v6222 = vrot.slane %v6221, 4
    %v6223 = vadd.f32 %v6221, %v6222
    %v6224 = vrot.slane %v6223, 2
    %v6225 = vadd.f32 %v6223, %v6224
    %v6226 = vrot.slane %v6225, 1
    %v6227 = vadd.f32 %v6225, %v6226
    %v6228 = vsel %vm1639, %v6206, 0.0
    %v6229 = vrot.slane %v6228, 4
    %v6230 = vadd.f32 %v6228, %v6229
    %v6231 = vrot.slane %v6230, 2
    %v6232 = vadd.f32 %v6230, %v6231
    %v6233 = vrot.slane %v6232, 1
    %v6234 = vadd.f32 %v6232, %v6233
    %v6235 = vsel %vm1639, %v6207, 0.0
    %v6236 = vrot.slane %v6235, 4
    %v6237 = vadd.f32 %v6235, %v6236
    %v6238 = vrot.slane %v6237, 2
    %v6239 = vadd.f32 %v6237, %v6238
    %v6240 = vrot.slane %v6239, 1
    %v6241 = vadd.f32 %v6239, %v6240
    %v6242 = vsel %vm1639, %v6208, 0.0
    %v6243 = vrot.slane %v6242, 4
    %v6244 = vadd.f32 %v6242, %v6243
    %v6245 = vrot.slane %v6244, 2
    %v6246 = vadd.f32 %v6244, %v6245
    %v6247 = vrot.slane %v6246, 1
    %v6248 = vadd.f32 %v6246, %v6247
    %v6249 = vsel %vm1639, %v6209, 0.0
    %v6250 = vrot.slane %v6249, 4
    %v6251 = vadd.f32 %v6249, %v6250
    %v6252 = vrot.slane %v6251, 2
    %v6253 = vadd.f32 %v6251, %v6252
    %v6254 = vrot.slane %v6253, 1
    %v6255 = vadd.f32 %v6253, %v6254
    %v6256 = vsel %vm1639, %v6210, 0.0
    %v6257 = vrot.slane %v6256, 4
    %v6258 = vadd.f32 %v6256, %v6257
    %v6259 = vrot.slane %v6258, 2
    %v6260 = vadd.f32 %v6258, %v6259
    %v6261 = vrot.slane %v6260, 1
    %v6262 = vadd.f32 %v6260, %v6261
    %v6263 = vsel %vm1639, %v6211, 0.0
    %v6264 = vrot.slane %v6263, 4
    %v6265 = vadd.f32 %v6263, %v6264
    %v6266 = vrot.slane %v6265, 2
    %v6267 = vadd.f32 %v6265, %v6266
    %v6268 = vrot.slane %v6267, 1
    %v6269 = vadd.f32 %v6267, %v6268
    %v6270 = vsel %vm1639, %v6212, 0.0
    %v6271 = vrot.slane %v6270, 4
    %v6272 = vadd.f32 %v6270, %v6271
    %v6273 = vrot.slane %v6272, 2
    %v6274 = vadd.f32 %v6272, %v6273
    %v6275 = vrot.slane %v6274, 1
    %v6276 = vadd.f32 %v6274, %v6275
    %v6277 = vsel %vm1639, %v6213, 0.0
    %v6278 = vrot.slane %v6277, 4
    %v6279 = vadd.f32 %v6277, %v6278
    %v6280 = vrot.slane %v6279, 2
    %v6281 = vadd.f32 %v6279, %v6280
    %v6282 = vrot.slane %v6281, 1
    %v6283 = vadd.f32 %v6281, %v6282
    %v6284 = vsel %vm1639, %v6214, 0.0
    %v6285 = vrot.slane %v6284, 4
    %v6286 = vadd.f32 %v6284, %v6285
    %v6287 = vrot.slane %v6286, 2
    %v6288 = vadd.f32 %v6286, %v6287
    %v6289 = vrot.slane %v6288, 1
    %v6290 = vadd.f32 %v6288, %v6289
    %v6291 = vsel %vm1639, %v6215, 0.0
    %v6292 = vrot.slane %v6291, 4
    %v6293 = vadd.f32 %v6291, %v6292
    %v6294 = vrot.slane %v6293, 2
    %v6295 = vadd.f32 %v6293, %v6294
    %v6296 = vrot.slane %v6295, 1
    %v6297 = vadd.f32 %v6295, %v6296
    %v6298 = vsel %vm1639, %v6216, 0.0
    %v6299 = vrot.slane %v6298, 4
    %v6300 = vadd.f32 %v6298, %v6299
    %v6301 = vrot.slane %v6300, 2
    %v6302 = vadd.f32 %v6300, %v6301
    %v6303 = vrot.slane %v6302, 1
    %v6304 = vadd.f32 %v6302, %v6303
    %v6305 = vsel %vm1639, %v6217, 0.0
    %v6306 = vrot.slane %v6305, 4
    %v6307 = vadd.f32 %v6305, %v6306
    %v6308 = vrot.slane %v6307, 2
    %v6309 = vadd.f32 %v6307, %v6308
    %v6310 = vrot.slane %v6309, 1
    %v6311 = vadd.f32 %v6309, %v6310
    %v6312 = vsel %vm1639, %v6218, 0.0
    %v6313 = vrot.slane %v6312, 4
    %v6314 = vadd.f32 %v6312, %v6313
    %v6315 = vrot.slane %v6314, 2
    %v6316 = vadd.f32 %v6314, %v6315
    %v6317 = vrot.slane %v6316, 1
    %v6318 = vadd.f32 %v6316, %v6317
    %v6319 = vsel %vm1639, %v6219, 0.0
    %v6320 = vrot.slane %v6319, 4
    %v6321 = vadd.f32 %v6319, %v6320
    %v6322 = vrot.slane %v6321, 2
    %v6323 = vadd.f32 %v6321, %v6322
    %v6324 = vrot.slane %v6323, 1
    %v6325 = vadd.f32 %v6323, %v6324
    %v6326 = vsel %vm1639, %v6220, 0.0
    %v6327 = vrot.slane %v6326, 4
    %v6328 = vadd.f32 %v6326, %v6327
    %v6329 = vrot.slane %v6328, 2
    %v6330 = vadd.f32 %v6328, %v6329
    %v6331 = vrot.slane %v6330, 1
    %v6332 = vadd.f32 %v6330, %v6331
    %6349 = vrot.lane.b32.xlu0 %v5499, 120
    %v6350 = vpop.permute.xlu0 %6349
    %6351 = vrot.lane.b32.xlu0 %v5500, 120
    %v6352 = vpop.permute.xlu0 %6351
    %6353 = vrot.lane.b32.xlu0 %v5501, 120
    %v6354 = vpop.permute.xlu0 %6353
    %6355 = vrot.lane.b32.xlu0 %v5502, 120
    %v6356 = vpop.permute.xlu0 %6355
    %6357 = vrot.lane.b32.xlu0 %v5503, 120
    %v6358 = vpop.permute.xlu0 %6357
    %6359 = vrot.lane.b32.xlu0 %v5504, 120
    %v6360 = vpop.permute.xlu0 %6359
    %6361 = vrot.lane.b32.xlu0 %v5505, 120
    %v6362 = vpop.permute.xlu0 %6361
    %6363 = vrot.lane.b32.xlu0 %v5506, 120
    %v6364 = vpop.permute.xlu0 %6363
    %6365 = vrot.lane.b32.xlu0 %v5507, 120
    %v6366 = vpop.permute.xlu0 %6365
    %6367 = vrot.lane.b32.xlu0 %v5508, 120
    %v6368 = vpop.permute.xlu0 %6367
    %6369 = vrot.lane.b32.xlu0 %v5509, 120
    %v6370 = vpop.permute.xlu0 %6369
    %6371 = vrot.lane.b32.xlu0 %v5510, 120
    %v6372 = vpop.permute.xlu0 %6371
    %6373 = vrot.lane.b32.xlu0 %v5511, 120
    %v6374 = vpop.permute.xlu0 %6373
    %6375 = vrot.lane.b32.xlu0 %v5512, 120
    %v6376 = vpop.permute.xlu0 %6375
    %6377 = vrot.lane.b32.xlu0 %v5513, 120
    %v6378 = vpop.permute.xlu0 %6377
    %6379 = vrot.lane.b32.xlu0 %v5514, 120
    %v6380 = vpop.permute.xlu0 %6379
    %v6397 = vsel %vm861, %v6350, 0.0
    %6398 = vadd.xlane.f32.xlu0 %v6397
    %v6399 = vpop.xlane.xlu0 %6398
    %v6400 = vsel %vm861, %v6352, 0.0
    %6401 = vadd.xlane.f32.xlu0 %v6400
    %v6402 = vpop.xlane.xlu0 %6401
    %v6403 = vsel %vm861, %v6354, 0.0
    %6404 = vadd.xlane.f32.xlu0 %v6403
    %v6405 = vpop.xlane.xlu0 %6404
    %v6406 = vsel %vm861, %v6356, 0.0
    %6407 = vadd.xlane.f32.xlu0 %v6406
    %v6408 = vpop.xlane.xlu0 %6407
    %v6409 = vsel %vm861, %v6358, 0.0
    %6410 = vadd.xlane.f32.xlu0 %v6409
    %v6411 = vpop.xlane.xlu0 %6410
    %v6412 = vsel %vm861, %v6360, 0.0
    %6413 = vadd.xlane.f32.xlu0 %v6412
    %v6414 = vpop.xlane.xlu0 %6413
    %v6415 = vsel %vm861, %v6362, 0.0
    %6416 = vadd.xlane.f32.xlu0 %v6415
    %v6417 = vpop.xlane.xlu0 %6416
    %v6418 = vsel %vm861, %v6364, 0.0
    %6419 = vadd.xlane.f32.xlu0 %v6418
    %v6420 = vpop.xlane.xlu0 %6419
    %v6421 = vsel %vm861, %v6366, 0.0
    %6422 = vadd.xlane.f32.xlu0 %v6421
    %v6423 = vpop.xlane.xlu0 %6422
    %v6424 = vsel %vm861, %v6368, 0.0
    %6425 = vadd.xlane.f32.xlu0 %v6424
    %v6426 = vpop.xlane.xlu0 %6425
    %v6427 = vsel %vm861, %v6370, 0.0
    %6428 = vadd.xlane.f32.xlu0 %v6427
    %v6429 = vpop.xlane.xlu0 %6428
    %v6430 = vsel %vm861, %v6372, 0.0
    %6431 = vadd.xlane.f32.xlu0 %v6430
    %v6432 = vpop.xlane.xlu0 %6431
    %v6433 = vsel %vm861, %v6374, 0.0
    %6434 = vadd.xlane.f32.xlu0 %v6433
    %v6435 = vpop.xlane.xlu0 %6434
    %v6436 = vsel %vm861, %v6376, 0.0
    %6437 = vadd.xlane.f32.xlu0 %v6436
    %v6438 = vpop.xlane.xlu0 %6437
    %v6439 = vsel %vm861, %v6378, 0.0
    %6440 = vadd.xlane.f32.xlu0 %v6439
    %v6441 = vpop.xlane.xlu0 %6440
    %v6442 = vsel %vm861, %v6380, 0.0
    %6443 = vadd.xlane.f32.xlu0 %v6442
    %v6444 = vpop.xlane.xlu0 %6443
    %v6445 = vmul.f32 %v6399, 0.125
    %v6446 = vmul.f32 %v6402, 0.125
    %v6447 = vmul.f32 %v6405, 0.125
    %v6448 = vmul.f32 %v6408, 0.125
    %v6449 = vmul.f32 %v6411, 0.125
    %v6450 = vmul.f32 %v6414, 0.125
    %v6451 = vmul.f32 %v6417, 0.125
    %v6452 = vmul.f32 %v6420, 0.125
    %v6453 = vmul.f32 %v6423, 0.125
    %v6454 = vmul.f32 %v6426, 0.125
    %v6455 = vmul.f32 %v6429, 0.125
    %v6456 = vmul.f32 %v6432, 0.125
    %v6457 = vmul.f32 %v6435, 0.125
    %v6458 = vmul.f32 %v6438, 0.125
    %v6459 = vmul.f32 %v6441, 0.125
    %v6460 = vmul.f32 %v6444, 0.125
    %v6461 = vadd.f32 %v6445, %v933
    %v6462 = vadd.f32 %v6446, %v940
    %v6463 = vadd.f32 %v6447, %v947
    %v6464 = vadd.f32 %v6448, %v954
    %v6465 = vadd.f32 %v6449, %v961
    %v6466 = vadd.f32 %v6450, %v968
    %v6467 = vadd.f32 %v6451, %v975
    %v6468 = vadd.f32 %v6452, %v982
    %v6469 = vadd.f32 %v6453, %v933
    %v6470 = vadd.f32 %v6454, %v940
    %v6471 = vadd.f32 %v6455, %v947
    %v6472 = vadd.f32 %v6456, %v954
    %v6473 = vadd.f32 %v6457, %v961
    %v6474 = vadd.f32 %v6458, %v968
    %v6475 = vadd.f32 %v6459, %v975
    %v6476 = vadd.f32 %v6460, %v982
    %6493 = vset.pattern.permute.xlu0 0
    %6494 = vperm.xlu0 %6493, %v6461
    %v6495 = vpop.permute.xlu0 %6494
    %6496 = vset.pattern.permute.xlu0 0
    %6497 = vperm.xlu0 %6496, %v6462
    %v6498 = vpop.permute.xlu0 %6497
    %6499 = vset.pattern.permute.xlu0 0
    %6500 = vperm.xlu0 %6499, %v6463
    %v6501 = vpop.permute.xlu0 %6500
    %6502 = vset.pattern.permute.xlu0 0
    %6503 = vperm.xlu0 %6502, %v6464
    %v6504 = vpop.permute.xlu0 %6503
    %6505 = vset.pattern.permute.xlu0 0
    %6506 = vperm.xlu0 %6505, %v6465
    %v6507 = vpop.permute.xlu0 %6506
    %6508 = vset.pattern.permute.xlu0 0
    %6509 = vperm.xlu0 %6508, %v6466
    %v6510 = vpop.permute.xlu0 %6509
    %6511 = vset.pattern.permute.xlu0 0
    %6512 = vperm.xlu0 %6511, %v6467
    %v6513 = vpop.permute.xlu0 %6512
    %6514 = vset.pattern.permute.xlu0 0
    %6515 = vperm.xlu0 %6514, %v6468
    %v6516 = vpop.permute.xlu0 %6515
    %6517 = vset.pattern.permute.xlu0 0
    %6518 = vperm.xlu0 %6517, %v6469
    %v6519 = vpop.permute.xlu0 %6518
    %6520 = vset.pattern.permute.xlu0 0
    %6521 = vperm.xlu0 %6520, %v6470
    %v6522 = vpop.permute.xlu0 %6521
    %6523 = vset.pattern.permute.xlu0 0
    %6524 = vperm.xlu0 %6523, %v6471
    %v6525 = vpop.permute.xlu0 %6524
    %6526 = vset.pattern.permute.xlu0 0
    %6527 = vperm.xlu0 %6526, %v6472
    %v6528 = vpop.permute.xlu0 %6527
    %6529 = vset.pattern.permute.xlu0 0
    %6530 = vperm.xlu0 %6529, %v6473
    %v6531 = vpop.permute.xlu0 %6530
    %6532 = vset.pattern.permute.xlu0 0
    %6533 = vperm.xlu0 %6532, %v6474
    %v6534 = vpop.permute.xlu0 %6533
    %6535 = vset.pattern.permute.xlu0 0
    %6536 = vperm.xlu0 %6535, %v6475
    %v6537 = vpop.permute.xlu0 %6536
    %6538 = vset.pattern.permute.xlu0 0
    %6539 = vperm.xlu0 %6538, %v6476
    %v6540 = vpop.permute.xlu0 %6539
    %v6541 = vlaneseq
    %v6542 = vshrl.u32 %v6541, 7
    %v6543 = vsub.s32 %v45, %v6542
    %v6544 = vrot.slane %v6495, %v6543
    %v6545 = vlaneseq
    %v6546 = vshrl.u32 %v6545, 7
    %v6547 = vsub.s32 %v45, %v6546
    %v6548 = vrot.slane %v6498, %v6547
    %v6549 = vlaneseq
    %v6550 = vshrl.u32 %v6549, 7
    %v6551 = vsub.s32 %v45, %v6550
    %v6552 = vrot.slane %v6501, %v6551
    %v6553 = vlaneseq
    %v6554 = vshrl.u32 %v6553, 7
    %v6555 = vsub.s32 %v45, %v6554
    %v6556 = vrot.slane %v6504, %v6555
    %v6557 = vlaneseq
    %v6558 = vshrl.u32 %v6557, 7
    %v6559 = vsub.s32 %v45, %v6558
    %v6560 = vrot.slane %v6507, %v6559
    %v6561 = vlaneseq
    %v6562 = vshrl.u32 %v6561, 7
    %v6563 = vsub.s32 %v45, %v6562
    %v6564 = vrot.slane %v6510, %v6563
    %v6565 = vlaneseq
    %v6566 = vshrl.u32 %v6565, 7
    %v6567 = vsub.s32 %v45, %v6566
    %v6568 = vrot.slane %v6513, %v6567
    %v6569 = vlaneseq
    %v6570 = vshrl.u32 %v6569, 7
    %v6571 = vsub.s32 %v45, %v6570
    %v6572 = vrot.slane %v6516, %v6571
    %v6573 = vlaneseq
    %v6574 = vshrl.u32 %v6573, 7
    %v6575 = vsub.s32 %v45, %v6574
    %v6576 = vrot.slane %v6519, %v6575
    %v6577 = vlaneseq
    %v6578 = vshrl.u32 %v6577, 7
    %v6579 = vsub.s32 %v45, %v6578
    %v6580 = vrot.slane %v6522, %v6579
    %v6581 = vlaneseq
    %v6582 = vshrl.u32 %v6581, 7
    %v6583 = vsub.s32 %v45, %v6582
    %v6584 = vrot.slane %v6525, %v6583
    %v6585 = vlaneseq
    %v6586 = vshrl.u32 %v6585, 7
    %v6587 = vsub.s32 %v45, %v6586
    %v6588 = vrot.slane %v6528, %v6587
    %v6589 = vlaneseq
    %v6590 = vshrl.u32 %v6589, 7
    %v6591 = vsub.s32 %v45, %v6590
    %v6592 = vrot.slane %v6531, %v6591
    %v6593 = vlaneseq
    %v6594 = vshrl.u32 %v6593, 7
    %v6595 = vsub.s32 %v45, %v6594
    %v6596 = vrot.slane %v6534, %v6595
    %v6597 = vlaneseq
    %v6598 = vshrl.u32 %v6597, 7
    %v6599 = vsub.s32 %v45, %v6598
    %v6600 = vrot.slane %v6537, %v6599
    %v6601 = vlaneseq
    %v6602 = vshrl.u32 %v6601, 7
    %v6603 = vsub.s32 %v45, %v6602
    %v6604 = vrot.slane %v6540, %v6603
    %v6605 = vsel %vm1135, %v6548, %v6544
    %v6606 = vsel %vm321, %v6552, %v6605
    %v6607 = vsel %vm1138, %v6556, %v6606
    %v6608 = vsel %vm1140, %v6560, %v6607
    %v6609 = vsel %vm1142, %v6564, %v6608
    %v6610 = vsel %vm1144, %v6568, %v6609
    %v6611 = vsel %vm1146, %v6572, %v6610
    %v6612 = vsel %vm1135, %v6580, %v6576
    %v6613 = vsel %vm321, %v6584, %v6612
    %v6614 = vsel %vm1138, %v6588, %v6613
    %v6615 = vsel %vm1140, %v6592, %v6614
    %v6616 = vsel %vm1142, %v6596, %v6615
    %v6617 = vsel %vm1144, %v6600, %v6616
    %v6618 = vsel %vm1146, %v6604, %v6617
    %v6621 = vsel %vm861, %v6611, -inf
    %6622 = vmax.xlane.f32.xlu0 %v6621
    %v6623 = vpop.xlane.xlu0 %6622
    %v6624 = vsel %vm861, %v6618, -inf
    %6625 = vmax.xlane.f32.xlu0 %v6624
    %v6626 = vpop.xlane.xlu0 %6625
    %v6629 = vlaneseq
    %v6630 = vshrl.u32 %v6629, 7
    %v6631 = vsub.s32 0, %v6630
    %v6632 = vrot.slane %v6623, %v6631
    %v6633 = vlaneseq
    %v6634 = vshrl.u32 %v6633, 7
    %v6635 = vsub.s32 1, %v6634
    %v6636 = vrot.slane %v6623, %v6635
    %v6637 = vlaneseq
    %v6638 = vshrl.u32 %v6637, 7
    %v6639 = vsub.s32 2, %v6638
    %v6640 = vrot.slane %v6623, %v6639
    %v6641 = vlaneseq
    %v6642 = vshrl.u32 %v6641, 7
    %v6643 = vsub.s32 3, %v6642
    %v6644 = vrot.slane %v6623, %v6643
    %v6645 = vlaneseq
    %v6646 = vshrl.u32 %v6645, 7
    %v6647 = vsub.s32 4, %v6646
    %v6648 = vrot.slane %v6623, %v6647
    %v6649 = vlaneseq
    %v6650 = vshrl.u32 %v6649, 7
    %v6651 = vsub.s32 5, %v6650
    %v6652 = vrot.slane %v6623, %v6651
    %v6653 = vlaneseq
    %v6654 = vshrl.u32 %v6653, 7
    %v6655 = vsub.s32 6, %v6654
    %v6656 = vrot.slane %v6623, %v6655
    %v6657 = vlaneseq
    %v6658 = vshrl.u32 %v6657, 7
    %v6659 = vsub.s32 7, %v6658
    %v6660 = vrot.slane %v6623, %v6659
    %v6661 = vlaneseq
    %v6662 = vshrl.u32 %v6661, 7
    %v6663 = vsub.s32 0, %v6662
    %v6664 = vrot.slane %v6626, %v6663
    %v6665 = vlaneseq
    %v6666 = vshrl.u32 %v6665, 7
    %v6667 = vsub.s32 1, %v6666
    %v6668 = vrot.slane %v6626, %v6667
    %v6669 = vlaneseq
    %v6670 = vshrl.u32 %v6669, 7
    %v6671 = vsub.s32 2, %v6670
    %v6672 = vrot.slane %v6626, %v6671
    %v6673 = vlaneseq
    %v6674 = vshrl.u32 %v6673, 7
    %v6675 = vsub.s32 3, %v6674
    %v6676 = vrot.slane %v6626, %v6675
    %v6677 = vlaneseq
    %v6678 = vshrl.u32 %v6677, 7
    %v6679 = vsub.s32 4, %v6678
    %v6680 = vrot.slane %v6626, %v6679
    %v6681 = vlaneseq
    %v6682 = vshrl.u32 %v6681, 7
    %v6683 = vsub.s32 5, %v6682
    %v6684 = vrot.slane %v6626, %v6683
    %v6685 = vlaneseq
    %v6686 = vshrl.u32 %v6685, 7
    %v6687 = vsub.s32 6, %v6686
    %v6688 = vrot.slane %v6626, %v6687
    %v6689 = vlaneseq
    %v6690 = vshrl.u32 %v6689, 7
    %v6691 = vsub.s32 7, %v6690
    %v6692 = vrot.slane %v6626, %v6691
    %v6709 = vsub.f32 %v6461, %v6632
    %v6710 = vsub.f32 %v6462, %v6636
    %v6711 = vsub.f32 %v6463, %v6640
    %v6712 = vsub.f32 %v6464, %v6644
    %v6713 = vsub.f32 %v6465, %v6648
    %v6714 = vsub.f32 %v6466, %v6652
    %v6715 = vsub.f32 %v6467, %v6656
    %v6716 = vsub.f32 %v6468, %v6660
    %v6717 = vsub.f32 %v6469, %v6664
    %v6718 = vsub.f32 %v6470, %v6668
    %v6719 = vsub.f32 %v6471, %v6672
    %v6720 = vsub.f32 %v6472, %v6676
    %v6721 = vsub.f32 %v6473, %v6680
    %v6722 = vsub.f32 %v6474, %v6684
    %v6723 = vsub.f32 %v6475, %v6688
    %v6724 = vsub.f32 %v6476, %v6692
    %v6725 = vmul.f32 %v6709, 1.442695
    %v6726 = vpow.pop %v6725
    %v6727 = vmul.f32 %v6710, 1.442695
    %v6728 = vpow.pop %v6727
    %v6729 = vmul.f32 %v6711, 1.442695
    %v6730 = vpow.pop %v6729
    %v6731 = vmul.f32 %v6712, 1.442695
    %v6732 = vpow.pop %v6731
    %v6733 = vmul.f32 %v6713, 1.442695
    %v6734 = vpow.pop %v6733
    %v6735 = vmul.f32 %v6714, 1.442695
    %v6736 = vpow.pop %v6735
    %v6737 = vmul.f32 %v6715, 1.442695
    %v6738 = vpow.pop %v6737
    %v6739 = vmul.f32 %v6716, 1.442695
    %v6740 = vpow.pop %v6739
    %v6741 = vmul.f32 %v6717, 1.442695
    %v6742 = vpow.pop %v6741
    %v6743 = vmul.f32 %v6718, 1.442695
    %v6744 = vpow.pop %v6743
    %v6745 = vmul.f32 %v6719, 1.442695
    %v6746 = vpow.pop %v6745
    %v6747 = vmul.f32 %v6720, 1.442695
    %v6748 = vpow.pop %v6747
    %v6749 = vmul.f32 %v6721, 1.442695
    %v6750 = vpow.pop %v6749
    %v6751 = vmul.f32 %v6722, 1.442695
    %v6752 = vpow.pop %v6751
    %v6753 = vmul.f32 %v6723, 1.442695
    %v6754 = vpow.pop %v6753
    %v6755 = vmul.f32 %v6724, 1.442695
    %v6756 = vpow.pop %v6755
    %6773 = vset.pattern.permute.xlu0 0
    %6774 = vperm.xlu0 %6773, %v6726
    %v6775 = vpop.permute.xlu0 %6774
    %6776 = vset.pattern.permute.xlu0 0
    %6777 = vperm.xlu0 %6776, %v6728
    %v6778 = vpop.permute.xlu0 %6777
    %6779 = vset.pattern.permute.xlu0 0
    %6780 = vperm.xlu0 %6779, %v6730
    %v6781 = vpop.permute.xlu0 %6780
    %6782 = vset.pattern.permute.xlu0 0
    %6783 = vperm.xlu0 %6782, %v6732
    %v6784 = vpop.permute.xlu0 %6783
    %6785 = vset.pattern.permute.xlu0 0
    %6786 = vperm.xlu0 %6785, %v6734
    %v6787 = vpop.permute.xlu0 %6786
    %6788 = vset.pattern.permute.xlu0 0
    %6789 = vperm.xlu0 %6788, %v6736
    %v6790 = vpop.permute.xlu0 %6789
    %6791 = vset.pattern.permute.xlu0 0
    %6792 = vperm.xlu0 %6791, %v6738
    %v6793 = vpop.permute.xlu0 %6792
    %6794 = vset.pattern.permute.xlu0 0
    %6795 = vperm.xlu0 %6794, %v6740
    %v6796 = vpop.permute.xlu0 %6795
    %6797 = vset.pattern.permute.xlu0 0
    %6798 = vperm.xlu0 %6797, %v6742
    %v6799 = vpop.permute.xlu0 %6798
    %6800 = vset.pattern.permute.xlu0 0
    %6801 = vperm.xlu0 %6800, %v6744
    %v6802 = vpop.permute.xlu0 %6801
    %6803 = vset.pattern.permute.xlu0 0
    %6804 = vperm.xlu0 %6803, %v6746
    %v6805 = vpop.permute.xlu0 %6804
    %6806 = vset.pattern.permute.xlu0 0
    %6807 = vperm.xlu0 %6806, %v6748
    %v6808 = vpop.permute.xlu0 %6807
    %6809 = vset.pattern.permute.xlu0 0
    %6810 = vperm.xlu0 %6809, %v6750
    %v6811 = vpop.permute.xlu0 %6810
    %6812 = vset.pattern.permute.xlu0 0
    %6813 = vperm.xlu0 %6812, %v6752
    %v6814 = vpop.permute.xlu0 %6813
    %6815 = vset.pattern.permute.xlu0 0
    %6816 = vperm.xlu0 %6815, %v6754
    %v6817 = vpop.permute.xlu0 %6816
    %6818 = vset.pattern.permute.xlu0 0
    %6819 = vperm.xlu0 %6818, %v6756
    %v6820 = vpop.permute.xlu0 %6819
    %v6821 = vlaneseq
    %v6822 = vshrl.u32 %v6821, 7
    %v6823 = vsub.s32 %v45, %v6822
    %v6824 = vrot.slane %v6775, %v6823
    %v6825 = vlaneseq
    %v6826 = vshrl.u32 %v6825, 7
    %v6827 = vsub.s32 %v45, %v6826
    %v6828 = vrot.slane %v6778, %v6827
    %v6829 = vlaneseq
    %v6830 = vshrl.u32 %v6829, 7
    %v6831 = vsub.s32 %v45, %v6830
    %v6832 = vrot.slane %v6781, %v6831
    %v6833 = vlaneseq
    %v6834 = vshrl.u32 %v6833, 7
    %v6835 = vsub.s32 %v45, %v6834
    %v6836 = vrot.slane %v6784, %v6835
    %v6837 = vlaneseq
    %v6838 = vshrl.u32 %v6837, 7
    %v6839 = vsub.s32 %v45, %v6838
    %v6840 = vrot.slane %v6787, %v6839
    %v6841 = vlaneseq
    %v6842 = vshrl.u32 %v6841, 7
    %v6843 = vsub.s32 %v45, %v6842
    %v6844 = vrot.slane %v6790, %v6843
    %v6845 = vlaneseq
    %v6846 = vshrl.u32 %v6845, 7
    %v6847 = vsub.s32 %v45, %v6846
    %v6848 = vrot.slane %v6793, %v6847
    %v6849 = vlaneseq
    %v6850 = vshrl.u32 %v6849, 7
    %v6851 = vsub.s32 %v45, %v6850
    %v6852 = vrot.slane %v6796, %v6851
    %v6853 = vlaneseq
    %v6854 = vshrl.u32 %v6853, 7
    %v6855 = vsub.s32 %v45, %v6854
    %v6856 = vrot.slane %v6799, %v6855
    %v6857 = vlaneseq
    %v6858 = vshrl.u32 %v6857, 7
    %v6859 = vsub.s32 %v45, %v6858
    %v6860 = vrot.slane %v6802, %v6859
    %v6861 = vlaneseq
    %v6862 = vshrl.u32 %v6861, 7
    %v6863 = vsub.s32 %v45, %v6862
    %v6864 = vrot.slane %v6805, %v6863
    %v6865 = vlaneseq
    %v6866 = vshrl.u32 %v6865, 7
    %v6867 = vsub.s32 %v45, %v6866
    %v6868 = vrot.slane %v6808, %v6867
    %v6869 = vlaneseq
    %v6870 = vshrl.u32 %v6869, 7
    %v6871 = vsub.s32 %v45, %v6870
    %v6872 = vrot.slane %v6811, %v6871
    %v6873 = vlaneseq
    %v6874 = vshrl.u32 %v6873, 7
    %v6875 = vsub.s32 %v45, %v6874
    %v6876 = vrot.slane %v6814, %v6875
    %v6877 = vlaneseq
    %v6878 = vshrl.u32 %v6877, 7
    %v6879 = vsub.s32 %v45, %v6878
    %v6880 = vrot.slane %v6817, %v6879
    %v6881 = vlaneseq
    %v6882 = vshrl.u32 %v6881, 7
    %v6883 = vsub.s32 %v45, %v6882
    %v6884 = vrot.slane %v6820, %v6883
    %v6885 = vsel %vm1135, %v6828, %v6824
    %v6886 = vsel %vm321, %v6832, %v6885
    %v6887 = vsel %vm1138, %v6836, %v6886
    %v6888 = vsel %vm1140, %v6840, %v6887
    %v6889 = vsel %vm1142, %v6844, %v6888
    %v6890 = vsel %vm1144, %v6848, %v6889
    %v6891 = vsel %vm1146, %v6852, %v6890
    %v6892 = vsel %vm1135, %v6860, %v6856
    %v6893 = vsel %vm321, %v6864, %v6892
    %v6894 = vsel %vm1138, %v6868, %v6893
    %v6895 = vsel %vm1140, %v6872, %v6894
    %v6896 = vsel %vm1142, %v6876, %v6895
    %v6897 = vsel %vm1144, %v6880, %v6896
    %v6898 = vsel %vm1146, %v6884, %v6897
    %v6901 = vsel %vm861, %v6891, 0.0
    %6902 = vadd.xlane.f32.xlu0 %v6901
    %v6903 = vpop.xlane.xlu0 %6902
    %v6904 = vsel %vm861, %v6898, 0.0
    %6905 = vadd.xlane.f32.xlu0 %v6904
    %v6906 = vpop.xlane.xlu0 %6905
    %v6907 = vrcp.pop %v6903
    %v6908 = vrcp.pop %v6906
    %v6911 = vlaneseq
    %v6912 = vshrl.u32 %v6911, 7
    %v6913 = vsub.s32 0, %v6912
    %v6914 = vrot.slane %v6907, %v6913
    %v6915 = vlaneseq
    %v6916 = vshrl.u32 %v6915, 7
    %v6917 = vsub.s32 1, %v6916
    %v6918 = vrot.slane %v6907, %v6917
    %v6919 = vlaneseq
    %v6920 = vshrl.u32 %v6919, 7
    %v6921 = vsub.s32 2, %v6920
    %v6922 = vrot.slane %v6907, %v6921
    %v6923 = vlaneseq
    %v6924 = vshrl.u32 %v6923, 7
    %v6925 = vsub.s32 3, %v6924
    %v6926 = vrot.slane %v6907, %v6925
    %v6927 = vlaneseq
    %v6928 = vshrl.u32 %v6927, 7
    %v6929 = vsub.s32 4, %v6928
    %v6930 = vrot.slane %v6907, %v6929
    %v6931 = vlaneseq
    %v6932 = vshrl.u32 %v6931, 7
    %v6933 = vsub.s32 5, %v6932
    %v6934 = vrot.slane %v6907, %v6933
    %v6935 = vlaneseq
    %v6936 = vshrl.u32 %v6935, 7
    %v6937 = vsub.s32 6, %v6936
    %v6938 = vrot.slane %v6907, %v6937
    %v6939 = vlaneseq
    %v6940 = vshrl.u32 %v6939, 7
    %v6941 = vsub.s32 7, %v6940
    %v6942 = vrot.slane %v6907, %v6941
    %v6943 = vlaneseq
    %v6944 = vshrl.u32 %v6943, 7
    %v6945 = vsub.s32 0, %v6944
    %v6946 = vrot.slane %v6908, %v6945
    %v6947 = vlaneseq
    %v6948 = vshrl.u32 %v6947, 7
    %v6949 = vsub.s32 1, %v6948
    %v6950 = vrot.slane %v6908, %v6949
    %v6951 = vlaneseq
    %v6952 = vshrl.u32 %v6951, 7
    %v6953 = vsub.s32 2, %v6952
    %v6954 = vrot.slane %v6908, %v6953
    %v6955 = vlaneseq
    %v6956 = vshrl.u32 %v6955, 7
    %v6957 = vsub.s32 3, %v6956
    %v6958 = vrot.slane %v6908, %v6957
    %v6959 = vlaneseq
    %v6960 = vshrl.u32 %v6959, 7
    %v6961 = vsub.s32 4, %v6960
    %v6962 = vrot.slane %v6908, %v6961
    %v6963 = vlaneseq
    %v6964 = vshrl.u32 %v6963, 7
    %v6965 = vsub.s32 5, %v6964
    %v6966 = vrot.slane %v6908, %v6965
    %v6967 = vlaneseq
    %v6968 = vshrl.u32 %v6967, 7
    %v6969 = vsub.s32 6, %v6968
    %v6970 = vrot.slane %v6908, %v6969
    %v6971 = vlaneseq
    %v6972 = vshrl.u32 %v6971, 7
    %v6973 = vsub.s32 7, %v6972
    %v6974 = vrot.slane %v6908, %v6973
    %v6991 = vmul.f32 %v6726, %v6914
    %v6992 = vmul.f32 %v6728, %v6918
    %v6993 = vmul.f32 %v6730, %v6922
    %v6994 = vmul.f32 %v6732, %v6926
    %v6995 = vmul.f32 %v6734, %v6930
    %v6996 = vmul.f32 %v6736, %v6934
    %v6997 = vmul.f32 %v6738, %v6938
    %v6998 = vmul.f32 %v6740, %v6942
    %v6999 = vmul.f32 %v6742, %v6946
    %v7000 = vmul.f32 %v6744, %v6950
    %v7001 = vmul.f32 %v6746, %v6954
    %v7002 = vmul.f32 %v6748, %v6958
    %v7003 = vmul.f32 %v6750, %v6962
    %v7004 = vmul.f32 %v6752, %v6966
    %v7005 = vmul.f32 %v6754, %v6970
    %v7006 = vmul.f32 %v6756, %v6974
    %7008 = vset.pattern.permute.xlu0 0
    %7009 = vperm.xlu0 %7008, %v6991
    %v7010 = vpop.permute.xlu0 %7009
    %7013 = vset.pattern.permute.xlu0 0
    %7014 = vperm.xlu0 %7013, %v6992
    %v7015 = vpop.permute.xlu0 %7014
    %7018 = vset.pattern.permute.xlu0 0
    %7019 = vperm.xlu0 %7018, %v6993
    %v7020 = vpop.permute.xlu0 %7019
    %7023 = vset.pattern.permute.xlu0 0
    %7024 = vperm.xlu0 %7023, %v6994
    %v7025 = vpop.permute.xlu0 %7024
    %7028 = vset.pattern.permute.xlu0 0
    %7029 = vperm.xlu0 %7028, %v6995
    %v7030 = vpop.permute.xlu0 %7029
    %7033 = vset.pattern.permute.xlu0 0
    %7034 = vperm.xlu0 %7033, %v6996
    %v7035 = vpop.permute.xlu0 %7034
    %7038 = vset.pattern.permute.xlu0 0
    %7039 = vperm.xlu0 %7038, %v6997
    %v7040 = vpop.permute.xlu0 %7039
    %7043 = vset.pattern.permute.xlu0 0
    %7044 = vperm.xlu0 %7043, %v6998
    %v7045 = vpop.permute.xlu0 %7044
    %7048 = vset.pattern.permute.xlu0 0
    %7049 = vperm.xlu0 %7048, %v6999
    %v7050 = vpop.permute.xlu0 %7049
    %7053 = vset.pattern.permute.xlu0 0
    %7054 = vperm.xlu0 %7053, %v7000
    %v7055 = vpop.permute.xlu0 %7054
    %7058 = vset.pattern.permute.xlu0 0
    %7059 = vperm.xlu0 %7058, %v7001
    %v7060 = vpop.permute.xlu0 %7059
    %7063 = vset.pattern.permute.xlu0 0
    %7064 = vperm.xlu0 %7063, %v7002
    %v7065 = vpop.permute.xlu0 %7064
    %7068 = vset.pattern.permute.xlu0 0
    %7069 = vperm.xlu0 %7068, %v7003
    %v7070 = vpop.permute.xlu0 %7069
    %7073 = vset.pattern.permute.xlu0 0
    %7074 = vperm.xlu0 %7073, %v7004
    %v7075 = vpop.permute.xlu0 %7074
    %7078 = vset.pattern.permute.xlu0 0
    %7079 = vperm.xlu0 %7078, %v7005
    %v7080 = vpop.permute.xlu0 %7079
    %7083 = vset.pattern.permute.xlu0 0
    %7084 = vperm.xlu0 %7083, %v7006
    %v7085 = vpop.permute.xlu0 %7084
    %v7087 = vmul.f32 %v7010, %v4959
    %v7088 = vmul.f32 %v7015, %v4959
    %v7089 = vmul.f32 %v7020, %v4959
    %v7090 = vmul.f32 %v7025, %v4959
    %v7091 = vmul.f32 %v7030, %v4959
    %v7092 = vmul.f32 %v7035, %v4959
    %v7093 = vmul.f32 %v7040, %v4959
    %v7094 = vmul.f32 %v7045, %v4959
    %v7095 = vmul.f32 %v7050, %v4964
    %v7096 = vmul.f32 %v7055, %v4964
    %v7097 = vmul.f32 %v7060, %v4964
    %v7098 = vmul.f32 %v7065, %v4964
    %v7099 = vmul.f32 %v7070, %v4964
    %v7100 = vmul.f32 %v7075, %v4964
    %v7101 = vmul.f32 %v7080, %v4964
    %v7102 = vmul.f32 %v7085, %v4964
    %v7103 = vsel %vm2522, %v7087, 0.0
    %v7104 = vrot.slane %v7103, 4
    %v7105 = vadd.f32 %v7103, %v7104
    %v7106 = vrot.slane %v7105, 2
    %v7107 = vadd.f32 %v7105, %v7106
    %v7108 = vrot.slane %v7107, 1
    %v7109 = vadd.f32 %v7107, %v7108
    %v7110 = vsel %vm2522, %v7088, 0.0
    %v7111 = vrot.slane %v7110, 4
    %v7112 = vadd.f32 %v7110, %v7111
    %v7113 = vrot.slane %v7112, 2
    %v7114 = vadd.f32 %v7112, %v7113
    %v7115 = vrot.slane %v7114, 1
    %v7116 = vadd.f32 %v7114, %v7115
    %v7117 = vsel %vm2522, %v7089, 0.0
    %v7118 = vrot.slane %v7117, 4
    %v7119 = vadd.f32 %v7117, %v7118
    %v7120 = vrot.slane %v7119, 2
    %v7121 = vadd.f32 %v7119, %v7120
    %v7122 = vrot.slane %v7121, 1
    %v7123 = vadd.f32 %v7121, %v7122
    %v7124 = vsel %vm2522, %v7090, 0.0
    %v7125 = vrot.slane %v7124, 4
    %v7126 = vadd.f32 %v7124, %v7125
    %v7127 = vrot.slane %v7126, 2
    %v7128 = vadd.f32 %v7126, %v7127
    %v7129 = vrot.slane %v7128, 1
    %v7130 = vadd.f32 %v7128, %v7129
    %v7131 = vsel %vm2522, %v7091, 0.0
    %v7132 = vrot.slane %v7131, 4
    %v7133 = vadd.f32 %v7131, %v7132
    %v7134 = vrot.slane %v7133, 2
    %v7135 = vadd.f32 %v7133, %v7134
    %v7136 = vrot.slane %v7135, 1
    %v7137 = vadd.f32 %v7135, %v7136
    %v7138 = vsel %vm2522, %v7092, 0.0
    %v7139 = vrot.slane %v7138, 4
    %v7140 = vadd.f32 %v7138, %v7139
    %v7141 = vrot.slane %v7140, 2
    %v7142 = vadd.f32 %v7140, %v7141
    %v7143 = vrot.slane %v7142, 1
    %v7144 = vadd.f32 %v7142, %v7143
    %v7145 = vsel %vm2522, %v7093, 0.0
    %v7146 = vrot.slane %v7145, 4
    %v7147 = vadd.f32 %v7145, %v7146
    %v7148 = vrot.slane %v7147, 2
    %v7149 = vadd.f32 %v7147, %v7148
    %v7150 = vrot.slane %v7149, 1
    %v7151 = vadd.f32 %v7149, %v7150
    %v7152 = vsel %vm2522, %v7094, 0.0
    %v7153 = vrot.slane %v7152, 4
    %v7154 = vadd.f32 %v7152, %v7153
    %v7155 = vrot.slane %v7154, 2
    %v7156 = vadd.f32 %v7154, %v7155
    %v7157 = vrot.slane %v7156, 1
    %v7158 = vadd.f32 %v7156, %v7157
    %v7159 = vsel %vm2522, %v7095, 0.0
    %v7160 = vrot.slane %v7159, 4
    %v7161 = vadd.f32 %v7159, %v7160
    %v7162 = vrot.slane %v7161, 2
    %v7163 = vadd.f32 %v7161, %v7162
    %v7164 = vrot.slane %v7163, 1
    %v7165 = vadd.f32 %v7163, %v7164
    %v7166 = vsel %vm2522, %v7096, 0.0
    %v7167 = vrot.slane %v7166, 4
    %v7168 = vadd.f32 %v7166, %v7167
    %v7169 = vrot.slane %v7168, 2
    %v7170 = vadd.f32 %v7168, %v7169
    %v7171 = vrot.slane %v7170, 1
    %v7172 = vadd.f32 %v7170, %v7171
    %v7173 = vsel %vm2522, %v7097, 0.0
    %v7174 = vrot.slane %v7173, 4
    %v7175 = vadd.f32 %v7173, %v7174
    %v7176 = vrot.slane %v7175, 2
    %v7177 = vadd.f32 %v7175, %v7176
    %v7178 = vrot.slane %v7177, 1
    %v7179 = vadd.f32 %v7177, %v7178
    %v7180 = vsel %vm2522, %v7098, 0.0
    %v7181 = vrot.slane %v7180, 4
    %v7182 = vadd.f32 %v7180, %v7181
    %v7183 = vrot.slane %v7182, 2
    %v7184 = vadd.f32 %v7182, %v7183
    %v7185 = vrot.slane %v7184, 1
    %v7186 = vadd.f32 %v7184, %v7185
    %v7187 = vsel %vm2522, %v7099, 0.0
    %v7188 = vrot.slane %v7187, 4
    %v7189 = vadd.f32 %v7187, %v7188
    %v7190 = vrot.slane %v7189, 2
    %v7191 = vadd.f32 %v7189, %v7190
    %v7192 = vrot.slane %v7191, 1
    %v7193 = vadd.f32 %v7191, %v7192
    %v7194 = vsel %vm2522, %v7100, 0.0
    %v7195 = vrot.slane %v7194, 4
    %v7196 = vadd.f32 %v7194, %v7195
    %v7197 = vrot.slane %v7196, 2
    %v7198 = vadd.f32 %v7196, %v7197
    %v7199 = vrot.slane %v7198, 1
    %v7200 = vadd.f32 %v7198, %v7199
    %v7201 = vsel %vm2522, %v7101, 0.0
    %v7202 = vrot.slane %v7201, 4
    %v7203 = vadd.f32 %v7201, %v7202
    %v7204 = vrot.slane %v7203, 2
    %v7205 = vadd.f32 %v7203, %v7204
    %v7206 = vrot.slane %v7205, 1
    %v7207 = vadd.f32 %v7205, %v7206
    %v7208 = vsel %vm2522, %v7102, 0.0
    %v7209 = vrot.slane %v7208, 4
    %v7210 = vadd.f32 %v7208, %v7209
    %v7211 = vrot.slane %v7210, 2
    %v7212 = vadd.f32 %v7210, %v7211
    %v7213 = vrot.slane %v7212, 1
    %v7214 = vadd.f32 %v7212, %v7213
    %7215 = vrot.lane.b32.xlu0 %v5499, 112
    %v7216 = vpop.permute.xlu0 %7215
    %7217 = vrot.lane.b32.xlu0 %v5500, 112
    %v7218 = vpop.permute.xlu0 %7217
    %7219 = vrot.lane.b32.xlu0 %v5501, 112
    %v7220 = vpop.permute.xlu0 %7219
    %7221 = vrot.lane.b32.xlu0 %v5502, 112
    %v7222 = vpop.permute.xlu0 %7221
    %7223 = vrot.lane.b32.xlu0 %v5503, 112
    %v7224 = vpop.permute.xlu0 %7223
    %7225 = vrot.lane.b32.xlu0 %v5504, 112
    %v7226 = vpop.permute.xlu0 %7225
    %7227 = vrot.lane.b32.xlu0 %v5505, 112
    %v7228 = vpop.permute.xlu0 %7227
    %7229 = vrot.lane.b32.xlu0 %v5506, 112
    %v7230 = vpop.permute.xlu0 %7229
    %7231 = vrot.lane.b32.xlu0 %v5507, 112
    %v7232 = vpop.permute.xlu0 %7231
    %7233 = vrot.lane.b32.xlu0 %v5508, 112
    %v7234 = vpop.permute.xlu0 %7233
    %7235 = vrot.lane.b32.xlu0 %v5509, 112
    %v7236 = vpop.permute.xlu0 %7235
    %7237 = vrot.lane.b32.xlu0 %v5510, 112
    %v7238 = vpop.permute.xlu0 %7237
    %7239 = vrot.lane.b32.xlu0 %v5511, 112
    %v7240 = vpop.permute.xlu0 %7239
    %7241 = vrot.lane.b32.xlu0 %v5512, 112
    %v7242 = vpop.permute.xlu0 %7241
    %7243 = vrot.lane.b32.xlu0 %v5513, 112
    %v7244 = vpop.permute.xlu0 %7243
    %7245 = vrot.lane.b32.xlu0 %v5514, 112
    %v7246 = vpop.permute.xlu0 %7245
    %v7263 = vsel %vm861, %v7216, 0.0
    %7264 = vadd.xlane.f32.xlu0 %v7263
    %v7265 = vpop.xlane.xlu0 %7264
    %v7266 = vsel %vm861, %v7218, 0.0
    %7267 = vadd.xlane.f32.xlu0 %v7266
    %v7268 = vpop.xlane.xlu0 %7267
    %v7269 = vsel %vm861, %v7220, 0.0
    %7270 = vadd.xlane.f32.xlu0 %v7269
    %v7271 = vpop.xlane.xlu0 %7270
    %v7272 = vsel %vm861, %v7222, 0.0
    %7273 = vadd.xlane.f32.xlu0 %v7272
    %v7274 = vpop.xlane.xlu0 %7273
    %v7275 = vsel %vm861, %v7224, 0.0
    %7276 = vadd.xlane.f32.xlu0 %v7275
    %v7277 = vpop.xlane.xlu0 %7276
    %v7278 = vsel %vm861, %v7226, 0.0
    %7279 = vadd.xlane.f32.xlu0 %v7278
    %v7280 = vpop.xlane.xlu0 %7279
    %v7281 = vsel %vm861, %v7228, 0.0
    %7282 = vadd.xlane.f32.xlu0 %v7281
    %v7283 = vpop.xlane.xlu0 %7282
    %v7284 = vsel %vm861, %v7230, 0.0
    %7285 = vadd.xlane.f32.xlu0 %v7284
    %v7286 = vpop.xlane.xlu0 %7285
    %v7287 = vsel %vm861, %v7232, 0.0
    %7288 = vadd.xlane.f32.xlu0 %v7287
    %v7289 = vpop.xlane.xlu0 %7288
    %v7290 = vsel %vm861, %v7234, 0.0
    %7291 = vadd.xlane.f32.xlu0 %v7290
    %v7292 = vpop.xlane.xlu0 %7291
    %v7293 = vsel %vm861, %v7236, 0.0
    %7294 = vadd.xlane.f32.xlu0 %v7293
    %v7295 = vpop.xlane.xlu0 %7294
    %v7296 = vsel %vm861, %v7238, 0.0
    %7297 = vadd.xlane.f32.xlu0 %v7296
    %v7298 = vpop.xlane.xlu0 %7297
    %v7299 = vsel %vm861, %v7240, 0.0
    %7300 = vadd.xlane.f32.xlu0 %v7299
    %v7301 = vpop.xlane.xlu0 %7300
    %v7302 = vsel %vm861, %v7242, 0.0
    %7303 = vadd.xlane.f32.xlu0 %v7302
    %v7304 = vpop.xlane.xlu0 %7303
    %v7305 = vsel %vm861, %v7244, 0.0
    %7306 = vadd.xlane.f32.xlu0 %v7305
    %v7307 = vpop.xlane.xlu0 %7306
    %v7308 = vsel %vm861, %v7246, 0.0
    %7309 = vadd.xlane.f32.xlu0 %v7308
    %v7310 = vpop.xlane.xlu0 %7309
    %v7311 = vmul.f32 %v7265, 0.125
    %v7312 = vmul.f32 %v7268, 0.125
    %v7313 = vmul.f32 %v7271, 0.125
    %v7314 = vmul.f32 %v7274, 0.125
    %v7315 = vmul.f32 %v7277, 0.125
    %v7316 = vmul.f32 %v7280, 0.125
    %v7317 = vmul.f32 %v7283, 0.125
    %v7318 = vmul.f32 %v7286, 0.125
    %v7319 = vmul.f32 %v7289, 0.125
    %v7320 = vmul.f32 %v7292, 0.125
    %v7321 = vmul.f32 %v7295, 0.125
    %v7322 = vmul.f32 %v7298, 0.125
    %v7323 = vmul.f32 %v7301, 0.125
    %v7324 = vmul.f32 %v7304, 0.125
    %v7325 = vmul.f32 %v7307, 0.125
    %v7326 = vmul.f32 %v7310, 0.125
    %v7327 = vadd.f32 %v7311, %v933
    %v7328 = vadd.f32 %v7312, %v940
    %v7329 = vadd.f32 %v7313, %v947
    %v7330 = vadd.f32 %v7314, %v954
    %v7331 = vadd.f32 %v7315, %v961
    %v7332 = vadd.f32 %v7316, %v968
    %v7333 = vadd.f32 %v7317, %v975
    %v7334 = vadd.f32 %v7318, %v982
    %v7335 = vadd.f32 %v7319, %v933
    %v7336 = vadd.f32 %v7320, %v940
    %v7337 = vadd.f32 %v7321, %v947
    %v7338 = vadd.f32 %v7322, %v954
    %v7339 = vadd.f32 %v7323, %v961
    %v7340 = vadd.f32 %v7324, %v968
    %v7341 = vadd.f32 %v7325, %v975
    %v7342 = vadd.f32 %v7326, %v982
    %7359 = vset.pattern.permute.xlu0 0
    %7360 = vperm.xlu0 %7359, %v7327
    %v7361 = vpop.permute.xlu0 %7360
    %7362 = vset.pattern.permute.xlu0 0
    %7363 = vperm.xlu0 %7362, %v7328
    %v7364 = vpop.permute.xlu0 %7363
    %7365 = vset.pattern.permute.xlu0 0
    %7366 = vperm.xlu0 %7365, %v7329
    %v7367 = vpop.permute.xlu0 %7366
    %7368 = vset.pattern.permute.xlu0 0
    %7369 = vperm.xlu0 %7368, %v7330
    %v7370 = vpop.permute.xlu0 %7369
    %7371 = vset.pattern.permute.xlu0 0
    %7372 = vperm.xlu0 %7371, %v7331
    %v7373 = vpop.permute.xlu0 %7372
    %7374 = vset.pattern.permute.xlu0 0
    %7375 = vperm.xlu0 %7374, %v7332
    %v7376 = vpop.permute.xlu0 %7375
    %7377 = vset.pattern.permute.xlu0 0
    %7378 = vperm.xlu0 %7377, %v7333
    %v7379 = vpop.permute.xlu0 %7378
    %7380 = vset.pattern.permute.xlu0 0
    %7381 = vperm.xlu0 %7380, %v7334
    %v7382 = vpop.permute.xlu0 %7381
    %7383 = vset.pattern.permute.xlu0 0
    %7384 = vperm.xlu0 %7383, %v7335
    %v7385 = vpop.permute.xlu0 %7384
    %7386 = vset.pattern.permute.xlu0 0
    %7387 = vperm.xlu0 %7386, %v7336
    %v7388 = vpop.permute.xlu0 %7387
    %7389 = vset.pattern.permute.xlu0 0
    %7390 = vperm.xlu0 %7389, %v7337
    %v7391 = vpop.permute.xlu0 %7390
    %7392 = vset.pattern.permute.xlu0 0
    %7393 = vperm.xlu0 %7392, %v7338
    %v7394 = vpop.permute.xlu0 %7393
    %7395 = vset.pattern.permute.xlu0 0
    %7396 = vperm.xlu0 %7395, %v7339
    %v7397 = vpop.permute.xlu0 %7396
    %7398 = vset.pattern.permute.xlu0 0
    %7399 = vperm.xlu0 %7398, %v7340
    %v7400 = vpop.permute.xlu0 %7399
    %7401 = vset.pattern.permute.xlu0 0
    %7402 = vperm.xlu0 %7401, %v7341
    %v7403 = vpop.permute.xlu0 %7402
    %7404 = vset.pattern.permute.xlu0 0
    %7405 = vperm.xlu0 %7404, %v7342
    %v7406 = vpop.permute.xlu0 %7405
    %v7407 = vlaneseq
    %v7408 = vshrl.u32 %v7407, 7
    %v7409 = vsub.s32 %v45, %v7408
    %v7410 = vrot.slane %v7361, %v7409
    %v7411 = vlaneseq
    %v7412 = vshrl.u32 %v7411, 7
    %v7413 = vsub.s32 %v45, %v7412
    %v7414 = vrot.slane %v7364, %v7413
    %v7415 = vlaneseq
    %v7416 = vshrl.u32 %v7415, 7
    %v7417 = vsub.s32 %v45, %v7416
    %v7418 = vrot.slane %v7367, %v7417
    %v7419 = vlaneseq
    %v7420 = vshrl.u32 %v7419, 7
    %v7421 = vsub.s32 %v45, %v7420
    %v7422 = vrot.slane %v7370, %v7421
    %v7423 = vlaneseq
    %v7424 = vshrl.u32 %v7423, 7
    %v7425 = vsub.s32 %v45, %v7424
    %v7426 = vrot.slane %v7373, %v7425
    %v7427 = vlaneseq
    %v7428 = vshrl.u32 %v7427, 7
    %v7429 = vsub.s32 %v45, %v7428
    %v7430 = vrot.slane %v7376, %v7429
    %v7431 = vlaneseq
    %v7432 = vshrl.u32 %v7431, 7
    %v7433 = vsub.s32 %v45, %v7432
    %v7434 = vrot.slane %v7379, %v7433
    %v7435 = vlaneseq
    %v7436 = vshrl.u32 %v7435, 7
    %v7437 = vsub.s32 %v45, %v7436
    %v7438 = vrot.slane %v7382, %v7437
    %v7439 = vlaneseq
    %v7440 = vshrl.u32 %v7439, 7
    %v7441 = vsub.s32 %v45, %v7440
    %v7442 = vrot.slane %v7385, %v7441
    %v7443 = vlaneseq
    %v7444 = vshrl.u32 %v7443, 7
    %v7445 = vsub.s32 %v45, %v7444
    %v7446 = vrot.slane %v7388, %v7445
    %v7447 = vlaneseq
    %v7448 = vshrl.u32 %v7447, 7
    %v7449 = vsub.s32 %v45, %v7448
    %v7450 = vrot.slane %v7391, %v7449
    %v7451 = vlaneseq
    %v7452 = vshrl.u32 %v7451, 7
    %v7453 = vsub.s32 %v45, %v7452
    %v7454 = vrot.slane %v7394, %v7453
    %v7455 = vlaneseq
    %v7456 = vshrl.u32 %v7455, 7
    %v7457 = vsub.s32 %v45, %v7456
    %v7458 = vrot.slane %v7397, %v7457
    %v7459 = vlaneseq
    %v7460 = vshrl.u32 %v7459, 7
    %v7461 = vsub.s32 %v45, %v7460
    %v7462 = vrot.slane %v7400, %v7461
    %v7463 = vlaneseq
    %v7464 = vshrl.u32 %v7463, 7
    %v7465 = vsub.s32 %v45, %v7464
    %v7466 = vrot.slane %v7403, %v7465
    %v7467 = vlaneseq
    %v7468 = vshrl.u32 %v7467, 7
    %v7469 = vsub.s32 %v45, %v7468
    %v7470 = vrot.slane %v7406, %v7469
    %v7471 = vsel %vm1135, %v7414, %v7410
    %v7472 = vsel %vm321, %v7418, %v7471
    %v7473 = vsel %vm1138, %v7422, %v7472
    %v7474 = vsel %vm1140, %v7426, %v7473
    %v7475 = vsel %vm1142, %v7430, %v7474
    %v7476 = vsel %vm1144, %v7434, %v7475
    %v7477 = vsel %vm1146, %v7438, %v7476
    %v7478 = vsel %vm1135, %v7446, %v7442
    %v7479 = vsel %vm321, %v7450, %v7478
    %v7480 = vsel %vm1138, %v7454, %v7479
    %v7481 = vsel %vm1140, %v7458, %v7480
    %v7482 = vsel %vm1142, %v7462, %v7481
    %v7483 = vsel %vm1144, %v7466, %v7482
    %v7484 = vsel %vm1146, %v7470, %v7483
    %v7487 = vsel %vm861, %v7477, -inf
    %7488 = vmax.xlane.f32.xlu0 %v7487
    %v7489 = vpop.xlane.xlu0 %7488
    %v7490 = vsel %vm861, %v7484, -inf
    %7491 = vmax.xlane.f32.xlu0 %v7490
    %v7492 = vpop.xlane.xlu0 %7491
    %v7495 = vlaneseq
    %v7496 = vshrl.u32 %v7495, 7
    %v7497 = vsub.s32 0, %v7496
    %v7498 = vrot.slane %v7489, %v7497
    %v7499 = vlaneseq
    %v7500 = vshrl.u32 %v7499, 7
    %v7501 = vsub.s32 1, %v7500
    %v7502 = vrot.slane %v7489, %v7501
    %v7503 = vlaneseq
    %v7504 = vshrl.u32 %v7503, 7
    %v7505 = vsub.s32 2, %v7504
    %v7506 = vrot.slane %v7489, %v7505
    %v7507 = vlaneseq
    %v7508 = vshrl.u32 %v7507, 7
    %v7509 = vsub.s32 3, %v7508
    %v7510 = vrot.slane %v7489, %v7509
    %v7511 = vlaneseq
    %v7512 = vshrl.u32 %v7511, 7
    %v7513 = vsub.s32 4, %v7512
    %v7514 = vrot.slane %v7489, %v7513
    %v7515 = vlaneseq
    %v7516 = vshrl.u32 %v7515, 7
    %v7517 = vsub.s32 5, %v7516
    %v7518 = vrot.slane %v7489, %v7517
    %v7519 = vlaneseq
    %v7520 = vshrl.u32 %v7519, 7
    %v7521 = vsub.s32 6, %v7520
    %v7522 = vrot.slane %v7489, %v7521
    %v7523 = vlaneseq
    %v7524 = vshrl.u32 %v7523, 7
    %v7525 = vsub.s32 7, %v7524
    %v7526 = vrot.slane %v7489, %v7525
    %v7527 = vlaneseq
    %v7528 = vshrl.u32 %v7527, 7
    %v7529 = vsub.s32 0, %v7528
    %v7530 = vrot.slane %v7492, %v7529
    %v7531 = vlaneseq
    %v7532 = vshrl.u32 %v7531, 7
    %v7533 = vsub.s32 1, %v7532
    %v7534 = vrot.slane %v7492, %v7533
    %v7535 = vlaneseq
    %v7536 = vshrl.u32 %v7535, 7
    %v7537 = vsub.s32 2, %v7536
    %v7538 = vrot.slane %v7492, %v7537
    %v7539 = vlaneseq
    %v7540 = vshrl.u32 %v7539, 7
    %v7541 = vsub.s32 3, %v7540
    %v7542 = vrot.slane %v7492, %v7541
    %v7543 = vlaneseq
    %v7544 = vshrl.u32 %v7543, 7
    %v7545 = vsub.s32 4, %v7544
    %v7546 = vrot.slane %v7492, %v7545
    %v7547 = vlaneseq
    %v7548 = vshrl.u32 %v7547, 7
    %v7549 = vsub.s32 5, %v7548
    %v7550 = vrot.slane %v7492, %v7549
    %v7551 = vlaneseq
    %v7552 = vshrl.u32 %v7551, 7
    %v7553 = vsub.s32 6, %v7552
    %v7554 = vrot.slane %v7492, %v7553
    %v7555 = vlaneseq
    %v7556 = vshrl.u32 %v7555, 7
    %v7557 = vsub.s32 7, %v7556
    %v7558 = vrot.slane %v7492, %v7557
    %v7575 = vsub.f32 %v7327, %v7498
    %v7576 = vsub.f32 %v7328, %v7502
    %v7577 = vsub.f32 %v7329, %v7506
    %v7578 = vsub.f32 %v7330, %v7510
    %v7579 = vsub.f32 %v7331, %v7514
    %v7580 = vsub.f32 %v7332, %v7518
    %v7581 = vsub.f32 %v7333, %v7522
    %v7582 = vsub.f32 %v7334, %v7526
    %v7583 = vsub.f32 %v7335, %v7530
    %v7584 = vsub.f32 %v7336, %v7534
    %v7585 = vsub.f32 %v7337, %v7538
    %v7586 = vsub.f32 %v7338, %v7542
    %v7587 = vsub.f32 %v7339, %v7546
    %v7588 = vsub.f32 %v7340, %v7550
    %v7589 = vsub.f32 %v7341, %v7554
    %v7590 = vsub.f32 %v7342, %v7558
    %v7591 = vmul.f32 %v7575, 1.442695
    %v7592 = vpow.pop %v7591
    %v7593 = vmul.f32 %v7576, 1.442695
    %v7594 = vpow.pop %v7593
    %v7595 = vmul.f32 %v7577, 1.442695
    %v7596 = vpow.pop %v7595
    %v7597 = vmul.f32 %v7578, 1.442695
    %v7598 = vpow.pop %v7597
    %v7599 = vmul.f32 %v7579, 1.442695
    %v7600 = vpow.pop %v7599
    %v7601 = vmul.f32 %v7580, 1.442695
    %v7602 = vpow.pop %v7601
    %v7603 = vmul.f32 %v7581, 1.442695
    %v7604 = vpow.pop %v7603
    %v7605 = vmul.f32 %v7582, 1.442695
    %v7606 = vpow.pop %v7605
    %v7607 = vmul.f32 %v7583, 1.442695
    %v7608 = vpow.pop %v7607
    %v7609 = vmul.f32 %v7584, 1.442695
    %v7610 = vpow.pop %v7609
    %v7611 = vmul.f32 %v7585, 1.442695
    %v7612 = vpow.pop %v7611
    %v7613 = vmul.f32 %v7586, 1.442695
    %v7614 = vpow.pop %v7613
    %v7615 = vmul.f32 %v7587, 1.442695
    %v7616 = vpow.pop %v7615
    %v7617 = vmul.f32 %v7588, 1.442695
    %v7618 = vpow.pop %v7617
    %v7619 = vmul.f32 %v7589, 1.442695
    %v7620 = vpow.pop %v7619
    %v7621 = vmul.f32 %v7590, 1.442695
    %v7622 = vpow.pop %v7621
    %7639 = vset.pattern.permute.xlu0 0
    %7640 = vperm.xlu0 %7639, %v7592
    %v7641 = vpop.permute.xlu0 %7640
    %7642 = vset.pattern.permute.xlu0 0
    %7643 = vperm.xlu0 %7642, %v7594
    %v7644 = vpop.permute.xlu0 %7643
    %7645 = vset.pattern.permute.xlu0 0
    %7646 = vperm.xlu0 %7645, %v7596
    %v7647 = vpop.permute.xlu0 %7646
    %7648 = vset.pattern.permute.xlu0 0
    %7649 = vperm.xlu0 %7648, %v7598
    %v7650 = vpop.permute.xlu0 %7649
    %7651 = vset.pattern.permute.xlu0 0
    %7652 = vperm.xlu0 %7651, %v7600
    %v7653 = vpop.permute.xlu0 %7652
    %7654 = vset.pattern.permute.xlu0 0
    %7655 = vperm.xlu0 %7654, %v7602
    %v7656 = vpop.permute.xlu0 %7655
    %7657 = vset.pattern.permute.xlu0 0
    %7658 = vperm.xlu0 %7657, %v7604
    %v7659 = vpop.permute.xlu0 %7658
    %7660 = vset.pattern.permute.xlu0 0
    %7661 = vperm.xlu0 %7660, %v7606
    %v7662 = vpop.permute.xlu0 %7661
    %7663 = vset.pattern.permute.xlu0 0
    %7664 = vperm.xlu0 %7663, %v7608
    %v7665 = vpop.permute.xlu0 %7664
    %7666 = vset.pattern.permute.xlu0 0
    %7667 = vperm.xlu0 %7666, %v7610
    %v7668 = vpop.permute.xlu0 %7667
    %7669 = vset.pattern.permute.xlu0 0
    %7670 = vperm.xlu0 %7669, %v7612
    %v7671 = vpop.permute.xlu0 %7670
    %7672 = vset.pattern.permute.xlu0 0
    %7673 = vperm.xlu0 %7672, %v7614
    %v7674 = vpop.permute.xlu0 %7673
    %7675 = vset.pattern.permute.xlu0 0
    %7676 = vperm.xlu0 %7675, %v7616
    %v7677 = vpop.permute.xlu0 %7676
    %7678 = vset.pattern.permute.xlu0 0
    %7679 = vperm.xlu0 %7678, %v7618
    %v7680 = vpop.permute.xlu0 %7679
    %7681 = vset.pattern.permute.xlu0 0
    %7682 = vperm.xlu0 %7681, %v7620
    %v7683 = vpop.permute.xlu0 %7682
    %7684 = vset.pattern.permute.xlu0 0
    %7685 = vperm.xlu0 %7684, %v7622
    %v7686 = vpop.permute.xlu0 %7685
    %v7687 = vlaneseq
    %v7688 = vshrl.u32 %v7687, 7
    %v7689 = vsub.s32 %v45, %v7688
    %v7690 = vrot.slane %v7641, %v7689
    %v7691 = vlaneseq
    %v7692 = vshrl.u32 %v7691, 7
    %v7693 = vsub.s32 %v45, %v7692
    %v7694 = vrot.slane %v7644, %v7693
    %v7695 = vlaneseq
    %v7696 = vshrl.u32 %v7695, 7
    %v7697 = vsub.s32 %v45, %v7696
    %v7698 = vrot.slane %v7647, %v7697
    %v7699 = vlaneseq
    %v7700 = vshrl.u32 %v7699, 7
    %v7701 = vsub.s32 %v45, %v7700
    %v7702 = vrot.slane %v7650, %v7701
    %v7703 = vlaneseq
    %v7704 = vshrl.u32 %v7703, 7
    %v7705 = vsub.s32 %v45, %v7704
    %v7706 = vrot.slane %v7653, %v7705
    %v7707 = vlaneseq
    %v7708 = vshrl.u32 %v7707, 7
    %v7709 = vsub.s32 %v45, %v7708
    %v7710 = vrot.slane %v7656, %v7709
    %v7711 = vlaneseq
    %v7712 = vshrl.u32 %v7711, 7
    %v7713 = vsub.s32 %v45, %v7712
    %v7714 = vrot.slane %v7659, %v7713
    %v7715 = vlaneseq
    %v7716 = vshrl.u32 %v7715, 7
    %v7717 = vsub.s32 %v45, %v7716
    %v7718 = vrot.slane %v7662, %v7717
    %v7719 = vlaneseq
    %v7720 = vshrl.u32 %v7719, 7
    %v7721 = vsub.s32 %v45, %v7720
    %v7722 = vrot.slane %v7665, %v7721
    %v7723 = vlaneseq
    %v7724 = vshrl.u32 %v7723, 7
    %v7725 = vsub.s32 %v45, %v7724
    %v7726 = vrot.slane %v7668, %v7725
    %v7727 = vlaneseq
    %v7728 = vshrl.u32 %v7727, 7
    %v7729 = vsub.s32 %v45, %v7728
    %v7730 = vrot.slane %v7671, %v7729
    %v7731 = vlaneseq
    %v7732 = vshrl.u32 %v7731, 7
    %v7733 = vsub.s32 %v45, %v7732
    %v7734 = vrot.slane %v7674, %v7733
    %v7735 = vlaneseq
    %v7736 = vshrl.u32 %v7735, 7
    %v7737 = vsub.s32 %v45, %v7736
    %v7738 = vrot.slane %v7677, %v7737
    %v7739 = vlaneseq
    %v7740 = vshrl.u32 %v7739, 7
    %v7741 = vsub.s32 %v45, %v7740
    %v7742 = vrot.slane %v7680, %v7741
    %v7743 = vlaneseq
    %v7744 = vshrl.u32 %v7743, 7
    %v7745 = vsub.s32 %v45, %v7744
    %v7746 = vrot.slane %v7683, %v7745
    %v7747 = vlaneseq
    %v7748 = vshrl.u32 %v7747, 7
    %v7749 = vsub.s32 %v45, %v7748
    %v7750 = vrot.slane %v7686, %v7749
    %v7751 = vsel %vm1135, %v7694, %v7690
    %v7752 = vsel %vm321, %v7698, %v7751
    %v7753 = vsel %vm1138, %v7702, %v7752
    %v7754 = vsel %vm1140, %v7706, %v7753
    %v7755 = vsel %vm1142, %v7710, %v7754
    %v7756 = vsel %vm1144, %v7714, %v7755
    %v7757 = vsel %vm1146, %v7718, %v7756
    %v7758 = vsel %vm1135, %v7726, %v7722
    %v7759 = vsel %vm321, %v7730, %v7758
    %v7760 = vsel %vm1138, %v7734, %v7759
    %v7761 = vsel %vm1140, %v7738, %v7760
    %v7762 = vsel %vm1142, %v7742, %v7761
    %v7763 = vsel %vm1144, %v7746, %v7762
    %v7764 = vsel %vm1146, %v7750, %v7763
    %v7767 = vsel %vm861, %v7757, 0.0
    %7768 = vadd.xlane.f32.xlu0 %v7767
    %v7769 = vpop.xlane.xlu0 %7768
    %v7770 = vsel %vm861, %v7764, 0.0
    %7771 = vadd.xlane.f32.xlu0 %v7770
    %v7772 = vpop.xlane.xlu0 %7771
    %v7773 = vrcp.pop %v7769
    %v7774 = vrcp.pop %v7772
    %v7777 = vlaneseq
    %v7778 = vshrl.u32 %v7777, 7
    %v7779 = vsub.s32 0, %v7778
    %v7780 = vrot.slane %v7773, %v7779
    %v7781 = vlaneseq
    %v7782 = vshrl.u32 %v7781, 7
    %v7783 = vsub.s32 1, %v7782
    %v7784 = vrot.slane %v7773, %v7783
    %v7785 = vlaneseq
    %v7786 = vshrl.u32 %v7785, 7
    %v7787 = vsub.s32 2, %v7786
    %v7788 = vrot.slane %v7773, %v7787
    %v7789 = vlaneseq
    %v7790 = vshrl.u32 %v7789, 7
    %v7791 = vsub.s32 3, %v7790
    %v7792 = vrot.slane %v7773, %v7791
    %v7793 = vlaneseq
    %v7794 = vshrl.u32 %v7793, 7
    %v7795 = vsub.s32 4, %v7794
    %v7796 = vrot.slane %v7773, %v7795
    %v7797 = vlaneseq
    %v7798 = vshrl.u32 %v7797, 7
    %v7799 = vsub.s32 5, %v7798
    %v7800 = vrot.slane %v7773, %v7799
    %v7801 = vlaneseq
    %v7802 = vshrl.u32 %v7801, 7
    %v7803 = vsub.s32 6, %v7802
    %v7804 = vrot.slane %v7773, %v7803
    %v7805 = vlaneseq
    %v7806 = vshrl.u32 %v7805, 7
    %v7807 = vsub.s32 7, %v7806
    %v7808 = vrot.slane %v7773, %v7807
    %v7809 = vlaneseq
    %v7810 = vshrl.u32 %v7809, 7
    %v7811 = vsub.s32 0, %v7810
    %v7812 = vrot.slane %v7774, %v7811
    %v7813 = vlaneseq
    %v7814 = vshrl.u32 %v7813, 7
    %v7815 = vsub.s32 1, %v7814
    %v7816 = vrot.slane %v7774, %v7815
    %v7817 = vlaneseq
    %v7818 = vshrl.u32 %v7817, 7
    %v7819 = vsub.s32 2, %v7818
    %v7820 = vrot.slane %v7774, %v7819
    %v7821 = vlaneseq
    %v7822 = vshrl.u32 %v7821, 7
    %v7823 = vsub.s32 3, %v7822
    %v7824 = vrot.slane %v7774, %v7823
    %v7825 = vlaneseq
    %v7826 = vshrl.u32 %v7825, 7
    %v7827 = vsub.s32 4, %v7826
    %v7828 = vrot.slane %v7774, %v7827
    %v7829 = vlaneseq
    %v7830 = vshrl.u32 %v7829, 7
    %v7831 = vsub.s32 5, %v7830
    %v7832 = vrot.slane %v7774, %v7831
    %v7833 = vlaneseq
    %v7834 = vshrl.u32 %v7833, 7
    %v7835 = vsub.s32 6, %v7834
    %v7836 = vrot.slane %v7774, %v7835
    %v7837 = vlaneseq
    %v7838 = vshrl.u32 %v7837, 7
    %v7839 = vsub.s32 7, %v7838
    %v7840 = vrot.slane %v7774, %v7839
    %v7857 = vmul.f32 %v7592, %v7780
    %v7858 = vmul.f32 %v7594, %v7784
    %v7859 = vmul.f32 %v7596, %v7788
    %v7860 = vmul.f32 %v7598, %v7792
    %v7861 = vmul.f32 %v7600, %v7796
    %v7862 = vmul.f32 %v7602, %v7800
    %v7863 = vmul.f32 %v7604, %v7804
    %v7864 = vmul.f32 %v7606, %v7808
    %v7865 = vmul.f32 %v7608, %v7812
    %v7866 = vmul.f32 %v7610, %v7816
    %v7867 = vmul.f32 %v7612, %v7820
    %v7868 = vmul.f32 %v7614, %v7824
    %v7869 = vmul.f32 %v7616, %v7828
    %v7870 = vmul.f32 %v7618, %v7832
    %v7871 = vmul.f32 %v7620, %v7836
    %v7872 = vmul.f32 %v7622, %v7840
    %7874 = vset.pattern.permute.xlu0 0
    %7875 = vperm.xlu0 %7874, %v7857
    %v7876 = vpop.permute.xlu0 %7875
    %7879 = vset.pattern.permute.xlu0 0
    %7880 = vperm.xlu0 %7879, %v7858
    %v7881 = vpop.permute.xlu0 %7880
    %7884 = vset.pattern.permute.xlu0 0
    %7885 = vperm.xlu0 %7884, %v7859
    %v7886 = vpop.permute.xlu0 %7885
    %7889 = vset.pattern.permute.xlu0 0
    %7890 = vperm.xlu0 %7889, %v7860
    %v7891 = vpop.permute.xlu0 %7890
    %7894 = vset.pattern.permute.xlu0 0
    %7895 = vperm.xlu0 %7894, %v7861
    %v7896 = vpop.permute.xlu0 %7895
    %7899 = vset.pattern.permute.xlu0 0
    %7900 = vperm.xlu0 %7899, %v7862
    %v7901 = vpop.permute.xlu0 %7900
    %7904 = vset.pattern.permute.xlu0 0
    %7905 = vperm.xlu0 %7904, %v7863
    %v7906 = vpop.permute.xlu0 %7905
    %7909 = vset.pattern.permute.xlu0 0
    %7910 = vperm.xlu0 %7909, %v7864
    %v7911 = vpop.permute.xlu0 %7910
    %7914 = vset.pattern.permute.xlu0 0
    %7915 = vperm.xlu0 %7914, %v7865
    %v7916 = vpop.permute.xlu0 %7915
    %7919 = vset.pattern.permute.xlu0 0
    %7920 = vperm.xlu0 %7919, %v7866
    %v7921 = vpop.permute.xlu0 %7920
    %7924 = vset.pattern.permute.xlu0 0
    %7925 = vperm.xlu0 %7924, %v7867
    %v7926 = vpop.permute.xlu0 %7925
    %7929 = vset.pattern.permute.xlu0 0
    %7930 = vperm.xlu0 %7929, %v7868
    %v7931 = vpop.permute.xlu0 %7930
    %7934 = vset.pattern.permute.xlu0 0
    %7935 = vperm.xlu0 %7934, %v7869
    %v7936 = vpop.permute.xlu0 %7935
    %7939 = vset.pattern.permute.xlu0 0
    %7940 = vperm.xlu0 %7939, %v7870
    %v7941 = vpop.permute.xlu0 %7940
    %7944 = vset.pattern.permute.xlu0 0
    %7945 = vperm.xlu0 %7944, %v7871
    %v7946 = vpop.permute.xlu0 %7945
    %7949 = vset.pattern.permute.xlu0 0
    %7950 = vperm.xlu0 %7949, %v7872
    %v7951 = vpop.permute.xlu0 %7950
    %v7953 = vmul.f32 %v7876, %v4959
    %v7954 = vmul.f32 %v7881, %v4959
    %v7955 = vmul.f32 %v7886, %v4959
    %v7956 = vmul.f32 %v7891, %v4959
    %v7957 = vmul.f32 %v7896, %v4959
    %v7958 = vmul.f32 %v7901, %v4959
    %v7959 = vmul.f32 %v7906, %v4959
    %v7960 = vmul.f32 %v7911, %v4959
    %v7961 = vmul.f32 %v7916, %v4964
    %v7962 = vmul.f32 %v7921, %v4964
    %v7963 = vmul.f32 %v7926, %v4964
    %v7964 = vmul.f32 %v7931, %v4964
    %v7965 = vmul.f32 %v7936, %v4964
    %v7966 = vmul.f32 %v7941, %v4964
    %v7967 = vmul.f32 %v7946, %v4964
    %v7968 = vmul.f32 %v7951, %v4964
    %v7969 = vsel %vm3389, %v7953, 0.0
    %v7970 = vrot.slane %v7969, 4
    %v7971 = vadd.f32 %v7969, %v7970
    %v7972 = vrot.slane %v7971, 2
    %v7973 = vadd.f32 %v7971, %v7972
    %v7974 = vrot.slane %v7973, 1
    %v7975 = vadd.f32 %v7973, %v7974
    %v7976 = vsel %vm3389, %v7954, 0.0
    %v7977 = vrot.slane %v7976, 4
    %v7978 = vadd.f32 %v7976, %v7977
    %v7979 = vrot.slane %v7978, 2
    %v7980 = vadd.f32 %v7978, %v7979
    %v7981 = vrot.slane %v7980, 1
    %v7982 = vadd.f32 %v7980, %v7981
    %v7983 = vsel %vm3389, %v7955, 0.0
    %v7984 = vrot.slane %v7983, 4
    %v7985 = vadd.f32 %v7983, %v7984
    %v7986 = vrot.slane %v7985, 2
    %v7987 = vadd.f32 %v7985, %v7986
    %v7988 = vrot.slane %v7987, 1
    %v7989 = vadd.f32 %v7987, %v7988
    %v7990 = vsel %vm3389, %v7956, 0.0
    %v7991 = vrot.slane %v7990, 4
    %v7992 = vadd.f32 %v7990, %v7991
    %v7993 = vrot.slane %v7992, 2
    %v7994 = vadd.f32 %v7992, %v7993
    %v7995 = vrot.slane %v7994, 1
    %v7996 = vadd.f32 %v7994, %v7995
    %v7997 = vsel %vm3389, %v7957, 0.0
    %v7998 = vrot.slane %v7997, 4
    %v7999 = vadd.f32 %v7997, %v7998
    %v8000 = vrot.slane %v7999, 2
    %v8001 = vadd.f32 %v7999, %v8000
    %v8002 = vrot.slane %v8001, 1
    %v8003 = vadd.f32 %v8001, %v8002
    %v8004 = vsel %vm3389, %v7958, 0.0
    %v8005 = vrot.slane %v8004, 4
    %v8006 = vadd.f32 %v8004, %v8005
    %v8007 = vrot.slane %v8006, 2
    %v8008 = vadd.f32 %v8006, %v8007
    %v8009 = vrot.slane %v8008, 1
    %v8010 = vadd.f32 %v8008, %v8009
    %v8011 = vsel %vm3389, %v7959, 0.0
    %v8012 = vrot.slane %v8011, 4
    %v8013 = vadd.f32 %v8011, %v8012
    %v8014 = vrot.slane %v8013, 2
    %v8015 = vadd.f32 %v8013, %v8014
    %v8016 = vrot.slane %v8015, 1
    %v8017 = vadd.f32 %v8015, %v8016
    %v8018 = vsel %vm3389, %v7960, 0.0
    %v8019 = vrot.slane %v8018, 4
    %v8020 = vadd.f32 %v8018, %v8019
    %v8021 = vrot.slane %v8020, 2
    %v8022 = vadd.f32 %v8020, %v8021
    %v8023 = vrot.slane %v8022, 1
    %v8024 = vadd.f32 %v8022, %v8023
    %v8025 = vsel %vm3389, %v7961, 0.0
    %v8026 = vrot.slane %v8025, 4
    %v8027 = vadd.f32 %v8025, %v8026
    %v8028 = vrot.slane %v8027, 2
    %v8029 = vadd.f32 %v8027, %v8028
    %v8030 = vrot.slane %v8029, 1
    %v8031 = vadd.f32 %v8029, %v8030
    %v8032 = vsel %vm3389, %v7962, 0.0
    %v8033 = vrot.slane %v8032, 4
    %v8034 = vadd.f32 %v8032, %v8033
    %v8035 = vrot.slane %v8034, 2
    %v8036 = vadd.f32 %v8034, %v8035
    %v8037 = vrot.slane %v8036, 1
    %v8038 = vadd.f32 %v8036, %v8037
    %v8039 = vsel %vm3389, %v7963, 0.0
    %v8040 = vrot.slane %v8039, 4
    %v8041 = vadd.f32 %v8039, %v8040
    %v8042 = vrot.slane %v8041, 2
    %v8043 = vadd.f32 %v8041, %v8042
    %v8044 = vrot.slane %v8043, 1
    %v8045 = vadd.f32 %v8043, %v8044
    %v8046 = vsel %vm3389, %v7964, 0.0
    %v8047 = vrot.slane %v8046, 4
    %v8048 = vadd.f32 %v8046, %v8047
    %v8049 = vrot.slane %v8048, 2
    %v8050 = vadd.f32 %v8048, %v8049
    %v8051 = vrot.slane %v8050, 1
    %v8052 = vadd.f32 %v8050, %v8051
    %v8053 = vsel %vm3389, %v7965, 0.0
    %v8054 = vrot.slane %v8053, 4
    %v8055 = vadd.f32 %v8053, %v8054
    %v8056 = vrot.slane %v8055, 2
    %v8057 = vadd.f32 %v8055, %v8056
    %v8058 = vrot.slane %v8057, 1
    %v8059 = vadd.f32 %v8057, %v8058
    %v8060 = vsel %vm3389, %v7966, 0.0
    %v8061 = vrot.slane %v8060, 4
    %v8062 = vadd.f32 %v8060, %v8061
    %v8063 = vrot.slane %v8062, 2
    %v8064 = vadd.f32 %v8062, %v8063
    %v8065 = vrot.slane %v8064, 1
    %v8066 = vadd.f32 %v8064, %v8065
    %v8067 = vsel %vm3389, %v7967, 0.0
    %v8068 = vrot.slane %v8067, 4
    %v8069 = vadd.f32 %v8067, %v8068
    %v8070 = vrot.slane %v8069, 2
    %v8071 = vadd.f32 %v8069, %v8070
    %v8072 = vrot.slane %v8071, 1
    %v8073 = vadd.f32 %v8071, %v8072
    %v8074 = vsel %vm3389, %v7968, 0.0
    %v8075 = vrot.slane %v8074, 4
    %v8076 = vadd.f32 %v8074, %v8075
    %v8077 = vrot.slane %v8076, 2
    %v8078 = vadd.f32 %v8076, %v8077
    %v8079 = vrot.slane %v8078, 1
    %v8080 = vadd.f32 %v8078, %v8079
    %8081 = vrot.lane.b32.xlu0 %v5499, 104
    %v8082 = vpop.permute.xlu0 %8081
    %8083 = vrot.lane.b32.xlu0 %v5500, 104
    %v8084 = vpop.permute.xlu0 %8083
    %8085 = vrot.lane.b32.xlu0 %v5501, 104
    %v8086 = vpop.permute.xlu0 %8085
    %8087 = vrot.lane.b32.xlu0 %v5502, 104
    %v8088 = vpop.permute.xlu0 %8087
    %8089 = vrot.lane.b32.xlu0 %v5503, 104
    %v8090 = vpop.permute.xlu0 %8089
    %8091 = vrot.lane.b32.xlu0 %v5504, 104
    %v8092 = vpop.permute.xlu0 %8091
    %8093 = vrot.lane.b32.xlu0 %v5505, 104
    %v8094 = vpop.permute.xlu0 %8093
    %8095 = vrot.lane.b32.xlu0 %v5506, 104
    %v8096 = vpop.permute.xlu0 %8095
    %8097 = vrot.lane.b32.xlu0 %v5507, 104
    %v8098 = vpop.permute.xlu0 %8097
    %8099 = vrot.lane.b32.xlu0 %v5508, 104
    %v8100 = vpop.permute.xlu0 %8099
    %8101 = vrot.lane.b32.xlu0 %v5509, 104
    %v8102 = vpop.permute.xlu0 %8101
    %8103 = vrot.lane.b32.xlu0 %v5510, 104
    %v8104 = vpop.permute.xlu0 %8103
    %8105 = vrot.lane.b32.xlu0 %v5511, 104
    %v8106 = vpop.permute.xlu0 %8105
    %8107 = vrot.lane.b32.xlu0 %v5512, 104
    %v8108 = vpop.permute.xlu0 %8107
    %8109 = vrot.lane.b32.xlu0 %v5513, 104
    %v8110 = vpop.permute.xlu0 %8109
    %8111 = vrot.lane.b32.xlu0 %v5514, 104
    %v8112 = vpop.permute.xlu0 %8111
    %v8129 = vsel %vm861, %v8082, 0.0
    %8130 = vadd.xlane.f32.xlu0 %v8129
    %v8131 = vpop.xlane.xlu0 %8130
    %v8132 = vsel %vm861, %v8084, 0.0
    %8133 = vadd.xlane.f32.xlu0 %v8132
    %v8134 = vpop.xlane.xlu0 %8133
    %v8135 = vsel %vm861, %v8086, 0.0
    %8136 = vadd.xlane.f32.xlu0 %v8135
    %v8137 = vpop.xlane.xlu0 %8136
    %v8138 = vsel %vm861, %v8088, 0.0
    %8139 = vadd.xlane.f32.xlu0 %v8138
    %v8140 = vpop.xlane.xlu0 %8139
    %v8141 = vsel %vm861, %v8090, 0.0
    %8142 = vadd.xlane.f32.xlu0 %v8141
    %v8143 = vpop.xlane.xlu0 %8142
    %v8144 = vsel %vm861, %v8092, 0.0
    %8145 = vadd.xlane.f32.xlu0 %v8144
    %v8146 = vpop.xlane.xlu0 %8145
    %v8147 = vsel %vm861, %v8094, 0.0
    %8148 = vadd.xlane.f32.xlu0 %v8147
    %v8149 = vpop.xlane.xlu0 %8148
    %v8150 = vsel %vm861, %v8096, 0.0
    %8151 = vadd.xlane.f32.xlu0 %v8150
    %v8152 = vpop.xlane.xlu0 %8151
    %v8153 = vsel %vm861, %v8098, 0.0
    %8154 = vadd.xlane.f32.xlu0 %v8153
    %v8155 = vpop.xlane.xlu0 %8154
    %v8156 = vsel %vm861, %v8100, 0.0
    %8157 = vadd.xlane.f32.xlu0 %v8156
    %v8158 = vpop.xlane.xlu0 %8157
    %v8159 = vsel %vm861, %v8102, 0.0
    %8160 = vadd.xlane.f32.xlu0 %v8159
    %v8161 = vpop.xlane.xlu0 %8160
    %v8162 = vsel %vm861, %v8104, 0.0
    %8163 = vadd.xlane.f32.xlu0 %v8162
    %v8164 = vpop.xlane.xlu0 %8163
    %v8165 = vsel %vm861, %v8106, 0.0
    %8166 = vadd.xlane.f32.xlu0 %v8165
    %v8167 = vpop.xlane.xlu0 %8166
    %v8168 = vsel %vm861, %v8108, 0.0
    %8169 = vadd.xlane.f32.xlu0 %v8168
    %v8170 = vpop.xlane.xlu0 %8169
    %v8171 = vsel %vm861, %v8110, 0.0
    %8172 = vadd.xlane.f32.xlu0 %v8171
    %v8173 = vpop.xlane.xlu0 %8172
    %v8174 = vsel %vm861, %v8112, 0.0
    %8175 = vadd.xlane.f32.xlu0 %v8174
    %v8176 = vpop.xlane.xlu0 %8175
    %v8177 = vmul.f32 %v8131, 0.125
    %v8178 = vmul.f32 %v8134, 0.125
    %v8179 = vmul.f32 %v8137, 0.125
    %v8180 = vmul.f32 %v8140, 0.125
    %v8181 = vmul.f32 %v8143, 0.125
    %v8182 = vmul.f32 %v8146, 0.125
    %v8183 = vmul.f32 %v8149, 0.125
    %v8184 = vmul.f32 %v8152, 0.125
    %v8185 = vmul.f32 %v8155, 0.125
    %v8186 = vmul.f32 %v8158, 0.125
    %v8187 = vmul.f32 %v8161, 0.125
    %v8188 = vmul.f32 %v8164, 0.125
    %v8189 = vmul.f32 %v8167, 0.125
    %v8190 = vmul.f32 %v8170, 0.125
    %v8191 = vmul.f32 %v8173, 0.125
    %v8192 = vmul.f32 %v8176, 0.125
    %v8193 = vadd.f32 %v8177, %v933
    %v8194 = vadd.f32 %v8178, %v940
    %v8195 = vadd.f32 %v8179, %v947
    %v8196 = vadd.f32 %v8180, %v954
    %v8197 = vadd.f32 %v8181, %v961
    %v8198 = vadd.f32 %v8182, %v968
    %v8199 = vadd.f32 %v8183, %v975
    %v8200 = vadd.f32 %v8184, %v982
    %v8201 = vadd.f32 %v8185, %v933
    %v8202 = vadd.f32 %v8186, %v940
    %v8203 = vadd.f32 %v8187, %v947
    %v8204 = vadd.f32 %v8188, %v954
    %v8205 = vadd.f32 %v8189, %v961
    %v8206 = vadd.f32 %v8190, %v968
    %v8207 = vadd.f32 %v8191, %v975
    %v8208 = vadd.f32 %v8192, %v982
    %8225 = vset.pattern.permute.xlu0 0
    %8226 = vperm.xlu0 %8225, %v8193
    %v8227 = vpop.permute.xlu0 %8226
    %8228 = vset.pattern.permute.xlu0 0
    %8229 = vperm.xlu0 %8228, %v8194
    %v8230 = vpop.permute.xlu0 %8229
    %8231 = vset.pattern.permute.xlu0 0
    %8232 = vperm.xlu0 %8231, %v8195
    %v8233 = vpop.permute.xlu0 %8232
    %8234 = vset.pattern.permute.xlu0 0
    %8235 = vperm.xlu0 %8234, %v8196
    %v8236 = vpop.permute.xlu0 %8235
    %8237 = vset.pattern.permute.xlu0 0
    %8238 = vperm.xlu0 %8237, %v8197
    %v8239 = vpop.permute.xlu0 %8238
    %8240 = vset.pattern.permute.xlu0 0
    %8241 = vperm.xlu0 %8240, %v8198
    %v8242 = vpop.permute.xlu0 %8241
    %8243 = vset.pattern.permute.xlu0 0
    %8244 = vperm.xlu0 %8243, %v8199
    %v8245 = vpop.permute.xlu0 %8244
    %8246 = vset.pattern.permute.xlu0 0
    %8247 = vperm.xlu0 %8246, %v8200
    %v8248 = vpop.permute.xlu0 %8247
    %8249 = vset.pattern.permute.xlu0 0
    %8250 = vperm.xlu0 %8249, %v8201
    %v8251 = vpop.permute.xlu0 %8250
    %8252 = vset.pattern.permute.xlu0 0
    %8253 = vperm.xlu0 %8252, %v8202
    %v8254 = vpop.permute.xlu0 %8253
    %8255 = vset.pattern.permute.xlu0 0
    %8256 = vperm.xlu0 %8255, %v8203
    %v8257 = vpop.permute.xlu0 %8256
    %8258 = vset.pattern.permute.xlu0 0
    %8259 = vperm.xlu0 %8258, %v8204
    %v8260 = vpop.permute.xlu0 %8259
    %8261 = vset.pattern.permute.xlu0 0
    %8262 = vperm.xlu0 %8261, %v8205
    %v8263 = vpop.permute.xlu0 %8262
    %8264 = vset.pattern.permute.xlu0 0
    %8265 = vperm.xlu0 %8264, %v8206
    %v8266 = vpop.permute.xlu0 %8265
    %8267 = vset.pattern.permute.xlu0 0
    %8268 = vperm.xlu0 %8267, %v8207
    %v8269 = vpop.permute.xlu0 %8268
    %8270 = vset.pattern.permute.xlu0 0
    %8271 = vperm.xlu0 %8270, %v8208
    %v8272 = vpop.permute.xlu0 %8271
    %v8273 = vlaneseq
    %v8274 = vshrl.u32 %v8273, 7
    %v8275 = vsub.s32 %v45, %v8274
    %v8276 = vrot.slane %v8227, %v8275
    %v8277 = vlaneseq
    %v8278 = vshrl.u32 %v8277, 7
    %v8279 = vsub.s32 %v45, %v8278
    %v8280 = vrot.slane %v8230, %v8279
    %v8281 = vlaneseq
    %v8282 = vshrl.u32 %v8281, 7
    %v8283 = vsub.s32 %v45, %v8282
    %v8284 = vrot.slane %v8233, %v8283
    %v8285 = vlaneseq
    %v8286 = vshrl.u32 %v8285, 7
    %v8287 = vsub.s32 %v45, %v8286
    %v8288 = vrot.slane %v8236, %v8287
    %v8289 = vlaneseq
    %v8290 = vshrl.u32 %v8289, 7
    %v8291 = vsub.s32 %v45, %v8290
    %v8292 = vrot.slane %v8239, %v8291
    %v8293 = vlaneseq
    %v8294 = vshrl.u32 %v8293, 7
    %v8295 = vsub.s32 %v45, %v8294
    %v8296 = vrot.slane %v8242, %v8295
    %v8297 = vlaneseq
    %v8298 = vshrl.u32 %v8297, 7
    %v8299 = vsub.s32 %v45, %v8298
    %v8300 = vrot.slane %v8245, %v8299
    %v8301 = vlaneseq
    %v8302 = vshrl.u32 %v8301, 7
    %v8303 = vsub.s32 %v45, %v8302
    %v8304 = vrot.slane %v8248, %v8303
    %v8305 = vlaneseq
    %v8306 = vshrl.u32 %v8305, 7
    %v8307 = vsub.s32 %v45, %v8306
    %v8308 = vrot.slane %v8251, %v8307
    %v8309 = vlaneseq
    %v8310 = vshrl.u32 %v8309, 7
    %v8311 = vsub.s32 %v45, %v8310
    %v8312 = vrot.slane %v8254, %v8311
    %v8313 = vlaneseq
    %v8314 = vshrl.u32 %v8313, 7
    %v8315 = vsub.s32 %v45, %v8314
    %v8316 = vrot.slane %v8257, %v8315
    %v8317 = vlaneseq
    %v8318 = vshrl.u32 %v8317, 7
    %v8319 = vsub.s32 %v45, %v8318
    %v8320 = vrot.slane %v8260, %v8319
    %v8321 = vlaneseq
    %v8322 = vshrl.u32 %v8321, 7
    %v8323 = vsub.s32 %v45, %v8322
    %v8324 = vrot.slane %v8263, %v8323
    %v8325 = vlaneseq
    %v8326 = vshrl.u32 %v8325, 7
    %v8327 = vsub.s32 %v45, %v8326
    %v8328 = vrot.slane %v8266, %v8327
    %v8329 = vlaneseq
    %v8330 = vshrl.u32 %v8329, 7
    %v8331 = vsub.s32 %v45, %v8330
    %v8332 = vrot.slane %v8269, %v8331
    %v8333 = vlaneseq
    %v8334 = vshrl.u32 %v8333, 7
    %v8335 = vsub.s32 %v45, %v8334
    %v8336 = vrot.slane %v8272, %v8335
    %v8337 = vsel %vm1135, %v8280, %v8276
    %v8338 = vsel %vm321, %v8284, %v8337
    %v8339 = vsel %vm1138, %v8288, %v8338
    %v8340 = vsel %vm1140, %v8292, %v8339
    %v8341 = vsel %vm1142, %v8296, %v8340
    %v8342 = vsel %vm1144, %v8300, %v8341
    %v8343 = vsel %vm1146, %v8304, %v8342
    %v8344 = vsel %vm1135, %v8312, %v8308
    %v8345 = vsel %vm321, %v8316, %v8344
    %v8346 = vsel %vm1138, %v8320, %v8345
    %v8347 = vsel %vm1140, %v8324, %v8346
    %v8348 = vsel %vm1142, %v8328, %v8347
    %v8349 = vsel %vm1144, %v8332, %v8348
    %v8350 = vsel %vm1146, %v8336, %v8349
    %v8353 = vsel %vm861, %v8343, -inf
    %8354 = vmax.xlane.f32.xlu0 %v8353
    %v8355 = vpop.xlane.xlu0 %8354
    %v8356 = vsel %vm861, %v8350, -inf
    %8357 = vmax.xlane.f32.xlu0 %v8356
    %v8358 = vpop.xlane.xlu0 %8357
    %v8361 = vlaneseq
    %v8362 = vshrl.u32 %v8361, 7
    %v8363 = vsub.s32 0, %v8362
    %v8364 = vrot.slane %v8355, %v8363
    %v8365 = vlaneseq
    %v8366 = vshrl.u32 %v8365, 7
    %v8367 = vsub.s32 1, %v8366
    %v8368 = vrot.slane %v8355, %v8367
    %v8369 = vlaneseq
    %v8370 = vshrl.u32 %v8369, 7
    %v8371 = vsub.s32 2, %v8370
    %v8372 = vrot.slane %v8355, %v8371
    %v8373 = vlaneseq
    %v8374 = vshrl.u32 %v8373, 7
    %v8375 = vsub.s32 3, %v8374
    %v8376 = vrot.slane %v8355, %v8375
    %v8377 = vlaneseq
    %v8378 = vshrl.u32 %v8377, 7
    %v8379 = vsub.s32 4, %v8378
    %v8380 = vrot.slane %v8355, %v8379
    %v8381 = vlaneseq
    %v8382 = vshrl.u32 %v8381, 7
    %v8383 = vsub.s32 5, %v8382
    %v8384 = vrot.slane %v8355, %v8383
    %v8385 = vlaneseq
    %v8386 = vshrl.u32 %v8385, 7
    %v8387 = vsub.s32 6, %v8386
    %v8388 = vrot.slane %v8355, %v8387
    %v8389 = vlaneseq
    %v8390 = vshrl.u32 %v8389, 7
    %v8391 = vsub.s32 7, %v8390
    %v8392 = vrot.slane %v8355, %v8391
    %v8393 = vlaneseq
    %v8394 = vshrl.u32 %v8393, 7
    %v8395 = vsub.s32 0, %v8394
    %v8396 = vrot.slane %v8358, %v8395
    %v8397 = vlaneseq
    %v8398 = vshrl.u32 %v8397, 7
    %v8399 = vsub.s32 1, %v8398
    %v8400 = vrot.slane %v8358, %v8399
    %v8401 = vlaneseq
    %v8402 = vshrl.u32 %v8401, 7
    %v8403 = vsub.s32 2, %v8402
    %v8404 = vrot.slane %v8358, %v8403
    %v8405 = vlaneseq
    %v8406 = vshrl.u32 %v8405, 7
    %v8407 = vsub.s32 3, %v8406
    %v8408 = vrot.slane %v8358, %v8407
    %v8409 = vlaneseq
    %v8410 = vshrl.u32 %v8409, 7
    %v8411 = vsub.s32 4, %v8410
    %v8412 = vrot.slane %v8358, %v8411
    %v8413 = vlaneseq
    %v8414 = vshrl.u32 %v8413, 7
    %v8415 = vsub.s32 5, %v8414
    %v8416 = vrot.slane %v8358, %v8415
    %v8417 = vlaneseq
    %v8418 = vshrl.u32 %v8417, 7
    %v8419 = vsub.s32 6, %v8418
    %v8420 = vrot.slane %v8358, %v8419
    %v8421 = vlaneseq
    %v8422 = vshrl.u32 %v8421, 7
    %v8423 = vsub.s32 7, %v8422
    %v8424 = vrot.slane %v8358, %v8423
    %v8441 = vsub.f32 %v8193, %v8364
    %v8442 = vsub.f32 %v8194, %v8368
    %v8443 = vsub.f32 %v8195, %v8372
    %v8444 = vsub.f32 %v8196, %v8376
    %v8445 = vsub.f32 %v8197, %v8380
    %v8446 = vsub.f32 %v8198, %v8384
    %v8447 = vsub.f32 %v8199, %v8388
    %v8448 = vsub.f32 %v8200, %v8392
    %v8449 = vsub.f32 %v8201, %v8396
    %v8450 = vsub.f32 %v8202, %v8400
    %v8451 = vsub.f32 %v8203, %v8404
    %v8452 = vsub.f32 %v8204, %v8408
    %v8453 = vsub.f32 %v8205, %v8412
    %v8454 = vsub.f32 %v8206, %v8416
    %v8455 = vsub.f32 %v8207, %v8420
    %v8456 = vsub.f32 %v8208, %v8424
    %v8457 = vmul.f32 %v8441, 1.442695
    %v8458 = vpow.pop %v8457
    %v8459 = vmul.f32 %v8442, 1.442695
    %v8460 = vpow.pop %v8459
    %v8461 = vmul.f32 %v8443, 1.442695
    %v8462 = vpow.pop %v8461
    %v8463 = vmul.f32 %v8444, 1.442695
    %v8464 = vpow.pop %v8463
    %v8465 = vmul.f32 %v8445, 1.442695
    %v8466 = vpow.pop %v8465
    %v8467 = vmul.f32 %v8446, 1.442695
    %v8468 = vpow.pop %v8467
    %v8469 = vmul.f32 %v8447, 1.442695
    %v8470 = vpow.pop %v8469
    %v8471 = vmul.f32 %v8448, 1.442695
    %v8472 = vpow.pop %v8471
    %v8473 = vmul.f32 %v8449, 1.442695
    %v8474 = vpow.pop %v8473
    %v8475 = vmul.f32 %v8450, 1.442695
    %v8476 = vpow.pop %v8475
    %v8477 = vmul.f32 %v8451, 1.442695
    %v8478 = vpow.pop %v8477
    %v8479 = vmul.f32 %v8452, 1.442695
    %v8480 = vpow.pop %v8479
    %v8481 = vmul.f32 %v8453, 1.442695
    %v8482 = vpow.pop %v8481
    %v8483 = vmul.f32 %v8454, 1.442695
    %v8484 = vpow.pop %v8483
    %v8485 = vmul.f32 %v8455, 1.442695
    %v8486 = vpow.pop %v8485
    %v8487 = vmul.f32 %v8456, 1.442695
    %v8488 = vpow.pop %v8487
    %8505 = vset.pattern.permute.xlu0 0
    %8506 = vperm.xlu0 %8505, %v8458
    %v8507 = vpop.permute.xlu0 %8506
    %8508 = vset.pattern.permute.xlu0 0
    %8509 = vperm.xlu0 %8508, %v8460
    %v8510 = vpop.permute.xlu0 %8509
    %8511 = vset.pattern.permute.xlu0 0
    %8512 = vperm.xlu0 %8511, %v8462
    %v8513 = vpop.permute.xlu0 %8512
    %8514 = vset.pattern.permute.xlu0 0
    %8515 = vperm.xlu0 %8514, %v8464
    %v8516 = vpop.permute.xlu0 %8515
    %8517 = vset.pattern.permute.xlu0 0
    %8518 = vperm.xlu0 %8517, %v8466
    %v8519 = vpop.permute.xlu0 %8518
    %8520 = vset.pattern.permute.xlu0 0
    %8521 = vperm.xlu0 %8520, %v8468
    %v8522 = vpop.permute.xlu0 %8521
    %8523 = vset.pattern.permute.xlu0 0
    %8524 = vperm.xlu0 %8523, %v8470
    %v8525 = vpop.permute.xlu0 %8524
    %8526 = vset.pattern.permute.xlu0 0
    %8527 = vperm.xlu0 %8526, %v8472
    %v8528 = vpop.permute.xlu0 %8527
    %8529 = vset.pattern.permute.xlu0 0
    %8530 = vperm.xlu0 %8529, %v8474
    %v8531 = vpop.permute.xlu0 %8530
    %8532 = vset.pattern.permute.xlu0 0
    %8533 = vperm.xlu0 %8532, %v8476
    %v8534 = vpop.permute.xlu0 %8533
    %8535 = vset.pattern.permute.xlu0 0
    %8536 = vperm.xlu0 %8535, %v8478
    %v8537 = vpop.permute.xlu0 %8536
    %8538 = vset.pattern.permute.xlu0 0
    %8539 = vperm.xlu0 %8538, %v8480
    %v8540 = vpop.permute.xlu0 %8539
    %8541 = vset.pattern.permute.xlu0 0
    %8542 = vperm.xlu0 %8541, %v8482
    %v8543 = vpop.permute.xlu0 %8542
    %8544 = vset.pattern.permute.xlu0 0
    %8545 = vperm.xlu0 %8544, %v8484
    %v8546 = vpop.permute.xlu0 %8545
    %8547 = vset.pattern.permute.xlu0 0
    %8548 = vperm.xlu0 %8547, %v8486
    %v8549 = vpop.permute.xlu0 %8548
    %8550 = vset.pattern.permute.xlu0 0
    %8551 = vperm.xlu0 %8550, %v8488
    %v8552 = vpop.permute.xlu0 %8551
    %v8553 = vlaneseq
    %v8554 = vshrl.u32 %v8553, 7
    %v8555 = vsub.s32 %v45, %v8554
    %v8556 = vrot.slane %v8507, %v8555
    %v8557 = vlaneseq
    %v8558 = vshrl.u32 %v8557, 7
    %v8559 = vsub.s32 %v45, %v8558
    %v8560 = vrot.slane %v8510, %v8559
    %v8561 = vlaneseq
    %v8562 = vshrl.u32 %v8561, 7
    %v8563 = vsub.s32 %v45, %v8562
    %v8564 = vrot.slane %v8513, %v8563
    %v8565 = vlaneseq
    %v8566 = vshrl.u32 %v8565, 7
    %v8567 = vsub.s32 %v45, %v8566
    %v8568 = vrot.slane %v8516, %v8567
    %v8569 = vlaneseq
    %v8570 = vshrl.u32 %v8569, 7
    %v8571 = vsub.s32 %v45, %v8570
    %v8572 = vrot.slane %v8519, %v8571
    %v8573 = vlaneseq
    %v8574 = vshrl.u32 %v8573, 7
    %v8575 = vsub.s32 %v45, %v8574
    %v8576 = vrot.slane %v8522, %v8575
    %v8577 = vlaneseq
    %v8578 = vshrl.u32 %v8577, 7
    %v8579 = vsub.s32 %v45, %v8578
    %v8580 = vrot.slane %v8525, %v8579
    %v8581 = vlaneseq
    %v8582 = vshrl.u32 %v8581, 7
    %v8583 = vsub.s32 %v45, %v8582
    %v8584 = vrot.slane %v8528, %v8583
    %v8585 = vlaneseq
    %v8586 = vshrl.u32 %v8585, 7
    %v8587 = vsub.s32 %v45, %v8586
    %v8588 = vrot.slane %v8531, %v8587
    %v8589 = vlaneseq
    %v8590 = vshrl.u32 %v8589, 7
    %v8591 = vsub.s32 %v45, %v8590
    %v8592 = vrot.slane %v8534, %v8591
    %v8593 = vlaneseq
    %v8594 = vshrl.u32 %v8593, 7
    %v8595 = vsub.s32 %v45, %v8594
    %v8596 = vrot.slane %v8537, %v8595
    %v8597 = vlaneseq
    %v8598 = vshrl.u32 %v8597, 7
    %v8599 = vsub.s32 %v45, %v8598
    %v8600 = vrot.slane %v8540, %v8599
    %v8601 = vlaneseq
    %v8602 = vshrl.u32 %v8601, 7
    %v8603 = vsub.s32 %v45, %v8602
    %v8604 = vrot.slane %v8543, %v8603
    %v8605 = vlaneseq
    %v8606 = vshrl.u32 %v8605, 7
    %v8607 = vsub.s32 %v45, %v8606
    %v8608 = vrot.slane %v8546, %v8607
    %v8609 = vlaneseq
    %v8610 = vshrl.u32 %v8609, 7
    %v8611 = vsub.s32 %v45, %v8610
    %v8612 = vrot.slane %v8549, %v8611
    %v8613 = vlaneseq
    %v8614 = vshrl.u32 %v8613, 7
    %v8615 = vsub.s32 %v45, %v8614
    %v8616 = vrot.slane %v8552, %v8615
    %v8617 = vsel %vm1135, %v8560, %v8556
    %v8618 = vsel %vm321, %v8564, %v8617
    %v8619 = vsel %vm1138, %v8568, %v8618
    %v8620 = vsel %vm1140, %v8572, %v8619
    %v8621 = vsel %vm1142, %v8576, %v8620
    %v8622 = vsel %vm1144, %v8580, %v8621
    %v8623 = vsel %vm1146, %v8584, %v8622
    %v8624 = vsel %vm1135, %v8592, %v8588
    %v8625 = vsel %vm321, %v8596, %v8624
    %v8626 = vsel %vm1138, %v8600, %v8625
    %v8627 = vsel %vm1140, %v8604, %v8626
    %v8628 = vsel %vm1142, %v8608, %v8627
    %v8629 = vsel %vm1144, %v8612, %v8628
    %v8630 = vsel %vm1146, %v8616, %v8629
    %v8633 = vsel %vm861, %v8623, 0.0
    %8634 = vadd.xlane.f32.xlu0 %v8633
    %v8635 = vpop.xlane.xlu0 %8634
    %v8636 = vsel %vm861, %v8630, 0.0
    %8637 = vadd.xlane.f32.xlu0 %v8636
    %v8638 = vpop.xlane.xlu0 %8637
    %v8639 = vrcp.pop %v8635
    %v8640 = vrcp.pop %v8638
    %v8643 = vlaneseq
    %v8644 = vshrl.u32 %v8643, 7
    %v8645 = vsub.s32 0, %v8644
    %v8646 = vrot.slane %v8639, %v8645
    %v8647 = vlaneseq
    %v8648 = vshrl.u32 %v8647, 7
    %v8649 = vsub.s32 1, %v8648
    %v8650 = vrot.slane %v8639, %v8649
    %v8651 = vlaneseq
    %v8652 = vshrl.u32 %v8651, 7
    %v8653 = vsub.s32 2, %v8652
    %v8654 = vrot.slane %v8639, %v8653
    %v8655 = vlaneseq
    %v8656 = vshrl.u32 %v8655, 7
    %v8657 = vsub.s32 3, %v8656
    %v8658 = vrot.slane %v8639, %v8657
    %v8659 = vlaneseq
    %v8660 = vshrl.u32 %v8659, 7
    %v8661 = vsub.s32 4, %v8660
    %v8662 = vrot.slane %v8639, %v8661
    %v8663 = vlaneseq
    %v8664 = vshrl.u32 %v8663, 7
    %v8665 = vsub.s32 5, %v8664
    %v8666 = vrot.slane %v8639, %v8665
    %v8667 = vlaneseq
    %v8668 = vshrl.u32 %v8667, 7
    %v8669 = vsub.s32 6, %v8668
    %v8670 = vrot.slane %v8639, %v8669
    %v8671 = vlaneseq
    %v8672 = vshrl.u32 %v8671, 7
    %v8673 = vsub.s32 7, %v8672
    %v8674 = vrot.slane %v8639, %v8673
    %v8675 = vlaneseq
    %v8676 = vshrl.u32 %v8675, 7
    %v8677 = vsub.s32 0, %v8676
    %v8678 = vrot.slane %v8640, %v8677
    %v8679 = vlaneseq
    %v8680 = vshrl.u32 %v8679, 7
    %v8681 = vsub.s32 1, %v8680
    %v8682 = vrot.slane %v8640, %v8681
    %v8683 = vlaneseq
    %v8684 = vshrl.u32 %v8683, 7
    %v8685 = vsub.s32 2, %v8684
    %v8686 = vrot.slane %v8640, %v8685
    %v8687 = vlaneseq
    %v8688 = vshrl.u32 %v8687, 7
    %v8689 = vsub.s32 3, %v8688
    %v8690 = vrot.slane %v8640, %v8689
    %v8691 = vlaneseq
    %v8692 = vshrl.u32 %v8691, 7
    %v8693 = vsub.s32 4, %v8692
    %v8694 = vrot.slane %v8640, %v8693
    %v8695 = vlaneseq
    %v8696 = vshrl.u32 %v8695, 7
    %v8697 = vsub.s32 5, %v8696
    %v8698 = vrot.slane %v8640, %v8697
    %v8699 = vlaneseq
    %v8700 = vshrl.u32 %v8699, 7
    %v8701 = vsub.s32 6, %v8700
    %v8702 = vrot.slane %v8640, %v8701
    %v8703 = vlaneseq
    %v8704 = vshrl.u32 %v8703, 7
    %v8705 = vsub.s32 7, %v8704
    %v8706 = vrot.slane %v8640, %v8705
    %v8723 = vmul.f32 %v8458, %v8646
    %v8724 = vmul.f32 %v8460, %v8650
    %v8725 = vmul.f32 %v8462, %v8654
    %v8726 = vmul.f32 %v8464, %v8658
    %v8727 = vmul.f32 %v8466, %v8662
    %v8728 = vmul.f32 %v8468, %v8666
    %v8729 = vmul.f32 %v8470, %v8670
    %v8730 = vmul.f32 %v8472, %v8674
    %v8731 = vmul.f32 %v8474, %v8678
    %v8732 = vmul.f32 %v8476, %v8682
    %v8733 = vmul.f32 %v8478, %v8686
    %v8734 = vmul.f32 %v8480, %v8690
    %v8735 = vmul.f32 %v8482, %v8694
    %v8736 = vmul.f32 %v8484, %v8698
    %v8737 = vmul.f32 %v8486, %v8702
    %v8738 = vmul.f32 %v8488, %v8706
    %8740 = vset.pattern.permute.xlu0 0
    %8741 = vperm.xlu0 %8740, %v8723
    %v8742 = vpop.permute.xlu0 %8741
    %8745 = vset.pattern.permute.xlu0 0
    %8746 = vperm.xlu0 %8745, %v8724
    %v8747 = vpop.permute.xlu0 %8746
    %8750 = vset.pattern.permute.xlu0 0
    %8751 = vperm.xlu0 %8750, %v8725
    %v8752 = vpop.permute.xlu0 %8751
    %8755 = vset.pattern.permute.xlu0 0
    %8756 = vperm.xlu0 %8755, %v8726
    %v8757 = vpop.permute.xlu0 %8756
    %8760 = vset.pattern.permute.xlu0 0
    %8761 = vperm.xlu0 %8760, %v8727
    %v8762 = vpop.permute.xlu0 %8761
    %8765 = vset.pattern.permute.xlu0 0
    %8766 = vperm.xlu0 %8765, %v8728
    %v8767 = vpop.permute.xlu0 %8766
    %8770 = vset.pattern.permute.xlu0 0
    %8771 = vperm.xlu0 %8770, %v8729
    %v8772 = vpop.permute.xlu0 %8771
    %8775 = vset.pattern.permute.xlu0 0
    %8776 = vperm.xlu0 %8775, %v8730
    %v8777 = vpop.permute.xlu0 %8776
    %8780 = vset.pattern.permute.xlu0 0
    %8781 = vperm.xlu0 %8780, %v8731
    %v8782 = vpop.permute.xlu0 %8781
    %8785 = vset.pattern.permute.xlu0 0
    %8786 = vperm.xlu0 %8785, %v8732
    %v8787 = vpop.permute.xlu0 %8786
    %8790 = vset.pattern.permute.xlu0 0
    %8791 = vperm.xlu0 %8790, %v8733
    %v8792 = vpop.permute.xlu0 %8791
    %8795 = vset.pattern.permute.xlu0 0
    %8796 = vperm.xlu0 %8795, %v8734
    %v8797 = vpop.permute.xlu0 %8796
    %8800 = vset.pattern.permute.xlu0 0
    %8801 = vperm.xlu0 %8800, %v8735
    %v8802 = vpop.permute.xlu0 %8801
    %8805 = vset.pattern.permute.xlu0 0
    %8806 = vperm.xlu0 %8805, %v8736
    %v8807 = vpop.permute.xlu0 %8806
    %8810 = vset.pattern.permute.xlu0 0
    %8811 = vperm.xlu0 %8810, %v8737
    %v8812 = vpop.permute.xlu0 %8811
    %8815 = vset.pattern.permute.xlu0 0
    %8816 = vperm.xlu0 %8815, %v8738
    %v8817 = vpop.permute.xlu0 %8816
    %v8819 = vmul.f32 %v8742, %v4959
    %v8820 = vmul.f32 %v8747, %v4959
    %v8821 = vmul.f32 %v8752, %v4959
    %v8822 = vmul.f32 %v8757, %v4959
    %v8823 = vmul.f32 %v8762, %v4959
    %v8824 = vmul.f32 %v8767, %v4959
    %v8825 = vmul.f32 %v8772, %v4959
    %v8826 = vmul.f32 %v8777, %v4959
    %v8827 = vmul.f32 %v8782, %v4964
    %v8828 = vmul.f32 %v8787, %v4964
    %v8829 = vmul.f32 %v8792, %v4964
    %v8830 = vmul.f32 %v8797, %v4964
    %v8831 = vmul.f32 %v8802, %v4964
    %v8832 = vmul.f32 %v8807, %v4964
    %v8833 = vmul.f32 %v8812, %v4964
    %v8834 = vmul.f32 %v8817, %v4964
    %v8835 = vsel %vm4256, %v8819, 0.0
    %v8836 = vrot.slane %v8835, 4
    %v8837 = vadd.f32 %v8835, %v8836
    %v8838 = vrot.slane %v8837, 2
    %v8839 = vadd.f32 %v8837, %v8838
    %v8840 = vrot.slane %v8839, 1
    %v8841 = vadd.f32 %v8839, %v8840
    %v8842 = vsel %vm4256, %v8820, 0.0
    %v8843 = vrot.slane %v8842, 4
    %v8844 = vadd.f32 %v8842, %v8843
    %v8845 = vrot.slane %v8844, 2
    %v8846 = vadd.f32 %v8844, %v8845
    %v8847 = vrot.slane %v8846, 1
    %v8848 = vadd.f32 %v8846, %v8847
    %v8849 = vsel %vm4256, %v8821, 0.0
    %v8850 = vrot.slane %v8849, 4
    %v8851 = vadd.f32 %v8849, %v8850
    %v8852 = vrot.slane %v8851, 2
    %v8853 = vadd.f32 %v8851, %v8852
    %v8854 = vrot.slane %v8853, 1
    %v8855 = vadd.f32 %v8853, %v8854
    %v8856 = vsel %vm4256, %v8822, 0.0
    %v8857 = vrot.slane %v8856, 4
    %v8858 = vadd.f32 %v8856, %v8857
    %v8859 = vrot.slane %v8858, 2
    %v8860 = vadd.f32 %v8858, %v8859
    %v8861 = vrot.slane %v8860, 1
    %v8862 = vadd.f32 %v8860, %v8861
    %v8863 = vsel %vm4256, %v8823, 0.0
    %v8864 = vrot.slane %v8863, 4
    %v8865 = vadd.f32 %v8863, %v8864
    %v8866 = vrot.slane %v8865, 2
    %v8867 = vadd.f32 %v8865, %v8866
    %v8868 = vrot.slane %v8867, 1
    %v8869 = vadd.f32 %v8867, %v8868
    %v8870 = vsel %vm4256, %v8824, 0.0
    %v8871 = vrot.slane %v8870, 4
    %v8872 = vadd.f32 %v8870, %v8871
    %v8873 = vrot.slane %v8872, 2
    %v8874 = vadd.f32 %v8872, %v8873
    %v8875 = vrot.slane %v8874, 1
    %v8876 = vadd.f32 %v8874, %v8875
    %v8877 = vsel %vm4256, %v8825, 0.0
    %v8878 = vrot.slane %v8877, 4
    %v8879 = vadd.f32 %v8877, %v8878
    %v8880 = vrot.slane %v8879, 2
    %v8881 = vadd.f32 %v8879, %v8880
    %v8882 = vrot.slane %v8881, 1
    %v8883 = vadd.f32 %v8881, %v8882
    %v8884 = vsel %vm4256, %v8826, 0.0
    %v8885 = vrot.slane %v8884, 4
    %v8886 = vadd.f32 %v8884, %v8885
    %v8887 = vrot.slane %v8886, 2
    %v8888 = vadd.f32 %v8886, %v8887
    %v8889 = vrot.slane %v8888, 1
    %v8890 = vadd.f32 %v8888, %v8889
    %v8891 = vsel %vm4256, %v8827, 0.0
    %v8892 = vrot.slane %v8891, 4
    %v8893 = vadd.f32 %v8891, %v8892
    %v8894 = vrot.slane %v8893, 2
    %v8895 = vadd.f32 %v8893, %v8894
    %v8896 = vrot.slane %v8895, 1
    %v8897 = vadd.f32 %v8895, %v8896
    %v8898 = vsel %vm4256, %v8828, 0.0
    %v8899 = vrot.slane %v8898, 4
    %v8900 = vadd.f32 %v8898, %v8899
    %v8901 = vrot.slane %v8900, 2
    %v8902 = vadd.f32 %v8900, %v8901
    %v8903 = vrot.slane %v8902, 1
    %v8904 = vadd.f32 %v8902, %v8903
    %v8905 = vsel %vm4256, %v8829, 0.0
    %v8906 = vrot.slane %v8905, 4
    %v8907 = vadd.f32 %v8905, %v8906
    %v8908 = vrot.slane %v8907, 2
    %v8909 = vadd.f32 %v8907, %v8908
    %v8910 = vrot.slane %v8909, 1
    %v8911 = vadd.f32 %v8909, %v8910
    %v8912 = vsel %vm4256, %v8830, 0.0
    %v8913 = vrot.slane %v8912, 4
    %v8914 = vadd.f32 %v8912, %v8913
    %v8915 = vrot.slane %v8914, 2
    %v8916 = vadd.f32 %v8914, %v8915
    %v8917 = vrot.slane %v8916, 1
    %v8918 = vadd.f32 %v8916, %v8917
    %v8919 = vsel %vm4256, %v8831, 0.0
    %v8920 = vrot.slane %v8919, 4
    %v8921 = vadd.f32 %v8919, %v8920
    %v8922 = vrot.slane %v8921, 2
    %v8923 = vadd.f32 %v8921, %v8922
    %v8924 = vrot.slane %v8923, 1
    %v8925 = vadd.f32 %v8923, %v8924
    %v8926 = vsel %vm4256, %v8832, 0.0
    %v8927 = vrot.slane %v8926, 4
    %v8928 = vadd.f32 %v8926, %v8927
    %v8929 = vrot.slane %v8928, 2
    %v8930 = vadd.f32 %v8928, %v8929
    %v8931 = vrot.slane %v8930, 1
    %v8932 = vadd.f32 %v8930, %v8931
    %v8933 = vsel %vm4256, %v8833, 0.0
    %v8934 = vrot.slane %v8933, 4
    %v8935 = vadd.f32 %v8933, %v8934
    %v8936 = vrot.slane %v8935, 2
    %v8937 = vadd.f32 %v8935, %v8936
    %v8938 = vrot.slane %v8937, 1
    %v8939 = vadd.f32 %v8937, %v8938
    %v8940 = vsel %vm4256, %v8834, 0.0
    %v8941 = vrot.slane %v8940, 4
    %v8942 = vadd.f32 %v8940, %v8941
    %v8943 = vrot.slane %v8942, 2
    %v8944 = vadd.f32 %v8942, %v8943
    %v8945 = vrot.slane %v8944, 1
    %v8946 = vadd.f32 %v8944, %v8945
    %v8963 = vsel %vm1135, %v6234, %v6227
    %v8964 = vsel %vm321, %v6241, %v8963
    %v8965 = vsel %vm1138, %v6248, %v8964
    %v8966 = vsel %vm1140, %v6255, %v8965
    %v8967 = vsel %vm1142, %v6262, %v8966
    %v8968 = vsel %vm1144, %v6269, %v8967
    %v8969 = vsel %vm1146, %v6276, %v8968
    %v8970 = vsel %vm1135, %v6290, %v6283
    %v8971 = vsel %vm321, %v6297, %v8970
    %v8972 = vsel %vm1138, %v6304, %v8971
    %v8973 = vsel %vm1140, %v6311, %v8972
    %v8974 = vsel %vm1142, %v6318, %v8973
    %v8975 = vsel %vm1144, %v6325, %v8974
    %v8976 = vsel %vm1146, %v6332, %v8975
    %8977 = vrot.lane.b32.xlu0 %v8969, 96
    %v8978 = vpop.permute.xlu0 %8977
    %8979 = vrot.lane.b32.xlu0 %v8976, 96
    %v8980 = vpop.permute.xlu0 %8979
    %v8999 = vsel %vm1135, %v7116, %v7109
    %v9000 = vsel %vm321, %v7123, %v8999
    %v9001 = vsel %vm1138, %v7130, %v9000
    %v9002 = vsel %vm1140, %v7137, %v9001
    %v9003 = vsel %vm1142, %v7144, %v9002
    %v9004 = vsel %vm1144, %v7151, %v9003
    %v9005 = vsel %vm1146, %v7158, %v9004
    %v9006 = vsel %vm1135, %v7172, %v7165
    %v9007 = vsel %vm321, %v7179, %v9006
    %v9008 = vsel %vm1138, %v7186, %v9007
    %v9009 = vsel %vm1140, %v7193, %v9008
    %v9010 = vsel %vm1142, %v7200, %v9009
    %v9011 = vsel %vm1144, %v7207, %v9010
    %v9012 = vsel %vm1146, %v7214, %v9011
    %9013 = vrot.lane.b32.xlu0 %v9005, 96
    %v9014 = vpop.permute.xlu0 %9013
    %9015 = vrot.lane.b32.xlu0 %v9012, 96
    %v9016 = vpop.permute.xlu0 %9015
    %v9035 = vsel %vm1135, %v7982, %v7975
    %v9036 = vsel %vm321, %v7989, %v9035
    %v9037 = vsel %vm1138, %v7996, %v9036
    %v9038 = vsel %vm1140, %v8003, %v9037
    %v9039 = vsel %vm1142, %v8010, %v9038
    %v9040 = vsel %vm1144, %v8017, %v9039
    %v9041 = vsel %vm1146, %v8024, %v9040
    %v9042 = vsel %vm1135, %v8038, %v8031
    %v9043 = vsel %vm321, %v8045, %v9042
    %v9044 = vsel %vm1138, %v8052, %v9043
    %v9045 = vsel %vm1140, %v8059, %v9044
    %v9046 = vsel %vm1142, %v8066, %v9045
    %v9047 = vsel %vm1144, %v8073, %v9046
    %v9048 = vsel %vm1146, %v8080, %v9047
    %9049 = vrot.lane.b32.xlu0 %v9041, 96
    %v9050 = vpop.permute.xlu0 %9049
    %9051 = vrot.lane.b32.xlu0 %v9048, 96
    %v9052 = vpop.permute.xlu0 %9051
    %v9071 = vsel %vm1135, %v8848, %v8841
    %v9072 = vsel %vm321, %v8855, %v9071
    %v9073 = vsel %vm1138, %v8862, %v9072
    %v9074 = vsel %vm1140, %v8869, %v9073
    %v9075 = vsel %vm1142, %v8876, %v9074
    %v9076 = vsel %vm1144, %v8883, %v9075
    %v9077 = vsel %vm1146, %v8890, %v9076
    %v9078 = vsel %vm1135, %v8904, %v8897
    %v9079 = vsel %vm321, %v8911, %v9078
    %v9080 = vsel %vm1138, %v8918, %v9079
    %v9081 = vsel %vm1140, %v8925, %v9080
    %v9082 = vsel %vm1142, %v8932, %v9081
    %v9083 = vsel %vm1144, %v8939, %v9082
    %v9084 = vsel %vm1146, %v8946, %v9083
    %9085 = vrot.lane.b32.xlu0 %v9077, 96
    %v9086 = vpop.permute.xlu0 %9085
    %9087 = vrot.lane.b32.xlu0 %v9084, 96
    %v9088 = vpop.permute.xlu0 %9087
    %v9091 = vsel %vm861, %v8978, %v9014
    %v9092 = vsel %vm861, %v8980, %v9016
    %v9093 = vsel %vm4515, %v9091, %v9050
    %v9094 = vsel %vm4515, %v9092, %v9052
    %v9095 = vsel %vm4518, %v9093, %v9086
    %v9096 = vsel %vm4518, %v9094, %v9088
    %v9097 = vlaneseq
    %v9098 = vshrl.u32 %v9097, 7
    %v9099 = vsub.s32 1, %v9098
    %v9100 = vrot.slane %v4880, %v9099
    %v9102 = vsel %vm230, %v9095, 0
    %v9105 = vsel %vm230, %v9096, 0
    %9107 = vmatprep.subr.mxu0 0.0
    %9108 = vmatpush1.msra.mxu0 %v4864
    %9109 = vmatprep.subr.mxu0 0.0
    %9110 = vmatpush1.msra.mxu0 %v4865
    %9111 = vmatprep.subr.mxu0 0.0
    %9112 = vmatpush1.msra.mxu0 %v4866
    %9113 = vmatprep.subr.mxu0 0.0
    %9114 = vmatpush1.msra.mxu0 %v4867
    %9115 = vmatprep.subr.mxu0 0.0
    %9116 = vmatpush1.msra.mxu0 0.0
    %9117 = vmatprep.subr.mxu0 0.0
    %9118 = vmatpush1.msra.mxu0 0.0
    %9119 = vmatprep.subr.mxu0 0.0
    %9120 = vmatpush1.msra.mxu0 0.0
    %9121 = vmatprep.subr.mxu0 0.0
    %9122 = vmatpush1.msra.mxu0 0.0
    %9123 = vmatprep.subr.mxu0 0.0
    %9124 = vmatpush1.msra.mxu0 0.0
    %9125 = vmatprep.subr.mxu0 0.0
    %9126 = vmatpush1.msra.mxu0 0.0
    %9127 = vmatprep.subr.mxu0 0.0
    %9128 = vmatpush1.msra.mxu0 0.0
    %9129 = vmatprep.subr.mxu0 0.0
    %9130 = vmatpush1.msra.mxu0 0.0
    %9131 = vmatprep.subr.mxu0 0.0
    %9132 = vmatpush1.msra.mxu0 0.0
    %9133 = vmatprep.subr.mxu0 0.0
    %9134 = vmatpush1.msra.mxu0 0.0
    %9135 = vmatprep.subr.mxu0 0.0
    %9136 = vmatpush1.msra.mxu0 0.0
    %9137 = vmatprep.subr.mxu0 0.0
    %9138 = vmatpush1.msra.mxu0 0.0
    %9139 = vmatprep.subr.mxu0 0.0
    %9140 = vmatpush1.msra.mxu0 0.0
    %9141 = vmatprep.subr.mxu0 0.0
    %9142 = vmatpush1.msra.mxu0 0.0
    %9143 = vmatprep.subr.mxu0 0.0
    %9144 = vmatpush1.msra.mxu0 0.0
    %9145 = vmatprep.subr.mxu0 0.0
    %9146 = vmatpush1.msra.mxu0 0.0
    %9147 = vmatprep.subr.mxu0 0.0
    %9148 = vmatpush1.msra.mxu0 0.0
    %9149 = vmatprep.subr.mxu0 0.0
    %9150 = vmatpush1.msra.mxu0 0.0
    %9151 = vmatprep.subr.mxu0 0.0
    %9152 = vmatpush1.msra.mxu0 0.0
    %9153 = vmatprep.subr.mxu0 0.0
    %9154 = vmatpush1.msra.mxu0 0.0
    %9155 = vmatprep.subr.mxu0 0.0
    %9156 = vmatpush1.msra.mxu0 0.0
    %9157 = vmatprep.subr.mxu0 0.0
    %9158 = vmatpush1.msra.mxu0 0.0
    %9159 = vmatprep.subr.mxu0 0.0
    %9160 = vmatpush1.msra.mxu0 0.0
    %9161 = vmatprep.subr.mxu0 0.0
    %9162 = vmatpush1.msra.mxu0 0.0
    %9163 = vmatprep.subr.mxu0 0.0
    %9164 = vmatpush1.msra.mxu0 0.0
    %9165 = vmatprep.subr.mxu0 0.0
    %9166 = vmatpush1.msra.mxu0 0.0
    %9167 = vmatprep.subr.mxu0 0.0
    %9168 = vmatpush1.msra.mxu0 0.0
    %9169 = vmatprep.subr.mxu0 0.0
    %9170 = vmatpush1.msra.mxu0 0.0
    %9171 = vmatprep.mubr.f32.mxu0 0.0
    %9172 = vmatmul.mubr.f32.gmra.mrb[0].mxu0 %v9102
    %v9173 = vpop.f32.mrb[0].mxu0
    %v9174 = vadd.f32 %v9100, %v9173
    %v9175 = vpop.f32.mrb[0].mxu0
    %9176 = vmatprep.mubr.f32.mxu0 0.0
    %9177 = vmatmul.mubr.f32.gmra.mrb[0].mxu0 %v9105
    %v9178 = vpop.f32.mrb[0].mxu0
    %v9179 = vadd.f32 %v9100, %v9178
    %v9180 = vpop.f32.mrb[0].mxu0
    %9181 = vdwg.mxu0
    %v9182 = vadd.f32 %v4858, %v9174
    %v9183 = vadd.f32 %v4859, %v9179
    %v9184 = vsel %vm230, %v9182, 0.0
    %9185 = vadd.xlane.f32.xlu0 %v9184
    %v9186 = vpop.xlane.xlu0 %9185
    %v9187 = vsel %vm230, %v9183, 0.0
    %9188 = vadd.xlane.f32.xlu0 %v9187
    %v9189 = vpop.xlane.xlu0 %9188
    %v9190 = vmul.f32 %v9186, %v4614
    %v9191 = vmul.f32 %v9189, %v4614
    %v9192 = vsub.f32 %v9182, %v9190
    %v9193 = vsub.f32 %v9183, %v9191
    %v9194 = vmul.f32 %v9192, %v9192
    %v9195 = vmul.f32 %v9193, %v9193
    %v9196 = vsel %vm230, %v9194, 0.0
    %9197 = vadd.xlane.f32.xlu0 %v9196
    %v9198 = vpop.xlane.xlu0 %9197
    %v9199 = vsel %vm230, %v9195, 0.0
    %9200 = vadd.xlane.f32.xlu0 %v9199
    %v9201 = vpop.xlane.xlu0 %9200
    %v9202 = vmul.f32 %v9198, %v4614
    %v9203 = vmul.f32 %v9201, %v4614
    %v9204 = vadd.f32 %v9202, 1e-05
    %v9205 = vadd.f32 %v9203, 1e-05
    %v9206 = vrsqrt.pop %v9204
    %v9207 = vrsqrt.pop %v9205
    %v9208 = vmul.f32 %v9192, %v9206
    %v9209 = vmul.f32 %v9193, %v9207
    %v9210 = vlaneseq
    %v9211 = vshrl.u32 %v9210, 7
    %v9212 = vsub.s32 3, %v9211
    %v9213 = vrot.slane %v4880, %v9212
    %v9214 = vmul.f32 %v9208, %v9213
    %v9215 = vmul.f32 %v9209, %v9213
    %v9216 = vlaneseq
    %v9217 = vshrl.u32 %v9216, 7
    %v9218 = vsub.s32 4, %v9217
    %v9219 = vrot.slane %v4880, %v9218
    %v9220 = vadd.f32 %v9214, %v9219
    %v9221 = vadd.f32 %v9215, %v9219
    %v9222 = vlaneseq
    %v9223 = vshrl.u32 %v9222, 7
    %v9224 = vsub.s32 5, %v9223
    %v9225 = vrot.slane %v4880, %v9224
    %v9227 = vsel %vm230, %v9220, 0
    %v9230 = vsel %vm230, %v9221, 0
    %9232 = vmatprep.subr.mxu0 0.0
    %9233 = vmatpush1.msra.mxu0 %v4868
    %9234 = vmatprep.subr.mxu0 0.0
    %9235 = vmatpush1.msra.mxu0 %v4869
    %9236 = vmatprep.subr.mxu0 0.0
    %9237 = vmatpush1.msra.mxu0 %v4870
    %9238 = vmatprep.subr.mxu0 0.0
    %9239 = vmatpush1.msra.mxu0 %v4871
    %9240 = vmatprep.subr.mxu0 0.0
    %9241 = vmatpush1.msra.mxu0 0.0
    %9242 = vmatprep.subr.mxu0 0.0
    %9243 = vmatpush1.msra.mxu0 0.0
    %9244 = vmatprep.subr.mxu0 0.0
    %9245 = vmatpush1.msra.mxu0 0.0
    %9246 = vmatprep.subr.mxu0 0.0
    %9247 = vmatpush1.msra.mxu0 0.0
    %9248 = vmatprep.subr.mxu0 0.0
    %9249 = vmatpush1.msra.mxu0 0.0
    %9250 = vmatprep.subr.mxu0 0.0
    %9251 = vmatpush1.msra.mxu0 0.0
    %9252 = vmatprep.subr.mxu0 0.0
    %9253 = vmatpush1.msra.mxu0 0.0
    %9254 = vmatprep.subr.mxu0 0.0
    %9255 = vmatpush1.msra.mxu0 0.0
    %9256 = vmatprep.subr.mxu0 0.0
    %9257 = vmatpush1.msra.mxu0 0.0
    %9258 = vmatprep.subr.mxu0 0.0
    %9259 = vmatpush1.msra.mxu0 0.0
    %9260 = vmatprep.subr.mxu0 0.0
    %9261 = vmatpush1.msra.mxu0 0.0
    %9262 = vmatprep.subr.mxu0 0.0
    %9263 = vmatpush1.msra.mxu0 0.0
    %9264 = vmatprep.subr.mxu0 0.0
    %9265 = vmatpush1.msra.mxu0 0.0
    %9266 = vmatprep.subr.mxu0 0.0
    %9267 = vmatpush1.msra.mxu0 0.0
    %9268 = vmatprep.subr.mxu0 0.0
    %9269 = vmatpush1.msra.mxu0 0.0
    %9270 = vmatprep.subr.mxu0 0.0
    %9271 = vmatpush1.msra.mxu0 0.0
    %9272 = vmatprep.subr.mxu0 0.0
    %9273 = vmatpush1.msra.mxu0 0.0
    %9274 = vmatprep.subr.mxu0 0.0
    %9275 = vmatpush1.msra.mxu0 0.0
    %9276 = vmatprep.subr.mxu0 0.0
    %9277 = vmatpush1.msra.mxu0 0.0
    %9278 = vmatprep.subr.mxu0 0.0
    %9279 = vmatpush1.msra.mxu0 0.0
    %9280 = vmatprep.subr.mxu0 0.0
    %9281 = vmatpush1.msra.mxu0 0.0
    %9282 = vmatprep.subr.mxu0 0.0
    %9283 = vmatpush1.msra.mxu0 0.0
    %9284 = vmatprep.subr.mxu0 0.0
    %9285 = vmatpush1.msra.mxu0 0.0
    %9286 = vmatprep.subr.mxu0 0.0
    %9287 = vmatpush1.msra.mxu0 0.0
    %9288 = vmatprep.subr.mxu0 0.0
    %9289 = vmatpush1.msra.mxu0 0.0
    %9290 = vmatprep.subr.mxu0 0.0
    %9291 = vmatpush1.msra.mxu0 0.0
    %9292 = vmatprep.subr.mxu0 0.0
    %9293 = vmatpush1.msra.mxu0 0.0
    %9294 = vmatprep.subr.mxu0 0.0
    %9295 = vmatpush1.msra.mxu0 0.0
    %9296 = vmatprep.mubr.f32.mxu0 0.0
    %9297 = vmatmul.mubr.f32.gmra.mrb[0].mxu0 %v9227
    %v9298 = vpop.f32.mrb[0].mxu0
    %v9299 = vadd.f32 %v9225, %v9298
    %v9300 = vpop.f32.mrb[0].mxu0
    %9301 = vmatprep.mubr.f32.mxu0 0.0
    %9302 = vmatmul.mubr.f32.gmra.mrb[0].mxu0 %v9230
    %v9303 = vpop.f32.mrb[0].mxu0
    %v9304 = vadd.f32 %v9225, %v9303
    %v9305 = vpop.f32.mrb[0].mxu0
    %9306 = vdwg.mxu0
    %v9307 = vmax.f32 %v9299, 0.0
    %v9308 = vmax.f32 %v9304, 0.0
    %v9309 = vlaneseq
    %v9310 = vshrl.u32 %v9309, 7
    %v9311 = vsub.s32 6, %v9310
    %v9312 = vrot.slane %v4880, %v9311
    %v9314 = vsel %vm4738, %v9307, 0
    %v9317 = vsel %vm4738, %v9308, 0
    %9319 = vmatprep.subr.mxu0 0.0
    %9320 = vmatpush1.msra.mxu0 %v4872
    %9321 = vmatprep.subr.mxu0 0.0
    %9322 = vmatpush1.msra.mxu0 %v4873
    %9323 = vmatprep.subr.mxu0 0.0
    %9324 = vmatpush1.msra.mxu0 %v4874
    %9325 = vmatprep.subr.mxu0 0.0
    %9326 = vmatpush1.msra.mxu0 %v4875
    %9327 = vmatprep.subr.mxu0 0.0
    %9328 = vmatpush1.msra.mxu0 %v4876
    %9329 = vmatprep.subr.mxu0 0.0
    %9330 = vmatpush1.msra.mxu0 %v4877
    %9331 = vmatprep.subr.mxu0 0.0
    %9332 = vmatpush1.msra.mxu0 %v4878
    %9333 = vmatprep.subr.mxu0 0.0
    %9334 = vmatpush1.msra.mxu0 %v4879
    %9335 = vmatprep.subr.mxu0 0.0
    %9336 = vmatpush1.msra.mxu0 0.0
    %9337 = vmatprep.subr.mxu0 0.0
    %9338 = vmatpush1.msra.mxu0 0.0
    %9339 = vmatprep.subr.mxu0 0.0
    %9340 = vmatpush1.msra.mxu0 0.0
    %9341 = vmatprep.subr.mxu0 0.0
    %9342 = vmatpush1.msra.mxu0 0.0
    %9343 = vmatprep.subr.mxu0 0.0
    %9344 = vmatpush1.msra.mxu0 0.0
    %9345 = vmatprep.subr.mxu0 0.0
    %9346 = vmatpush1.msra.mxu0 0.0
    %9347 = vmatprep.subr.mxu0 0.0
    %9348 = vmatpush1.msra.mxu0 0.0
    %9349 = vmatprep.subr.mxu0 0.0
    %9350 = vmatpush1.msra.mxu0 0.0
    %9351 = vmatprep.subr.mxu0 0.0
    %9352 = vmatpush1.msra.mxu0 0.0
    %9353 = vmatprep.subr.mxu0 0.0
    %9354 = vmatpush1.msra.mxu0 0.0
    %9355 = vmatprep.subr.mxu0 0.0
    %9356 = vmatpush1.msra.mxu0 0.0
    %9357 = vmatprep.subr.mxu0 0.0
    %9358 = vmatpush1.msra.mxu0 0.0
    %9359 = vmatprep.subr.mxu0 0.0
    %9360 = vmatpush1.msra.mxu0 0.0
    %9361 = vmatprep.subr.mxu0 0.0
    %9362 = vmatpush1.msra.mxu0 0.0
    %9363 = vmatprep.subr.mxu0 0.0
    %9364 = vmatpush1.msra.mxu0 0.0
    %9365 = vmatprep.subr.mxu0 0.0
    %9366 = vmatpush1.msra.mxu0 0.0
    %9367 = vmatprep.subr.mxu0 0.0
    %9368 = vmatpush1.msra.mxu0 0.0
    %9369 = vmatprep.subr.mxu0 0.0
    %9370 = vmatpush1.msra.mxu0 0.0
    %9371 = vmatprep.subr.mxu0 0.0
    %9372 = vmatpush1.msra.mxu0 0.0
    %9373 = vmatprep.subr.mxu0 0.0
    %9374 = vmatpush1.msra.mxu0 0.0
    %9375 = vmatprep.subr.mxu0 0.0
    %9376 = vmatpush1.msra.mxu0 0.0
    %9377 = vmatprep.subr.mxu0 0.0
    %9378 = vmatpush1.msra.mxu0 0.0
    %9379 = vmatprep.subr.mxu0 0.0
    %9380 = vmatpush1.msra.mxu0 0.0
    %9381 = vmatprep.subr.mxu0 0.0
    %9382 = vmatpush1.msra.mxu0 0.0
    %9383 = vmatprep.mubr.f32.mxu0 0.0
    %9384 = vmatmul.mubr.f32.gmra.mrb[0].mxu0 %v9314
    %v9385 = vpop.f32.mrb[0].mxu0
    %v9386 = vadd.f32 %v9312, %v9385
    %v9387 = vpop.f32.mrb[0].mxu0
    %9388 = vmatprep.mubr.f32.mxu0 0.0
    %9389 = vmatmul.mubr.f32.gmra.mrb[0].mxu0 %v9317
    %v9390 = vpop.f32.mrb[0].mxu0
    %v9391 = vadd.f32 %v9312, %v9390
    %v9392 = vpop.f32.mrb[0].mxu0
    %9393 = vdwg.mxu0
    %v9394 = vadd.f32 %v9220, %v9386
    %v9395 = vadd.f32 %v9221, %v9391
    %v9396 = vsel %vm230, %v9394, 0.0
    %9397 = vadd.xlane.f32.xlu0 %v9396
    %v9398 = vpop.xlane.xlu0 %9397
    %v9399 = vsel %vm230, %v9395, 0.0
    %9400 = vadd.xlane.f32.xlu0 %v9399
    %v9401 = vpop.xlane.xlu0 %9400
    %v9402 = vmul.f32 %v9398, %v4614
    %v9403 = vmul.f32 %v9401, %v4614
    %v9404 = vsub.f32 %v9394, %v9402
    %v9405 = vsub.f32 %v9395, %v9403
    %v9406 = vmul.f32 %v9404, %v9404
    %v9407 = vmul.f32 %v9405, %v9405
    %v9408 = vsel %vm230, %v9406, 0.0
    %9409 = vadd.xlane.f32.xlu0 %v9408
    %v9410 = vpop.xlane.xlu0 %9409
    %v9411 = vsel %vm230, %v9407, 0.0
    %9412 = vadd.xlane.f32.xlu0 %v9411
    %v9413 = vpop.xlane.xlu0 %9412
    %v9414 = vmul.f32 %v9410, %v4614
    %v9415 = vmul.f32 %v9413, %v4614
    %v9416 = vadd.f32 %v9414, 1e-05
    %v9417 = vadd.f32 %v9415, 1e-05
    %v9418 = vrsqrt.pop %v9416
    %v9419 = vrsqrt.pop %v9417
    %v9420 = vmul.f32 %v9404, %v9418
    %v9421 = vmul.f32 %v9405, %v9419
    %v9422 = vlaneseq
    %v9423 = vshrl.u32 %v9422, 7
    %v9424 = vsub.s32 7, %v9423
    %v9425 = vrot.slane %v4880, %v9424
    %v9426 = vmul.f32 %v9420, %v9425
    %v9427 = vmul.f32 %v9421, %v9425
    %v9428 = vlaneseq
    %v9429 = vshrl.u32 %v9428, 7
    %v9430 = vsub.s32 0, %v9429
    %v9431 = vrot.slane %v4881, %v9430
    %v9432 = vadd.f32 %v9426, %v9431
    %v9433 = vadd.f32 %v9427, %v9431
    %v9434 = vld [vmem:[#allocation6 + $0x160] sm:$0xff]
    %v9435 = vld [vmem:[#allocation6 + $0x168] sm:$0xff]
    %v9436 = vld [vmem:[#allocation6 + $0x170] sm:$0xff]
    %v9437 = vld [vmem:[#allocation6 + $0x178] sm:$0xff]
    %v9438 = vld [vmem:[#allocation6 + $0x180] sm:$0x1]
    %v9439 = vlaneseq
    %v9440 = vshrl.u32 %v9439, 7
    %v9441 = vsub.s32 0, %v9440
    %v9442 = vrot.slane %v9438, %v9441
    %v9444 = vsel %vm230, %v9432, 0
    %v9447 = vsel %vm230, %v9433, 0
    %9449 = vmatprep.subr.mxu0 0.0
    %9450 = vmatpush1.msra.mxu0 %v9434
    %9451 = vmatprep.subr.mxu0 0.0
    %9452 = vmatpush1.msra.mxu0 %v9435
    %9453 = vmatprep.subr.mxu0 0.0
    %9454 = vmatpush1.msra.mxu0 %v9436
    %9455 = vmatprep.subr.mxu0 0.0
    %9456 = vmatpush1.msra.mxu0 %v9437
    %9457 = vmatprep.subr.mxu0 0.0
    %9458 = vmatpush1.msra.mxu0 0.0
    %9459 = vmatprep.subr.mxu0 0.0
    %9460 = vmatpush1.msra.mxu0 0.0
    %9461 = vmatprep.subr.mxu0 0.0
    %9462 = vmatpush1.msra.mxu0 0.0
    %9463 = vmatprep.subr.mxu0 0.0
    %9464 = vmatpush1.msra.mxu0 0.0
    %9465 = vmatprep.subr.mxu0 0.0
    %9466 = vmatpush1.msra.mxu0 0.0
    %9467 = vmatprep.subr.mxu0 0.0
    %9468 = vmatpush1.msra.mxu0 0.0
    %9469 = vmatprep.subr.mxu0 0.0
    %9470 = vmatpush1.msra.mxu0 0.0
    %9471 = vmatprep.subr.mxu0 0.0
    %9472 = vmatpush1.msra.mxu0 0.0
    %9473 = vmatprep.subr.mxu0 0.0
    %9474 = vmatpush1.msra.mxu0 0.0
    %9475 = vmatprep.subr.mxu0 0.0
    %9476 = vmatpush1.msra.mxu0 0.0
    %9477 = vmatprep.subr.mxu0 0.0
    %9478 = vmatpush1.msra.mxu0 0.0
    %9479 = vmatprep.subr.mxu0 0.0
    %9480 = vmatpush1.msra.mxu0 0.0
    %9481 = vmatprep.subr.mxu0 0.0
    %9482 = vmatpush1.msra.mxu0 0.0
    %9483 = vmatprep.subr.mxu0 0.0
    %9484 = vmatpush1.msra.mxu0 0.0
    %9485 = vmatprep.subr.mxu0 0.0
    %9486 = vmatpush1.msra.mxu0 0.0
    %9487 = vmatprep.subr.mxu0 0.0
    %9488 = vmatpush1.msra.mxu0 0.0
    %9489 = vmatprep.subr.mxu0 0.0
    %9490 = vmatpush1.msra.mxu0 0.0
    %9491 = vmatprep.subr.mxu0 0.0
    %9492 = vmatpush1.msra.mxu0 0.0
    %9493 = vmatprep.subr.mxu0 0.0
    %9494 = vmatpush1.msra.mxu0 0.0
    %9495 = vmatprep.subr.mxu0 0.0
    %9496 = vmatpush1.msra.mxu0 0.0
    %9497 = vmatprep.subr.mxu0 0.0
    %9498 = vmatpush1.msra.mxu0 0.0
    %9499 = vmatprep.subr.mxu0 0.0
    %9500 = vmatpush1.msra.mxu0 0.0
    %9501 = vmatprep.subr.mxu0 0.0
    %9502 = vmatpush1.msra.mxu0 0.0
    %9503 = vmatprep.subr.mxu0 0.0
    %9504 = vmatpush1.msra.mxu0 0.0
    %9505 = vmatprep.subr.mxu0 0.0
    %9506 = vmatpush1.msra.mxu0 0.0
    %9507 = vmatprep.subr.mxu0 0.0
    %9508 = vmatpush1.msra.mxu0 0.0
    %9509 = vmatprep.subr.mxu0 0.0
    %9510 = vmatpush1.msra.mxu0 0.0
    %9511 = vmatprep.subr.mxu0 0.0
    %9512 = vmatpush1.msra.mxu0 0.0
    %9513 = vmatprep.mubr.f32.mxu0 0.0
    %9514 = vmatmul.mubr.f32.gmra.mrb[0].mxu0 %v9444
    %v9515 = vpop.f32.mrb[0].mxu0
    %v9516 = vadd.f32 %v9442, %v9515
    %v9517 = vpop.f32.mrb[0].mxu0
    %9518 = vmatprep.mubr.f32.mxu0 0.0
    %9519 = vmatmul.mubr.f32.gmra.mrb[0].mxu0 %v9447
    %v9520 = vpop.f32.mrb[0].mxu0
    %v9521 = vadd.f32 %v9442, %v9520
    %v9522 = vpop.f32.mrb[0].mxu0
    %9523 = vdwg.mxu0
    %9524 = vst [vmem:[#allocation7] sm:$0xff] %v9516
    %9525 = vst [vmem:[#allocation7 + $0x8] sm:$0xff] %v9521
    // Predicated region
    $region22: #{forward.1} parent=1 // pred_check
      _
    $region23: #{forward.1} parent=1 // pred_check_branch
      %9527 = sbr.rel (0) target = $region25
    $region24: #{forward.1} parent=1 // pred_region
      %s9529 = ssub.s32 256, 256
      %9530 = vsyncadd [#allocation4], %s9529
      %s9531 = sshll.u32 [#allocation7], 4
      %s9532 = int_to_ptr.vmem [resolvable:$true] %s9531
      %9537 = dma.vmem_to_hbm [thread:$0]  %s9532, 256, %s3, [#allocation4], 128, 128, 8
    $region25: #{forward.1} parent=1 // pred_fallthru
      _
    // Predicated region
    $region26: #{forward.1} parent=1 // pred_check
      _
    $region27: #{forward.1} parent=1 // pred_check_branch
      %9539 = sbr.rel (0) target = $region29
    $region28: #{forward.1} parent=1 // pred_region
      %9540 = dma.done [#allocation4], 256
    $region29: #{forward.1} parent=1 // pred_fallthru
      _
    %9541 = vsyncpa [#allocation3], 1
    %9542 = vsyncpa [#allocation4], 1
    %9543 = vsyncpa [#allocation5], 1

</llo_original>
